<compile_context>
chip_gen: v5e
topology: v5e:2x2
jax: 0.10.0
libtpu: 0.0.40
codegen_flags: <defaults>
</compile_context>

<pallas_src>
import math

import jax
import jax.numpy as jnp
from jax.experimental import pallas as pl
from jax.experimental.pallas import tpu as pltpu

# ---- model dimensions (fixed by Linear(3968, 1024): 64 * ((L - 4) // 2) == 3968) ----
IN_CHANNELS = 1
SEQ_LEN = 128
CONV_CH = 64
L1 = SEQ_LEN - 2            # 126 after conv1 (k=3, valid)
L2 = L1 - 2                 # 124 after conv2
LP = L2 // 2                # 62  after MaxPool1d(2)
FLAT = CONV_CH * LP         # 3968
HID1, HID2 = 1024, 128
OUT_SIZES = (6, 6)
NHEAD_OUT = OUT_SIZES[0] + OUT_SIZES[1]   # 12

# ---- kernel tiling knobs ----
ROWS_OUT = 32                         # 31 lane-dense rows of 128 pooled features + 1 zero row
FLAT_PAD = ROWS_OUT * 2 * CONV_CH     # 4096 (= FLAT padded; extra fc1 weight rows are zero)
CONV_BB = 32                          # conv samples per grid step (was 8)
MLP_MT = 256                          # MLP batch-tile rows (caps VMEM, enables megacore split)
TK = 1024                             # fc1 reduction tile (2 MiB bf16 weight tiles, 4 steps)


def _round_up(v, m):
    return ((v + m - 1) // m) * m


# ----------------------------------------------------------------------------
# Kernel 1: conv1+ReLU -> conv2+ReLU -> (Dropout=identity) -> MaxPool1d(2),
#           emitted lane-dense as (B, 32, 128) bf16 flattened-feature rows.
#           Fully batched over the block: no per-sample Python loop.
# ----------------------------------------------------------------------------
def _conv_kernel(x_ref, w1_ref, b1_ref, w2_ref, b2_ref, sel_ref, out_ref):
    bb = x_ref.shape[0]
    x = x_ref[...]                                     # (bb, 128, 1)  f32
    w1 = w1_ref[...]                                   # (3, 64)       [tap, out_ch]
    b1 = b1_ref[...]                                   # (1, 64)
    w2 = w2_ref[...]                                   # (3, 64, 64)   [tap, in_ch, out_ch] bf16
    b2 = b2_ref[...]                                   # (1, 64)

    # Conv1d(1 -> 64, k=3) + ReLU : batched tap-wise outer products on the VPU.
    # Pad x by two zero rows so y1 has 128 (sublane-tile aligned) positions; rows
    # >= L1 are never consumed downstream.
    xp = jnp.concatenate([x, jnp.zeros((bb, 2, IN_CHANNELS), jnp.float32)], axis=1)  # (bb,130,1)
    y1 = xp[:, 0:SEQ_LEN, :] * w1[0:1, :]
    y1 = y1 + xp[:, 1:1 + SEQ_LEN, :] * w1[1:2, :]
    y1 = y1 + xp[:, 2:2 + SEQ_LEN, :] * w1[2:3, :]
    y1 = jnp.maximum(y1 + b1, 0.0)                     # (bb, 128, 64) f32
    y1b = y1.astype(jnp.bfloat16).reshape(bb * SEQ_LEN, CONV_CH)   # aligned merge, no relayout

    # Conv1d(64 -> 64, k=3) + ReLU : three accumulating K=64 MXU matmuls (no concat copy),
    # each one big-M (bb*128 rows) bf16 matmul with f32 accumulation.
    z0 = jnp.dot(y1b, w2[0], preferred_element_type=jnp.float32).reshape(bb, SEQ_LEN, CONV_CH)
    z1 = jnp.dot(y1b, w2[1], preferred_element_type=jnp.float32).reshape(bb, SEQ_LEN, CONV_CH)
    z2 = jnp.dot(y1b, w2[2], preferred_element_type=jnp.float32).reshape(bb, SEQ_LEN, CONV_CH)
    y2 = z0[:, 0:L2, :] + z1[:, 1:1 + L2, :] + z2[:, 2:2 + L2, :] + b2
    y2 = jnp.maximum(y2, 0.0)                          # (bb, 124, 64) f32

    # Dropout(0.5): identity at inference time.
    # MaxPool1d(2) + lane-dense repack: pairwise max of adjacent positions (valid at even
    # rows), then ONE batched selection matmul picks rows {4q, 4q+2}; the lane concat packs
    # row q = [pool[2q] | pool[2q+1]].  sel rows 31/63 are all-zero -> output row 31 = 0,
    # which is the free 3968 -> 4096 zero pad for fc1.
    m = jnp.maximum(y2[:, 0:L2 - 1, :], y2[:, 1:L2, :]).astype(jnp.bfloat16)   # (bb, 123, 64)
    sel = jnp.broadcast_to(sel_ref[...], (bb, 2 * ROWS_OUT, L2 - 1))           # (bb, 64, 123)
    g = jnp.einsum('bql,blc->bqc', sel, m,
                   preferred_element_type=jnp.float32)                          # (bb, 64, 64)
    out_ref[...] = jnp.concatenate(
        [g[:, 0:ROWS_OUT, :], g[:, ROWS_OUT:2 * ROWS_OUT, :]],
        axis=-1).astype(jnp.bfloat16)                                           # (bb, 32, 128)


def conv_forward(x_nlc, w1k, b1, w2t, b2, sel, *, block_b):
    n_pad = x_nlc.shape[0]
    return pl.pallas_call(
        _conv_kernel,
        out_shape=jax.ShapeDtypeStruct((n_pad, ROWS_OUT, 2 * CONV_CH), jnp.bfloat16),
        grid_spec=pltpu.PrefetchScalarGridSpec(
            num_scalar_prefetch=0,
            grid=(n_pad // block_b,),
            in_specs=[
                pl.BlockSpec((block_b, SEQ_LEN, IN_CHANNELS), lambda g: (g, 0, 0)),
                pl.BlockSpec((3, CONV_CH), lambda g: (0, 0)),
                pl.BlockSpec((1, CONV_CH), lambda g: (0, 0)),
                pl.BlockSpec((3, CONV_CH, CONV_CH), lambda g: (0, 0, 0)),
                pl.BlockSpec((1, CONV_CH), lambda g: (0, 0)),
                pl.BlockSpec((2 * ROWS_OUT, L2 - 1), lambda g: (0, 0)),
            ],
            out_specs=pl.BlockSpec((block_b, ROWS_OUT, 2 * CONV_CH), lambda g: (g, 0, 0)),
        ),
        compiler_params=pltpu.CompilerParams(dimension_semantics=("parallel",)),
    )(x_nlc, w1k, b1, w2t, b2, sel)


# ----------------------------------------------------------------------------
# Kernel 2: Linear(3968,1024)+ReLU (M-tiled x K-tiled, bf16 weight streaming) ->
#           Linear(1024,128)+ReLU -> fused heads Linear(128,12) -> 2x Softmax(6)
#           written as one lane-packed (MT, 12) block.
# ----------------------------------------------------------------------------
def _mlp_kernel(f_ref, wf1_ref, bf1_ref, wf2_ref, bf2_ref, wh_ref, bh_ref,
                out_ref, acc_ref):
    k = pl.program_id(1)

    @pl.when(k == 0)
    def _():
        acc_ref[...] = jnp.zeros_like(acc_ref)

    # fc1 partial product for this K tile (bf16 x bf16 -> f32 accumulate).
    acc_ref[...] += jnp.dot(f_ref[...], wf1_ref[...],          # (MT, TK) @ (TK, 1024)
                            preferred_element_type=jnp.float32)

    @pl.when(k == pl.num_programs(1) - 1)
    def _():
        h = jnp.maximum(acc_ref[...] + bf1_ref[...], 0.0)                     # (MT, 1024)
        h = jnp.dot(h.astype(jnp.bfloat16), wf2_ref[...],
                    preferred_element_type=jnp.float32) + bf2_ref[...]
        h = jnp.maximum(h, 0.0)                                               # (MT, 128)
        logits = jnp.dot(h, wh_ref[...],
                         preferred_element_type=jnp.float32) + bh_ref[...]    # (MT, 12)

        def _softmax(l):
            mval = jnp.max(l, axis=-1, keepdims=True)
            e = jnp.exp(l - mval)
            return e / jnp.sum(e, axis=-1, keepdims=True)

        out_ref[...] = jnp.concatenate(
            [_softmax(logits[:, 0:OUT_SIZES[0]]),
             _softmax(logits[:, OUT_SIZES[0]:NHEAD_OUT])], axis=-1)           # (MT, 12)


def mlp_forward(feats, wf1, bf1, wf2, bf2, wh, bh, *, block_m):
    n_pad = feats.shape[0]
    return pl.pallas_call(
        _mlp_kernel,
        out_shape=jax.ShapeDtypeStruct((n_pad, NHEAD_OUT), jnp.float32),
        grid_spec=pltpu.PrefetchScalarGridSpec(
            num_scalar_prefetch=0,
            grid=(n_pad // block_m, FLAT_PAD // TK),
            in_specs=[
                pl.BlockSpec((block_m, TK), lambda m, k: (m, k)),     # activations (M,K tiled)
                pl.BlockSpec((TK, HID1), lambda m, k: (k, 0)),        # fc1 weight tile (streamed)
                pl.BlockSpec((1, HID1), lambda m, k: (0, 0)),
                pl.BlockSpec((HID1, HID2), lambda m, k: (0, 0)),      # fc2 weight (resident, bf16)
                pl.BlockSpec((1, HID2), lambda m, k: (0, 0)),
                pl.BlockSpec((HID2, NHEAD_OUT), lambda m, k: (0, 0)),
                pl.BlockSpec((1, NHEAD_OUT), lambda m, k: (0, 0)),
            ],
            out_specs=pl.BlockSpec((block_m, NHEAD_OUT), lambda m, k: (m, 0)),
            scratch_shapes=[pltpu.VMEM((block_m, HID1), jnp.float32)],
        ),
        compiler_params=pltpu.CompilerParams(
            dimension_semantics=("parallel", "arbitrary")),
    )(feats, wf1, bf1, wf2, bf2, wh, bh)


# ----------------------------------------------------------------------------
# Parameters: PyTorch-convention init, then a ONE-TIME re-layout for the kernels.
# ----------------------------------------------------------------------------
def init_params(key):
    ks = jax.random.split(key, 12)

    def u(k, shape, fan_in):
        bound = 1.0 / math.sqrt(fan_in)
        return jax.random.uniform(k, shape, jnp.float32, -bound, bound)

    return dict(
        conv1_w=u(ks[0], (CONV_CH, IN_CHANNELS, 3), IN_CHANNELS * 3),
        conv1_b=u(ks[1], (CONV_CH,), IN_CHANNELS * 3),
        conv2_w=u(ks[2], (CONV_CH, CONV_CH, 3), CONV_CH * 3),
        conv2_b=u(ks[3], (CONV_CH,), CONV_CH * 3),
        fc1_w=u(ks[4], (HID1, FLAT), FLAT),
        fc1_b=u(ks[5], (HID1,), FLAT),
        fc2_w=u(ks[6], (HID2, HID1), HID1),
        fc2_b=u(ks[7], (HID2,), HID1),
        head0_w=u(ks[8], (OUT_SIZES[0], HID2), HID2),
        head0_b=u(ks[9], (OUT_SIZES[0],), HID2),
        head1_w=u(ks[10], (OUT_SIZES[1], HID2), HID2),
        head1_b=u(ks[11], (OUT_SIZES[1],), HID2),
    )


def prepare_params(p):
    """One-time weight re-layout / dtype prep (hoisted out of the forward pass)."""
    # Conv weights: torch (out, in, k) -> [tap, out] (f32, VPU) and per-tap (in, out) bf16 (MXU).
    w1k = jnp.transpose(p["conv1_w"], (2, 1, 0)).reshape(3, CONV_CH)
    b1 = p["conv1_b"].reshape(1, CONV_CH)
    w2t = jnp.transpose(p["conv2_w"], (2, 1, 0)).astype(jnp.bfloat16)     # (3, 64, 64)
    b2 = p["conv2_b"].reshape(1, CONV_CH)

    # Pool/repack selection matrix (hoisted from the kernel): rows 0..31 select pairwise-max
    # row 4q (= pool[2q]); rows 32..63 select row 4q+2 (= pool[2q+1]); rows 31/63 are zero.
    tgt = jnp.concatenate([4 * jnp.arange(ROWS_OUT), 4 * jnp.arange(ROWS_OUT) + 2])
    sel = (jnp.arange(L2 - 1)[None, :] == tgt[:, None]).astype(jnp.bfloat16)  # (64, 123)

    # fc1: PyTorch flattens (N, 64, 62) channel-major (col = o*LP + p); the conv kernel
    # emits features position-major (p*64 + o), so permute fc1's input columns to match,
    # pad K to FLAT_PAD with zero rows, and store bf16 for half the HBM traffic.
    wf1 = jnp.transpose(p["fc1_w"].reshape(HID1, CONV_CH, LP), (2, 1, 0)).reshape(FLAT, HID1)
    wf1 = jnp.pad(wf1, ((0, FLAT_PAD - FLAT), (0, 0))).astype(jnp.bfloat16)
    bf1 = p["fc1_b"].reshape(1, HID1)
    wf2 = jnp.transpose(p["fc2_w"]).astype(jnp.bfloat16)                  # (1024, 128)
    bf2 = p["fc2_b"].reshape(1, HID2)

    # Heads fused into one (128, 12) matmul (kept f32 — tiny).
    wh = jnp.concatenate([jnp.transpose(p["head0_w"]), jnp.transpose(p["head1_w"])], axis=1)
    bh = jnp.concatenate([p["head0_b"], p["head1_b"]]).reshape(1, NHEAD_OUT)

    return dict(w1k=w1k, b1=b1, w2t=w2t, b2=b2, sel=sel,
                wf1=wf1, bf1=bf1, wf2=wf2, bf2=bf2, wh=wh, bh=bh)


def cnn_module_branch_forward(x_lnc, kp):
    """x_lnc: (L, N, C) exactly as the PyTorch module expects before permute(1,2,0)."""
    n = x_lnc.shape[1]

    # Block sizes: conv block bb <= 32 samples, MLP M-tile mt <= 256 rows (multiple of bb).
    bb = min(CONV_BB, _round_up(n, 8))
    mt = min(MLP_MT, _round_up(n, bb))
    n_pad = _round_up(n, mt)

    # (L, N, C) -> kernel layout (N, L, C); pad batch to n_pad (garbage rows sliced off below).
    x_nlc = jnp.transpose(x_lnc, (1, 0, 2)).astype(jnp.float32)
    if n_pad != n:
        x_nlc = jnp.pad(x_nlc, ((0, n_pad - n), (0, 0), (0, 0)))

    conv_out = conv_forward(x_nlc, kp["w1k"], kp["b1"], kp["w2t"], kp["b2"], kp["sel"],
                            block_b=bb)                          # (n_pad, 32, 128) bf16
    feats = conv_out.reshape(n_pad, FLAT_PAD)                    # free contiguous reshape

    probs = mlp_forward(feats, kp["wf1"], kp["bf1"], kp["wf2"], kp["bf2"],
                        kp["wh"], kp["bh"], block_m=mt)          # (n_pad, 12)

    feature_outputs = [probs[:n, 0:OUT_SIZES[0]], probs[:n, OUT_SIZES[0]:NHEAD_OUT]]
    neural_output = None          # neural_branch=False (module default)
    return feature_outputs, neural_output


if __name__ == "__main__":
    key = jax.random.PRNGKey(0)
    k_x, k_p = jax.random.split(key)

    N = 2
    # Module requires seq=128 so the flattened conv features match Linear(3968, ...).
    x = jax.random.normal(k_x, (SEQ_LEN, N, IN_CHANNELS), jnp.float32)
    params = init_params(k_p)
    kparams = prepare_params(params)            # one-time re-layout / bf16 cast

    fwd = jax.jit(cnn_module_branch_forward)
    feature_outputs, neural_output = fwd(x, kparams)
    for o in feature_outputs:
        jax.block_until_ready(o)
    print("KERNEL_OK")
</pallas_src>

<mosaic_0001>
module attributes {stable_mosaic.version = 11 : i64} {
  func.func @_conv_kernel(%arg0: i32, %arg1: memref<8x128x1xf32, #tpu.memory_space<vmem>>, %arg2: memref<3x64xf32, #tpu.memory_space<vmem>>, %arg3: memref<1x64xf32, #tpu.memory_space<vmem>>, %arg4: memref<3x64x64xbf16, #tpu.memory_space<vmem>>, %arg5: memref<1x64xf32, #tpu.memory_space<vmem>>, %arg6: memref<64x123xbf16, #tpu.memory_space<vmem>>, %arg7: memref<8x32x128xbf16, #tpu.memory_space<vmem>>) attributes {dimension_semantics = [#tpu.dimension_semantics<parallel>], iteration_bounds = array<i64: 1>, scalar_prefetch = 0 : i64, scratch_operands = 0 : i64, tpu.core_type = #tpu.core_type<tc>, window_params = [{transform_indices = @transform_0, window_bounds = array<i64: 8, 128, 1>}, {pipeline_mode = #tpu.pipeline_mode<synchronous>, transform_indices = @transform_1, window_bounds = array<i64: 3, 64>}, {pipeline_mode = #tpu.pipeline_mode<synchronous>, transform_indices = @transform_2, window_bounds = array<i64: 1, 64>}, {pipeline_mode = #tpu.pipeline_mode<synchronous>, transform_indices = @transform_3, window_bounds = array<i64: 3, 64, 64>}, {pipeline_mode = #tpu.pipeline_mode<synchronous>, transform_indices = @transform_4, window_bounds = array<i64: 1, 64>}, {pipeline_mode = #tpu.pipeline_mode<synchronous>, transform_indices = @transform_5, window_bounds = array<i64: 64, 123>}, {transform_indices = @transform_6, window_bounds = array<i64: 8, 32, 128>}]} {
    %c0 = arith.constant 0 : index
    %c0_0 = arith.constant 0 : index
    %c0_1 = arith.constant 0 : index
    %0 = vector.load %arg1[%c0, %c0_0, %c0_1] : memref<8x128x1xf32, #tpu.memory_space<vmem>>, vector<8x128x1xf32>
    %c0_2 = arith.constant 0 : index
    %c0_3 = arith.constant 0 : index
    %1 = vector.load %arg2[%c0_2, %c0_3] : memref<3x64xf32, #tpu.memory_space<vmem>>, vector<3x64xf32>
    %c0_4 = arith.constant 0 : index
    %c0_5 = arith.constant 0 : index
    %2 = vector.load %arg3[%c0_4, %c0_5] : memref<1x64xf32, #tpu.memory_space<vmem>>, vector<1x64xf32>
    %c0_6 = arith.constant 0 : index
    %c0_7 = arith.constant 0 : index
    %c0_8 = arith.constant 0 : index
    %3 = vector.load %arg4[%c0_6, %c0_7, %c0_8] : memref<3x64x64xbf16, #tpu.memory_space<vmem>>, vector<3x64x64xbf16>
    %c0_9 = arith.constant 0 : index
    %c0_10 = arith.constant 0 : index
    %4 = vector.load %arg5[%c0_9, %c0_10] : memref<1x64xf32, #tpu.memory_space<vmem>>, vector<1x64xf32>
    %cst = arith.constant 0.000000e+00 : f32
    %5 = vector.broadcast %cst : f32 to vector<8x2x1xf32>
    %6 = tpu.concatenate %0, %5 in 1 : vector<8x128x1xf32>, vector<8x2x1xf32> -> vector<8x130x1xf32>
    %7 = vector.extract_strided_slice %6 {offsets = [0, 0, 0], sizes = [8, 128, 1], strides = [1, 1, 1]} : vector<8x130x1xf32> to vector<8x128x1xf32>
    %8 = vector.extract_strided_slice %1 {offsets = [0, 0], sizes = [1, 64], strides = [1, 1]} : vector<3x64xf32> to vector<1x64xf32>
    %9 = vector.shape_cast %8 : vector<1x64xf32> to vector<1x1x64xf32>
    %10 = vector.broadcast %7 : vector<8x128x1xf32> to vector<8x128x64xf32>
    %11 = vector.broadcast %9 : vector<1x1x64xf32> to vector<8x128x64xf32>
    %12 = arith.mulf %10, %11 : vector<8x128x64xf32>
    %13 = vector.extract_strided_slice %6 {offsets = [0, 1, 0], sizes = [8, 128, 1], strides = [1, 1, 1]} : vector<8x130x1xf32> to vector<8x128x1xf32>
    %14 = vector.extract_strided_slice %1 {offsets = [1, 0], sizes = [1, 64], strides = [1, 1]} : vector<3x64xf32> to vector<1x64xf32>
    %15 = vector.shape_cast %14 : vector<1x64xf32> to vector<1x1x64xf32>
    %16 = vector.broadcast %13 : vector<8x128x1xf32> to vector<8x128x64xf32>
    %17 = vector.broadcast %15 : vector<1x1x64xf32> to vector<8x128x64xf32>
    %18 = arith.mulf %16, %17 : vector<8x128x64xf32>
    %19 = arith.addf %12, %18 : vector<8x128x64xf32>
    %20 = vector.extract_strided_slice %6 {offsets = [0, 2, 0], sizes = [8, 128, 1], strides = [1, 1, 1]} : vector<8x130x1xf32> to vector<8x128x1xf32>
    %21 = vector.extract_strided_slice %1 {offsets = [2, 0], sizes = [1, 64], strides = [1, 1]} : vector<3x64xf32> to vector<1x64xf32>
    %22 = vector.shape_cast %21 : vector<1x64xf32> to vector<1x1x64xf32>
    %23 = vector.broadcast %20 : vector<8x128x1xf32> to vector<8x128x64xf32>
    %24 = vector.broadcast %22 : vector<1x1x64xf32> to vector<8x128x64xf32>
    %25 = arith.mulf %23, %24 : vector<8x128x64xf32>
    %26 = arith.addf %19, %25 : vector<8x128x64xf32>
    %27 = vector.shape_cast %2 : vector<1x64xf32> to vector<1x1x64xf32>
    %28 = vector.broadcast %27 : vector<1x1x64xf32> to vector<8x128x64xf32>
    %29 = arith.addf %26, %28 : vector<8x128x64xf32>
    %cst_11 = arith.constant 0.000000e+00 : f32
    %30 = vector.broadcast %cst_11 : f32 to vector<8x128x64xf32>
    %31 = arith.maximumf %29, %30 : vector<8x128x64xf32>
    %32 = arith.truncf %31 : vector<8x128x64xf32> to vector<8x128x64xbf16>
    %33 = vector.shape_cast %32 : vector<8x128x64xbf16> to vector<1024x64xbf16>
    %34 = vector.extract_strided_slice %3 {offsets = [0, 0, 0], sizes = [1, 64, 64], strides = [1, 1, 1]} : vector<3x64x64xbf16> to vector<1x64x64xbf16>
    %35 = vector.shape_cast %34 : vector<1x64x64xbf16> to vector<64x64xbf16>
    %cst_12 = arith.constant dense<0.000000e+00> : vector<1024x64xf32>
    %36 = tpu.matmul %33, %35, %cst_12 {dimension_numbers = #tpu.dot_dimension_numbers<[1], [0], [0], [1], [0, 0, 1, 1], [], []>} : vector<1024x64xbf16>, vector<64x64xbf16>, vector<1024x64xf32> -> vector<1024x64xf32>
    %37 = vector.shape_cast %36 : vector<1024x64xf32> to vector<8x128x64xf32>
    %38 = vector.extract_strided_slice %3 {offsets = [1, 0, 0], sizes = [1, 64, 64], strides = [1, 1, 1]} : vector<3x64x64xbf16> to vector<1x64x64xbf16>
    %39 = vector.shape_cast %38 : vector<1x64x64xbf16> to vector<64x64xbf16>
    %cst_13 = arith.constant dense<0.000000e+00> : vector<1024x64xf32>
    %40 = tpu.matmul %33, %39, %cst_13 {dimension_numbers = #tpu.dot_dimension_numbers<[1], [0], [0], [1], [0, 0, 1, 1], [], []>} : vector<1024x64xbf16>, vector<64x64xbf16>, vector<1024x64xf32> -> vector<1024x64xf32>
    %41 = vector.shape_cast %40 : vector<1024x64xf32> to vector<8x128x64xf32>
    %42 = vector.extract_strided_slice %3 {offsets = [2, 0, 0], sizes = [1, 64, 64], strides = [1, 1, 1]} : vector<3x64x64xbf16> to vector<1x64x64xbf16>
    %43 = vector.shape_cast %42 : vector<1x64x64xbf16> to vector<64x64xbf16>
    %cst_14 = arith.constant dense<0.000000e+00> : vector<1024x64xf32>
    %44 = tpu.matmul %33, %43, %cst_14 {dimension_numbers = #tpu.dot_dimension_numbers<[1], [0], [0], [1], [0, 0, 1, 1], [], []>} : vector<1024x64xbf16>, vector<64x64xbf16>, vector<1024x64xf32> -> vector<1024x64xf32>
    %45 = vector.shape_cast %44 : vector<1024x64xf32> to vector<8x128x64xf32>
    %46 = vector.extract_strided_slice %37 {offsets = [0, 0, 0], sizes = [8, 124, 64], strides = [1, 1, 1]} : vector<8x128x64xf32> to vector<8x124x64xf32>
    %47 = vector.extract_strided_slice %41 {offsets = [0, 1, 0], sizes = [8, 124, 64], strides = [1, 1, 1]} : vector<8x128x64xf32> to vector<8x124x64xf32>
    %48 = arith.addf %46, %47 : vector<8x124x64xf32>
    %49 = vector.extract_strided_slice %45 {offsets = [0, 2, 0], sizes = [8, 124, 64], strides = [1, 1, 1]} : vector<8x128x64xf32> to vector<8x124x64xf32>
    %50 = arith.addf %48, %49 : vector<8x124x64xf32>
    %51 = vector.shape_cast %4 : vector<1x64xf32> to vector<1x1x64xf32>
    %52 = vector.broadcast %51 : vector<1x1x64xf32> to vector<8x124x64xf32>
    %53 = arith.addf %50, %52 : vector<8x124x64xf32>
    %cst_15 = arith.constant 0.000000e+00 : f32
    %54 = vector.broadcast %cst_15 : f32 to vector<8x124x64xf32>
    %55 = arith.maximumf %53, %54 : vector<8x124x64xf32>
    %56 = vector.extract_strided_slice %55 {offsets = [0, 0, 0], sizes = [8, 123, 64], strides = [1, 1, 1]} : vector<8x124x64xf32> to vector<8x123x64xf32>
    %57 = vector.extract_strided_slice %55 {offsets = [0, 1, 0], sizes = [8, 123, 64], strides = [1, 1, 1]} : vector<8x124x64xf32> to vector<8x123x64xf32>
    %58 = arith.maximumf %56, %57 : vector<8x123x64xf32>
    %59 = arith.truncf %58 : vector<8x123x64xf32> to vector<8x123x64xbf16>
    %c0_16 = arith.constant 0 : index
    %c0_17 = arith.constant 0 : index
    %60 = vector.load %arg6[%c0_16, %c0_17] : memref<64x123xbf16, #tpu.memory_space<vmem>>, vector<64x123xbf16>
    %61 = vector.shape_cast %60 : vector<64x123xbf16> to vector<1x64x123xbf16>
    %62 = vector.broadcast %61 : vector<1x64x123xbf16> to vector<8x64x123xbf16>
    "tpu.trace_start"() <{level = 10 : i32, message = "bql,blc->bqc"}> : () -> ()
    %cst_18 = arith.constant dense<0.000000e+00> : vector<8x64x64xf32>
    %63 = tpu.matmul %62, %59, %cst_18 {dimension_numbers = #tpu.dot_dimension_numbers<[2], [1], [1], [2], [0, 0, 0, 1, 1, 2], [0], [0]>} : vector<8x64x123xbf16>, vector<8x123x64xbf16>, vector<8x64x64xf32> -> vector<8x64x64xf32>
    "tpu.trace_stop"() : () -> ()
    %64 = vector.extract_strided_slice %63 {offsets = [0, 0, 0], sizes = [8, 32, 64], strides = [1, 1, 1]} : vector<8x64x64xf32> to vector<8x32x64xf32>
    %65 = vector.extract_strided_slice %63 {offsets = [0, 32, 0], sizes = [8, 32, 64], strides = [1, 1, 1]} : vector<8x64x64xf32> to vector<8x32x64xf32>
    %66 = tpu.concatenate %64, %65 in 2 : vector<8x32x64xf32>, vector<8x32x64xf32> -> vector<8x32x128xf32>
    %67 = arith.truncf %66 : vector<8x32x128xf32> to vector<8x32x128xbf16>
    %c0_19 = arith.constant 0 : index
    %c0_20 = arith.constant 0 : index
    %c0_21 = arith.constant 0 : index
    %68 = vector.load %arg7[%c0_19, %c0_20, %c0_21] : memref<8x32x128xbf16, #tpu.memory_space<vmem>>, vector<8x32x128xbf16>
    tpu.vector_store %arg7[%c0_19, %c0_20, %c0_21], %67 {strides = array<i32>} : memref<8x32x128xbf16, #tpu.memory_space<vmem>>, vector<8x32x128xbf16>,
    return
  }
  func.func @transform_0(%arg0: i32) -> (i32, i32, i32) {
    %c0_i32 = arith.constant 0 : i32
    %c0_i32_0 = arith.constant 0 : i32
    %c0_i32_1 = arith.constant 0 : i32
    return %arg0, %c0_i32, %c0_i32_0 : i32, i32, i32
  }
  func.func @transform_1(%arg0: i32) -> (i32, i32) {
    %c0_i32 = arith.constant 0 : i32
    %c0_i32_0 = arith.constant 0 : i32
    %c0_i32_1 = arith.constant 0 : i32
    return %c0_i32, %c0_i32_0 : i32, i32
  }
  func.func @transform_2(%arg0: i32) -> (i32, i32) {
    %c0_i32 = arith.constant 0 : i32
    %c0_i32_0 = arith.constant 0 : i32
    %c0_i32_1 = arith.constant 0 : i32
    return %c0_i32, %c0_i32_0 : i32, i32
  }
  func.func @transform_3(%arg0: i32) -> (i32, i32, i32) {
    %c0_i32 = arith.constant 0 : i32
    %c0_i32_0 = arith.constant 0 : i32
    %c0_i32_1 = arith.constant 0 : i32
    %c0_i32_2 = arith.constant 0 : i32
    return %c0_i32, %c0_i32_0, %c0_i32_1 : i32, i32, i32
  }
  func.func @transform_4(%arg0: i32) -> (i32, i32) {
    %c0_i32 = arith.constant 0 : i32
    %c0_i32_0 = arith.constant 0 : i32
    %c0_i32_1 = arith.constant 0 : i32
    return %c0_i32, %c0_i32_0 : i32, i32
  }
  func.func @transform_5(%arg0: i32) -> (i32, i32) {
    %c0_i32 = arith.constant 0 : i32
    %c0_i32_0 = arith.constant 0 : i32
    %c0_i32_1 = arith.constant 0 : i32
    return %c0_i32, %c0_i32_0 : i32, i32
  }
  func.func @transform_6(%arg0: i32) -> (i32, i32, i32) {
    %c0_i32 = arith.constant 0 : i32
    %c0_i32_0 = arith.constant 0 : i32
    %c0_i32_1 = arith.constant 0 : i32
    return %arg0, %c0_i32, %c0_i32_0 : i32, i32, i32
  }
}

module attributes {stable_mosaic.version = 11 : i64} {
  func.func @_mlp_kernel(%arg0: i32, %arg1: i32, %arg2: memref<8x1024xbf16, #tpu.memory_space<vmem>>, %arg3: memref<1024x1024xbf16, #tpu.memory_space<vmem>>, %arg4: memref<1x1024xf32, #tpu.memory_space<vmem>>, %arg5: memref<1024x128xbf16, #tpu.memory_space<vmem>>, %arg6: memref<1x128xf32, #tpu.memory_space<vmem>>, %arg7: memref<128x12xf32, #tpu.memory_space<vmem>>, %arg8: memref<1x12xf32, #tpu.memory_space<vmem>>, %arg9: memref<8x12xf32, #tpu.memory_space<vmem>>, %arg10: memref<8x1024xf32, #tpu.memory_space<vmem>>) attributes {dimension_semantics = [#tpu.dimension_semantics<parallel>, #tpu.dimension_semantics<arbitrary>], iteration_bounds = array<i64: 1, 4>, scalar_prefetch = 0 : i64, scratch_operands = 1 : i64, tpu.core_type = #tpu.core_type<tc>, window_params = [{transform_indices = @transform_0, window_bounds = array<i64: 8, 1024>}, {transform_indices = @transform_1, window_bounds = array<i64: 1024, 1024>}, {pipeline_mode = #tpu.pipeline_mode<synchronous>, transform_indices = @transform_2, window_bounds = array<i64: 1, 1024>}, {pipeline_mode = #tpu.pipeline_mode<synchronous>, transform_indices = @transform_3, window_bounds = array<i64: 1024, 128>}, {pipeline_mode = #tpu.pipeline_mode<synchronous>, transform_indices = @transform_4, window_bounds = array<i64: 1, 128>}, {pipeline_mode = #tpu.pipeline_mode<synchronous>, transform_indices = @transform_5, window_bounds = array<i64: 128, 12>}, {pipeline_mode = #tpu.pipeline_mode<synchronous>, transform_indices = @transform_6, window_bounds = array<i64: 1, 12>}, {transform_indices = @transform_7, window_bounds = array<i64: 8, 12>}]} {
    %c0_i32 = arith.constant 0 : i32
    %0 = arith.cmpi eq, %arg1, %c0_i32 : i32
    %1 = arith.extui %0 : i1 to i32
    %c0_i32_0 = arith.constant 0 : i32
    %2 = arith.cmpi ne, %1, %c0_i32_0 : i32
    scf.if %2 {
      %cst_9 = arith.constant 0.000000e+00 : f32
      %12 = vector.broadcast %cst_9 : f32 to vector<8x1024xf32>
      %c0_10 = arith.constant 0 : index
      %c0_11 = arith.constant 0 : index
      %13 = vector.load %arg10[%c0_10, %c0_11] : memref<8x1024xf32, #tpu.memory_space<vmem>>, vector<8x1024xf32>
      tpu.vector_store %arg10[%c0_10, %c0_11], %12 {strides = array<i32>} : memref<8x1024xf32, #tpu.memory_space<vmem>>, vector<8x1024xf32>,
    } else {
    }
    %c0 = arith.constant 0 : index
    %c0_1 = arith.constant 0 : index
    %3 = vector.load %arg10[%c0, %c0_1] : memref<8x1024xf32, #tpu.memory_space<vmem>>, vector<8x1024xf32>
    %c0_2 = arith.constant 0 : index
    %c0_3 = arith.constant 0 : index
    %4 = vector.load %arg2[%c0_2, %c0_3] : memref<8x1024xbf16, #tpu.memory_space<vmem>>, vector<8x1024xbf16>
    %c0_4 = arith.constant 0 : index
    %c0_5 = arith.constant 0 : index
    %5 = vector.load %arg3[%c0_4, %c0_5] : memref<1024x1024xbf16, #tpu.memory_space<vmem>>, vector<1024x1024xbf16>
    %cst = arith.constant dense<0.000000e+00> : vector<8x1024xf32>
    %6 = tpu.matmul %4, %5, %cst {dimension_numbers = #tpu.dot_dimension_numbers<[1], [0], [0], [1], [0, 0, 1, 1], [], []>} : vector<8x1024xbf16>, vector<1024x1024xbf16>, vector<8x1024xf32> -> vector<8x1024xf32>
    %7 = arith.addf %3, %6 : vector<8x1024xf32>
    %c0_6 = arith.constant 0 : index
    %c0_7 = arith.constant 0 : index
    %8 = vector.load %arg10[%c0_6, %c0_7] : memref<8x1024xf32, #tpu.memory_space<vmem>>, vector<8x1024xf32>
    tpu.vector_store %arg10[%c0_6, %c0_7], %7 {strides = array<i32>} : memref<8x1024xf32, #tpu.memory_space<vmem>>, vector<8x1024xf32>,
    %c3_i32 = arith.constant 3 : i32
    %9 = arith.cmpi eq, %arg1, %c3_i32 : i32
    %10 = arith.extui %9 : i1 to i32
    %c0_i32_8 = arith.constant 0 : i32
    %11 = arith.cmpi ne, %10, %c0_i32_8 : i32
    scf.if %11 {
      %c0_9 = arith.constant 0 : index
      %c0_10 = arith.constant 0 : index
      %12 = vector.load %arg10[%c0_9, %c0_10] : memref<8x1024xf32, #tpu.memory_space<vmem>>, vector<8x1024xf32>
      %c0_11 = arith.constant 0 : index
      %c0_12 = arith.constant 0 : index
      %13 = vector.load %arg4[%c0_11, %c0_12] : memref<1x1024xf32, #tpu.memory_space<vmem>>, vector<1x1024xf32>
      %14 = vector.broadcast %13 : vector<1x1024xf32> to vector<8x1024xf32>
      %15 = arith.addf %12, %14 : vector<8x1024xf32>
      %cst_13 = arith.constant 0.000000e+00 : f32
      %16 = vector.broadcast %cst_13 : f32 to vector<8x1024xf32>
      %17 = arith.maximumf %15, %16 : vector<8x1024xf32>
      %18 = arith.truncf %17 : vector<8x1024xf32> to vector<8x1024xbf16>
      %c0_14 = arith.constant 0 : index
      %c0_15 = arith.constant 0 : index
      %19 = vector.load %arg5[%c0_14, %c0_15] : memref<1024x128xbf16, #tpu.memory_space<vmem>>, vector<1024x128xbf16>
      %cst_16 = arith.constant dense<0.000000e+00> : vector<8x128xf32>
      %20 = tpu.matmul %18, %19, %cst_16 {dimension_numbers = #tpu.dot_dimension_numbers<[1], [0], [0], [1], [0, 0, 1, 1], [], []>} : vector<8x1024xbf16>, vector<1024x128xbf16>, vector<8x128xf32> -> vector<8x128xf32>
      %c0_17 = arith.constant 0 : index
      %c0_18 = arith.constant 0 : index
      %21 = vector.load %arg6[%c0_17, %c0_18] : memref<1x128xf32, #tpu.memory_space<vmem>>, vector<1x128xf32>
      %22 = vector.broadcast %21 : vector<1x128xf32> to vector<8x128xf32>
      %23 = arith.addf %20, %22 : vector<8x128xf32>
      %cst_19 = arith.constant 0.000000e+00 : f32
      %24 = vector.broadcast %cst_19 : f32 to vector<8x128xf32>
      %25 = arith.maximumf %23, %24 : vector<8x128xf32>
      %c0_20 = arith.constant 0 : index
      %c0_21 = arith.constant 0 : index
      %26 = vector.load %arg7[%c0_20, %c0_21] : memref<128x12xf32, #tpu.memory_space<vmem>>, vector<128x12xf32>
      %cst_22 = arith.constant dense<0.000000e+00> : vector<8x12xf32>
      %27 = tpu.matmul %25, %26, %cst_22 {dimension_numbers = #tpu.dot_dimension_numbers<[1], [0], [0], [1], [0, 0, 1, 1], [], []>} : vector<8x128xf32>, vector<128x12xf32>, vector<8x12xf32> -> vector<8x12xf32>
      %c0_23 = arith.constant 0 : index
      %c0_24 = arith.constant 0 : index
      %28 = vector.load %arg8[%c0_23, %c0_24] : memref<1x12xf32, #tpu.memory_space<vmem>>, vector<1x12xf32>
      %29 = vector.broadcast %28 : vector<1x12xf32> to vector<8x12xf32>
      %30 = arith.addf %27, %29 : vector<8x12xf32>
      %31 = vector.extract_strided_slice %30 {offsets = [0, 0], sizes = [8, 6], strides = [1, 1]} : vector<8x12xf32> to vector<8x6xf32>
      %cst_25 = arith.constant dense<0xFF800000> : vector<8xf32>
      %32 = vector.multi_reduction <maximumf>, %31, %cst_25 [1] : vector<8x6xf32> to vector<8xf32>
      %33 = vector.shape_cast %32 : vector<8xf32> to vector<8x1xf32>
      %34 = vector.broadcast %33 : vector<8x1xf32> to vector<8x6xf32>
      %35 = arith.subf %31, %34 : vector<8x6xf32>
      %36 = math.exp %35 : vector<8x6xf32>
      %cst_26 = arith.constant dense<0.000000e+00> : vector<8xf32>
      %37 = vector.multi_reduction <add>, %36, %cst_26 [1] : vector<8x6xf32> to vector<8xf32>
      %38 = vector.shape_cast %37 : vector<8xf32> to vector<8x1xf32>
      %39 = vector.broadcast %38 : vector<8x1xf32> to vector<8x6xf32>
      %40 = arith.divf %36, %39 : vector<8x6xf32>
      %41 = vector.extract_strided_slice %30 {offsets = [0, 6], sizes = [8, 6], strides = [1, 1]} : vector<8x12xf32> to vector<8x6xf32>
      %cst_27 = arith.constant dense<0xFF800000> : vector<8xf32>
      %42 = vector.multi_reduction <maximumf>, %41, %cst_27 [1] : vector<8x6xf32> to vector<8xf32>
      %43 = vector.shape_cast %42 : vector<8xf32> to vector<8x1xf32>
      %44 = vector.broadcast %43 : vector<8x1xf32> to vector<8x6xf32>
      %45 = arith.subf %41, %44 : vector<8x6xf32>
      %46 = math.exp %45 : vector<8x6xf32>
      %cst_28 = arith.constant dense<0.000000e+00> : vector<8xf32>
      %47 = vector.multi_reduction <add>, %46, %cst_28 [1] : vector<8x6xf32> to vector<8xf32>
      %48 = vector.shape_cast %47 : vector<8xf32> to vector<8x1xf32>
      %49 = vector.broadcast %48 : vector<8x1xf32> to vector<8x6xf32>
      %50 = arith.divf %46, %49 : vector<8x6xf32>
      %51 = tpu.concatenate %40, %50 in 1 : vector<8x6xf32>, vector<8x6xf32> -> vector<8x12xf32>
      %c0_29 = arith.constant 0 : index
      %c0_30 = arith.constant 0 : index
      %52 = vector.load %arg9[%c0_29, %c0_30] : memref<8x12xf32, #tpu.memory_space<vmem>>, vector<8x12xf32>
      tpu.vector_store %arg9[%c0_29, %c0_30], %51 {strides = array<i32>} : memref<8x12xf32, #tpu.memory_space<vmem>>, vector<8x12xf32>,
    } else {
    }
    return
  }
  func.func @transform_0(%arg0: i32, %arg1: i32) -> (i32, i32) {
    %c0_i32 = arith.constant 0 : i32
    return %arg0, %arg1 : i32, i32
  }
  func.func @transform_1(%arg0: i32, %arg1: i32) -> (i32, i32) {
    %c0_i32 = arith.constant 0 : i32
    %c0_i32_0 = arith.constant 0 : i32
    return %arg1, %c0_i32 : i32, i32
  }
  func.func @transform_2(%arg0: i32, %arg1: i32) -> (i32, i32) {
    %c0_i32 = arith.constant 0 : i32
    %c0_i32_0 = arith.constant 0 : i32
    %c0_i32_1 = arith.constant 0 : i32
    return %c0_i32, %c0_i32_0 : i32, i32
  }
  func.func @transform_3(%arg0: i32, %arg1: i32) -> (i32, i32) {
    %c0_i32 = arith.constant 0 : i32
    %c0_i32_0 = arith.constant 0 : i32
    %c0_i32_1 = arith.constant 0 : i32
    return %c0_i32, %c0_i32_0 : i32, i32
  }
  func.func @transform_4(%arg0: i32, %arg1: i32) -> (i32, i32) {
    %c0_i32 = arith.constant 0 : i32
    %c0_i32_0 = arith.constant 0 : i32
    %c0_i32_1 = arith.constant 0 : i32
    return %c0_i32, %c0_i32_0 : i32, i32
  }
  func.func @transform_5(%arg0: i32, %arg1: i32) -> (i32, i32) {
    %c0_i32 = arith.constant 0 : i32
    %c0_i32_0 = arith.constant 0 : i32
    %c0_i32_1 = arith.constant 0 : i32
    return %c0_i32, %c0_i32_0 : i32, i32
  }
  func.func @transform_6(%arg0: i32, %arg1: i32) -> (i32, i32) {
    %c0_i32 = arith.constant 0 : i32
    %c0_i32_0 = arith.constant 0 : i32
    %c0_i32_1 = arith.constant 0 : i32
    return %c0_i32, %c0_i32_0 : i32, i32
  }
  func.func @transform_7(%arg0: i32, %arg1: i32) -> (i32, i32) {
    %c0_i32 = arith.constant 0 : i32
    %c0_i32_0 = arith.constant 0 : i32
    return %arg0, %c0_i32 : i32, i32
  }
}

</mosaic_0001>

<llo_original>
// kernel: cnn_module_branch_forward.3
$region0: #{cnn_module_branch_forward.3}
  #allocation0 [shape = 'u32[]', space=smem, size = 0x4, offset = 0x4, fixed_abs, tag = 'smem constant byte address 0x4 - core index']
  #allocation1 [shape = 'u32[72,128]{1,0:T(1,128)}', space=vmem, size = 0x9000, scoped, tag = 'internal scratch']
  #allocation2 [shape = 'f32[8,1024]{1,0:T(8,128)}', space=vmem, size = 0x8000, scoped, tag = 'scratch operand']
  %s0 = inlined_call_operand.vmem [shape: bf16[8,4096], index: 0, kind: input, shape index: {}]
  %s1 = inlined_call_operand.hbm [shape: bf16[4096,1024], index: 1, kind: input, shape index: {}]
  %s2 = inlined_call_operand.hbm [shape: f32[1,1024], index: 2, kind: input, shape index: {}]
  %s3 = inlined_call_operand.hbm [shape: bf16[1024,128], index: 3, kind: input, shape index: {}]
  %s4 = inlined_call_operand.hbm [shape: f32[1,128], index: 4, kind: input, shape index: {}]
  %s5 = inlined_call_operand.vmem [shape: f32[128,12], index: 5, kind: input, shape index: {}]
  %s6 = inlined_call_operand.hbm [shape: f32[1,12], index: 6, kind: input, shape index: {}]
  %s7 = inlined_call_operand.vmem [shape: f32[8,12], index: 7, kind: output, shape index: {}]
  %s8 = sld [smem:[#allocation0]]
  $region89: #{cnn_module_branch_forward.3} parent=0
    _
  %s10 = ssub.s32 1, %s8
  %s11 = scalar_select 0, %s10, %s8
  $region1: #{cnn_module_branch_forward.3} parent=0
    #allocation3 [shape = 'u8[4194304]{0}', space=vmem, size = 0x400000, scoped, tag = 'input window, operand 1']
    #allocation4 [shape = 's32[2]{0}', space=sflag, size = 0x8, scoped, tag = 'scoped memory for cnn_module_branch_forward.3']
    #allocation5 [shape = 'u8[4096]{0}', space=vmem, size = 0x1000, scoped, tag = 'input window, operand 2, single buffered']
    #allocation6 [shape = 's32[1]{0}', space=sflag, size = 0x4, scoped, tag = 'scoped memory for cnn_module_branch_forward.3']
    #allocation7 [shape = 'u8[262144]{0}', space=vmem, size = 0x40000, scoped, tag = 'input window, operand 3, single buffered']
    #allocation8 [shape = 'u8[512]{0}', space=vmem, size = 0x400, scoped, tag = 'input window, operand 4, single buffered']
    #allocation9 [shape = 's32[1]{0}', space=sflag, size = 0x4, scoped, tag = 'scoped memory for cnn_module_branch_forward.3']
    #allocation10 [shape = 'u8[512]{0}', space=vmem, size = 0x400, scoped, tag = 'input window, operand 6, single buffered']
    %12 = vsyncpa [#allocation4], 0
    %s13 = scalar_lea.sflag [#allocation4], 1
    %14 = vsyncpa %s13, 0
    %15 = vsyncpa [#allocation6], 0
    %16 = vsyncpa [#allocation9], 0
    loop: start=0, step=1, limit=6
    $region2: #{cnn_module_branch_forward.3} parent=1 // loop_pre_header
      _
    $region3: #{cnn_module_branch_forward.3} parent=1 // loop_header
      %s18 = sphi 0, %s22
      %p19 = scmp.ge.s32.totalorder %s18, 6
      %s25 = sphi 0, %s37
      %s26 = sphi 0, %s33
      %s27 = sphi 0, %s25
      %s28 = sphi 0, %s26
      %s29 = sphi 0, %s27
      %s30 = sphi 0, %s28
      %s42 = sphi 0, %s44
      %s45 = sphi 0, %s42
      %s46 = sphi 0, %s45
      %s62 = sphi 0, %s46
      %s68 = sphi 0, %s70
      %s71 = sphi 0, %s68
      %s72 = sphi 0, %s71
      %s88 = sphi 0, %s72
      %s92 = sphi 0, %s92
      %s94 = sphi 0, %s92
      %s95 = sphi 0, %s94
      %s109 = sphi 0, %s95
      %s113 = sphi 0, %s113
      %s115 = sphi 0, %s113
      %s116 = sphi 0, %s115
      %s130 = sphi 0, %s116
      %s134 = sphi 0, %s134
      %s136 = sphi 0, %s134
      %s137 = sphi 0, %s136
      %s151 = sphi 0, %s137
      %s155 = sphi 0, %s155
      %s157 = sphi 0, %s155
      %s158 = sphi 0, %s157
      %s172 = sphi 0, %s158
      %s176 = sphi 0, %s176
      %s178 = sphi 0, %s176
      %s179 = sphi 0, %s178
      %s193 = sphi 0, %s179
      %s199 = sphi 0, %s201
      %s202 = sphi 0, %s199
      %s203 = sphi 0, %s202
      %s219 = sphi 0, %s203
    $region4: #{cnn_module_branch_forward.3} parent=1 // loop_header_branch
      %21 = sbr.rel (%p19) target = $region8
    $region5: #{cnn_module_branch_forward.3} parent=1 // loop_body
      %s23 = ssub.s32 %s18, 1
      %s24 = ssub.s32 %s18, 2
      %s31 = sadd.s32 1, %s26
      %p32 = scmp.ge.s32.totalorder %s31, 4
      %s33 = scalar_select %p32, 0, %s31
      %s34 = sadd.s32 1, %s25
      %s35 = scalar_select %p32, %s34, %s25
      %p36 = scmp.ge.s32.totalorder %s35, 1
      %s37 = scalar_select %p36, 0, %s35
      %s38 = ssub.s32 %s25, %s37
      %s39 = ssub.s32 %s26, %s33
      %s40 = sor.u32 %s38, %s39
      %p41 = scmp.eq.s32.totalorder %s40, 0
      %s43 = sadd.s32 %s42, 1
      %s44 = scalar_select %p41, %s42, %s43
      %p47 = pneg %p41
      %p48 = scmp.eq.s32.totalorder %s18, 3
      %p49 = por %p47, %p48
      %p50 = scmp.ne.s32.totalorder %s42, %s45
      %p51 = scmp.eq.s32.totalorder %s18, 0
      %p52 = por %p50, %p51
      %p53 = scmp.ne.s32.totalorder %s42, %s45
      %p54 = scmp.eq.s32.totalorder %s23, 3
      %p55 = por %p53, %p54
      %p56 = scmp.ne.s32.totalorder %s45, %s46
      %p57 = scmp.eq.s32.totalorder %s23, 0
      %p58 = por %p56, %p57
      %p59 = scmp.ne.s32.totalorder %s45, %s46
      %p60 = scmp.eq.s32.totalorder %s24, 3
      %p61 = por %p59, %p60
      %p63 = scmp.ne.s32.totalorder %s46, %s62
      %p64 = scmp.eq.s32.totalorder %s24, 0
      %p65 = por %p63, %p64
      %s66 = ssub.s32 %s26, %s33
      %p67 = scmp.eq.s32.totalorder %s66, 0
      %s69 = sadd.s32 %s68, 1
      %s70 = scalar_select %p67, %s68, %s69
      %p73 = pneg %p67
      %p74 = scmp.eq.s32.totalorder %s18, 3
      %p75 = por %p73, %p74
      %p76 = scmp.ne.s32.totalorder %s68, %s71
      %p77 = scmp.eq.s32.totalorder %s18, 0
      %p78 = por %p76, %p77
      %p79 = scmp.ne.s32.totalorder %s68, %s71
      %p80 = scmp.eq.s32.totalorder %s23, 3
      %p81 = por %p79, %p80
      %p82 = scmp.ne.s32.totalorder %s71, %s72
      %p83 = scmp.eq.s32.totalorder %s23, 0
      %p84 = por %p82, %p83
      %p85 = scmp.ne.s32.totalorder %s71, %s72
      %p86 = scmp.eq.s32.totalorder %s24, 3
      %p87 = por %p85, %p86
      %p89 = scmp.ne.s32.totalorder %s72, %s88
      %p90 = scmp.eq.s32.totalorder %s24, 0
      %p91 = por %p89, %p90
      %s93 = sadd.s32 %s92, 1
      %p96 = scmp.eq.s32.totalorder %s18, 3
      %p97 = scmp.ne.s32.totalorder %s92, %s94
      %p98 = scmp.eq.s32.totalorder %s18, 0
      %p99 = por %p97, %p98
      %p100 = scmp.ne.s32.totalorder %s92, %s94
      %p101 = scmp.eq.s32.totalorder %s23, 3
      %p102 = por %p100, %p101
      %p103 = scmp.ne.s32.totalorder %s94, %s95
      %p104 = scmp.eq.s32.totalorder %s23, 0
      %p105 = por %p103, %p104
      %p106 = scmp.ne.s32.totalorder %s94, %s95
      %p107 = scmp.eq.s32.totalorder %s24, 3
      %p108 = por %p106, %p107
      %p110 = scmp.ne.s32.totalorder %s95, %s109
      %p111 = scmp.eq.s32.totalorder %s24, 0
      %p112 = por %p110, %p111
      %s114 = sadd.s32 %s113, 1
      %p117 = scmp.eq.s32.totalorder %s18, 3
      %p118 = scmp.ne.s32.totalorder %s113, %s115
      %p119 = scmp.eq.s32.totalorder %s18, 0
      %p120 = por %p118, %p119
      %p121 = scmp.ne.s32.totalorder %s113, %s115
      %p122 = scmp.eq.s32.totalorder %s23, 3
      %p123 = por %p121, %p122
      %p124 = scmp.ne.s32.totalorder %s115, %s116
      %p125 = scmp.eq.s32.totalorder %s23, 0
      %p126 = por %p124, %p125
      %p127 = scmp.ne.s32.totalorder %s115, %s116
      %p128 = scmp.eq.s32.totalorder %s24, 3
      %p129 = por %p127, %p128
      %p131 = scmp.ne.s32.totalorder %s116, %s130
      %p132 = scmp.eq.s32.totalorder %s24, 0
      %p133 = por %p131, %p132
      %s135 = sadd.s32 %s134, 1
      %p138 = scmp.eq.s32.totalorder %s18, 3
      %p139 = scmp.ne.s32.totalorder %s134, %s136
      %p140 = scmp.eq.s32.totalorder %s18, 0
      %p141 = por %p139, %p140
      %p142 = scmp.ne.s32.totalorder %s134, %s136
      %p143 = scmp.eq.s32.totalorder %s23, 3
      %p144 = por %p142, %p143
      %p145 = scmp.ne.s32.totalorder %s136, %s137
      %p146 = scmp.eq.s32.totalorder %s23, 0
      %p147 = por %p145, %p146
      %p148 = scmp.ne.s32.totalorder %s136, %s137
      %p149 = scmp.eq.s32.totalorder %s24, 3
      %p150 = por %p148, %p149
      %p152 = scmp.ne.s32.totalorder %s137, %s151
      %p153 = scmp.eq.s32.totalorder %s24, 0
      %p154 = por %p152, %p153
      %s156 = sadd.s32 %s155, 1
      %p159 = scmp.eq.s32.totalorder %s18, 3
      %p160 = scmp.ne.s32.totalorder %s155, %s157
      %p161 = scmp.eq.s32.totalorder %s18, 0
      %p162 = por %p160, %p161
      %p163 = scmp.ne.s32.totalorder %s155, %s157
      %p164 = scmp.eq.s32.totalorder %s23, 3
      %p165 = por %p163, %p164
      %p166 = scmp.ne.s32.totalorder %s157, %s158
      %p167 = scmp.eq.s32.totalorder %s23, 0
      %p168 = por %p166, %p167
      %p169 = scmp.ne.s32.totalorder %s157, %s158
      %p170 = scmp.eq.s32.totalorder %s24, 3
      %p171 = por %p169, %p170
      %p173 = scmp.ne.s32.totalorder %s158, %s172
      %p174 = scmp.eq.s32.totalorder %s24, 0
      %p175 = por %p173, %p174
      %s177 = sadd.s32 %s176, 1
      %p180 = scmp.eq.s32.totalorder %s18, 3
      %p181 = scmp.ne.s32.totalorder %s176, %s178
      %p182 = scmp.eq.s32.totalorder %s18, 0
      %p183 = por %p181, %p182
      %p184 = scmp.ne.s32.totalorder %s176, %s178
      %p185 = scmp.eq.s32.totalorder %s23, 3
      %p186 = por %p184, %p185
      %p187 = scmp.ne.s32.totalorder %s178, %s179
      %p188 = scmp.eq.s32.totalorder %s23, 0
      %p189 = por %p187, %p188
      %p190 = scmp.ne.s32.totalorder %s178, %s179
      %p191 = scmp.eq.s32.totalorder %s24, 3
      %p192 = por %p190, %p191
      %p194 = scmp.ne.s32.totalorder %s179, %s193
      %p195 = scmp.eq.s32.totalorder %s24, 0
      %p196 = por %p194, %p195
      %s197 = ssub.s32 %s25, %s37
      %p198 = scmp.eq.s32.totalorder %s197, 0
      %s200 = sadd.s32 %s199, 1
      %s201 = scalar_select %p198, %s199, %s200
      %p204 = pneg %p198
      %p205 = scmp.eq.s32.totalorder %s18, 3
      %p206 = por %p204, %p205
      %p207 = scmp.ne.s32.totalorder %s199, %s202
      %p208 = scmp.eq.s32.totalorder %s18, 0
      %p209 = por %p207, %p208
      %p210 = scmp.ne.s32.totalorder %s199, %s202
      %p211 = scmp.eq.s32.totalorder %s23, 3
      %p212 = por %p210, %p211
      %p213 = scmp.ne.s32.totalorder %s202, %s203
      %p214 = scmp.eq.s32.totalorder %s23, 0
      %p215 = por %p213, %p214
      %p216 = scmp.ne.s32.totalorder %s202, %s203
      %p217 = scmp.eq.s32.totalorder %s24, 3
      %p218 = por %p216, %p217
      %p220 = scmp.ne.s32.totalorder %s203, %s219
      %p221 = scmp.eq.s32.totalorder %s24, 0
      %p222 = por %p220, %p221
      %p223 = scmp.le.s32.totalorder 1, %s18
      %p224 = scmp.lt.s32.totalorder %s18, 5
      %p225 = pnand %p223, %p224
      %p226 = pneg %p225
      // Predicated region
      $region9: #{cnn_module_branch_forward.3} parent=5 // pred_check
        _
      $region10: #{cnn_module_branch_forward.3} parent=5 // pred_check_branch
        %228 = sbr.rel (%p225) target = $region12
      $region11: #{cnn_module_branch_forward.3} parent=5 // pred_region
        %s229 = ssub.s32 %s18, 1
        // Predicated region
        $region13: #{cnn_module_branch_forward.3} parent=11 // pred_check
          %p230 = pneg %p105
        $region14: #{cnn_module_branch_forward.3} parent=11 // pred_check_branch
          %232 = sbr.rel (%p230) target = $region16
        $region15: #{cnn_module_branch_forward.3} parent=11 // pred_region
          %234 = vsyncadd [#allocation6], 0
          %s236 = sshll.u32 %s2, 4
          %s237 = int_to_ptr.hbm [resolvable:$true] %s236
          %s238 = sshll.u32 [#allocation5], 4
          %s239 = int_to_ptr.vmem [resolvable:$true] %s238
          %241 = dma.hbm_to_vmem [thread:$0]  %s237, 128, %s239, [#allocation6]
        $region16: #{cnn_module_branch_forward.3} parent=11 // pred_fallthru
          _
        // Predicated region
        $region17: #{cnn_module_branch_forward.3} parent=11 // pred_check
          %p242 = pneg %p126
        $region18: #{cnn_module_branch_forward.3} parent=11 // pred_check_branch
          %244 = sbr.rel (%p242) target = $region20
        $region19: #{cnn_module_branch_forward.3} parent=11 // pred_region
          %246 = vsyncadd [#allocation6], 0
          %s247 = sshll.u32 %s3, 4
          %s248 = int_to_ptr.hbm [resolvable:$true] %s247
          %s249 = sshll.u32 [#allocation7], 4
          %s250 = int_to_ptr.vmem [resolvable:$true] %s249
          %255 = dma.hbm_to_vmem [thread:$0]  %s248, 8192, %s250, [#allocation6], 64, 64, 4
        $region20: #{cnn_module_branch_forward.3} parent=11 // pred_fallthru
          _
        // Predicated region
        $region21: #{cnn_module_branch_forward.3} parent=11 // pred_check
          %p256 = pneg %p147
        $region22: #{cnn_module_branch_forward.3} parent=11 // pred_check_branch
          %258 = sbr.rel (%p256) target = $region24
        $region23: #{cnn_module_branch_forward.3} parent=11 // pred_region
          %260 = vsyncadd [#allocation9], 0
          %s262 = sshll.u32 %s4, 4
          %s263 = int_to_ptr.hbm [resolvable:$true] %s262
          %s264 = sshll.u32 [#allocation8], 4
          %s265 = int_to_ptr.vmem [resolvable:$true] %s264
          %267 = dma.hbm_to_vmem [thread:$0]  %s263, 16, %s265, [#allocation9]
        $region24: #{cnn_module_branch_forward.3} parent=11 // pred_fallthru
          _
        // Predicated region
        $region25: #{cnn_module_branch_forward.3} parent=11 // pred_check
          %p268 = pneg %p168
        $region26: #{cnn_module_branch_forward.3} parent=11 // pred_check_branch
          %270 = sbr.rel (%p268) target = $region28
        $region27: #{cnn_module_branch_forward.3} parent=11 // pred_region
          _
        $region28: #{cnn_module_branch_forward.3} parent=11 // pred_fallthru
          _
        // Predicated region
        $region29: #{cnn_module_branch_forward.3} parent=11 // pred_check
          %p271 = pneg %p189
        $region30: #{cnn_module_branch_forward.3} parent=11 // pred_check_branch
          %273 = sbr.rel (%p271) target = $region32
        $region31: #{cnn_module_branch_forward.3} parent=11 // pred_region
          %275 = vsyncadd [#allocation9], 0
          %s277 = sshll.u32 %s6, 4
          %s278 = int_to_ptr.hbm [resolvable:$true] %s277
          %s279 = sshll.u32 [#allocation10], 4
          %s280 = int_to_ptr.vmem [resolvable:$true] %s279
          %282 = dma.hbm_to_vmem [thread:$0]  %s278, 16, %s280, [#allocation9]
        $region32: #{cnn_module_branch_forward.3} parent=11 // pred_fallthru
          _
      $region12: #{cnn_module_branch_forward.3} parent=5 // pred_fallthru
        _
      %p283 = scmp.lt.s32.totalorder %s18, 4
      // Predicated region
      $region33: #{cnn_module_branch_forward.3} parent=5 // pred_check
        %p284 = pneg %p283
      $region34: #{cnn_module_branch_forward.3} parent=5 // pred_check_branch
        %286 = sbr.rel (%p284) target = $region36
      $region35: #{cnn_module_branch_forward.3} parent=5 // pred_region
        // Predicated region
        $region37: #{cnn_module_branch_forward.3} parent=35 // pred_check
          %p287 = pneg %p52
        $region38: #{cnn_module_branch_forward.3} parent=35 // pred_check_branch
          %289 = sbr.rel (%p287) target = $region40
        $region39: #{cnn_module_branch_forward.3} parent=35 // pred_region
          %s290 = smul.u32 8, %s26
          %p291 = scmp.lt.s32.totalorder %s25, 0
          %s292 = scalar_select %p291, %s25, 0
          %p293 = scmp.lt.s32.totalorder %s290, 31
          %s294 = scalar_select %p293, %s290, 31
          %s295 = smul.addr %s292, 32
          %s296 = sadd.s32 %s294, %s295
          %s297 = smul.addr %s296, 4
          %s298 = scalar_lea.vmem %s0, %s297
          %s299 = smul.u32 8, %s26
        $region40: #{cnn_module_branch_forward.3} parent=35 // pred_fallthru
          _
        // Predicated region
        $region41: #{cnn_module_branch_forward.3} parent=35 // pred_check
          %p300 = pneg %p78
        $region42: #{cnn_module_branch_forward.3} parent=35 // pred_check_branch
          %302 = sbr.rel (%p300) target = $region44
        $region43: #{cnn_module_branch_forward.3} parent=35 // pred_region
          %s303 = sand.u32 %s68, 1
          %s304 = scalar_lea.sflag [#allocation4], %s303
          %s305 = sand.u32 %s68, 1
          %s306 = smul.addr %s305, 4096
          %s307 = scalar_lea.vmem [#allocation3], %s306
          %s308 = smul.u32 128, %s26
          %310 = vsyncadd %s304, 0
          %s311 = smul.addr %s308, 8
          %s312 = smul.addr %s311, 4
          %s313 = scalar_lea.hbm %s1, %s312
          %s314 = sshll.u32 %s313, 4
          %s315 = int_to_ptr.hbm [resolvable:$true] %s314
          %s316 = sshll.u32 %s307, 4
          %s317 = int_to_ptr.vmem [resolvable:$true] %s316
          %322 = dma.hbm_to_vmem [thread:$0]  %s315, 65536, %s317, %s304, 512, 512, 32
        $region44: #{cnn_module_branch_forward.3} parent=35 // pred_fallthru
          _
      $region36: #{cnn_module_branch_forward.3} parent=5 // pred_fallthru
        _
      %p323 = scmp.le.s32.totalorder 1, %s18
      %p324 = scmp.lt.s32.totalorder %s18, 5
      %p325 = pnand %p323, %p324
      %p326 = pneg %p325
      // Predicated region
      $region45: #{cnn_module_branch_forward.3} parent=5 // pred_check
        _
      $region46: #{cnn_module_branch_forward.3} parent=5 // pred_check_branch
        %328 = sbr.rel (%p325) target = $region48
      $region47: #{cnn_module_branch_forward.3} parent=5 // pred_region
        %s329 = ssub.s32 %s18, 1
        %s330 = sand.u32 %s71, 1
        %s331 = scalar_lea.sflag [#allocation4], %s330
        %s332 = sand.u32 %s71, 1
        %s333 = smul.addr %s332, 4096
        %s334 = scalar_lea.vmem [#allocation3], %s333
        // Predicated region
        $region49: #{cnn_module_branch_forward.3} parent=47 // pred_check
          %p335 = pneg %p84
        $region50: #{cnn_module_branch_forward.3} parent=47 // pred_check_branch
          %337 = sbr.rel (%p335) target = $region52
        $region51: #{cnn_module_branch_forward.3} parent=47 // pred_region
          %339 = dma.done %s331, 65536
        $region52: #{cnn_module_branch_forward.3} parent=47 // pred_fallthru
          _
        // Predicated region
        $region53: #{cnn_module_branch_forward.3} parent=47 // pred_check
          %p340 = pneg %p105
        $region54: #{cnn_module_branch_forward.3} parent=47 // pred_check_branch
          %342 = sbr.rel (%p340) target = $region56
        $region55: #{cnn_module_branch_forward.3} parent=47 // pred_region
          %344 = dma.done [#allocation6], 128
        $region56: #{cnn_module_branch_forward.3} parent=47 // pred_fallthru
          _
        // Predicated region
        $region57: #{cnn_module_branch_forward.3} parent=47 // pred_check
          %p345 = pneg %p126
        $region58: #{cnn_module_branch_forward.3} parent=47 // pred_check_branch
          %347 = sbr.rel (%p345) target = $region60
        $region59: #{cnn_module_branch_forward.3} parent=47 // pred_region
          %349 = dma.done [#allocation6], 8192
        $region60: #{cnn_module_branch_forward.3} parent=47 // pred_fallthru
          _
        // Predicated region
        $region61: #{cnn_module_branch_forward.3} parent=47 // pred_check
          %p350 = pneg %p147
        $region62: #{cnn_module_branch_forward.3} parent=47 // pred_check_branch
          %352 = sbr.rel (%p350) target = $region64
        $region63: #{cnn_module_branch_forward.3} parent=47 // pred_region
          %354 = dma.done [#allocation9], 16
        $region64: #{cnn_module_branch_forward.3} parent=47 // pred_fallthru
          _
        // Predicated region
        $region65: #{cnn_module_branch_forward.3} parent=47 // pred_check
          %p355 = pneg %p189
        $region66: #{cnn_module_branch_forward.3} parent=47 // pred_check_branch
          %357 = sbr.rel (%p355) target = $region68
        $region67: #{cnn_module_branch_forward.3} parent=47 // pred_region
          %359 = dma.done [#allocation9], 16
        $region68: #{cnn_module_branch_forward.3} parent=47 // pred_fallthru
          _
        %s360 = smul.u32 8, %s28
        %p361 = scmp.lt.s32.totalorder %s27, 0
        %s362 = scalar_select %p361, %s27, 0
        %p363 = scmp.lt.s32.totalorder %s360, 31
        %s364 = scalar_select %p363, %s360, 31
        %s365 = smul.addr %s362, 32
        %s366 = sadd.s32 %s364, %s365
        %s367 = smul.addr %s366, 4
        %s368 = scalar_lea.vmem %s0, %s367
        %p369 = pneg %p58
        %p370 = pneg %p55
        %s371 = sand.u32 %s71, 1
        %s372 = scalar_lea.sflag [#allocation4], %s371
        %s373 = sand.u32 %s71, 1
        %s374 = smul.addr %s373, 4096
        %s375 = scalar_lea.vmem [#allocation3], %s374
        %p376 = pneg %p84
        %p377 = pneg %p81
        %p378 = pneg %p105
        %p379 = pneg %p102
        %p380 = pneg %p126
        %p381 = pneg %p123
        %p382 = pneg %p147
        %p383 = pneg %p144
        %p384 = pneg %p168
        %p385 = pneg %p165
        %p386 = pneg %p189
        %p387 = pneg %p186
        %p388 = pneg %p215
        %p389 = pneg %p212
        %p390 = scmp.lt.s32.totalorder %s27, 0
        %s391 = scalar_select %p390, %s27, 0
        %s392 = smul.addr %s391, 8
        %s393 = scalar_lea.vmem %s7, %s392
        %s394 = smul.u32 8, %s28
        %p395 = scmp.lt.s32.totalorder %s27, 0
        %s396 = scalar_select %p395, %s27, 0
        %p397 = scmp.lt.s32.totalorder %s394, 31
        %s398 = scalar_select %p397, %s394, 31
        %s399 = smul.addr %s396, 32
        %s400 = sadd.s32 %s398, %s399
        %s401 = smul.addr %s400, 4
        %s402 = scalar_lea.vmem %s0, %s401
        %s403 = smul.u32 8, %s28
        %s404 = smul.u32 128, %s28
        %p405 = scmp.lt.s32.totalorder %s27, 0
        %s406 = scalar_select %p405, %s27, 0
        %s407 = smul.addr %s406, 8
        %s408 = scalar_lea.vmem %s7, %s407
        %p409 = scmp.eq.s32.totalorder %s28, 0
        // Predicated region
        $region69: #{cnn_module_branch_forward.3} parent=47 // pred_check
          %p410 = pneg %p409
        $region70: #{cnn_module_branch_forward.3} parent=47 // pred_check_branch
          %412 = sbr.rel (%p410) target = $region72
        $region71: #{cnn_module_branch_forward.3} parent=47 // pred_region
          %413 = vst [vmem:[#allocation2] sm:$0xff] 0.0
          %414 = vst [vmem:[#allocation2 + $0x8] sm:$0xff] 0.0
          %415 = vst [vmem:[#allocation2 + $0x10] sm:$0xff] 0.0
          %416 = vst [vmem:[#allocation2 + $0x18] sm:$0xff] 0.0
          %417 = vst [vmem:[#allocation2 + $0x20] sm:$0xff] 0.0
          %418 = vst [vmem:[#allocation2 + $0x28] sm:$0xff] 0.0
          %419 = vst [vmem:[#allocation2 + $0x30] sm:$0xff] 0.0
          %420 = vst [vmem:[#allocation2 + $0x38] sm:$0xff] 0.0
        $region72: #{cnn_module_branch_forward.3} parent=47 // pred_fallthru
          _
        %v421 = vld [vmem:[#allocation2] sm:$0xff]
        %v422 = vld [vmem:[#allocation2 + $0x8] sm:$0xff]
        %v423 = vld [vmem:[#allocation2 + $0x10] sm:$0xff]
        %v424 = vld [vmem:[#allocation2 + $0x18] sm:$0xff]
        %v425 = vld [vmem:[#allocation2 + $0x20] sm:$0xff]
        %v426 = vld [vmem:[#allocation2 + $0x28] sm:$0xff]
        %v427 = vld [vmem:[#allocation2 + $0x30] sm:$0xff]
        %v428 = vld [vmem:[#allocation2 + $0x38] sm:$0xff]
        %v429 = vld [vmem:[%s402] sm:$0xff]
        %v430 = vld [vmem:[%s402 + $0x8] sm:$0xff]
        %v431 = vld [vmem:[%s402 + $0x10] sm:$0xff]
        %v432 = vld [vmem:[%s402 + $0x18] sm:$0xff]
        %v433 = vld [vmem:[%s334] sm:$0xff]
        %v434 = vld [vmem:[%s334 + $0x8] sm:$0xff]
        %v435 = vld [vmem:[%s334 + $0x10] sm:$0xff]
        %v436 = vld [vmem:[%s334 + $0x18] sm:$0xff]
        %v437 = vld [vmem:[%s334 + $0x20] sm:$0xff]
        %v438 = vld [vmem:[%s334 + $0x28] sm:$0xff]
        %v439 = vld [vmem:[%s334 + $0x30] sm:$0xff]
        %v440 = vld [vmem:[%s334 + $0x38] sm:$0xff]
        %v441 = vld [vmem:[%s334 + $0x40] sm:$0xff]
        %v442 = vld [vmem:[%s334 + $0x48] sm:$0xff]
        %v443 = vld [vmem:[%s334 + $0x50] sm:$0xff]
        %v444 = vld [vmem:[%s334 + $0x58] sm:$0xff]
        %v445 = vld [vmem:[%s334 + $0x60] sm:$0xff]
        %v446 = vld [vmem:[%s334 + $0x68] sm:$0xff]
        %v447 = vld [vmem:[%s334 + $0x70] sm:$0xff]
        %v448 = vld [vmem:[%s334 + $0x78] sm:$0xff]
        %v449 = vld [vmem:[%s334 + $0x80] sm:$0xff]
        %v450 = vld [vmem:[%s334 + $0x88] sm:$0xff]
        %v451 = vld [vmem:[%s334 + $0x90] sm:$0xff]
        %v452 = vld [vmem:[%s334 + $0x98] sm:$0xff]
        %v453 = vld [vmem:[%s334 + $0xa0] sm:$0xff]
        %v454 = vld [vmem:[%s334 + $0xa8] sm:$0xff]
        %v455 = vld [vmem:[%s334 + $0xb0] sm:$0xff]
        %v456 = vld [vmem:[%s334 + $0xb8] sm:$0xff]
        %v457 = vld [vmem:[%s334 + $0xc0] sm:$0xff]
        %v458 = vld [vmem:[%s334 + $0xc8] sm:$0xff]
        %v459 = vld [vmem:[%s334 + $0xd0] sm:$0xff]
        %v460 = vld [vmem:[%s334 + $0xd8] sm:$0xff]
        %v461 = vld [vmem:[%s334 + $0xe0] sm:$0xff]
        %v462 = vld [vmem:[%s334 + $0xe8] sm:$0xff]
        %v463 = vld [vmem:[%s334 + $0xf0] sm:$0xff]
        %v464 = vld [vmem:[%s334 + $0xf8] sm:$0xff]
        %v465 = vld [vmem:[%s334 + $0x100] sm:$0xff]
        %v466 = vld [vmem:[%s334 + $0x108] sm:$0xff]
        %v467 = vld [vmem:[%s334 + $0x110] sm:$0xff]
        %v468 = vld [vmem:[%s334 + $0x118] sm:$0xff]
        %v469 = vld [vmem:[%s334 + $0x120] sm:$0xff]
        %v470 = vld [vmem:[%s334 + $0x128] sm:$0xff]
        %v471 = vld [vmem:[%s334 + $0x130] sm:$0xff]
        %v472 = vld [vmem:[%s334 + $0x138] sm:$0xff]
        %v473 = vld [vmem:[%s334 + $0x140] sm:$0xff]
        %v474 = vld [vmem:[%s334 + $0x148] sm:$0xff]
        %v475 = vld [vmem:[%s334 + $0x150] sm:$0xff]
        %v476 = vld [vmem:[%s334 + $0x158] sm:$0xff]
        %v477 = vld [vmem:[%s334 + $0x160] sm:$0xff]
        %v478 = vld [vmem:[%s334 + $0x168] sm:$0xff]
        %v479 = vld [vmem:[%s334 + $0x170] sm:$0xff]
        %v480 = vld [vmem:[%s334 + $0x178] sm:$0xff]
        %v481 = vld [vmem:[%s334 + $0x180] sm:$0xff]
        %v482 = vld [vmem:[%s334 + $0x188] sm:$0xff]
        %v483 = vld [vmem:[%s334 + $0x190] sm:$0xff]
        %v484 = vld [vmem:[%s334 + $0x198] sm:$0xff]
        %v485 = vld [vmem:[%s334 + $0x1a0] sm:$0xff]
        %v486 = vld [vmem:[%s334 + $0x1a8] sm:$0xff]
        %v487 = vld [vmem:[%s334 + $0x1b0] sm:$0xff]
        %v488 = vld [vmem:[%s334 + $0x1b8] sm:$0xff]
        %v489 = vld [vmem:[%s334 + $0x1c0] sm:$0xff]
        %v490 = vld [vmem:[%s334 + $0x1c8] sm:$0xff]
        %v491 = vld [vmem:[%s334 + $0x1d0] sm:$0xff]
        %v492 = vld [vmem:[%s334 + $0x1d8] sm:$0xff]
        %v493 = vld [vmem:[%s334 + $0x1e0] sm:$0xff]
        %v494 = vld [vmem:[%s334 + $0x1e8] sm:$0xff]
        %v495 = vld [vmem:[%s334 + $0x1f0] sm:$0xff]
        %v496 = vld [vmem:[%s334 + $0x1f8] sm:$0xff]
        %v497 = vld [vmem:[%s334 + $0x200] sm:$0xff]
        %v498 = vld [vmem:[%s334 + $0x208] sm:$0xff]
        %v499 = vld [vmem:[%s334 + $0x210] sm:$0xff]
        %v500 = vld [vmem:[%s334 + $0x218] sm:$0xff]
        %v501 = vld [vmem:[%s334 + $0x220] sm:$0xff]
        %v502 = vld [vmem:[%s334 + $0x228] sm:$0xff]
        %v503 = vld [vmem:[%s334 + $0x230] sm:$0xff]
        %v504 = vld [vmem:[%s334 + $0x238] sm:$0xff]
        %v505 = vld [vmem:[%s334 + $0x240] sm:$0xff]
        %v506 = vld [vmem:[%s334 + $0x248] sm:$0xff]
        %v507 = vld [vmem:[%s334 + $0x250] sm:$0xff]
        %v508 = vld [vmem:[%s334 + $0x258] sm:$0xff]
        %v509 = vld [vmem:[%s334 + $0x260] sm:$0xff]
        %v510 = vld [vmem:[%s334 + $0x268] sm:$0xff]
        %v511 = vld [vmem:[%s334 + $0x270] sm:$0xff]
        %v512 = vld [vmem:[%s334 + $0x278] sm:$0xff]
        %v513 = vld [vmem:[%s334 + $0x280] sm:$0xff]
        %v514 = vld [vmem:[%s334 + $0x288] sm:$0xff]
        %v515 = vld [vmem:[%s334 + $0x290] sm:$0xff]
        %v516 = vld [vmem:[%s334 + $0x298] sm:$0xff]
        %v517 = vld [vmem:[%s334 + $0x2a0] sm:$0xff]
        %v518 = vld [vmem:[%s334 + $0x2a8] sm:$0xff]
        %v519 = vld [vmem:[%s334 + $0x2b0] sm:$0xff]
        %v520 = vld [vmem:[%s334 + $0x2b8] sm:$0xff]
        %v521 = vld [vmem:[%s334 + $0x2c0] sm:$0xff]
        %v522 = vld [vmem:[%s334 + $0x2c8] sm:$0xff]
        %v523 = vld [vmem:[%s334 + $0x2d0] sm:$0xff]
        %v524 = vld [vmem:[%s334 + $0x2d8] sm:$0xff]
        %v525 = vld [vmem:[%s334 + $0x2e0] sm:$0xff]
        %v526 = vld [vmem:[%s334 + $0x2e8] sm:$0xff]
        %v527 = vld [vmem:[%s334 + $0x2f0] sm:$0xff]
        %v528 = vld [vmem:[%s334 + $0x2f8] sm:$0xff]
        %v529 = vld [vmem:[%s334 + $0x300] sm:$0xff]
        %v530 = vld [vmem:[%s334 + $0x308] sm:$0xff]
        %v531 = vld [vmem:[%s334 + $0x310] sm:$0xff]
        %v532 = vld [vmem:[%s334 + $0x318] sm:$0xff]
        %v533 = vld [vmem:[%s334 + $0x320] sm:$0xff]
        %v534 = vld [vmem:[%s334 + $0x328] sm:$0xff]
        %v535 = vld [vmem:[%s334 + $0x330] sm:$0xff]
        %v536 = vld [vmem:[%s334 + $0x338] sm:$0xff]
        %v537 = vld [vmem:[%s334 + $0x340] sm:$0xff]
        %v538 = vld [vmem:[%s334 + $0x348] sm:$0xff]
        %v539 = vld [vmem:[%s334 + $0x350] sm:$0xff]
        %v540 = vld [vmem:[%s334 + $0x358] sm:$0xff]
        %v541 = vld [vmem:[%s334 + $0x360] sm:$0xff]
        %v542 = vld [vmem:[%s334 + $0x368] sm:$0xff]
        %v543 = vld [vmem:[%s334 + $0x370] sm:$0xff]
        %v544 = vld [vmem:[%s334 + $0x378] sm:$0xff]
        %v545 = vld [vmem:[%s334 + $0x380] sm:$0xff]
        %v546 = vld [vmem:[%s334 + $0x388] sm:$0xff]
        %v547 = vld [vmem:[%s334 + $0x390] sm:$0xff]
        %v548 = vld [vmem:[%s334 + $0x398] sm:$0xff]
        %v549 = vld [vmem:[%s334 + $0x3a0] sm:$0xff]
        %v550 = vld [vmem:[%s334 + $0x3a8] sm:$0xff]
        %v551 = vld [vmem:[%s334 + $0x3b0] sm:$0xff]
        %v552 = vld [vmem:[%s334 + $0x3b8] sm:$0xff]
        %v553 = vld [vmem:[%s334 + $0x3c0] sm:$0xff]
        %v554 = vld [vmem:[%s334 + $0x3c8] sm:$0xff]
        %v555 = vld [vmem:[%s334 + $0x3d0] sm:$0xff]
        %v556 = vld [vmem:[%s334 + $0x3d8] sm:$0xff]
        %v557 = vld [vmem:[%s334 + $0x3e0] sm:$0xff]
        %v558 = vld [vmem:[%s334 + $0x3e8] sm:$0xff]
        %v559 = vld [vmem:[%s334 + $0x3f0] sm:$0xff]
        %v560 = vld [vmem:[%s334 + $0x3f8] sm:$0xff]
        %v561 = vld [vmem:[%s334 + $0x400] sm:$0xff]
        %v562 = vld [vmem:[%s334 + $0x408] sm:$0xff]
        %v563 = vld [vmem:[%s334 + $0x410] sm:$0xff]
        %v564 = vld [vmem:[%s334 + $0x418] sm:$0xff]
        %v565 = vld [vmem:[%s334 + $0x420] sm:$0xff]
        %v566 = vld [vmem:[%s334 + $0x428] sm:$0xff]
        %v567 = vld [vmem:[%s334 + $0x430] sm:$0xff]
        %v568 = vld [vmem:[%s334 + $0x438] sm:$0xff]
        %v569 = vld [vmem:[%s334 + $0x440] sm:$0xff]
        %v570 = vld [vmem:[%s334 + $0x448] sm:$0xff]
        %v571 = vld [vmem:[%s334 + $0x450] sm:$0xff]
        %v572 = vld [vmem:[%s334 + $0x458] sm:$0xff]
        %v573 = vld [vmem:[%s334 + $0x460] sm:$0xff]
        %v574 = vld [vmem:[%s334 + $0x468] sm:$0xff]
        %v575 = vld [vmem:[%s334 + $0x470] sm:$0xff]
        %v576 = vld [vmem:[%s334 + $0x478] sm:$0xff]
        %v577 = vld [vmem:[%s334 + $0x480] sm:$0xff]
        %v578 = vld [vmem:[%s334 + $0x488] sm:$0xff]
        %v579 = vld [vmem:[%s334 + $0x490] sm:$0xff]
        %v580 = vld [vmem:[%s334 + $0x498] sm:$0xff]
        %v581 = vld [vmem:[%s334 + $0x4a0] sm:$0xff]
        %v582 = vld [vmem:[%s334 + $0x4a8] sm:$0xff]
        %v583 = vld [vmem:[%s334 + $0x4b0] sm:$0xff]
        %v584 = vld [vmem:[%s334 + $0x4b8] sm:$0xff]
        %v585 = vld [vmem:[%s334 + $0x4c0] sm:$0xff]
        %v586 = vld [vmem:[%s334 + $0x4c8] sm:$0xff]
        %v587 = vld [vmem:[%s334 + $0x4d0] sm:$0xff]
        %v588 = vld [vmem:[%s334 + $0x4d8] sm:$0xff]
        %v589 = vld [vmem:[%s334 + $0x4e0] sm:$0xff]
        %v590 = vld [vmem:[%s334 + $0x4e8] sm:$0xff]
        %v591 = vld [vmem:[%s334 + $0x4f0] sm:$0xff]
        %v592 = vld [vmem:[%s334 + $0x4f8] sm:$0xff]
        %v593 = vld [vmem:[%s334 + $0x500] sm:$0xff]
        %v594 = vld [vmem:[%s334 + $0x508] sm:$0xff]
        %v595 = vld [vmem:[%s334 + $0x510] sm:$0xff]
        %v596 = vld [vmem:[%s334 + $0x518] sm:$0xff]
        %v597 = vld [vmem:[%s334 + $0x520] sm:$0xff]
        %v598 = vld [vmem:[%s334 + $0x528] sm:$0xff]
        %v599 = vld [vmem:[%s334 + $0x530] sm:$0xff]
        %v600 = vld [vmem:[%s334 + $0x538] sm:$0xff]
        %v601 = vld [vmem:[%s334 + $0x540] sm:$0xff]
        %v602 = vld [vmem:[%s334 + $0x548] sm:$0xff]
        %v603 = vld [vmem:[%s334 + $0x550] sm:$0xff]
        %v604 = vld [vmem:[%s334 + $0x558] sm:$0xff]
        %v605 = vld [vmem:[%s334 + $0x560] sm:$0xff]
        %v606 = vld [vmem:[%s334 + $0x568] sm:$0xff]
        %v607 = vld [vmem:[%s334 + $0x570] sm:$0xff]
        %v608 = vld [vmem:[%s334 + $0x578] sm:$0xff]
        %v609 = vld [vmem:[%s334 + $0x580] sm:$0xff]
        %v610 = vld [vmem:[%s334 + $0x588] sm:$0xff]
        %v611 = vld [vmem:[%s334 + $0x590] sm:$0xff]
        %v612 = vld [vmem:[%s334 + $0x598] sm:$0xff]
        %v613 = vld [vmem:[%s334 + $0x5a0] sm:$0xff]
        %v614 = vld [vmem:[%s334 + $0x5a8] sm:$0xff]
        %v615 = vld [vmem:[%s334 + $0x5b0] sm:$0xff]
        %v616 = vld [vmem:[%s334 + $0x5b8] sm:$0xff]
        %v617 = vld [vmem:[%s334 + $0x5c0] sm:$0xff]
        %v618 = vld [vmem:[%s334 + $0x5c8] sm:$0xff]
        %v619 = vld [vmem:[%s334 + $0x5d0] sm:$0xff]
        %v620 = vld [vmem:[%s334 + $0x5d8] sm:$0xff]
        %v621 = vld [vmem:[%s334 + $0x5e0] sm:$0xff]
        %v622 = vld [vmem:[%s334 + $0x5e8] sm:$0xff]
        %v623 = vld [vmem:[%s334 + $0x5f0] sm:$0xff]
        %v624 = vld [vmem:[%s334 + $0x5f8] sm:$0xff]
        %v625 = vld [vmem:[%s334 + $0x600] sm:$0xff]
        %v626 = vld [vmem:[%s334 + $0x608] sm:$0xff]
        %v627 = vld [vmem:[%s334 + $0x610] sm:$0xff]
        %v628 = vld [vmem:[%s334 + $0x618] sm:$0xff]
        %v629 = vld [vmem:[%s334 + $0x620] sm:$0xff]
        %v630 = vld [vmem:[%s334 + $0x628] sm:$0xff]
        %v631 = vld [vmem:[%s334 + $0x630] sm:$0xff]
        %v632 = vld [vmem:[%s334 + $0x638] sm:$0xff]
        %v633 = vld [vmem:[%s334 + $0x640] sm:$0xff]
        %v634 = vld [vmem:[%s334 + $0x648] sm:$0xff]
        %v635 = vld [vmem:[%s334 + $0x650] sm:$0xff]
        %v636 = vld [vmem:[%s334 + $0x658] sm:$0xff]
        %v637 = vld [vmem:[%s334 + $0x660] sm:$0xff]
        %v638 = vld [vmem:[%s334 + $0x668] sm:$0xff]
        %v639 = vld [vmem:[%s334 + $0x670] sm:$0xff]
        %v640 = vld [vmem:[%s334 + $0x678] sm:$0xff]
        %v641 = vld [vmem:[%s334 + $0x680] sm:$0xff]
        %v642 = vld [vmem:[%s334 + $0x688] sm:$0xff]
        %v643 = vld [vmem:[%s334 + $0x690] sm:$0xff]
        %v644 = vld [vmem:[%s334 + $0x698] sm:$0xff]
        %v645 = vld [vmem:[%s334 + $0x6a0] sm:$0xff]
        %v646 = vld [vmem:[%s334 + $0x6a8] sm:$0xff]
        %v647 = vld [vmem:[%s334 + $0x6b0] sm:$0xff]
        %v648 = vld [vmem:[%s334 + $0x6b8] sm:$0xff]
        %v649 = vld [vmem:[%s334 + $0x6c0] sm:$0xff]
        %v650 = vld [vmem:[%s334 + $0x6c8] sm:$0xff]
        %v651 = vld [vmem:[%s334 + $0x6d0] sm:$0xff]
        %v652 = vld [vmem:[%s334 + $0x6d8] sm:$0xff]
        %v653 = vld [vmem:[%s334 + $0x6e0] sm:$0xff]
        %v654 = vld [vmem:[%s334 + $0x6e8] sm:$0xff]
        %v655 = vld [vmem:[%s334 + $0x6f0] sm:$0xff]
        %v656 = vld [vmem:[%s334 + $0x6f8] sm:$0xff]
        %v657 = vld [vmem:[%s334 + $0x700] sm:$0xff]
        %v658 = vld [vmem:[%s334 + $0x708] sm:$0xff]
        %v659 = vld [vmem:[%s334 + $0x710] sm:$0xff]
        %v660 = vld [vmem:[%s334 + $0x718] sm:$0xff]
        %v661 = vld [vmem:[%s334 + $0x720] sm:$0xff]
        %v662 = vld [vmem:[%s334 + $0x728] sm:$0xff]
        %v663 = vld [vmem:[%s334 + $0x730] sm:$0xff]
        %v664 = vld [vmem:[%s334 + $0x738] sm:$0xff]
        %v665 = vld [vmem:[%s334 + $0x740] sm:$0xff]
        %v666 = vld [vmem:[%s334 + $0x748] sm:$0xff]
        %v667 = vld [vmem:[%s334 + $0x750] sm:$0xff]
        %v668 = vld [vmem:[%s334 + $0x758] sm:$0xff]
        %v669 = vld [vmem:[%s334 + $0x760] sm:$0xff]
        %v670 = vld [vmem:[%s334 + $0x768] sm:$0xff]
        %v671 = vld [vmem:[%s334 + $0x770] sm:$0xff]
        %v672 = vld [vmem:[%s334 + $0x778] sm:$0xff]
        %v673 = vld [vmem:[%s334 + $0x780] sm:$0xff]
        %v674 = vld [vmem:[%s334 + $0x788] sm:$0xff]
        %v675 = vld [vmem:[%s334 + $0x790] sm:$0xff]
        %v676 = vld [vmem:[%s334 + $0x798] sm:$0xff]
        %v677 = vld [vmem:[%s334 + $0x7a0] sm:$0xff]
        %v678 = vld [vmem:[%s334 + $0x7a8] sm:$0xff]
        %v679 = vld [vmem:[%s334 + $0x7b0] sm:$0xff]
        %v680 = vld [vmem:[%s334 + $0x7b8] sm:$0xff]
        %v681 = vld [vmem:[%s334 + $0x7c0] sm:$0xff]
        %v682 = vld [vmem:[%s334 + $0x7c8] sm:$0xff]
        %v683 = vld [vmem:[%s334 + $0x7d0] sm:$0xff]
        %v684 = vld [vmem:[%s334 + $0x7d8] sm:$0xff]
        %v685 = vld [vmem:[%s334 + $0x7e0] sm:$0xff]
        %v686 = vld [vmem:[%s334 + $0x7e8] sm:$0xff]
        %v687 = vld [vmem:[%s334 + $0x7f0] sm:$0xff]
        %v688 = vld [vmem:[%s334 + $0x7f8] sm:$0xff]
        %v689 = vld [vmem:[%s334 + $0x800] sm:$0xff]
        %v690 = vld [vmem:[%s334 + $0x808] sm:$0xff]
        %v691 = vld [vmem:[%s334 + $0x810] sm:$0xff]
        %v692 = vld [vmem:[%s334 + $0x818] sm:$0xff]
        %v693 = vld [vmem:[%s334 + $0x820] sm:$0xff]
        %v694 = vld [vmem:[%s334 + $0x828] sm:$0xff]
        %v695 = vld [vmem:[%s334 + $0x830] sm:$0xff]
        %v696 = vld [vmem:[%s334 + $0x838] sm:$0xff]
        %v697 = vld [vmem:[%s334 + $0x840] sm:$0xff]
        %v698 = vld [vmem:[%s334 + $0x848] sm:$0xff]
        %v699 = vld [vmem:[%s334 + $0x850] sm:$0xff]
        %v700 = vld [vmem:[%s334 + $0x858] sm:$0xff]
        %v701 = vld [vmem:[%s334 + $0x860] sm:$0xff]
        %v702 = vld [vmem:[%s334 + $0x868] sm:$0xff]
        %v703 = vld [vmem:[%s334 + $0x870] sm:$0xff]
        %v704 = vld [vmem:[%s334 + $0x878] sm:$0xff]
        %v705 = vld [vmem:[%s334 + $0x880] sm:$0xff]
        %v706 = vld [vmem:[%s334 + $0x888] sm:$0xff]
        %v707 = vld [vmem:[%s334 + $0x890] sm:$0xff]
        %v708 = vld [vmem:[%s334 + $0x898] sm:$0xff]
        %v709 = vld [vmem:[%s334 + $0x8a0] sm:$0xff]
        %v710 = vld [vmem:[%s334 + $0x8a8] sm:$0xff]
        %v711 = vld [vmem:[%s334 + $0x8b0] sm:$0xff]
        %v712 = vld [vmem:[%s334 + $0x8b8] sm:$0xff]
        %v713 = vld [vmem:[%s334 + $0x8c0] sm:$0xff]
        %v714 = vld [vmem:[%s334 + $0x8c8] sm:$0xff]
        %v715 = vld [vmem:[%s334 + $0x8d0] sm:$0xff]
        %v716 = vld [vmem:[%s334 + $0x8d8] sm:$0xff]
        %v717 = vld [vmem:[%s334 + $0x8e0] sm:$0xff]
        %v718 = vld [vmem:[%s334 + $0x8e8] sm:$0xff]
        %v719 = vld [vmem:[%s334 + $0x8f0] sm:$0xff]
        %v720 = vld [vmem:[%s334 + $0x8f8] sm:$0xff]
        %v721 = vld [vmem:[%s334 + $0x900] sm:$0xff]
        %v722 = vld [vmem:[%s334 + $0x908] sm:$0xff]
        %v723 = vld [vmem:[%s334 + $0x910] sm:$0xff]
        %v724 = vld [vmem:[%s334 + $0x918] sm:$0xff]
        %v725 = vld [vmem:[%s334 + $0x920] sm:$0xff]
        %v726 = vld [vmem:[%s334 + $0x928] sm:$0xff]
        %v727 = vld [vmem:[%s334 + $0x930] sm:$0xff]
        %v728 = vld [vmem:[%s334 + $0x938] sm:$0xff]
        %v729 = vld [vmem:[%s334 + $0x940] sm:$0xff]
        %v730 = vld [vmem:[%s334 + $0x948] sm:$0xff]
        %v731 = vld [vmem:[%s334 + $0x950] sm:$0xff]
        %v732 = vld [vmem:[%s334 + $0x958] sm:$0xff]
        %v733 = vld [vmem:[%s334 + $0x960] sm:$0xff]
        %v734 = vld [vmem:[%s334 + $0x968] sm:$0xff]
        %v735 = vld [vmem:[%s334 + $0x970] sm:$0xff]
        %v736 = vld [vmem:[%s334 + $0x978] sm:$0xff]
        %v737 = vld [vmem:[%s334 + $0x980] sm:$0xff]
        %v738 = vld [vmem:[%s334 + $0x988] sm:$0xff]
        %v739 = vld [vmem:[%s334 + $0x990] sm:$0xff]
        %v740 = vld [vmem:[%s334 + $0x998] sm:$0xff]
        %v741 = vld [vmem:[%s334 + $0x9a0] sm:$0xff]
        %v742 = vld [vmem:[%s334 + $0x9a8] sm:$0xff]
        %v743 = vld [vmem:[%s334 + $0x9b0] sm:$0xff]
        %v744 = vld [vmem:[%s334 + $0x9b8] sm:$0xff]
        %v745 = vld [vmem:[%s334 + $0x9c0] sm:$0xff]
        %v746 = vld [vmem:[%s334 + $0x9c8] sm:$0xff]
        %v747 = vld [vmem:[%s334 + $0x9d0] sm:$0xff]
        %v748 = vld [vmem:[%s334 + $0x9d8] sm:$0xff]
        %v749 = vld [vmem:[%s334 + $0x9e0] sm:$0xff]
        %v750 = vld [vmem:[%s334 + $0x9e8] sm:$0xff]
        %v751 = vld [vmem:[%s334 + $0x9f0] sm:$0xff]
        %v752 = vld [vmem:[%s334 + $0x9f8] sm:$0xff]
        %v753 = vld [vmem:[%s334 + $0xa00] sm:$0xff]
        %v754 = vld [vmem:[%s334 + $0xa08] sm:$0xff]
        %v755 = vld [vmem:[%s334 + $0xa10] sm:$0xff]
        %v756 = vld [vmem:[%s334 + $0xa18] sm:$0xff]
        %v757 = vld [vmem:[%s334 + $0xa20] sm:$0xff]
        %v758 = vld [vmem:[%s334 + $0xa28] sm:$0xff]
        %v759 = vld [vmem:[%s334 + $0xa30] sm:$0xff]
        %v760 = vld [vmem:[%s334 + $0xa38] sm:$0xff]
        %v761 = vld [vmem:[%s334 + $0xa40] sm:$0xff]
        %v762 = vld [vmem:[%s334 + $0xa48] sm:$0xff]
        %v763 = vld [vmem:[%s334 + $0xa50] sm:$0xff]
        %v764 = vld [vmem:[%s334 + $0xa58] sm:$0xff]
        %v765 = vld [vmem:[%s334 + $0xa60] sm:$0xff]
        %v766 = vld [vmem:[%s334 + $0xa68] sm:$0xff]
        %v767 = vld [vmem:[%s334 + $0xa70] sm:$0xff]
        %v768 = vld [vmem:[%s334 + $0xa78] sm:$0xff]
        %v769 = vld [vmem:[%s334 + $0xa80] sm:$0xff]
        %v770 = vld [vmem:[%s334 + $0xa88] sm:$0xff]
        %v771 = vld [vmem:[%s334 + $0xa90] sm:$0xff]
        %v772 = vld [vmem:[%s334 + $0xa98] sm:$0xff]
        %v773 = vld [vmem:[%s334 + $0xaa0] sm:$0xff]
        %v774 = vld [vmem:[%s334 + $0xaa8] sm:$0xff]
        %v775 = vld [vmem:[%s334 + $0xab0] sm:$0xff]
        %v776 = vld [vmem:[%s334 + $0xab8] sm:$0xff]
        %v777 = vld [vmem:[%s334 + $0xac0] sm:$0xff]
        %v778 = vld [vmem:[%s334 + $0xac8] sm:$0xff]
        %v779 = vld [vmem:[%s334 + $0xad0] sm:$0xff]
        %v780 = vld [vmem:[%s334 + $0xad8] sm:$0xff]
        %v781 = vld [vmem:[%s334 + $0xae0] sm:$0xff]
        %v782 = vld [vmem:[%s334 + $0xae8] sm:$0xff]
        %v783 = vld [vmem:[%s334 + $0xaf0] sm:$0xff]
        %v784 = vld [vmem:[%s334 + $0xaf8] sm:$0xff]
        %v785 = vld [vmem:[%s334 + $0xb00] sm:$0xff]
        %v786 = vld [vmem:[%s334 + $0xb08] sm:$0xff]
        %v787 = vld [vmem:[%s334 + $0xb10] sm:$0xff]
        %v788 = vld [vmem:[%s334 + $0xb18] sm:$0xff]
        %v789 = vld [vmem:[%s334 + $0xb20] sm:$0xff]
        %v790 = vld [vmem:[%s334 + $0xb28] sm:$0xff]
        %v791 = vld [vmem:[%s334 + $0xb30] sm:$0xff]
        %v792 = vld [vmem:[%s334 + $0xb38] sm:$0xff]
        %v793 = vld [vmem:[%s334 + $0xb40] sm:$0xff]
        %v794 = vld [vmem:[%s334 + $0xb48] sm:$0xff]
        %v795 = vld [vmem:[%s334 + $0xb50] sm:$0xff]
        %v796 = vld [vmem:[%s334 + $0xb58] sm:$0xff]
        %v797 = vld [vmem:[%s334 + $0xb60] sm:$0xff]
        %v798 = vld [vmem:[%s334 + $0xb68] sm:$0xff]
        %v799 = vld [vmem:[%s334 + $0xb70] sm:$0xff]
        %v800 = vld [vmem:[%s334 + $0xb78] sm:$0xff]
        %v801 = vld [vmem:[%s334 + $0xb80] sm:$0xff]
        %v802 = vld [vmem:[%s334 + $0xb88] sm:$0xff]
        %v803 = vld [vmem:[%s334 + $0xb90] sm:$0xff]
        %v804 = vld [vmem:[%s334 + $0xb98] sm:$0xff]
        %v805 = vld [vmem:[%s334 + $0xba0] sm:$0xff]
        %v806 = vld [vmem:[%s334 + $0xba8] sm:$0xff]
        %v807 = vld [vmem:[%s334 + $0xbb0] sm:$0xff]
        %v808 = vld [vmem:[%s334 + $0xbb8] sm:$0xff]
        %v809 = vld [vmem:[%s334 + $0xbc0] sm:$0xff]
        %v810 = vld [vmem:[%s334 + $0xbc8] sm:$0xff]
        %v811 = vld [vmem:[%s334 + $0xbd0] sm:$0xff]
        %v812 = vld [vmem:[%s334 + $0xbd8] sm:$0xff]
        %v813 = vld [vmem:[%s334 + $0xbe0] sm:$0xff]
        %v814 = vld [vmem:[%s334 + $0xbe8] sm:$0xff]
        %v815 = vld [vmem:[%s334 + $0xbf0] sm:$0xff]
        %v816 = vld [vmem:[%s334 + $0xbf8] sm:$0xff]
        %v817 = vld [vmem:[%s334 + $0xc00] sm:$0xff]
        %v818 = vld [vmem:[%s334 + $0xc08] sm:$0xff]
        %v819 = vld [vmem:[%s334 + $0xc10] sm:$0xff]
        %v820 = vld [vmem:[%s334 + $0xc18] sm:$0xff]
        %v821 = vld [vmem:[%s334 + $0xc20] sm:$0xff]
        %v822 = vld [vmem:[%s334 + $0xc28] sm:$0xff]
        %v823 = vld [vmem:[%s334 + $0xc30] sm:$0xff]
        %v824 = vld [vmem:[%s334 + $0xc38] sm:$0xff]
        %v825 = vld [vmem:[%s334 + $0xc40] sm:$0xff]
        %v826 = vld [vmem:[%s334 + $0xc48] sm:$0xff]
        %v827 = vld [vmem:[%s334 + $0xc50] sm:$0xff]
        %v828 = vld [vmem:[%s334 + $0xc58] sm:$0xff]
        %v829 = vld [vmem:[%s334 + $0xc60] sm:$0xff]
        %v830 = vld [vmem:[%s334 + $0xc68] sm:$0xff]
        %v831 = vld [vmem:[%s334 + $0xc70] sm:$0xff]
        %v832 = vld [vmem:[%s334 + $0xc78] sm:$0xff]
        %v833 = vld [vmem:[%s334 + $0xc80] sm:$0xff]
        %v834 = vld [vmem:[%s334 + $0xc88] sm:$0xff]
        %v835 = vld [vmem:[%s334 + $0xc90] sm:$0xff]
        %v836 = vld [vmem:[%s334 + $0xc98] sm:$0xff]
        %v837 = vld [vmem:[%s334 + $0xca0] sm:$0xff]
        %v838 = vld [vmem:[%s334 + $0xca8] sm:$0xff]
        %v839 = vld [vmem:[%s334 + $0xcb0] sm:$0xff]
        %v840 = vld [vmem:[%s334 + $0xcb8] sm:$0xff]
        %v841 = vld [vmem:[%s334 + $0xcc0] sm:$0xff]
        %v842 = vld [vmem:[%s334 + $0xcc8] sm:$0xff]
        %v843 = vld [vmem:[%s334 + $0xcd0] sm:$0xff]
        %v844 = vld [vmem:[%s334 + $0xcd8] sm:$0xff]
        %v845 = vld [vmem:[%s334 + $0xce0] sm:$0xff]
        %v846 = vld [vmem:[%s334 + $0xce8] sm:$0xff]
        %v847 = vld [vmem:[%s334 + $0xcf0] sm:$0xff]
        %v848 = vld [vmem:[%s334 + $0xcf8] sm:$0xff]
        %v849 = vld [vmem:[%s334 + $0xd00] sm:$0xff]
        %v850 = vld [vmem:[%s334 + $0xd08] sm:$0xff]
        %v851 = vld [vmem:[%s334 + $0xd10] sm:$0xff]
        %v852 = vld [vmem:[%s334 + $0xd18] sm:$0xff]
        %v853 = vld [vmem:[%s334 + $0xd20] sm:$0xff]
        %v854 = vld [vmem:[%s334 + $0xd28] sm:$0xff]
        %v855 = vld [vmem:[%s334 + $0xd30] sm:$0xff]
        %v856 = vld [vmem:[%s334 + $0xd38] sm:$0xff]
        %v857 = vld [vmem:[%s334 + $0xd40] sm:$0xff]
        %v858 = vld [vmem:[%s334 + $0xd48] sm:$0xff]
        %v859 = vld [vmem:[%s334 + $0xd50] sm:$0xff]
        %v860 = vld [vmem:[%s334 + $0xd58] sm:$0xff]
        %v861 = vld [vmem:[%s334 + $0xd60] sm:$0xff]
        %v862 = vld [vmem:[%s334 + $0xd68] sm:$0xff]
        %v863 = vld [vmem:[%s334 + $0xd70] sm:$0xff]
        %v864 = vld [vmem:[%s334 + $0xd78] sm:$0xff]
        %v865 = vld [vmem:[%s334 + $0xd80] sm:$0xff]
        %v866 = vld [vmem:[%s334 + $0xd88] sm:$0xff]
        %v867 = vld [vmem:[%s334 + $0xd90] sm:$0xff]
        %v868 = vld [vmem:[%s334 + $0xd98] sm:$0xff]
        %v869 = vld [vmem:[%s334 + $0xda0] sm:$0xff]
        %v870 = vld [vmem:[%s334 + $0xda8] sm:$0xff]
        %v871 = vld [vmem:[%s334 + $0xdb0] sm:$0xff]
        %v872 = vld [vmem:[%s334 + $0xdb8] sm:$0xff]
        %v873 = vld [vmem:[%s334 + $0xdc0] sm:$0xff]
        %v874 = vld [vmem:[%s334 + $0xdc8] sm:$0xff]
        %v875 = vld [vmem:[%s334 + $0xdd0] sm:$0xff]
        %v876 = vld [vmem:[%s334 + $0xdd8] sm:$0xff]
        %v877 = vld [vmem:[%s334 + $0xde0] sm:$0xff]
        %v878 = vld [vmem:[%s334 + $0xde8] sm:$0xff]
        %v879 = vld [vmem:[%s334 + $0xdf0] sm:$0xff]
        %v880 = vld [vmem:[%s334 + $0xdf8] sm:$0xff]
        %v881 = vld [vmem:[%s334 + $0xe00] sm:$0xff]
        %v882 = vld [vmem:[%s334 + $0xe08] sm:$0xff]
        %v883 = vld [vmem:[%s334 + $0xe10] sm:$0xff]
        %v884 = vld [vmem:[%s334 + $0xe18] sm:$0xff]
        %v885 = vld [vmem:[%s334 + $0xe20] sm:$0xff]
        %v886 = vld [vmem:[%s334 + $0xe28] sm:$0xff]
        %v887 = vld [vmem:[%s334 + $0xe30] sm:$0xff]
        %v888 = vld [vmem:[%s334 + $0xe38] sm:$0xff]
        %v889 = vld [vmem:[%s334 + $0xe40] sm:$0xff]
        %v890 = vld [vmem:[%s334 + $0xe48] sm:$0xff]
        %v891 = vld [vmem:[%s334 + $0xe50] sm:$0xff]
        %v892 = vld [vmem:[%s334 + $0xe58] sm:$0xff]
        %v893 = vld [vmem:[%s334 + $0xe60] sm:$0xff]
        %v894 = vld [vmem:[%s334 + $0xe68] sm:$0xff]
        %v895 = vld [vmem:[%s334 + $0xe70] sm:$0xff]
        %v896 = vld [vmem:[%s334 + $0xe78] sm:$0xff]
        %v897 = vld [vmem:[%s334 + $0xe80] sm:$0xff]
        %v898 = vld [vmem:[%s334 + $0xe88] sm:$0xff]
        %v899 = vld [vmem:[%s334 + $0xe90] sm:$0xff]
        %v900 = vld [vmem:[%s334 + $0xe98] sm:$0xff]
        %v901 = vld [vmem:[%s334 + $0xea0] sm:$0xff]
        %v902 = vld [vmem:[%s334 + $0xea8] sm:$0xff]
        %v903 = vld [vmem:[%s334 + $0xeb0] sm:$0xff]
        %v904 = vld [vmem:[%s334 + $0xeb8] sm:$0xff]
        %v905 = vld [vmem:[%s334 + $0xec0] sm:$0xff]
        %v906 = vld [vmem:[%s334 + $0xec8] sm:$0xff]
        %v907 = vld [vmem:[%s334 + $0xed0] sm:$0xff]
        %v908 = vld [vmem:[%s334 + $0xed8] sm:$0xff]
        %v909 = vld [vmem:[%s334 + $0xee0] sm:$0xff]
        %v910 = vld [vmem:[%s334 + $0xee8] sm:$0xff]
        %v911 = vld [vmem:[%s334 + $0xef0] sm:$0xff]
        %v912 = vld [vmem:[%s334 + $0xef8] sm:$0xff]
        %v913 = vld [vmem:[%s334 + $0xf00] sm:$0xff]
        %v914 = vld [vmem:[%s334 + $0xf08] sm:$0xff]
        %v915 = vld [vmem:[%s334 + $0xf10] sm:$0xff]
        %v916 = vld [vmem:[%s334 + $0xf18] sm:$0xff]
        %v917 = vld [vmem:[%s334 + $0xf20] sm:$0xff]
        %v918 = vld [vmem:[%s334 + $0xf28] sm:$0xff]
        %v919 = vld [vmem:[%s334 + $0xf30] sm:$0xff]
        %v920 = vld [vmem:[%s334 + $0xf38] sm:$0xff]
        %v921 = vld [vmem:[%s334 + $0xf40] sm:$0xff]
        %v922 = vld [vmem:[%s334 + $0xf48] sm:$0xff]
        %v923 = vld [vmem:[%s334 + $0xf50] sm:$0xff]
        %v924 = vld [vmem:[%s334 + $0xf58] sm:$0xff]
        %v925 = vld [vmem:[%s334 + $0xf60] sm:$0xff]
        %v926 = vld [vmem:[%s334 + $0xf68] sm:$0xff]
        %v927 = vld [vmem:[%s334 + $0xf70] sm:$0xff]
        %v928 = vld [vmem:[%s334 + $0xf78] sm:$0xff]
        %v929 = vld [vmem:[%s334 + $0xf80] sm:$0xff]
        %v930 = vld [vmem:[%s334 + $0xf88] sm:$0xff]
        %v931 = vld [vmem:[%s334 + $0xf90] sm:$0xff]
        %v932 = vld [vmem:[%s334 + $0xf98] sm:$0xff]
        %v933 = vld [vmem:[%s334 + $0xfa0] sm:$0xff]
        %v934 = vld [vmem:[%s334 + $0xfa8] sm:$0xff]
        %v935 = vld [vmem:[%s334 + $0xfb0] sm:$0xff]
        %v936 = vld [vmem:[%s334 + $0xfb8] sm:$0xff]
        %v937 = vld [vmem:[%s334 + $0xfc0] sm:$0xff]
        %v938 = vld [vmem:[%s334 + $0xfc8] sm:$0xff]
        %v939 = vld [vmem:[%s334 + $0xfd0] sm:$0xff]
        %v940 = vld [vmem:[%s334 + $0xfd8] sm:$0xff]
        %v941 = vld [vmem:[%s334 + $0xfe0] sm:$0xff]
        %v942 = vld [vmem:[%s334 + $0xfe8] sm:$0xff]
        %v943 = vld [vmem:[%s334 + $0xff0] sm:$0xff]
        %v944 = vld [vmem:[%s334 + $0xff8] sm:$0xff]
        %v949 = vunpack.c.l.b16 %v429
        %v950 = vunpack.c.h.b16 %v429
        %v951 = vunpack.c.l.b16 %v430
        %v952 = vunpack.c.h.b16 %v430
        %v953 = vunpack.c.l.b16 %v431
        %v954 = vunpack.c.h.b16 %v431
        %v955 = vunpack.c.l.b16 %v432
        %v956 = vunpack.c.h.b16 %v432
        %v957 = vpack.c.b16 %v949, %v949
        %v958 = vpack.c.b16 %v950, %v950
        %v959 = vpack.c.b16 %v951, %v951
        %v960 = vpack.c.b16 %v952, %v952
        %v961 = vpack.c.b16 %v953, %v953
        %v962 = vpack.c.b16 %v954, %v954
        %v963 = vpack.c.b16 %v955, %v955
        %v964 = vpack.c.b16 %v956, %v956
        %v1485 = vunpack.c.l.b16 %v433
        %v1486 = vunpack.c.h.b16 %v433
        %v1487 = vunpack.c.l.b16 %v434
        %v1488 = vunpack.c.h.b16 %v434
        %v1489 = vunpack.c.l.b16 %v435
        %v1490 = vunpack.c.h.b16 %v435
        %v1491 = vunpack.c.l.b16 %v436
        %v1492 = vunpack.c.h.b16 %v436
        %v1493 = vunpack.c.l.b16 %v437
        %v1494 = vunpack.c.h.b16 %v437
        %v1495 = vunpack.c.l.b16 %v438
        %v1496 = vunpack.c.h.b16 %v438
        %v1497 = vunpack.c.l.b16 %v439
        %v1498 = vunpack.c.h.b16 %v439
        %v1499 = vunpack.c.l.b16 %v440
        %v1500 = vunpack.c.h.b16 %v440
        %v1501 = vunpack.c.l.b16 %v441
        %v1502 = vunpack.c.h.b16 %v441
        %v1503 = vunpack.c.l.b16 %v442
        %v1504 = vunpack.c.h.b16 %v442
        %v1505 = vunpack.c.l.b16 %v443
        %v1506 = vunpack.c.h.b16 %v443
        %v1507 = vunpack.c.l.b16 %v444
        %v1508 = vunpack.c.h.b16 %v444
        %v1509 = vunpack.c.l.b16 %v445
        %v1510 = vunpack.c.h.b16 %v445
        %v1511 = vunpack.c.l.b16 %v446
        %v1512 = vunpack.c.h.b16 %v446
        %v1513 = vunpack.c.l.b16 %v447
        %v1514 = vunpack.c.h.b16 %v447
        %v1515 = vunpack.c.l.b16 %v448
        %v1516 = vunpack.c.h.b16 %v448
        %v1517 = vunpack.c.l.b16 %v449
        %v1518 = vunpack.c.h.b16 %v449
        %v1519 = vunpack.c.l.b16 %v450
        %v1520 = vunpack.c.h.b16 %v450
        %v1521 = vunpack.c.l.b16 %v451
        %v1522 = vunpack.c.h.b16 %v451
        %v1523 = vunpack.c.l.b16 %v452
        %v1524 = vunpack.c.h.b16 %v452
        %v1525 = vunpack.c.l.b16 %v453
        %v1526 = vunpack.c.h.b16 %v453
        %v1527 = vunpack.c.l.b16 %v454
        %v1528 = vunpack.c.h.b16 %v454
        %v1529 = vunpack.c.l.b16 %v455
        %v1530 = vunpack.c.h.b16 %v455
        %v1531 = vunpack.c.l.b16 %v456
        %v1532 = vunpack.c.h.b16 %v456
        %v1533 = vunpack.c.l.b16 %v457
        %v1534 = vunpack.c.h.b16 %v457
        %v1535 = vunpack.c.l.b16 %v458
        %v1536 = vunpack.c.h.b16 %v458
        %v1537 = vunpack.c.l.b16 %v459
        %v1538 = vunpack.c.h.b16 %v459
        %v1539 = vunpack.c.l.b16 %v460
        %v1540 = vunpack.c.h.b16 %v460
        %v1541 = vunpack.c.l.b16 %v461
        %v1542 = vunpack.c.h.b16 %v461
        %v1543 = vunpack.c.l.b16 %v462
        %v1544 = vunpack.c.h.b16 %v462
        %v1545 = vunpack.c.l.b16 %v463
        %v1546 = vunpack.c.h.b16 %v463
        %v1547 = vunpack.c.l.b16 %v464
        %v1548 = vunpack.c.h.b16 %v464
        %v1549 = vunpack.c.l.b16 %v465
        %v1550 = vunpack.c.h.b16 %v465
        %v1551 = vunpack.c.l.b16 %v466
        %v1552 = vunpack.c.h.b16 %v466
        %v1553 = vunpack.c.l.b16 %v467
        %v1554 = vunpack.c.h.b16 %v467
        %v1555 = vunpack.c.l.b16 %v468
        %v1556 = vunpack.c.h.b16 %v468
        %v1557 = vunpack.c.l.b16 %v469
        %v1558 = vunpack.c.h.b16 %v469
        %v1559 = vunpack.c.l.b16 %v470
        %v1560 = vunpack.c.h.b16 %v470
        %v1561 = vunpack.c.l.b16 %v471
        %v1562 = vunpack.c.h.b16 %v471
        %v1563 = vunpack.c.l.b16 %v472
        %v1564 = vunpack.c.h.b16 %v472
        %v1565 = vunpack.c.l.b16 %v473
        %v1566 = vunpack.c.h.b16 %v473
        %v1567 = vunpack.c.l.b16 %v474
        %v1568 = vunpack.c.h.b16 %v474
        %v1569 = vunpack.c.l.b16 %v475
        %v1570 = vunpack.c.h.b16 %v475
        %v1571 = vunpack.c.l.b16 %v476
        %v1572 = vunpack.c.h.b16 %v476
        %v1573 = vunpack.c.l.b16 %v477
        %v1574 = vunpack.c.h.b16 %v477
        %v1575 = vunpack.c.l.b16 %v478
        %v1576 = vunpack.c.h.b16 %v478
        %v1577 = vunpack.c.l.b16 %v479
        %v1578 = vunpack.c.h.b16 %v479
        %v1579 = vunpack.c.l.b16 %v480
        %v1580 = vunpack.c.h.b16 %v480
        %v1581 = vunpack.c.l.b16 %v481
        %v1582 = vunpack.c.h.b16 %v481
        %v1583 = vunpack.c.l.b16 %v482
        %v1584 = vunpack.c.h.b16 %v482
        %v1585 = vunpack.c.l.b16 %v483
        %v1586 = vunpack.c.h.b16 %v483
        %v1587 = vunpack.c.l.b16 %v484
        %v1588 = vunpack.c.h.b16 %v484
        %v1589 = vunpack.c.l.b16 %v485
        %v1590 = vunpack.c.h.b16 %v485
        %v1591 = vunpack.c.l.b16 %v486
        %v1592 = vunpack.c.h.b16 %v486
        %v1593 = vunpack.c.l.b16 %v487
        %v1594 = vunpack.c.h.b16 %v487
        %v1595 = vunpack.c.l.b16 %v488
        %v1596 = vunpack.c.h.b16 %v488
        %v1597 = vunpack.c.l.b16 %v489
        %v1598 = vunpack.c.h.b16 %v489
        %v1599 = vunpack.c.l.b16 %v490
        %v1600 = vunpack.c.h.b16 %v490
        %v1601 = vunpack.c.l.b16 %v491
        %v1602 = vunpack.c.h.b16 %v491
        %v1603 = vunpack.c.l.b16 %v492
        %v1604 = vunpack.c.h.b16 %v492
        %v1605 = vunpack.c.l.b16 %v493
        %v1606 = vunpack.c.h.b16 %v493
        %v1607 = vunpack.c.l.b16 %v494
        %v1608 = vunpack.c.h.b16 %v494
        %v1609 = vunpack.c.l.b16 %v495
        %v1610 = vunpack.c.h.b16 %v495
        %v1611 = vunpack.c.l.b16 %v496
        %v1612 = vunpack.c.h.b16 %v496
        %v1613 = vunpack.c.l.b16 %v497
        %v1614 = vunpack.c.h.b16 %v497
        %v1615 = vunpack.c.l.b16 %v498
        %v1616 = vunpack.c.h.b16 %v498
        %v1617 = vunpack.c.l.b16 %v499
        %v1618 = vunpack.c.h.b16 %v499
        %v1619 = vunpack.c.l.b16 %v500
        %v1620 = vunpack.c.h.b16 %v500
        %v1621 = vunpack.c.l.b16 %v501
        %v1622 = vunpack.c.h.b16 %v501
        %v1623 = vunpack.c.l.b16 %v502
        %v1624 = vunpack.c.h.b16 %v502
        %v1625 = vunpack.c.l.b16 %v503
        %v1626 = vunpack.c.h.b16 %v503
        %v1627 = vunpack.c.l.b16 %v504
        %v1628 = vunpack.c.h.b16 %v504
        %v1629 = vunpack.c.l.b16 %v505
        %v1630 = vunpack.c.h.b16 %v505
        %v1631 = vunpack.c.l.b16 %v506
        %v1632 = vunpack.c.h.b16 %v506
        %v1633 = vunpack.c.l.b16 %v507
        %v1634 = vunpack.c.h.b16 %v507
        %v1635 = vunpack.c.l.b16 %v508
        %v1636 = vunpack.c.h.b16 %v508
        %v1637 = vunpack.c.l.b16 %v509
        %v1638 = vunpack.c.h.b16 %v509
        %v1639 = vunpack.c.l.b16 %v510
        %v1640 = vunpack.c.h.b16 %v510
        %v1641 = vunpack.c.l.b16 %v511
        %v1642 = vunpack.c.h.b16 %v511
        %v1643 = vunpack.c.l.b16 %v512
        %v1644 = vunpack.c.h.b16 %v512
        %v1645 = vunpack.c.l.b16 %v513
        %v1646 = vunpack.c.h.b16 %v513
        %v1647 = vunpack.c.l.b16 %v514
        %v1648 = vunpack.c.h.b16 %v514
        %v1649 = vunpack.c.l.b16 %v515
        %v1650 = vunpack.c.h.b16 %v515
        %v1651 = vunpack.c.l.b16 %v516
        %v1652 = vunpack.c.h.b16 %v516
        %v1653 = vunpack.c.l.b16 %v517
        %v1654 = vunpack.c.h.b16 %v517
        %v1655 = vunpack.c.l.b16 %v518
        %v1656 = vunpack.c.h.b16 %v518
        %v1657 = vunpack.c.l.b16 %v519
        %v1658 = vunpack.c.h.b16 %v519
        %v1659 = vunpack.c.l.b16 %v520
        %v1660 = vunpack.c.h.b16 %v520
        %v1661 = vunpack.c.l.b16 %v521
        %v1662 = vunpack.c.h.b16 %v521
        %v1663 = vunpack.c.l.b16 %v522
        %v1664 = vunpack.c.h.b16 %v522
        %v1665 = vunpack.c.l.b16 %v523
        %v1666 = vunpack.c.h.b16 %v523
        %v1667 = vunpack.c.l.b16 %v524
        %v1668 = vunpack.c.h.b16 %v524
        %v1669 = vunpack.c.l.b16 %v525
        %v1670 = vunpack.c.h.b16 %v525
        %v1671 = vunpack.c.l.b16 %v526
        %v1672 = vunpack.c.h.b16 %v526
        %v1673 = vunpack.c.l.b16 %v527
        %v1674 = vunpack.c.h.b16 %v527
        %v1675 = vunpack.c.l.b16 %v528
        %v1676 = vunpack.c.h.b16 %v528
        %v1677 = vunpack.c.l.b16 %v529
        %v1678 = vunpack.c.h.b16 %v529
        %v1679 = vunpack.c.l.b16 %v530
        %v1680 = vunpack.c.h.b16 %v530
        %v1681 = vunpack.c.l.b16 %v531
        %v1682 = vunpack.c.h.b16 %v531
        %v1683 = vunpack.c.l.b16 %v532
        %v1684 = vunpack.c.h.b16 %v532
        %v1685 = vunpack.c.l.b16 %v533
        %v1686 = vunpack.c.h.b16 %v533
        %v1687 = vunpack.c.l.b16 %v534
        %v1688 = vunpack.c.h.b16 %v534
        %v1689 = vunpack.c.l.b16 %v535
        %v1690 = vunpack.c.h.b16 %v535
        %v1691 = vunpack.c.l.b16 %v536
        %v1692 = vunpack.c.h.b16 %v536
        %v1693 = vunpack.c.l.b16 %v537
        %v1694 = vunpack.c.h.b16 %v537
        %v1695 = vunpack.c.l.b16 %v538
        %v1696 = vunpack.c.h.b16 %v538
        %v1697 = vunpack.c.l.b16 %v539
        %v1698 = vunpack.c.h.b16 %v539
        %v1699 = vunpack.c.l.b16 %v540
        %v1700 = vunpack.c.h.b16 %v540
        %v1701 = vunpack.c.l.b16 %v541
        %v1702 = vunpack.c.h.b16 %v541
        %v1703 = vunpack.c.l.b16 %v542
        %v1704 = vunpack.c.h.b16 %v542
        %v1705 = vunpack.c.l.b16 %v543
        %v1706 = vunpack.c.h.b16 %v543
        %v1707 = vunpack.c.l.b16 %v544
        %v1708 = vunpack.c.h.b16 %v544
        %v1709 = vunpack.c.l.b16 %v545
        %v1710 = vunpack.c.h.b16 %v545
        %v1711 = vunpack.c.l.b16 %v546
        %v1712 = vunpack.c.h.b16 %v546
        %v1713 = vunpack.c.l.b16 %v547
        %v1714 = vunpack.c.h.b16 %v547
        %v1715 = vunpack.c.l.b16 %v548
        %v1716 = vunpack.c.h.b16 %v548
        %v1717 = vunpack.c.l.b16 %v549
        %v1718 = vunpack.c.h.b16 %v549
        %v1719 = vunpack.c.l.b16 %v550
        %v1720 = vunpack.c.h.b16 %v550
        %v1721 = vunpack.c.l.b16 %v551
        %v1722 = vunpack.c.h.b16 %v551
        %v1723 = vunpack.c.l.b16 %v552
        %v1724 = vunpack.c.h.b16 %v552
        %v1725 = vunpack.c.l.b16 %v553
        %v1726 = vunpack.c.h.b16 %v553
        %v1727 = vunpack.c.l.b16 %v554
        %v1728 = vunpack.c.h.b16 %v554
        %v1729 = vunpack.c.l.b16 %v555
        %v1730 = vunpack.c.h.b16 %v555
        %v1731 = vunpack.c.l.b16 %v556
        %v1732 = vunpack.c.h.b16 %v556
        %v1733 = vunpack.c.l.b16 %v557
        %v1734 = vunpack.c.h.b16 %v557
        %v1735 = vunpack.c.l.b16 %v558
        %v1736 = vunpack.c.h.b16 %v558
        %v1737 = vunpack.c.l.b16 %v559
        %v1738 = vunpack.c.h.b16 %v559
        %v1739 = vunpack.c.l.b16 %v560
        %v1740 = vunpack.c.h.b16 %v560
        %v1741 = vunpack.c.l.b16 %v561
        %v1742 = vunpack.c.h.b16 %v561
        %v1743 = vunpack.c.l.b16 %v562
        %v1744 = vunpack.c.h.b16 %v562
        %v1745 = vunpack.c.l.b16 %v563
        %v1746 = vunpack.c.h.b16 %v563
        %v1747 = vunpack.c.l.b16 %v564
        %v1748 = vunpack.c.h.b16 %v564
        %v1749 = vunpack.c.l.b16 %v565
        %v1750 = vunpack.c.h.b16 %v565
        %v1751 = vunpack.c.l.b16 %v566
        %v1752 = vunpack.c.h.b16 %v566
        %v1753 = vunpack.c.l.b16 %v567
        %v1754 = vunpack.c.h.b16 %v567
        %v1755 = vunpack.c.l.b16 %v568
        %v1756 = vunpack.c.h.b16 %v568
        %v1757 = vunpack.c.l.b16 %v569
        %v1758 = vunpack.c.h.b16 %v569
        %v1759 = vunpack.c.l.b16 %v570
        %v1760 = vunpack.c.h.b16 %v570
        %v1761 = vunpack.c.l.b16 %v571
        %v1762 = vunpack.c.h.b16 %v571
        %v1763 = vunpack.c.l.b16 %v572
        %v1764 = vunpack.c.h.b16 %v572
        %v1765 = vunpack.c.l.b16 %v573
        %v1766 = vunpack.c.h.b16 %v573
        %v1767 = vunpack.c.l.b16 %v574
        %v1768 = vunpack.c.h.b16 %v574
        %v1769 = vunpack.c.l.b16 %v575
        %v1770 = vunpack.c.h.b16 %v575
        %v1771 = vunpack.c.l.b16 %v576
        %v1772 = vunpack.c.h.b16 %v576
        %v1773 = vunpack.c.l.b16 %v577
        %v1774 = vunpack.c.h.b16 %v577
        %v1775 = vunpack.c.l.b16 %v578
        %v1776 = vunpack.c.h.b16 %v578
        %v1777 = vunpack.c.l.b16 %v579
        %v1778 = vunpack.c.h.b16 %v579
        %v1779 = vunpack.c.l.b16 %v580
        %v1780 = vunpack.c.h.b16 %v580
        %v1781 = vunpack.c.l.b16 %v581
        %v1782 = vunpack.c.h.b16 %v581
        %v1783 = vunpack.c.l.b16 %v582
        %v1784 = vunpack.c.h.b16 %v582
        %v1785 = vunpack.c.l.b16 %v583
        %v1786 = vunpack.c.h.b16 %v583
        %v1787 = vunpack.c.l.b16 %v584
        %v1788 = vunpack.c.h.b16 %v584
        %v1789 = vunpack.c.l.b16 %v585
        %v1790 = vunpack.c.h.b16 %v585
        %v1791 = vunpack.c.l.b16 %v586
        %v1792 = vunpack.c.h.b16 %v586
        %v1793 = vunpack.c.l.b16 %v587
        %v1794 = vunpack.c.h.b16 %v587
        %v1795 = vunpack.c.l.b16 %v588
        %v1796 = vunpack.c.h.b16 %v588
        %v1797 = vunpack.c.l.b16 %v589
        %v1798 = vunpack.c.h.b16 %v589
        %v1799 = vunpack.c.l.b16 %v590
        %v1800 = vunpack.c.h.b16 %v590
        %v1801 = vunpack.c.l.b16 %v591
        %v1802 = vunpack.c.h.b16 %v591
        %v1803 = vunpack.c.l.b16 %v592
        %v1804 = vunpack.c.h.b16 %v592
        %v1805 = vunpack.c.l.b16 %v593
        %v1806 = vunpack.c.h.b16 %v593
        %v1807 = vunpack.c.l.b16 %v594
        %v1808 = vunpack.c.h.b16 %v594
        %v1809 = vunpack.c.l.b16 %v595
        %v1810 = vunpack.c.h.b16 %v595
        %v1811 = vunpack.c.l.b16 %v596
        %v1812 = vunpack.c.h.b16 %v596
        %v1813 = vunpack.c.l.b16 %v597
        %v1814 = vunpack.c.h.b16 %v597
        %v1815 = vunpack.c.l.b16 %v598
        %v1816 = vunpack.c.h.b16 %v598
        %v1817 = vunpack.c.l.b16 %v599
        %v1818 = vunpack.c.h.b16 %v599
        %v1819 = vunpack.c.l.b16 %v600
        %v1820 = vunpack.c.h.b16 %v600
        %v1821 = vunpack.c.l.b16 %v601
        %v1822 = vunpack.c.h.b16 %v601
        %v1823 = vunpack.c.l.b16 %v602
        %v1824 = vunpack.c.h.b16 %v602
        %v1825 = vunpack.c.l.b16 %v603
        %v1826 = vunpack.c.h.b16 %v603
        %v1827 = vunpack.c.l.b16 %v604
        %v1828 = vunpack.c.h.b16 %v604
        %v1829 = vunpack.c.l.b16 %v605
        %v1830 = vunpack.c.h.b16 %v605
        %v1831 = vunpack.c.l.b16 %v606
        %v1832 = vunpack.c.h.b16 %v606
        %v1833 = vunpack.c.l.b16 %v607
        %v1834 = vunpack.c.h.b16 %v607
        %v1835 = vunpack.c.l.b16 %v608
        %v1836 = vunpack.c.h.b16 %v608
        %v1837 = vunpack.c.l.b16 %v609
        %v1838 = vunpack.c.h.b16 %v609
        %v1839 = vunpack.c.l.b16 %v610
        %v1840 = vunpack.c.h.b16 %v610
        %v1841 = vunpack.c.l.b16 %v611
        %v1842 = vunpack.c.h.b16 %v611
        %v1843 = vunpack.c.l.b16 %v612
        %v1844 = vunpack.c.h.b16 %v612
        %v1845 = vunpack.c.l.b16 %v613
        %v1846 = vunpack.c.h.b16 %v613
        %v1847 = vunpack.c.l.b16 %v614
        %v1848 = vunpack.c.h.b16 %v614
        %v1849 = vunpack.c.l.b16 %v615
        %v1850 = vunpack.c.h.b16 %v615
        %v1851 = vunpack.c.l.b16 %v616
        %v1852 = vunpack.c.h.b16 %v616
        %v1853 = vunpack.c.l.b16 %v617
        %v1854 = vunpack.c.h.b16 %v617
        %v1855 = vunpack.c.l.b16 %v618
        %v1856 = vunpack.c.h.b16 %v618
        %v1857 = vunpack.c.l.b16 %v619
        %v1858 = vunpack.c.h.b16 %v619
        %v1859 = vunpack.c.l.b16 %v620
        %v1860 = vunpack.c.h.b16 %v620
        %v1861 = vunpack.c.l.b16 %v621
        %v1862 = vunpack.c.h.b16 %v621
        %v1863 = vunpack.c.l.b16 %v622
        %v1864 = vunpack.c.h.b16 %v622
        %v1865 = vunpack.c.l.b16 %v623
        %v1866 = vunpack.c.h.b16 %v623
        %v1867 = vunpack.c.l.b16 %v624
        %v1868 = vunpack.c.h.b16 %v624
        %v1869 = vunpack.c.l.b16 %v625
        %v1870 = vunpack.c.h.b16 %v625
        %v1871 = vunpack.c.l.b16 %v626
        %v1872 = vunpack.c.h.b16 %v626
        %v1873 = vunpack.c.l.b16 %v627
        %v1874 = vunpack.c.h.b16 %v627
        %v1875 = vunpack.c.l.b16 %v628
        %v1876 = vunpack.c.h.b16 %v628
        %v1877 = vunpack.c.l.b16 %v629
        %v1878 = vunpack.c.h.b16 %v629
        %v1879 = vunpack.c.l.b16 %v630
        %v1880 = vunpack.c.h.b16 %v630
        %v1881 = vunpack.c.l.b16 %v631
        %v1882 = vunpack.c.h.b16 %v631
        %v1883 = vunpack.c.l.b16 %v632
        %v1884 = vunpack.c.h.b16 %v632
        %v1885 = vunpack.c.l.b16 %v633
        %v1886 = vunpack.c.h.b16 %v633
        %v1887 = vunpack.c.l.b16 %v634
        %v1888 = vunpack.c.h.b16 %v634
        %v1889 = vunpack.c.l.b16 %v635
        %v1890 = vunpack.c.h.b16 %v635
        %v1891 = vunpack.c.l.b16 %v636
        %v1892 = vunpack.c.h.b16 %v636
        %v1893 = vunpack.c.l.b16 %v637
        %v1894 = vunpack.c.h.b16 %v637
        %v1895 = vunpack.c.l.b16 %v638
        %v1896 = vunpack.c.h.b16 %v638
        %v1897 = vunpack.c.l.b16 %v639
        %v1898 = vunpack.c.h.b16 %v639
        %v1899 = vunpack.c.l.b16 %v640
        %v1900 = vunpack.c.h.b16 %v640
        %v1901 = vunpack.c.l.b16 %v641
        %v1902 = vunpack.c.h.b16 %v641
        %v1903 = vunpack.c.l.b16 %v642
        %v1904 = vunpack.c.h.b16 %v642
        %v1905 = vunpack.c.l.b16 %v643
        %v1906 = vunpack.c.h.b16 %v643
        %v1907 = vunpack.c.l.b16 %v644
        %v1908 = vunpack.c.h.b16 %v644
        %v1909 = vunpack.c.l.b16 %v645
        %v1910 = vunpack.c.h.b16 %v645
        %v1911 = vunpack.c.l.b16 %v646
        %v1912 = vunpack.c.h.b16 %v646
        %v1913 = vunpack.c.l.b16 %v647
        %v1914 = vunpack.c.h.b16 %v647
        %v1915 = vunpack.c.l.b16 %v648
        %v1916 = vunpack.c.h.b16 %v648
        %v1917 = vunpack.c.l.b16 %v649
        %v1918 = vunpack.c.h.b16 %v649
        %v1919 = vunpack.c.l.b16 %v650
        %v1920 = vunpack.c.h.b16 %v650
        %v1921 = vunpack.c.l.b16 %v651
        %v1922 = vunpack.c.h.b16 %v651
        %v1923 = vunpack.c.l.b16 %v652
        %v1924 = vunpack.c.h.b16 %v652
        %v1925 = vunpack.c.l.b16 %v653
        %v1926 = vunpack.c.h.b16 %v653
        %v1927 = vunpack.c.l.b16 %v654
        %v1928 = vunpack.c.h.b16 %v654
        %v1929 = vunpack.c.l.b16 %v655
        %v1930 = vunpack.c.h.b16 %v655
        %v1931 = vunpack.c.l.b16 %v656
        %v1932 = vunpack.c.h.b16 %v656
        %v1933 = vunpack.c.l.b16 %v657
        %v1934 = vunpack.c.h.b16 %v657
        %v1935 = vunpack.c.l.b16 %v658
        %v1936 = vunpack.c.h.b16 %v658
        %v1937 = vunpack.c.l.b16 %v659
        %v1938 = vunpack.c.h.b16 %v659
        %v1939 = vunpack.c.l.b16 %v660
        %v1940 = vunpack.c.h.b16 %v660
        %v1941 = vunpack.c.l.b16 %v661
        %v1942 = vunpack.c.h.b16 %v661
        %v1943 = vunpack.c.l.b16 %v662
        %v1944 = vunpack.c.h.b16 %v662
        %v1945 = vunpack.c.l.b16 %v663
        %v1946 = vunpack.c.h.b16 %v663
        %v1947 = vunpack.c.l.b16 %v664
        %v1948 = vunpack.c.h.b16 %v664
        %v1949 = vunpack.c.l.b16 %v665
        %v1950 = vunpack.c.h.b16 %v665
        %v1951 = vunpack.c.l.b16 %v666
        %v1952 = vunpack.c.h.b16 %v666
        %v1953 = vunpack.c.l.b16 %v667
        %v1954 = vunpack.c.h.b16 %v667
        %v1955 = vunpack.c.l.b16 %v668
        %v1956 = vunpack.c.h.b16 %v668
        %v1957 = vunpack.c.l.b16 %v669
        %v1958 = vunpack.c.h.b16 %v669
        %v1959 = vunpack.c.l.b16 %v670
        %v1960 = vunpack.c.h.b16 %v670
        %v1961 = vunpack.c.l.b16 %v671
        %v1962 = vunpack.c.h.b16 %v671
        %v1963 = vunpack.c.l.b16 %v672
        %v1964 = vunpack.c.h.b16 %v672
        %v1965 = vunpack.c.l.b16 %v673
        %v1966 = vunpack.c.h.b16 %v673
        %v1967 = vunpack.c.l.b16 %v674
        %v1968 = vunpack.c.h.b16 %v674
        %v1969 = vunpack.c.l.b16 %v675
        %v1970 = vunpack.c.h.b16 %v675
        %v1971 = vunpack.c.l.b16 %v676
        %v1972 = vunpack.c.h.b16 %v676
        %v1973 = vunpack.c.l.b16 %v677
        %v1974 = vunpack.c.h.b16 %v677
        %v1975 = vunpack.c.l.b16 %v678
        %v1976 = vunpack.c.h.b16 %v678
        %v1977 = vunpack.c.l.b16 %v679
        %v1978 = vunpack.c.h.b16 %v679
        %v1979 = vunpack.c.l.b16 %v680
        %v1980 = vunpack.c.h.b16 %v680
        %v1981 = vunpack.c.l.b16 %v681
        %v1982 = vunpack.c.h.b16 %v681
        %v1983 = vunpack.c.l.b16 %v682
        %v1984 = vunpack.c.h.b16 %v682
        %v1985 = vunpack.c.l.b16 %v683
        %v1986 = vunpack.c.h.b16 %v683
        %v1987 = vunpack.c.l.b16 %v684
        %v1988 = vunpack.c.h.b16 %v684
        %v1989 = vunpack.c.l.b16 %v685
        %v1990 = vunpack.c.h.b16 %v685
        %v1991 = vunpack.c.l.b16 %v686
        %v1992 = vunpack.c.h.b16 %v686
        %v1993 = vunpack.c.l.b16 %v687
        %v1994 = vunpack.c.h.b16 %v687
        %v1995 = vunpack.c.l.b16 %v688
        %v1996 = vunpack.c.h.b16 %v688
        %v1997 = vunpack.c.l.b16 %v689
        %v1998 = vunpack.c.h.b16 %v689
        %v1999 = vunpack.c.l.b16 %v690
        %v2000 = vunpack.c.h.b16 %v690
        %v2001 = vunpack.c.l.b16 %v691
        %v2002 = vunpack.c.h.b16 %v691
        %v2003 = vunpack.c.l.b16 %v692
        %v2004 = vunpack.c.h.b16 %v692
        %v2005 = vunpack.c.l.b16 %v693
        %v2006 = vunpack.c.h.b16 %v693
        %v2007 = vunpack.c.l.b16 %v694
        %v2008 = vunpack.c.h.b16 %v694
        %v2009 = vunpack.c.l.b16 %v695
        %v2010 = vunpack.c.h.b16 %v695
        %v2011 = vunpack.c.l.b16 %v696
        %v2012 = vunpack.c.h.b16 %v696
        %v2013 = vunpack.c.l.b16 %v697
        %v2014 = vunpack.c.h.b16 %v697
        %v2015 = vunpack.c.l.b16 %v698
        %v2016 = vunpack.c.h.b16 %v698
        %v2017 = vunpack.c.l.b16 %v699
        %v2018 = vunpack.c.h.b16 %v699
        %v2019 = vunpack.c.l.b16 %v700
        %v2020 = vunpack.c.h.b16 %v700
        %v2021 = vunpack.c.l.b16 %v701
        %v2022 = vunpack.c.h.b16 %v701
        %v2023 = vunpack.c.l.b16 %v702
        %v2024 = vunpack.c.h.b16 %v702
        %v2025 = vunpack.c.l.b16 %v703
        %v2026 = vunpack.c.h.b16 %v703
        %v2027 = vunpack.c.l.b16 %v704
        %v2028 = vunpack.c.h.b16 %v704
        %v2029 = vunpack.c.l.b16 %v705
        %v2030 = vunpack.c.h.b16 %v705
        %v2031 = vunpack.c.l.b16 %v706
        %v2032 = vunpack.c.h.b16 %v706
        %v2033 = vunpack.c.l.b16 %v707
        %v2034 = vunpack.c.h.b16 %v707
        %v2035 = vunpack.c.l.b16 %v708
        %v2036 = vunpack.c.h.b16 %v708
        %v2037 = vunpack.c.l.b16 %v709
        %v2038 = vunpack.c.h.b16 %v709
        %v2039 = vunpack.c.l.b16 %v710
        %v2040 = vunpack.c.h.b16 %v710
        %v2041 = vunpack.c.l.b16 %v711
        %v2042 = vunpack.c.h.b16 %v711
        %v2043 = vunpack.c.l.b16 %v712
        %v2044 = vunpack.c.h.b16 %v712
        %v2045 = vunpack.c.l.b16 %v713
        %v2046 = vunpack.c.h.b16 %v713
        %v2047 = vunpack.c.l.b16 %v714
        %v2048 = vunpack.c.h.b16 %v714
        %v2049 = vunpack.c.l.b16 %v715
        %v2050 = vunpack.c.h.b16 %v715
        %v2051 = vunpack.c.l.b16 %v716
        %v2052 = vunpack.c.h.b16 %v716
        %v2053 = vunpack.c.l.b16 %v717
        %v2054 = vunpack.c.h.b16 %v717
        %v2055 = vunpack.c.l.b16 %v718
        %v2056 = vunpack.c.h.b16 %v718
        %v2057 = vunpack.c.l.b16 %v719
        %v2058 = vunpack.c.h.b16 %v719
        %v2059 = vunpack.c.l.b16 %v720
        %v2060 = vunpack.c.h.b16 %v720
        %v2061 = vunpack.c.l.b16 %v721
        %v2062 = vunpack.c.h.b16 %v721
        %v2063 = vunpack.c.l.b16 %v722
        %v2064 = vunpack.c.h.b16 %v722
        %v2065 = vunpack.c.l.b16 %v723
        %v2066 = vunpack.c.h.b16 %v723
        %v2067 = vunpack.c.l.b16 %v724
        %v2068 = vunpack.c.h.b16 %v724
        %v2069 = vunpack.c.l.b16 %v725
        %v2070 = vunpack.c.h.b16 %v725
        %v2071 = vunpack.c.l.b16 %v726
        %v2072 = vunpack.c.h.b16 %v726
        %v2073 = vunpack.c.l.b16 %v727
        %v2074 = vunpack.c.h.b16 %v727
        %v2075 = vunpack.c.l.b16 %v728
        %v2076 = vunpack.c.h.b16 %v728
        %v2077 = vunpack.c.l.b16 %v729
        %v2078 = vunpack.c.h.b16 %v729
        %v2079 = vunpack.c.l.b16 %v730
        %v2080 = vunpack.c.h.b16 %v730
        %v2081 = vunpack.c.l.b16 %v731
        %v2082 = vunpack.c.h.b16 %v731
        %v2083 = vunpack.c.l.b16 %v732
        %v2084 = vunpack.c.h.b16 %v732
        %v2085 = vunpack.c.l.b16 %v733
        %v2086 = vunpack.c.h.b16 %v733
        %v2087 = vunpack.c.l.b16 %v734
        %v2088 = vunpack.c.h.b16 %v734
        %v2089 = vunpack.c.l.b16 %v735
        %v2090 = vunpack.c.h.b16 %v735
        %v2091 = vunpack.c.l.b16 %v736
        %v2092 = vunpack.c.h.b16 %v736
        %v2093 = vunpack.c.l.b16 %v737
        %v2094 = vunpack.c.h.b16 %v737
        %v2095 = vunpack.c.l.b16 %v738
        %v2096 = vunpack.c.h.b16 %v738
        %v2097 = vunpack.c.l.b16 %v739
        %v2098 = vunpack.c.h.b16 %v739
        %v2099 = vunpack.c.l.b16 %v740
        %v2100 = vunpack.c.h.b16 %v740
        %v2101 = vunpack.c.l.b16 %v741
        %v2102 = vunpack.c.h.b16 %v741
        %v2103 = vunpack.c.l.b16 %v742
        %v2104 = vunpack.c.h.b16 %v742
        %v2105 = vunpack.c.l.b16 %v743
        %v2106 = vunpack.c.h.b16 %v743
        %v2107 = vunpack.c.l.b16 %v744
        %v2108 = vunpack.c.h.b16 %v744
        %v2109 = vunpack.c.l.b16 %v745
        %v2110 = vunpack.c.h.b16 %v745
        %v2111 = vunpack.c.l.b16 %v746
        %v2112 = vunpack.c.h.b16 %v746
        %v2113 = vunpack.c.l.b16 %v747
        %v2114 = vunpack.c.h.b16 %v747
        %v2115 = vunpack.c.l.b16 %v748
        %v2116 = vunpack.c.h.b16 %v748
        %v2117 = vunpack.c.l.b16 %v749
        %v2118 = vunpack.c.h.b16 %v749
        %v2119 = vunpack.c.l.b16 %v750
        %v2120 = vunpack.c.h.b16 %v750
        %v2121 = vunpack.c.l.b16 %v751
        %v2122 = vunpack.c.h.b16 %v751
        %v2123 = vunpack.c.l.b16 %v752
        %v2124 = vunpack.c.h.b16 %v752
        %v2125 = vunpack.c.l.b16 %v753
        %v2126 = vunpack.c.h.b16 %v753
        %v2127 = vunpack.c.l.b16 %v754
        %v2128 = vunpack.c.h.b16 %v754
        %v2129 = vunpack.c.l.b16 %v755
        %v2130 = vunpack.c.h.b16 %v755
        %v2131 = vunpack.c.l.b16 %v756
        %v2132 = vunpack.c.h.b16 %v756
        %v2133 = vunpack.c.l.b16 %v757
        %v2134 = vunpack.c.h.b16 %v757
        %v2135 = vunpack.c.l.b16 %v758
        %v2136 = vunpack.c.h.b16 %v758
        %v2137 = vunpack.c.l.b16 %v759
        %v2138 = vunpack.c.h.b16 %v759
        %v2139 = vunpack.c.l.b16 %v760
        %v2140 = vunpack.c.h.b16 %v760
        %v2141 = vunpack.c.l.b16 %v761
        %v2142 = vunpack.c.h.b16 %v761
        %v2143 = vunpack.c.l.b16 %v762
        %v2144 = vunpack.c.h.b16 %v762
        %v2145 = vunpack.c.l.b16 %v763
        %v2146 = vunpack.c.h.b16 %v763
        %v2147 = vunpack.c.l.b16 %v764
        %v2148 = vunpack.c.h.b16 %v764
        %v2149 = vunpack.c.l.b16 %v765
        %v2150 = vunpack.c.h.b16 %v765
        %v2151 = vunpack.c.l.b16 %v766
        %v2152 = vunpack.c.h.b16 %v766
        %v2153 = vunpack.c.l.b16 %v767
        %v2154 = vunpack.c.h.b16 %v767
        %v2155 = vunpack.c.l.b16 %v768
        %v2156 = vunpack.c.h.b16 %v768
        %v2157 = vunpack.c.l.b16 %v769
        %v2158 = vunpack.c.h.b16 %v769
        %v2159 = vunpack.c.l.b16 %v770
        %v2160 = vunpack.c.h.b16 %v770
        %v2161 = vunpack.c.l.b16 %v771
        %v2162 = vunpack.c.h.b16 %v771
        %v2163 = vunpack.c.l.b16 %v772
        %v2164 = vunpack.c.h.b16 %v772
        %v2165 = vunpack.c.l.b16 %v773
        %v2166 = vunpack.c.h.b16 %v773
        %v2167 = vunpack.c.l.b16 %v774
        %v2168 = vunpack.c.h.b16 %v774
        %v2169 = vunpack.c.l.b16 %v775
        %v2170 = vunpack.c.h.b16 %v775
        %v2171 = vunpack.c.l.b16 %v776
        %v2172 = vunpack.c.h.b16 %v776
        %v2173 = vunpack.c.l.b16 %v777
        %v2174 = vunpack.c.h.b16 %v777
        %v2175 = vunpack.c.l.b16 %v778
        %v2176 = vunpack.c.h.b16 %v778
        %v2177 = vunpack.c.l.b16 %v779
        %v2178 = vunpack.c.h.b16 %v779
        %v2179 = vunpack.c.l.b16 %v780
        %v2180 = vunpack.c.h.b16 %v780
        %v2181 = vunpack.c.l.b16 %v781
        %v2182 = vunpack.c.h.b16 %v781
        %v2183 = vunpack.c.l.b16 %v782
        %v2184 = vunpack.c.h.b16 %v782
        %v2185 = vunpack.c.l.b16 %v783
        %v2186 = vunpack.c.h.b16 %v783
        %v2187 = vunpack.c.l.b16 %v784
        %v2188 = vunpack.c.h.b16 %v784
        %v2189 = vunpack.c.l.b16 %v785
        %v2190 = vunpack.c.h.b16 %v785
        %v2191 = vunpack.c.l.b16 %v786
        %v2192 = vunpack.c.h.b16 %v786
        %v2193 = vunpack.c.l.b16 %v787
        %v2194 = vunpack.c.h.b16 %v787
        %v2195 = vunpack.c.l.b16 %v788
        %v2196 = vunpack.c.h.b16 %v788
        %v2197 = vunpack.c.l.b16 %v789
        %v2198 = vunpack.c.h.b16 %v789
        %v2199 = vunpack.c.l.b16 %v790
        %v2200 = vunpack.c.h.b16 %v790
        %v2201 = vunpack.c.l.b16 %v791
        %v2202 = vunpack.c.h.b16 %v791
        %v2203 = vunpack.c.l.b16 %v792
        %v2204 = vunpack.c.h.b16 %v792
        %v2205 = vunpack.c.l.b16 %v793
        %v2206 = vunpack.c.h.b16 %v793
        %v2207 = vunpack.c.l.b16 %v794
        %v2208 = vunpack.c.h.b16 %v794
        %v2209 = vunpack.c.l.b16 %v795
        %v2210 = vunpack.c.h.b16 %v795
        %v2211 = vunpack.c.l.b16 %v796
        %v2212 = vunpack.c.h.b16 %v796
        %v2213 = vunpack.c.l.b16 %v797
        %v2214 = vunpack.c.h.b16 %v797
        %v2215 = vunpack.c.l.b16 %v798
        %v2216 = vunpack.c.h.b16 %v798
        %v2217 = vunpack.c.l.b16 %v799
        %v2218 = vunpack.c.h.b16 %v799
        %v2219 = vunpack.c.l.b16 %v800
        %v2220 = vunpack.c.h.b16 %v800
        %v2221 = vunpack.c.l.b16 %v801
        %v2222 = vunpack.c.h.b16 %v801
        %v2223 = vunpack.c.l.b16 %v802
        %v2224 = vunpack.c.h.b16 %v802
        %v2225 = vunpack.c.l.b16 %v803
        %v2226 = vunpack.c.h.b16 %v803
        %v2227 = vunpack.c.l.b16 %v804
        %v2228 = vunpack.c.h.b16 %v804
        %v2229 = vunpack.c.l.b16 %v805
        %v2230 = vunpack.c.h.b16 %v805
        %v2231 = vunpack.c.l.b16 %v806
        %v2232 = vunpack.c.h.b16 %v806
        %v2233 = vunpack.c.l.b16 %v807
        %v2234 = vunpack.c.h.b16 %v807
        %v2235 = vunpack.c.l.b16 %v808
        %v2236 = vunpack.c.h.b16 %v808
        %v2237 = vunpack.c.l.b16 %v809
        %v2238 = vunpack.c.h.b16 %v809
        %v2239 = vunpack.c.l.b16 %v810
        %v2240 = vunpack.c.h.b16 %v810
        %v2241 = vunpack.c.l.b16 %v811
        %v2242 = vunpack.c.h.b16 %v811
        %v2243 = vunpack.c.l.b16 %v812
        %v2244 = vunpack.c.h.b16 %v812
        %v2245 = vunpack.c.l.b16 %v813
        %v2246 = vunpack.c.h.b16 %v813
        %v2247 = vunpack.c.l.b16 %v814
        %v2248 = vunpack.c.h.b16 %v814
        %v2249 = vunpack.c.l.b16 %v815
        %v2250 = vunpack.c.h.b16 %v815
        %v2251 = vunpack.c.l.b16 %v816
        %v2252 = vunpack.c.h.b16 %v816
        %v2253 = vunpack.c.l.b16 %v817
        %v2254 = vunpack.c.h.b16 %v817
        %v2255 = vunpack.c.l.b16 %v818
        %v2256 = vunpack.c.h.b16 %v818
        %v2257 = vunpack.c.l.b16 %v819
        %v2258 = vunpack.c.h.b16 %v819
        %v2259 = vunpack.c.l.b16 %v820
        %v2260 = vunpack.c.h.b16 %v820
        %v2261 = vunpack.c.l.b16 %v821
        %v2262 = vunpack.c.h.b16 %v821
        %v2263 = vunpack.c.l.b16 %v822
        %v2264 = vunpack.c.h.b16 %v822
        %v2265 = vunpack.c.l.b16 %v823
        %v2266 = vunpack.c.h.b16 %v823
        %v2267 = vunpack.c.l.b16 %v824
        %v2268 = vunpack.c.h.b16 %v824
        %v2269 = vunpack.c.l.b16 %v825
        %v2270 = vunpack.c.h.b16 %v825
        %v2271 = vunpack.c.l.b16 %v826
        %v2272 = vunpack.c.h.b16 %v826
        %v2273 = vunpack.c.l.b16 %v827
        %v2274 = vunpack.c.h.b16 %v827
        %v2275 = vunpack.c.l.b16 %v828
        %v2276 = vunpack.c.h.b16 %v828
        %v2277 = vunpack.c.l.b16 %v829
        %v2278 = vunpack.c.h.b16 %v829
        %v2279 = vunpack.c.l.b16 %v830
        %v2280 = vunpack.c.h.b16 %v830
        %v2281 = vunpack.c.l.b16 %v831
        %v2282 = vunpack.c.h.b16 %v831
        %v2283 = vunpack.c.l.b16 %v832
        %v2284 = vunpack.c.h.b16 %v832
        %v2285 = vunpack.c.l.b16 %v833
        %v2286 = vunpack.c.h.b16 %v833
        %v2287 = vunpack.c.l.b16 %v834
        %v2288 = vunpack.c.h.b16 %v834
        %v2289 = vunpack.c.l.b16 %v835
        %v2290 = vunpack.c.h.b16 %v835
        %v2291 = vunpack.c.l.b16 %v836
        %v2292 = vunpack.c.h.b16 %v836
        %v2293 = vunpack.c.l.b16 %v837
        %v2294 = vunpack.c.h.b16 %v837
        %v2295 = vunpack.c.l.b16 %v838
        %v2296 = vunpack.c.h.b16 %v838
        %v2297 = vunpack.c.l.b16 %v839
        %v2298 = vunpack.c.h.b16 %v839
        %v2299 = vunpack.c.l.b16 %v840
        %v2300 = vunpack.c.h.b16 %v840
        %v2301 = vunpack.c.l.b16 %v841
        %v2302 = vunpack.c.h.b16 %v841
        %v2303 = vunpack.c.l.b16 %v842
        %v2304 = vunpack.c.h.b16 %v842
        %v2305 = vunpack.c.l.b16 %v843
        %v2306 = vunpack.c.h.b16 %v843
        %v2307 = vunpack.c.l.b16 %v844
        %v2308 = vunpack.c.h.b16 %v844
        %v2309 = vunpack.c.l.b16 %v845
        %v2310 = vunpack.c.h.b16 %v845
        %v2311 = vunpack.c.l.b16 %v846
        %v2312 = vunpack.c.h.b16 %v846
        %v2313 = vunpack.c.l.b16 %v847
        %v2314 = vunpack.c.h.b16 %v847
        %v2315 = vunpack.c.l.b16 %v848
        %v2316 = vunpack.c.h.b16 %v848
        %v2317 = vunpack.c.l.b16 %v849
        %v2318 = vunpack.c.h.b16 %v849
        %v2319 = vunpack.c.l.b16 %v850
        %v2320 = vunpack.c.h.b16 %v850
        %v2321 = vunpack.c.l.b16 %v851
        %v2322 = vunpack.c.h.b16 %v851
        %v2323 = vunpack.c.l.b16 %v852
        %v2324 = vunpack.c.h.b16 %v852
        %v2325 = vunpack.c.l.b16 %v853
        %v2326 = vunpack.c.h.b16 %v853
        %v2327 = vunpack.c.l.b16 %v854
        %v2328 = vunpack.c.h.b16 %v854
        %v2329 = vunpack.c.l.b16 %v855
        %v2330 = vunpack.c.h.b16 %v855
        %v2331 = vunpack.c.l.b16 %v856
        %v2332 = vunpack.c.h.b16 %v856
        %v2333 = vunpack.c.l.b16 %v857
        %v2334 = vunpack.c.h.b16 %v857
        %v2335 = vunpack.c.l.b16 %v858
        %v2336 = vunpack.c.h.b16 %v858
        %v2337 = vunpack.c.l.b16 %v859
        %v2338 = vunpack.c.h.b16 %v859
        %v2339 = vunpack.c.l.b16 %v860
        %v2340 = vunpack.c.h.b16 %v860
        %v2341 = vunpack.c.l.b16 %v861
        %v2342 = vunpack.c.h.b16 %v861
        %v2343 = vunpack.c.l.b16 %v862
        %v2344 = vunpack.c.h.b16 %v862
        %v2345 = vunpack.c.l.b16 %v863
        %v2346 = vunpack.c.h.b16 %v863
        %v2347 = vunpack.c.l.b16 %v864
        %v2348 = vunpack.c.h.b16 %v864
        %v2349 = vunpack.c.l.b16 %v865
        %v2350 = vunpack.c.h.b16 %v865
        %v2351 = vunpack.c.l.b16 %v866
        %v2352 = vunpack.c.h.b16 %v866
        %v2353 = vunpack.c.l.b16 %v867
        %v2354 = vunpack.c.h.b16 %v867
        %v2355 = vunpack.c.l.b16 %v868
        %v2356 = vunpack.c.h.b16 %v868
        %v2357 = vunpack.c.l.b16 %v869
        %v2358 = vunpack.c.h.b16 %v869
        %v2359 = vunpack.c.l.b16 %v870
        %v2360 = vunpack.c.h.b16 %v870
        %v2361 = vunpack.c.l.b16 %v871
        %v2362 = vunpack.c.h.b16 %v871
        %v2363 = vunpack.c.l.b16 %v872
        %v2364 = vunpack.c.h.b16 %v872
        %v2365 = vunpack.c.l.b16 %v873
        %v2366 = vunpack.c.h.b16 %v873
        %v2367 = vunpack.c.l.b16 %v874
        %v2368 = vunpack.c.h.b16 %v874
        %v2369 = vunpack.c.l.b16 %v875
        %v2370 = vunpack.c.h.b16 %v875
        %v2371 = vunpack.c.l.b16 %v876
        %v2372 = vunpack.c.h.b16 %v876
        %v2373 = vunpack.c.l.b16 %v877
        %v2374 = vunpack.c.h.b16 %v877
        %v2375 = vunpack.c.l.b16 %v878
        %v2376 = vunpack.c.h.b16 %v878
        %v2377 = vunpack.c.l.b16 %v879
        %v2378 = vunpack.c.h.b16 %v879
        %v2379 = vunpack.c.l.b16 %v880
        %v2380 = vunpack.c.h.b16 %v880
        %v2381 = vunpack.c.l.b16 %v881
        %v2382 = vunpack.c.h.b16 %v881
        %v2383 = vunpack.c.l.b16 %v882
        %v2384 = vunpack.c.h.b16 %v882
        %v2385 = vunpack.c.l.b16 %v883
        %v2386 = vunpack.c.h.b16 %v883
        %v2387 = vunpack.c.l.b16 %v884
        %v2388 = vunpack.c.h.b16 %v884
        %v2389 = vunpack.c.l.b16 %v885
        %v2390 = vunpack.c.h.b16 %v885
        %v2391 = vunpack.c.l.b16 %v886
        %v2392 = vunpack.c.h.b16 %v886
        %v2393 = vunpack.c.l.b16 %v887
        %v2394 = vunpack.c.h.b16 %v887
        %v2395 = vunpack.c.l.b16 %v888
        %v2396 = vunpack.c.h.b16 %v888
        %v2397 = vunpack.c.l.b16 %v889
        %v2398 = vunpack.c.h.b16 %v889
        %v2399 = vunpack.c.l.b16 %v890
        %v2400 = vunpack.c.h.b16 %v890
        %v2401 = vunpack.c.l.b16 %v891
        %v2402 = vunpack.c.h.b16 %v891
        %v2403 = vunpack.c.l.b16 %v892
        %v2404 = vunpack.c.h.b16 %v892
        %v2405 = vunpack.c.l.b16 %v893
        %v2406 = vunpack.c.h.b16 %v893
        %v2407 = vunpack.c.l.b16 %v894
        %v2408 = vunpack.c.h.b16 %v894
        %v2409 = vunpack.c.l.b16 %v895
        %v2410 = vunpack.c.h.b16 %v895
        %v2411 = vunpack.c.l.b16 %v896
        %v2412 = vunpack.c.h.b16 %v896
        %v2413 = vunpack.c.l.b16 %v897
        %v2414 = vunpack.c.h.b16 %v897
        %v2415 = vunpack.c.l.b16 %v898
        %v2416 = vunpack.c.h.b16 %v898
        %v2417 = vunpack.c.l.b16 %v899
        %v2418 = vunpack.c.h.b16 %v899
        %v2419 = vunpack.c.l.b16 %v900
        %v2420 = vunpack.c.h.b16 %v900
        %v2421 = vunpack.c.l.b16 %v901
        %v2422 = vunpack.c.h.b16 %v901
        %v2423 = vunpack.c.l.b16 %v902
        %v2424 = vunpack.c.h.b16 %v902
        %v2425 = vunpack.c.l.b16 %v903
        %v2426 = vunpack.c.h.b16 %v903
        %v2427 = vunpack.c.l.b16 %v904
        %v2428 = vunpack.c.h.b16 %v904
        %v2429 = vunpack.c.l.b16 %v905
        %v2430 = vunpack.c.h.b16 %v905
        %v2431 = vunpack.c.l.b16 %v906
        %v2432 = vunpack.c.h.b16 %v906
        %v2433 = vunpack.c.l.b16 %v907
        %v2434 = vunpack.c.h.b16 %v907
        %v2435 = vunpack.c.l.b16 %v908
        %v2436 = vunpack.c.h.b16 %v908
        %v2437 = vunpack.c.l.b16 %v909
        %v2438 = vunpack.c.h.b16 %v909
        %v2439 = vunpack.c.l.b16 %v910
        %v2440 = vunpack.c.h.b16 %v910
        %v2441 = vunpack.c.l.b16 %v911
        %v2442 = vunpack.c.h.b16 %v911
        %v2443 = vunpack.c.l.b16 %v912
        %v2444 = vunpack.c.h.b16 %v912
        %v2445 = vunpack.c.l.b16 %v913
        %v2446 = vunpack.c.h.b16 %v913
        %v2447 = vunpack.c.l.b16 %v914
        %v2448 = vunpack.c.h.b16 %v914
        %v2449 = vunpack.c.l.b16 %v915
        %v2450 = vunpack.c.h.b16 %v915
        %v2451 = vunpack.c.l.b16 %v916
        %v2452 = vunpack.c.h.b16 %v916
        %v2453 = vunpack.c.l.b16 %v917
        %v2454 = vunpack.c.h.b16 %v917
        %v2455 = vunpack.c.l.b16 %v918
        %v2456 = vunpack.c.h.b16 %v918
        %v2457 = vunpack.c.l.b16 %v919
        %v2458 = vunpack.c.h.b16 %v919
        %v2459 = vunpack.c.l.b16 %v920
        %v2460 = vunpack.c.h.b16 %v920
        %v2461 = vunpack.c.l.b16 %v921
        %v2462 = vunpack.c.h.b16 %v921
        %v2463 = vunpack.c.l.b16 %v922
        %v2464 = vunpack.c.h.b16 %v922
        %v2465 = vunpack.c.l.b16 %v923
        %v2466 = vunpack.c.h.b16 %v923
        %v2467 = vunpack.c.l.b16 %v924
        %v2468 = vunpack.c.h.b16 %v924
        %v2469 = vunpack.c.l.b16 %v925
        %v2470 = vunpack.c.h.b16 %v925
        %v2471 = vunpack.c.l.b16 %v926
        %v2472 = vunpack.c.h.b16 %v926
        %v2473 = vunpack.c.l.b16 %v927
        %v2474 = vunpack.c.h.b16 %v927
        %v2475 = vunpack.c.l.b16 %v928
        %v2476 = vunpack.c.h.b16 %v928
        %v2477 = vunpack.c.l.b16 %v929
        %v2478 = vunpack.c.h.b16 %v929
        %v2479 = vunpack.c.l.b16 %v930
        %v2480 = vunpack.c.h.b16 %v930
        %v2481 = vunpack.c.l.b16 %v931
        %v2482 = vunpack.c.h.b16 %v931
        %v2483 = vunpack.c.l.b16 %v932
        %v2484 = vunpack.c.h.b16 %v932
        %v2485 = vunpack.c.l.b16 %v933
        %v2486 = vunpack.c.h.b16 %v933
        %v2487 = vunpack.c.l.b16 %v934
        %v2488 = vunpack.c.h.b16 %v934
        %v2489 = vunpack.c.l.b16 %v935
        %v2490 = vunpack.c.h.b16 %v935
        %v2491 = vunpack.c.l.b16 %v936
        %v2492 = vunpack.c.h.b16 %v936
        %v2493 = vunpack.c.l.b16 %v937
        %v2494 = vunpack.c.h.b16 %v937
        %v2495 = vunpack.c.l.b16 %v938
        %v2496 = vunpack.c.h.b16 %v938
        %v2497 = vunpack.c.l.b16 %v939
        %v2498 = vunpack.c.h.b16 %v939
        %v2499 = vunpack.c.l.b16 %v940
        %v2500 = vunpack.c.h.b16 %v940
        %v2501 = vunpack.c.l.b16 %v941
        %v2502 = vunpack.c.h.b16 %v941
        %v2503 = vunpack.c.l.b16 %v942
        %v2504 = vunpack.c.h.b16 %v942
        %v2505 = vunpack.c.l.b16 %v943
        %v2506 = vunpack.c.h.b16 %v943
        %v2507 = vunpack.c.l.b16 %v944
        %v2508 = vunpack.c.h.b16 %v944
        %v2509 = vpack.c.b16 %v1493, %v1485
        %v2510 = vpack.c.b16 %v1494, %v1486
        %v2511 = vpack.c.b16 %v1495, %v1487
        %v2512 = vpack.c.b16 %v1496, %v1488
        %v2513 = vpack.c.b16 %v1497, %v1489
        %v2514 = vpack.c.b16 %v1498, %v1490
        %v2515 = vpack.c.b16 %v1499, %v1491
        %v2516 = vpack.c.b16 %v1500, %v1492
        %v2517 = vpack.c.b16 %v1509, %v1501
        %v2518 = vpack.c.b16 %v1510, %v1502
        %v2519 = vpack.c.b16 %v1511, %v1503
        %v2520 = vpack.c.b16 %v1512, %v1504
        %v2521 = vpack.c.b16 %v1513, %v1505
        %v2522 = vpack.c.b16 %v1514, %v1506
        %v2523 = vpack.c.b16 %v1515, %v1507
        %v2524 = vpack.c.b16 %v1516, %v1508
        %v2525 = vpack.c.b16 %v1525, %v1517
        %v2526 = vpack.c.b16 %v1526, %v1518
        %v2527 = vpack.c.b16 %v1527, %v1519
        %v2528 = vpack.c.b16 %v1528, %v1520
        %v2529 = vpack.c.b16 %v1529, %v1521
        %v2530 = vpack.c.b16 %v1530, %v1522
        %v2531 = vpack.c.b16 %v1531, %v1523
        %v2532 = vpack.c.b16 %v1532, %v1524
        %v2533 = vpack.c.b16 %v1541, %v1533
        %v2534 = vpack.c.b16 %v1542, %v1534
        %v2535 = vpack.c.b16 %v1543, %v1535
        %v2536 = vpack.c.b16 %v1544, %v1536
        %v2537 = vpack.c.b16 %v1545, %v1537
        %v2538 = vpack.c.b16 %v1546, %v1538
        %v2539 = vpack.c.b16 %v1547, %v1539
        %v2540 = vpack.c.b16 %v1548, %v1540
        %v2541 = vpack.c.b16 %v1557, %v1549
        %v2542 = vpack.c.b16 %v1558, %v1550
        %v2543 = vpack.c.b16 %v1559, %v1551
        %v2544 = vpack.c.b16 %v1560, %v1552
        %v2545 = vpack.c.b16 %v1561, %v1553
        %v2546 = vpack.c.b16 %v1562, %v1554
        %v2547 = vpack.c.b16 %v1563, %v1555
        %v2548 = vpack.c.b16 %v1564, %v1556
        %v2549 = vpack.c.b16 %v1573, %v1565
        %v2550 = vpack.c.b16 %v1574, %v1566
        %v2551 = vpack.c.b16 %v1575, %v1567
        %v2552 = vpack.c.b16 %v1576, %v1568
        %v2553 = vpack.c.b16 %v1577, %v1569
        %v2554 = vpack.c.b16 %v1578, %v1570
        %v2555 = vpack.c.b16 %v1579, %v1571
        %v2556 = vpack.c.b16 %v1580, %v1572
        %v2557 = vpack.c.b16 %v1589, %v1581
        %v2558 = vpack.c.b16 %v1590, %v1582
        %v2559 = vpack.c.b16 %v1591, %v1583
        %v2560 = vpack.c.b16 %v1592, %v1584
        %v2561 = vpack.c.b16 %v1593, %v1585
        %v2562 = vpack.c.b16 %v1594, %v1586
        %v2563 = vpack.c.b16 %v1595, %v1587
        %v2564 = vpack.c.b16 %v1596, %v1588
        %v2565 = vpack.c.b16 %v1605, %v1597
        %v2566 = vpack.c.b16 %v1606, %v1598
        %v2567 = vpack.c.b16 %v1607, %v1599
        %v2568 = vpack.c.b16 %v1608, %v1600
        %v2569 = vpack.c.b16 %v1609, %v1601
        %v2570 = vpack.c.b16 %v1610, %v1602
        %v2571 = vpack.c.b16 %v1611, %v1603
        %v2572 = vpack.c.b16 %v1612, %v1604
        %v2573 = vpack.c.b16 %v1621, %v1613
        %v2574 = vpack.c.b16 %v1622, %v1614
        %v2575 = vpack.c.b16 %v1623, %v1615
        %v2576 = vpack.c.b16 %v1624, %v1616
        %v2577 = vpack.c.b16 %v1625, %v1617
        %v2578 = vpack.c.b16 %v1626, %v1618
        %v2579 = vpack.c.b16 %v1627, %v1619
        %v2580 = vpack.c.b16 %v1628, %v1620
        %v2581 = vpack.c.b16 %v1637, %v1629
        %v2582 = vpack.c.b16 %v1638, %v1630
        %v2583 = vpack.c.b16 %v1639, %v1631
        %v2584 = vpack.c.b16 %v1640, %v1632
        %v2585 = vpack.c.b16 %v1641, %v1633
        %v2586 = vpack.c.b16 %v1642, %v1634
        %v2587 = vpack.c.b16 %v1643, %v1635
        %v2588 = vpack.c.b16 %v1644, %v1636
        %v2589 = vpack.c.b16 %v1653, %v1645
        %v2590 = vpack.c.b16 %v1654, %v1646
        %v2591 = vpack.c.b16 %v1655, %v1647
        %v2592 = vpack.c.b16 %v1656, %v1648
        %v2593 = vpack.c.b16 %v1657, %v1649
        %v2594 = vpack.c.b16 %v1658, %v1650
        %v2595 = vpack.c.b16 %v1659, %v1651
        %v2596 = vpack.c.b16 %v1660, %v1652
        %v2597 = vpack.c.b16 %v1669, %v1661
        %v2598 = vpack.c.b16 %v1670, %v1662
        %v2599 = vpack.c.b16 %v1671, %v1663
        %v2600 = vpack.c.b16 %v1672, %v1664
        %v2601 = vpack.c.b16 %v1673, %v1665
        %v2602 = vpack.c.b16 %v1674, %v1666
        %v2603 = vpack.c.b16 %v1675, %v1667
        %v2604 = vpack.c.b16 %v1676, %v1668
        %v2605 = vpack.c.b16 %v1685, %v1677
        %v2606 = vpack.c.b16 %v1686, %v1678
        %v2607 = vpack.c.b16 %v1687, %v1679
        %v2608 = vpack.c.b16 %v1688, %v1680
        %v2609 = vpack.c.b16 %v1689, %v1681
        %v2610 = vpack.c.b16 %v1690, %v1682
        %v2611 = vpack.c.b16 %v1691, %v1683
        %v2612 = vpack.c.b16 %v1692, %v1684
        %v2613 = vpack.c.b16 %v1701, %v1693
        %v2614 = vpack.c.b16 %v1702, %v1694
        %v2615 = vpack.c.b16 %v1703, %v1695
        %v2616 = vpack.c.b16 %v1704, %v1696
        %v2617 = vpack.c.b16 %v1705, %v1697
        %v2618 = vpack.c.b16 %v1706, %v1698
        %v2619 = vpack.c.b16 %v1707, %v1699
        %v2620 = vpack.c.b16 %v1708, %v1700
        %v2621 = vpack.c.b16 %v1717, %v1709
        %v2622 = vpack.c.b16 %v1718, %v1710
        %v2623 = vpack.c.b16 %v1719, %v1711
        %v2624 = vpack.c.b16 %v1720, %v1712
        %v2625 = vpack.c.b16 %v1721, %v1713
        %v2626 = vpack.c.b16 %v1722, %v1714
        %v2627 = vpack.c.b16 %v1723, %v1715
        %v2628 = vpack.c.b16 %v1724, %v1716
        %v2629 = vpack.c.b16 %v1733, %v1725
        %v2630 = vpack.c.b16 %v1734, %v1726
        %v2631 = vpack.c.b16 %v1735, %v1727
        %v2632 = vpack.c.b16 %v1736, %v1728
        %v2633 = vpack.c.b16 %v1737, %v1729
        %v2634 = vpack.c.b16 %v1738, %v1730
        %v2635 = vpack.c.b16 %v1739, %v1731
        %v2636 = vpack.c.b16 %v1740, %v1732
        %v2637 = vpack.c.b16 %v1749, %v1741
        %v2638 = vpack.c.b16 %v1750, %v1742
        %v2639 = vpack.c.b16 %v1751, %v1743
        %v2640 = vpack.c.b16 %v1752, %v1744
        %v2641 = vpack.c.b16 %v1753, %v1745
        %v2642 = vpack.c.b16 %v1754, %v1746
        %v2643 = vpack.c.b16 %v1755, %v1747
        %v2644 = vpack.c.b16 %v1756, %v1748
        %v2645 = vpack.c.b16 %v1765, %v1757
        %v2646 = vpack.c.b16 %v1766, %v1758
        %v2647 = vpack.c.b16 %v1767, %v1759
        %v2648 = vpack.c.b16 %v1768, %v1760
        %v2649 = vpack.c.b16 %v1769, %v1761
        %v2650 = vpack.c.b16 %v1770, %v1762
        %v2651 = vpack.c.b16 %v1771, %v1763
        %v2652 = vpack.c.b16 %v1772, %v1764
        %v2653 = vpack.c.b16 %v1781, %v1773
        %v2654 = vpack.c.b16 %v1782, %v1774
        %v2655 = vpack.c.b16 %v1783, %v1775
        %v2656 = vpack.c.b16 %v1784, %v1776
        %v2657 = vpack.c.b16 %v1785, %v1777
        %v2658 = vpack.c.b16 %v1786, %v1778
        %v2659 = vpack.c.b16 %v1787, %v1779
        %v2660 = vpack.c.b16 %v1788, %v1780
        %v2661 = vpack.c.b16 %v1797, %v1789
        %v2662 = vpack.c.b16 %v1798, %v1790
        %v2663 = vpack.c.b16 %v1799, %v1791
        %v2664 = vpack.c.b16 %v1800, %v1792
        %v2665 = vpack.c.b16 %v1801, %v1793
        %v2666 = vpack.c.b16 %v1802, %v1794
        %v2667 = vpack.c.b16 %v1803, %v1795
        %v2668 = vpack.c.b16 %v1804, %v1796
        %v2669 = vpack.c.b16 %v1813, %v1805
        %v2670 = vpack.c.b16 %v1814, %v1806
        %v2671 = vpack.c.b16 %v1815, %v1807
        %v2672 = vpack.c.b16 %v1816, %v1808
        %v2673 = vpack.c.b16 %v1817, %v1809
        %v2674 = vpack.c.b16 %v1818, %v1810
        %v2675 = vpack.c.b16 %v1819, %v1811
        %v2676 = vpack.c.b16 %v1820, %v1812
        %v2677 = vpack.c.b16 %v1829, %v1821
        %v2678 = vpack.c.b16 %v1830, %v1822
        %v2679 = vpack.c.b16 %v1831, %v1823
        %v2680 = vpack.c.b16 %v1832, %v1824
        %v2681 = vpack.c.b16 %v1833, %v1825
        %v2682 = vpack.c.b16 %v1834, %v1826
        %v2683 = vpack.c.b16 %v1835, %v1827
        %v2684 = vpack.c.b16 %v1836, %v1828
        %v2685 = vpack.c.b16 %v1845, %v1837
        %v2686 = vpack.c.b16 %v1846, %v1838
        %v2687 = vpack.c.b16 %v1847, %v1839
        %v2688 = vpack.c.b16 %v1848, %v1840
        %v2689 = vpack.c.b16 %v1849, %v1841
        %v2690 = vpack.c.b16 %v1850, %v1842
        %v2691 = vpack.c.b16 %v1851, %v1843
        %v2692 = vpack.c.b16 %v1852, %v1844
        %v2693 = vpack.c.b16 %v1861, %v1853
        %v2694 = vpack.c.b16 %v1862, %v1854
        %v2695 = vpack.c.b16 %v1863, %v1855
        %v2696 = vpack.c.b16 %v1864, %v1856
        %v2697 = vpack.c.b16 %v1865, %v1857
        %v2698 = vpack.c.b16 %v1866, %v1858
        %v2699 = vpack.c.b16 %v1867, %v1859
        %v2700 = vpack.c.b16 %v1868, %v1860
        %v2701 = vpack.c.b16 %v1877, %v1869
        %v2702 = vpack.c.b16 %v1878, %v1870
        %v2703 = vpack.c.b16 %v1879, %v1871
        %v2704 = vpack.c.b16 %v1880, %v1872
        %v2705 = vpack.c.b16 %v1881, %v1873
        %v2706 = vpack.c.b16 %v1882, %v1874
        %v2707 = vpack.c.b16 %v1883, %v1875
        %v2708 = vpack.c.b16 %v1884, %v1876
        %v2709 = vpack.c.b16 %v1893, %v1885
        %v2710 = vpack.c.b16 %v1894, %v1886
        %v2711 = vpack.c.b16 %v1895, %v1887
        %v2712 = vpack.c.b16 %v1896, %v1888
        %v2713 = vpack.c.b16 %v1897, %v1889
        %v2714 = vpack.c.b16 %v1898, %v1890
        %v2715 = vpack.c.b16 %v1899, %v1891
        %v2716 = vpack.c.b16 %v1900, %v1892
        %v2717 = vpack.c.b16 %v1909, %v1901
        %v2718 = vpack.c.b16 %v1910, %v1902
        %v2719 = vpack.c.b16 %v1911, %v1903
        %v2720 = vpack.c.b16 %v1912, %v1904
        %v2721 = vpack.c.b16 %v1913, %v1905
        %v2722 = vpack.c.b16 %v1914, %v1906
        %v2723 = vpack.c.b16 %v1915, %v1907
        %v2724 = vpack.c.b16 %v1916, %v1908
        %v2725 = vpack.c.b16 %v1925, %v1917
        %v2726 = vpack.c.b16 %v1926, %v1918
        %v2727 = vpack.c.b16 %v1927, %v1919
        %v2728 = vpack.c.b16 %v1928, %v1920
        %v2729 = vpack.c.b16 %v1929, %v1921
        %v2730 = vpack.c.b16 %v1930, %v1922
        %v2731 = vpack.c.b16 %v1931, %v1923
        %v2732 = vpack.c.b16 %v1932, %v1924
        %v2733 = vpack.c.b16 %v1941, %v1933
        %v2734 = vpack.c.b16 %v1942, %v1934
        %v2735 = vpack.c.b16 %v1943, %v1935
        %v2736 = vpack.c.b16 %v1944, %v1936
        %v2737 = vpack.c.b16 %v1945, %v1937
        %v2738 = vpack.c.b16 %v1946, %v1938
        %v2739 = vpack.c.b16 %v1947, %v1939
        %v2740 = vpack.c.b16 %v1948, %v1940
        %v2741 = vpack.c.b16 %v1957, %v1949
        %v2742 = vpack.c.b16 %v1958, %v1950
        %v2743 = vpack.c.b16 %v1959, %v1951
        %v2744 = vpack.c.b16 %v1960, %v1952
        %v2745 = vpack.c.b16 %v1961, %v1953
        %v2746 = vpack.c.b16 %v1962, %v1954
        %v2747 = vpack.c.b16 %v1963, %v1955
        %v2748 = vpack.c.b16 %v1964, %v1956
        %v2749 = vpack.c.b16 %v1973, %v1965
        %v2750 = vpack.c.b16 %v1974, %v1966
        %v2751 = vpack.c.b16 %v1975, %v1967
        %v2752 = vpack.c.b16 %v1976, %v1968
        %v2753 = vpack.c.b16 %v1977, %v1969
        %v2754 = vpack.c.b16 %v1978, %v1970
        %v2755 = vpack.c.b16 %v1979, %v1971
        %v2756 = vpack.c.b16 %v1980, %v1972
        %v2757 = vpack.c.b16 %v1989, %v1981
        %v2758 = vpack.c.b16 %v1990, %v1982
        %v2759 = vpack.c.b16 %v1991, %v1983
        %v2760 = vpack.c.b16 %v1992, %v1984
        %v2761 = vpack.c.b16 %v1993, %v1985
        %v2762 = vpack.c.b16 %v1994, %v1986
        %v2763 = vpack.c.b16 %v1995, %v1987
        %v2764 = vpack.c.b16 %v1996, %v1988
        %v2765 = vpack.c.b16 %v2005, %v1997
        %v2766 = vpack.c.b16 %v2006, %v1998
        %v2767 = vpack.c.b16 %v2007, %v1999
        %v2768 = vpack.c.b16 %v2008, %v2000
        %v2769 = vpack.c.b16 %v2009, %v2001
        %v2770 = vpack.c.b16 %v2010, %v2002
        %v2771 = vpack.c.b16 %v2011, %v2003
        %v2772 = vpack.c.b16 %v2012, %v2004
        %v2773 = vpack.c.b16 %v2021, %v2013
        %v2774 = vpack.c.b16 %v2022, %v2014
        %v2775 = vpack.c.b16 %v2023, %v2015
        %v2776 = vpack.c.b16 %v2024, %v2016
        %v2777 = vpack.c.b16 %v2025, %v2017
        %v2778 = vpack.c.b16 %v2026, %v2018
        %v2779 = vpack.c.b16 %v2027, %v2019
        %v2780 = vpack.c.b16 %v2028, %v2020
        %v2781 = vpack.c.b16 %v2037, %v2029
        %v2782 = vpack.c.b16 %v2038, %v2030
        %v2783 = vpack.c.b16 %v2039, %v2031
        %v2784 = vpack.c.b16 %v2040, %v2032
        %v2785 = vpack.c.b16 %v2041, %v2033
        %v2786 = vpack.c.b16 %v2042, %v2034
        %v2787 = vpack.c.b16 %v2043, %v2035
        %v2788 = vpack.c.b16 %v2044, %v2036
        %v2789 = vpack.c.b16 %v2053, %v2045
        %v2790 = vpack.c.b16 %v2054, %v2046
        %v2791 = vpack.c.b16 %v2055, %v2047
        %v2792 = vpack.c.b16 %v2056, %v2048
        %v2793 = vpack.c.b16 %v2057, %v2049
        %v2794 = vpack.c.b16 %v2058, %v2050
        %v2795 = vpack.c.b16 %v2059, %v2051
        %v2796 = vpack.c.b16 %v2060, %v2052
        %v2797 = vpack.c.b16 %v2069, %v2061
        %v2798 = vpack.c.b16 %v2070, %v2062
        %v2799 = vpack.c.b16 %v2071, %v2063
        %v2800 = vpack.c.b16 %v2072, %v2064
        %v2801 = vpack.c.b16 %v2073, %v2065
        %v2802 = vpack.c.b16 %v2074, %v2066
        %v2803 = vpack.c.b16 %v2075, %v2067
        %v2804 = vpack.c.b16 %v2076, %v2068
        %v2805 = vpack.c.b16 %v2085, %v2077
        %v2806 = vpack.c.b16 %v2086, %v2078
        %v2807 = vpack.c.b16 %v2087, %v2079
        %v2808 = vpack.c.b16 %v2088, %v2080
        %v2809 = vpack.c.b16 %v2089, %v2081
        %v2810 = vpack.c.b16 %v2090, %v2082
        %v2811 = vpack.c.b16 %v2091, %v2083
        %v2812 = vpack.c.b16 %v2092, %v2084
        %v2813 = vpack.c.b16 %v2101, %v2093
        %v2814 = vpack.c.b16 %v2102, %v2094
        %v2815 = vpack.c.b16 %v2103, %v2095
        %v2816 = vpack.c.b16 %v2104, %v2096
        %v2817 = vpack.c.b16 %v2105, %v2097
        %v2818 = vpack.c.b16 %v2106, %v2098
        %v2819 = vpack.c.b16 %v2107, %v2099
        %v2820 = vpack.c.b16 %v2108, %v2100
        %v2821 = vpack.c.b16 %v2117, %v2109
        %v2822 = vpack.c.b16 %v2118, %v2110
        %v2823 = vpack.c.b16 %v2119, %v2111
        %v2824 = vpack.c.b16 %v2120, %v2112
        %v2825 = vpack.c.b16 %v2121, %v2113
        %v2826 = vpack.c.b16 %v2122, %v2114
        %v2827 = vpack.c.b16 %v2123, %v2115
        %v2828 = vpack.c.b16 %v2124, %v2116
        %v2829 = vpack.c.b16 %v2133, %v2125
        %v2830 = vpack.c.b16 %v2134, %v2126
        %v2831 = vpack.c.b16 %v2135, %v2127
        %v2832 = vpack.c.b16 %v2136, %v2128
        %v2833 = vpack.c.b16 %v2137, %v2129
        %v2834 = vpack.c.b16 %v2138, %v2130
        %v2835 = vpack.c.b16 %v2139, %v2131
        %v2836 = vpack.c.b16 %v2140, %v2132
        %v2837 = vpack.c.b16 %v2149, %v2141
        %v2838 = vpack.c.b16 %v2150, %v2142
        %v2839 = vpack.c.b16 %v2151, %v2143
        %v2840 = vpack.c.b16 %v2152, %v2144
        %v2841 = vpack.c.b16 %v2153, %v2145
        %v2842 = vpack.c.b16 %v2154, %v2146
        %v2843 = vpack.c.b16 %v2155, %v2147
        %v2844 = vpack.c.b16 %v2156, %v2148
        %v2845 = vpack.c.b16 %v2165, %v2157
        %v2846 = vpack.c.b16 %v2166, %v2158
        %v2847 = vpack.c.b16 %v2167, %v2159
        %v2848 = vpack.c.b16 %v2168, %v2160
        %v2849 = vpack.c.b16 %v2169, %v2161
        %v2850 = vpack.c.b16 %v2170, %v2162
        %v2851 = vpack.c.b16 %v2171, %v2163
        %v2852 = vpack.c.b16 %v2172, %v2164
        %v2853 = vpack.c.b16 %v2181, %v2173
        %v2854 = vpack.c.b16 %v2182, %v2174
        %v2855 = vpack.c.b16 %v2183, %v2175
        %v2856 = vpack.c.b16 %v2184, %v2176
        %v2857 = vpack.c.b16 %v2185, %v2177
        %v2858 = vpack.c.b16 %v2186, %v2178
        %v2859 = vpack.c.b16 %v2187, %v2179
        %v2860 = vpack.c.b16 %v2188, %v2180
        %v2861 = vpack.c.b16 %v2197, %v2189
        %v2862 = vpack.c.b16 %v2198, %v2190
        %v2863 = vpack.c.b16 %v2199, %v2191
        %v2864 = vpack.c.b16 %v2200, %v2192
        %v2865 = vpack.c.b16 %v2201, %v2193
        %v2866 = vpack.c.b16 %v2202, %v2194
        %v2867 = vpack.c.b16 %v2203, %v2195
        %v2868 = vpack.c.b16 %v2204, %v2196
        %v2869 = vpack.c.b16 %v2213, %v2205
        %v2870 = vpack.c.b16 %v2214, %v2206
        %v2871 = vpack.c.b16 %v2215, %v2207
        %v2872 = vpack.c.b16 %v2216, %v2208
        %v2873 = vpack.c.b16 %v2217, %v2209
        %v2874 = vpack.c.b16 %v2218, %v2210
        %v2875 = vpack.c.b16 %v2219, %v2211
        %v2876 = vpack.c.b16 %v2220, %v2212
        %v2877 = vpack.c.b16 %v2229, %v2221
        %v2878 = vpack.c.b16 %v2230, %v2222
        %v2879 = vpack.c.b16 %v2231, %v2223
        %v2880 = vpack.c.b16 %v2232, %v2224
        %v2881 = vpack.c.b16 %v2233, %v2225
        %v2882 = vpack.c.b16 %v2234, %v2226
        %v2883 = vpack.c.b16 %v2235, %v2227
        %v2884 = vpack.c.b16 %v2236, %v2228
        %v2885 = vpack.c.b16 %v2245, %v2237
        %v2886 = vpack.c.b16 %v2246, %v2238
        %v2887 = vpack.c.b16 %v2247, %v2239
        %v2888 = vpack.c.b16 %v2248, %v2240
        %v2889 = vpack.c.b16 %v2249, %v2241
        %v2890 = vpack.c.b16 %v2250, %v2242
        %v2891 = vpack.c.b16 %v2251, %v2243
        %v2892 = vpack.c.b16 %v2252, %v2244
        %v2893 = vpack.c.b16 %v2261, %v2253
        %v2894 = vpack.c.b16 %v2262, %v2254
        %v2895 = vpack.c.b16 %v2263, %v2255
        %v2896 = vpack.c.b16 %v2264, %v2256
        %v2897 = vpack.c.b16 %v2265, %v2257
        %v2898 = vpack.c.b16 %v2266, %v2258
        %v2899 = vpack.c.b16 %v2267, %v2259
        %v2900 = vpack.c.b16 %v2268, %v2260
        %v2901 = vpack.c.b16 %v2277, %v2269
        %v2902 = vpack.c.b16 %v2278, %v2270
        %v2903 = vpack.c.b16 %v2279, %v2271
        %v2904 = vpack.c.b16 %v2280, %v2272
        %v2905 = vpack.c.b16 %v2281, %v2273
        %v2906 = vpack.c.b16 %v2282, %v2274
        %v2907 = vpack.c.b16 %v2283, %v2275
        %v2908 = vpack.c.b16 %v2284, %v2276
        %v2909 = vpack.c.b16 %v2293, %v2285
        %v2910 = vpack.c.b16 %v2294, %v2286
        %v2911 = vpack.c.b16 %v2295, %v2287
        %v2912 = vpack.c.b16 %v2296, %v2288
        %v2913 = vpack.c.b16 %v2297, %v2289
        %v2914 = vpack.c.b16 %v2298, %v2290
        %v2915 = vpack.c.b16 %v2299, %v2291
        %v2916 = vpack.c.b16 %v2300, %v2292
        %v2917 = vpack.c.b16 %v2309, %v2301
        %v2918 = vpack.c.b16 %v2310, %v2302
        %v2919 = vpack.c.b16 %v2311, %v2303
        %v2920 = vpack.c.b16 %v2312, %v2304
        %v2921 = vpack.c.b16 %v2313, %v2305
        %v2922 = vpack.c.b16 %v2314, %v2306
        %v2923 = vpack.c.b16 %v2315, %v2307
        %v2924 = vpack.c.b16 %v2316, %v2308
        %v2925 = vpack.c.b16 %v2325, %v2317
        %v2926 = vpack.c.b16 %v2326, %v2318
        %v2927 = vpack.c.b16 %v2327, %v2319
        %v2928 = vpack.c.b16 %v2328, %v2320
        %v2929 = vpack.c.b16 %v2329, %v2321
        %v2930 = vpack.c.b16 %v2330, %v2322
        %v2931 = vpack.c.b16 %v2331, %v2323
        %v2932 = vpack.c.b16 %v2332, %v2324
        %v2933 = vpack.c.b16 %v2341, %v2333
        %v2934 = vpack.c.b16 %v2342, %v2334
        %v2935 = vpack.c.b16 %v2343, %v2335
        %v2936 = vpack.c.b16 %v2344, %v2336
        %v2937 = vpack.c.b16 %v2345, %v2337
        %v2938 = vpack.c.b16 %v2346, %v2338
        %v2939 = vpack.c.b16 %v2347, %v2339
        %v2940 = vpack.c.b16 %v2348, %v2340
        %v2941 = vpack.c.b16 %v2357, %v2349
        %v2942 = vpack.c.b16 %v2358, %v2350
        %v2943 = vpack.c.b16 %v2359, %v2351
        %v2944 = vpack.c.b16 %v2360, %v2352
        %v2945 = vpack.c.b16 %v2361, %v2353
        %v2946 = vpack.c.b16 %v2362, %v2354
        %v2947 = vpack.c.b16 %v2363, %v2355
        %v2948 = vpack.c.b16 %v2364, %v2356
        %v2949 = vpack.c.b16 %v2373, %v2365
        %v2950 = vpack.c.b16 %v2374, %v2366
        %v2951 = vpack.c.b16 %v2375, %v2367
        %v2952 = vpack.c.b16 %v2376, %v2368
        %v2953 = vpack.c.b16 %v2377, %v2369
        %v2954 = vpack.c.b16 %v2378, %v2370
        %v2955 = vpack.c.b16 %v2379, %v2371
        %v2956 = vpack.c.b16 %v2380, %v2372
        %v2957 = vpack.c.b16 %v2389, %v2381
        %v2958 = vpack.c.b16 %v2390, %v2382
        %v2959 = vpack.c.b16 %v2391, %v2383
        %v2960 = vpack.c.b16 %v2392, %v2384
        %v2961 = vpack.c.b16 %v2393, %v2385
        %v2962 = vpack.c.b16 %v2394, %v2386
        %v2963 = vpack.c.b16 %v2395, %v2387
        %v2964 = vpack.c.b16 %v2396, %v2388
        %v2965 = vpack.c.b16 %v2405, %v2397
        %v2966 = vpack.c.b16 %v2406, %v2398
        %v2967 = vpack.c.b16 %v2407, %v2399
        %v2968 = vpack.c.b16 %v2408, %v2400
        %v2969 = vpack.c.b16 %v2409, %v2401
        %v2970 = vpack.c.b16 %v2410, %v2402
        %v2971 = vpack.c.b16 %v2411, %v2403
        %v2972 = vpack.c.b16 %v2412, %v2404
        %v2973 = vpack.c.b16 %v2421, %v2413
        %v2974 = vpack.c.b16 %v2422, %v2414
        %v2975 = vpack.c.b16 %v2423, %v2415
        %v2976 = vpack.c.b16 %v2424, %v2416
        %v2977 = vpack.c.b16 %v2425, %v2417
        %v2978 = vpack.c.b16 %v2426, %v2418
        %v2979 = vpack.c.b16 %v2427, %v2419
        %v2980 = vpack.c.b16 %v2428, %v2420
        %v2981 = vpack.c.b16 %v2437, %v2429
        %v2982 = vpack.c.b16 %v2438, %v2430
        %v2983 = vpack.c.b16 %v2439, %v2431
        %v2984 = vpack.c.b16 %v2440, %v2432
        %v2985 = vpack.c.b16 %v2441, %v2433
        %v2986 = vpack.c.b16 %v2442, %v2434
        %v2987 = vpack.c.b16 %v2443, %v2435
        %v2988 = vpack.c.b16 %v2444, %v2436
        %v2989 = vpack.c.b16 %v2453, %v2445
        %v2990 = vpack.c.b16 %v2454, %v2446
        %v2991 = vpack.c.b16 %v2455, %v2447
        %v2992 = vpack.c.b16 %v2456, %v2448
        %v2993 = vpack.c.b16 %v2457, %v2449
        %v2994 = vpack.c.b16 %v2458, %v2450
        %v2995 = vpack.c.b16 %v2459, %v2451
        %v2996 = vpack.c.b16 %v2460, %v2452
        %v2997 = vpack.c.b16 %v2469, %v2461
        %v2998 = vpack.c.b16 %v2470, %v2462
        %v2999 = vpack.c.b16 %v2471, %v2463
        %v3000 = vpack.c.b16 %v2472, %v2464
        %v3001 = vpack.c.b16 %v2473, %v2465
        %v3002 = vpack.c.b16 %v2474, %v2466
        %v3003 = vpack.c.b16 %v2475, %v2467
        %v3004 = vpack.c.b16 %v2476, %v2468
        %v3005 = vpack.c.b16 %v2485, %v2477
        %v3006 = vpack.c.b16 %v2486, %v2478
        %v3007 = vpack.c.b16 %v2487, %v2479
        %v3008 = vpack.c.b16 %v2488, %v2480
        %v3009 = vpack.c.b16 %v2489, %v2481
        %v3010 = vpack.c.b16 %v2490, %v2482
        %v3011 = vpack.c.b16 %v2491, %v2483
        %v3012 = vpack.c.b16 %v2492, %v2484
        %v3013 = vpack.c.b16 %v2501, %v2493
        %v3014 = vpack.c.b16 %v2502, %v2494
        %v3015 = vpack.c.b16 %v2503, %v2495
        %v3016 = vpack.c.b16 %v2504, %v2496
        %v3017 = vpack.c.b16 %v2505, %v2497
        %v3018 = vpack.c.b16 %v2506, %v2498
        %v3019 = vpack.c.b16 %v2507, %v2499
        %v3020 = vpack.c.b16 %v2508, %v2500
        %3533 = vmatpush.bf16.msra.mxu0 %v2565
        %3534 = vmatpush.bf16.msra.mxu0 %v2557
        %3535 = vmatpush.bf16.msra.mxu0 %v2549
        %3536 = vmatpush.bf16.msra.mxu0 %v2541
        %3537 = vmatpush.bf16.msra.mxu0 %v2533
        %3538 = vmatpush.bf16.msra.mxu0 %v2525
        %3539 = vmatpush.bf16.msra.mxu0 %v2517
        %3540 = vmatpush.bf16.msra.mxu0 %v2509
        %3541 = vmatmul.bf16.gmra.mxu0 %v957
        %v3542 = vpop.f32.mrf.mxu0
        %v3543 = vadd.f32 0.0, %v3542
        %v3544 = vpop.f32.mrf.mxu0
        %3545 = vdwg.mxu0
        %3546 = vmatpush.bf16.msra.mxu0 %v2629
        %3547 = vmatpush.bf16.msra.mxu0 %v2621
        %3548 = vmatpush.bf16.msra.mxu0 %v2613
        %3549 = vmatpush.bf16.msra.mxu0 %v2605
        %3550 = vmatpush.bf16.msra.mxu0 %v2597
        %3551 = vmatpush.bf16.msra.mxu0 %v2589
        %3552 = vmatpush.bf16.msra.mxu0 %v2581
        %3553 = vmatpush.bf16.msra.mxu0 %v2573
        %3554 = vmatmul.bf16.gmra.mxu0 %v958
        %v3555 = vpop.f32.mrf.mxu0
        %v3556 = vadd.f32 %v3543, %v3555
        %v3557 = vpop.f32.mrf.mxu0
        %3558 = vdwg.mxu0
        %3559 = vmatpush.bf16.msra.mxu0 %v2693
        %3560 = vmatpush.bf16.msra.mxu0 %v2685
        %3561 = vmatpush.bf16.msra.mxu0 %v2677
        %3562 = vmatpush.bf16.msra.mxu0 %v2669
        %3563 = vmatpush.bf16.msra.mxu0 %v2661
        %3564 = vmatpush.bf16.msra.mxu0 %v2653
        %3565 = vmatpush.bf16.msra.mxu0 %v2645
        %3566 = vmatpush.bf16.msra.mxu0 %v2637
        %3567 = vmatmul.bf16.gmra.mxu0 %v959
        %v3568 = vpop.f32.mrf.mxu0
        %v3569 = vadd.f32 %v3556, %v3568
        %v3570 = vpop.f32.mrf.mxu0
        %3571 = vdwg.mxu0
        %3572 = vmatpush.bf16.msra.mxu0 %v2757
        %3573 = vmatpush.bf16.msra.mxu0 %v2749
        %3574 = vmatpush.bf16.msra.mxu0 %v2741
        %3575 = vmatpush.bf16.msra.mxu0 %v2733
        %3576 = vmatpush.bf16.msra.mxu0 %v2725
        %3577 = vmatpush.bf16.msra.mxu0 %v2717
        %3578 = vmatpush.bf16.msra.mxu0 %v2709
        %3579 = vmatpush.bf16.msra.mxu0 %v2701
        %3580 = vmatmul.bf16.gmra.mxu0 %v960
        %v3581 = vpop.f32.mrf.mxu0
        %v3582 = vadd.f32 %v3569, %v3581
        %v3583 = vpop.f32.mrf.mxu0
        %3584 = vdwg.mxu0
        %3585 = vmatpush.bf16.msra.mxu0 %v2821
        %3586 = vmatpush.bf16.msra.mxu0 %v2813
        %3587 = vmatpush.bf16.msra.mxu0 %v2805
        %3588 = vmatpush.bf16.msra.mxu0 %v2797
        %3589 = vmatpush.bf16.msra.mxu0 %v2789
        %3590 = vmatpush.bf16.msra.mxu0 %v2781
        %3591 = vmatpush.bf16.msra.mxu0 %v2773
        %3592 = vmatpush.bf16.msra.mxu0 %v2765
        %3593 = vmatmul.bf16.gmra.mxu0 %v961
        %v3594 = vpop.f32.mrf.mxu0
        %v3595 = vadd.f32 %v3582, %v3594
        %v3596 = vpop.f32.mrf.mxu0
        %3597 = vdwg.mxu0
        %3598 = vmatpush.bf16.msra.mxu0 %v2885
        %3599 = vmatpush.bf16.msra.mxu0 %v2877
        %3600 = vmatpush.bf16.msra.mxu0 %v2869
        %3601 = vmatpush.bf16.msra.mxu0 %v2861
        %3602 = vmatpush.bf16.msra.mxu0 %v2853
        %3603 = vmatpush.bf16.msra.mxu0 %v2845
        %3604 = vmatpush.bf16.msra.mxu0 %v2837
        %3605 = vmatpush.bf16.msra.mxu0 %v2829
        %3606 = vmatmul.bf16.gmra.mxu0 %v962
        %v3607 = vpop.f32.mrf.mxu0
        %v3608 = vadd.f32 %v3595, %v3607
        %v3609 = vpop.f32.mrf.mxu0
        %3610 = vdwg.mxu0
        %3611 = vmatpush.bf16.msra.mxu0 %v2949
        %3612 = vmatpush.bf16.msra.mxu0 %v2941
        %3613 = vmatpush.bf16.msra.mxu0 %v2933
        %3614 = vmatpush.bf16.msra.mxu0 %v2925
        %3615 = vmatpush.bf16.msra.mxu0 %v2917
        %3616 = vmatpush.bf16.msra.mxu0 %v2909
        %3617 = vmatpush.bf16.msra.mxu0 %v2901
        %3618 = vmatpush.bf16.msra.mxu0 %v2893
        %3619 = vmatmul.bf16.gmra.mxu0 %v963
        %v3620 = vpop.f32.mrf.mxu0
        %v3621 = vadd.f32 %v3608, %v3620
        %v3622 = vpop.f32.mrf.mxu0
        %3623 = vdwg.mxu0
        %3624 = vmatpush.bf16.msra.mxu0 %v3013
        %3625 = vmatpush.bf16.msra.mxu0 %v3005
        %3626 = vmatpush.bf16.msra.mxu0 %v2997
        %3627 = vmatpush.bf16.msra.mxu0 %v2989
        %3628 = vmatpush.bf16.msra.mxu0 %v2981
        %3629 = vmatpush.bf16.msra.mxu0 %v2973
        %3630 = vmatpush.bf16.msra.mxu0 %v2965
        %3631 = vmatpush.bf16.msra.mxu0 %v2957
        %3632 = vmatmul.bf16.gmra.mxu0 %v964
        %v3633 = vpop.f32.mrf.mxu0
        %v3634 = vadd.f32 %v3621, %v3633
        %v3635 = vpop.f32.mrf.mxu0
        %3636 = vdwg.mxu0
        %3637 = vmatpush.bf16.msra.mxu0 %v2566
        %3638 = vmatpush.bf16.msra.mxu0 %v2558
        %3639 = vmatpush.bf16.msra.mxu0 %v2550
        %3640 = vmatpush.bf16.msra.mxu0 %v2542
        %3641 = vmatpush.bf16.msra.mxu0 %v2534
        %3642 = vmatpush.bf16.msra.mxu0 %v2526
        %3643 = vmatpush.bf16.msra.mxu0 %v2518
        %3644 = vmatpush.bf16.msra.mxu0 %v2510
        %3645 = vmatmul.bf16.gmra.mxu0 %v957
        %v3646 = vpop.f32.mrf.mxu0
        %v3647 = vadd.f32 0.0, %v3646
        %v3648 = vpop.f32.mrf.mxu0
        %3649 = vdwg.mxu0
        %3650 = vmatpush.bf16.msra.mxu0 %v2630
        %3651 = vmatpush.bf16.msra.mxu0 %v2622
        %3652 = vmatpush.bf16.msra.mxu0 %v2614
        %3653 = vmatpush.bf16.msra.mxu0 %v2606
        %3654 = vmatpush.bf16.msra.mxu0 %v2598
        %3655 = vmatpush.bf16.msra.mxu0 %v2590
        %3656 = vmatpush.bf16.msra.mxu0 %v2582
        %3657 = vmatpush.bf16.msra.mxu0 %v2574
        %3658 = vmatmul.bf16.gmra.mxu0 %v958
        %v3659 = vpop.f32.mrf.mxu0
        %v3660 = vadd.f32 %v3647, %v3659
        %v3661 = vpop.f32.mrf.mxu0
        %3662 = vdwg.mxu0
        %3663 = vmatpush.bf16.msra.mxu0 %v2694
        %3664 = vmatpush.bf16.msra.mxu0 %v2686
        %3665 = vmatpush.bf16.msra.mxu0 %v2678
        %3666 = vmatpush.bf16.msra.mxu0 %v2670
        %3667 = vmatpush.bf16.msra.mxu0 %v2662
        %3668 = vmatpush.bf16.msra.mxu0 %v2654
        %3669 = vmatpush.bf16.msra.mxu0 %v2646
        %3670 = vmatpush.bf16.msra.mxu0 %v2638
        %3671 = vmatmul.bf16.gmra.mxu0 %v959
        %v3672 = vpop.f32.mrf.mxu0
        %v3673 = vadd.f32 %v3660, %v3672
        %v3674 = vpop.f32.mrf.mxu0
        %3675 = vdwg.mxu0
        %3676 = vmatpush.bf16.msra.mxu0 %v2758
        %3677 = vmatpush.bf16.msra.mxu0 %v2750
        %3678 = vmatpush.bf16.msra.mxu0 %v2742
        %3679 = vmatpush.bf16.msra.mxu0 %v2734
        %3680 = vmatpush.bf16.msra.mxu0 %v2726
        %3681 = vmatpush.bf16.msra.mxu0 %v2718
        %3682 = vmatpush.bf16.msra.mxu0 %v2710
        %3683 = vmatpush.bf16.msra.mxu0 %v2702
        %3684 = vmatmul.bf16.gmra.mxu0 %v960
        %v3685 = vpop.f32.mrf.mxu0
        %v3686 = vadd.f32 %v3673, %v3685
        %v3687 = vpop.f32.mrf.mxu0
        %3688 = vdwg.mxu0
        %3689 = vmatpush.bf16.msra.mxu0 %v2822
        %3690 = vmatpush.bf16.msra.mxu0 %v2814
        %3691 = vmatpush.bf16.msra.mxu0 %v2806
        %3692 = vmatpush.bf16.msra.mxu0 %v2798
        %3693 = vmatpush.bf16.msra.mxu0 %v2790
        %3694 = vmatpush.bf16.msra.mxu0 %v2782
        %3695 = vmatpush.bf16.msra.mxu0 %v2774
        %3696 = vmatpush.bf16.msra.mxu0 %v2766
        %3697 = vmatmul.bf16.gmra.mxu0 %v961
        %v3698 = vpop.f32.mrf.mxu0
        %v3699 = vadd.f32 %v3686, %v3698
        %v3700 = vpop.f32.mrf.mxu0
        %3701 = vdwg.mxu0
        %3702 = vmatpush.bf16.msra.mxu0 %v2886
        %3703 = vmatpush.bf16.msra.mxu0 %v2878
        %3704 = vmatpush.bf16.msra.mxu0 %v2870
        %3705 = vmatpush.bf16.msra.mxu0 %v2862
        %3706 = vmatpush.bf16.msra.mxu0 %v2854
        %3707 = vmatpush.bf16.msra.mxu0 %v2846
        %3708 = vmatpush.bf16.msra.mxu0 %v2838
        %3709 = vmatpush.bf16.msra.mxu0 %v2830
        %3710 = vmatmul.bf16.gmra.mxu0 %v962
        %v3711 = vpop.f32.mrf.mxu0
        %v3712 = vadd.f32 %v3699, %v3711
        %v3713 = vpop.f32.mrf.mxu0
        %3714 = vdwg.mxu0
        %3715 = vmatpush.bf16.msra.mxu0 %v2950
        %3716 = vmatpush.bf16.msra.mxu0 %v2942
        %3717 = vmatpush.bf16.msra.mxu0 %v2934
        %3718 = vmatpush.bf16.msra.mxu0 %v2926
        %3719 = vmatpush.bf16.msra.mxu0 %v2918
        %3720 = vmatpush.bf16.msra.mxu0 %v2910
        %3721 = vmatpush.bf16.msra.mxu0 %v2902
        %3722 = vmatpush.bf16.msra.mxu0 %v2894
        %3723 = vmatmul.bf16.gmra.mxu0 %v963
        %v3724 = vpop.f32.mrf.mxu0
        %v3725 = vadd.f32 %v3712, %v3724
        %v3726 = vpop.f32.mrf.mxu0
        %3727 = vdwg.mxu0
        %3728 = vmatpush.bf16.msra.mxu0 %v3014
        %3729 = vmatpush.bf16.msra.mxu0 %v3006
        %3730 = vmatpush.bf16.msra.mxu0 %v2998
        %3731 = vmatpush.bf16.msra.mxu0 %v2990
        %3732 = vmatpush.bf16.msra.mxu0 %v2982
        %3733 = vmatpush.bf16.msra.mxu0 %v2974
        %3734 = vmatpush.bf16.msra.mxu0 %v2966
        %3735 = vmatpush.bf16.msra.mxu0 %v2958
        %3736 = vmatmul.bf16.gmra.mxu0 %v964
        %v3737 = vpop.f32.mrf.mxu0
        %v3738 = vadd.f32 %v3725, %v3737
        %v3739 = vpop.f32.mrf.mxu0
        %3740 = vdwg.mxu0
        %3741 = vmatpush.bf16.msra.mxu0 %v2567
        %3742 = vmatpush.bf16.msra.mxu0 %v2559
        %3743 = vmatpush.bf16.msra.mxu0 %v2551
        %3744 = vmatpush.bf16.msra.mxu0 %v2543
        %3745 = vmatpush.bf16.msra.mxu0 %v2535
        %3746 = vmatpush.bf16.msra.mxu0 %v2527
        %3747 = vmatpush.bf16.msra.mxu0 %v2519
        %3748 = vmatpush.bf16.msra.mxu0 %v2511
        %3749 = vmatmul.bf16.gmra.mxu0 %v957
        %v3750 = vpop.f32.mrf.mxu0
        %v3751 = vadd.f32 0.0, %v3750
        %v3752 = vpop.f32.mrf.mxu0
        %3753 = vdwg.mxu0
        %3754 = vmatpush.bf16.msra.mxu0 %v2631
        %3755 = vmatpush.bf16.msra.mxu0 %v2623
        %3756 = vmatpush.bf16.msra.mxu0 %v2615
        %3757 = vmatpush.bf16.msra.mxu0 %v2607
        %3758 = vmatpush.bf16.msra.mxu0 %v2599
        %3759 = vmatpush.bf16.msra.mxu0 %v2591
        %3760 = vmatpush.bf16.msra.mxu0 %v2583
        %3761 = vmatpush.bf16.msra.mxu0 %v2575
        %3762 = vmatmul.bf16.gmra.mxu0 %v958
        %v3763 = vpop.f32.mrf.mxu0
        %v3764 = vadd.f32 %v3751, %v3763
        %v3765 = vpop.f32.mrf.mxu0
        %3766 = vdwg.mxu0
        %3767 = vmatpush.bf16.msra.mxu0 %v2695
        %3768 = vmatpush.bf16.msra.mxu0 %v2687
        %3769 = vmatpush.bf16.msra.mxu0 %v2679
        %3770 = vmatpush.bf16.msra.mxu0 %v2671
        %3771 = vmatpush.bf16.msra.mxu0 %v2663
        %3772 = vmatpush.bf16.msra.mxu0 %v2655
        %3773 = vmatpush.bf16.msra.mxu0 %v2647
        %3774 = vmatpush.bf16.msra.mxu0 %v2639
        %3775 = vmatmul.bf16.gmra.mxu0 %v959
        %v3776 = vpop.f32.mrf.mxu0
        %v3777 = vadd.f32 %v3764, %v3776
        %v3778 = vpop.f32.mrf.mxu0
        %3779 = vdwg.mxu0
        %3780 = vmatpush.bf16.msra.mxu0 %v2759
        %3781 = vmatpush.bf16.msra.mxu0 %v2751
        %3782 = vmatpush.bf16.msra.mxu0 %v2743
        %3783 = vmatpush.bf16.msra.mxu0 %v2735
        %3784 = vmatpush.bf16.msra.mxu0 %v2727
        %3785 = vmatpush.bf16.msra.mxu0 %v2719
        %3786 = vmatpush.bf16.msra.mxu0 %v2711
        %3787 = vmatpush.bf16.msra.mxu0 %v2703
        %3788 = vmatmul.bf16.gmra.mxu0 %v960
        %v3789 = vpop.f32.mrf.mxu0
        %v3790 = vadd.f32 %v3777, %v3789
        %v3791 = vpop.f32.mrf.mxu0
        %3792 = vdwg.mxu0
        %3793 = vmatpush.bf16.msra.mxu0 %v2823
        %3794 = vmatpush.bf16.msra.mxu0 %v2815
        %3795 = vmatpush.bf16.msra.mxu0 %v2807
        %3796 = vmatpush.bf16.msra.mxu0 %v2799
        %3797 = vmatpush.bf16.msra.mxu0 %v2791
        %3798 = vmatpush.bf16.msra.mxu0 %v2783
        %3799 = vmatpush.bf16.msra.mxu0 %v2775
        %3800 = vmatpush.bf16.msra.mxu0 %v2767
        %3801 = vmatmul.bf16.gmra.mxu0 %v961
        %v3802 = vpop.f32.mrf.mxu0
        %v3803 = vadd.f32 %v3790, %v3802
        %v3804 = vpop.f32.mrf.mxu0
        %3805 = vdwg.mxu0
        %3806 = vmatpush.bf16.msra.mxu0 %v2887
        %3807 = vmatpush.bf16.msra.mxu0 %v2879
        %3808 = vmatpush.bf16.msra.mxu0 %v2871
        %3809 = vmatpush.bf16.msra.mxu0 %v2863
        %3810 = vmatpush.bf16.msra.mxu0 %v2855
        %3811 = vmatpush.bf16.msra.mxu0 %v2847
        %3812 = vmatpush.bf16.msra.mxu0 %v2839
        %3813 = vmatpush.bf16.msra.mxu0 %v2831
        %3814 = vmatmul.bf16.gmra.mxu0 %v962
        %v3815 = vpop.f32.mrf.mxu0
        %v3816 = vadd.f32 %v3803, %v3815
        %v3817 = vpop.f32.mrf.mxu0
        %3818 = vdwg.mxu0
        %3819 = vmatpush.bf16.msra.mxu0 %v2951
        %3820 = vmatpush.bf16.msra.mxu0 %v2943
        %3821 = vmatpush.bf16.msra.mxu0 %v2935
        %3822 = vmatpush.bf16.msra.mxu0 %v2927
        %3823 = vmatpush.bf16.msra.mxu0 %v2919
        %3824 = vmatpush.bf16.msra.mxu0 %v2911
        %3825 = vmatpush.bf16.msra.mxu0 %v2903
        %3826 = vmatpush.bf16.msra.mxu0 %v2895
        %3827 = vmatmul.bf16.gmra.mxu0 %v963
        %v3828 = vpop.f32.mrf.mxu0
        %v3829 = vadd.f32 %v3816, %v3828
        %v3830 = vpop.f32.mrf.mxu0
        %3831 = vdwg.mxu0
        %3832 = vmatpush.bf16.msra.mxu0 %v3015
        %3833 = vmatpush.bf16.msra.mxu0 %v3007
        %3834 = vmatpush.bf16.msra.mxu0 %v2999
        %3835 = vmatpush.bf16.msra.mxu0 %v2991
        %3836 = vmatpush.bf16.msra.mxu0 %v2983
        %3837 = vmatpush.bf16.msra.mxu0 %v2975
        %3838 = vmatpush.bf16.msra.mxu0 %v2967
        %3839 = vmatpush.bf16.msra.mxu0 %v2959
        %3840 = vmatmul.bf16.gmra.mxu0 %v964
        %v3841 = vpop.f32.mrf.mxu0
        %v3842 = vadd.f32 %v3829, %v3841
        %v3843 = vpop.f32.mrf.mxu0
        %3844 = vdwg.mxu0
        %3845 = vmatpush.bf16.msra.mxu0 %v2568
        %3846 = vmatpush.bf16.msra.mxu0 %v2560
        %3847 = vmatpush.bf16.msra.mxu0 %v2552
        %3848 = vmatpush.bf16.msra.mxu0 %v2544
        %3849 = vmatpush.bf16.msra.mxu0 %v2536
        %3850 = vmatpush.bf16.msra.mxu0 %v2528
        %3851 = vmatpush.bf16.msra.mxu0 %v2520
        %3852 = vmatpush.bf16.msra.mxu0 %v2512
        %3853 = vmatmul.bf16.gmra.mxu0 %v957
        %v3854 = vpop.f32.mrf.mxu0
        %v3855 = vadd.f32 0.0, %v3854
        %v3856 = vpop.f32.mrf.mxu0
        %3857 = vdwg.mxu0
        %3858 = vmatpush.bf16.msra.mxu0 %v2632
        %3859 = vmatpush.bf16.msra.mxu0 %v2624
        %3860 = vmatpush.bf16.msra.mxu0 %v2616
        %3861 = vmatpush.bf16.msra.mxu0 %v2608
        %3862 = vmatpush.bf16.msra.mxu0 %v2600
        %3863 = vmatpush.bf16.msra.mxu0 %v2592
        %3864 = vmatpush.bf16.msra.mxu0 %v2584
        %3865 = vmatpush.bf16.msra.mxu0 %v2576
        %3866 = vmatmul.bf16.gmra.mxu0 %v958
        %v3867 = vpop.f32.mrf.mxu0
        %v3868 = vadd.f32 %v3855, %v3867
        %v3869 = vpop.f32.mrf.mxu0
        %3870 = vdwg.mxu0
        %3871 = vmatpush.bf16.msra.mxu0 %v2696
        %3872 = vmatpush.bf16.msra.mxu0 %v2688
        %3873 = vmatpush.bf16.msra.mxu0 %v2680
        %3874 = vmatpush.bf16.msra.mxu0 %v2672
        %3875 = vmatpush.bf16.msra.mxu0 %v2664
        %3876 = vmatpush.bf16.msra.mxu0 %v2656
        %3877 = vmatpush.bf16.msra.mxu0 %v2648
        %3878 = vmatpush.bf16.msra.mxu0 %v2640
        %3879 = vmatmul.bf16.gmra.mxu0 %v959
        %v3880 = vpop.f32.mrf.mxu0
        %v3881 = vadd.f32 %v3868, %v3880
        %v3882 = vpop.f32.mrf.mxu0
        %3883 = vdwg.mxu0
        %3884 = vmatpush.bf16.msra.mxu0 %v2760
        %3885 = vmatpush.bf16.msra.mxu0 %v2752
        %3886 = vmatpush.bf16.msra.mxu0 %v2744
        %3887 = vmatpush.bf16.msra.mxu0 %v2736
        %3888 = vmatpush.bf16.msra.mxu0 %v2728
        %3889 = vmatpush.bf16.msra.mxu0 %v2720
        %3890 = vmatpush.bf16.msra.mxu0 %v2712
        %3891 = vmatpush.bf16.msra.mxu0 %v2704
        %3892 = vmatmul.bf16.gmra.mxu0 %v960
        %v3893 = vpop.f32.mrf.mxu0
        %v3894 = vadd.f32 %v3881, %v3893
        %v3895 = vpop.f32.mrf.mxu0
        %3896 = vdwg.mxu0
        %3897 = vmatpush.bf16.msra.mxu0 %v2824
        %3898 = vmatpush.bf16.msra.mxu0 %v2816
        %3899 = vmatpush.bf16.msra.mxu0 %v2808
        %3900 = vmatpush.bf16.msra.mxu0 %v2800
        %3901 = vmatpush.bf16.msra.mxu0 %v2792
        %3902 = vmatpush.bf16.msra.mxu0 %v2784
        %3903 = vmatpush.bf16.msra.mxu0 %v2776
        %3904 = vmatpush.bf16.msra.mxu0 %v2768
        %3905 = vmatmul.bf16.gmra.mxu0 %v961
        %v3906 = vpop.f32.mrf.mxu0
        %v3907 = vadd.f32 %v3894, %v3906
        %v3908 = vpop.f32.mrf.mxu0
        %3909 = vdwg.mxu0
        %3910 = vmatpush.bf16.msra.mxu0 %v2888
        %3911 = vmatpush.bf16.msra.mxu0 %v2880
        %3912 = vmatpush.bf16.msra.mxu0 %v2872
        %3913 = vmatpush.bf16.msra.mxu0 %v2864
        %3914 = vmatpush.bf16.msra.mxu0 %v2856
        %3915 = vmatpush.bf16.msra.mxu0 %v2848
        %3916 = vmatpush.bf16.msra.mxu0 %v2840
        %3917 = vmatpush.bf16.msra.mxu0 %v2832
        %3918 = vmatmul.bf16.gmra.mxu0 %v962
        %v3919 = vpop.f32.mrf.mxu0
        %v3920 = vadd.f32 %v3907, %v3919
        %v3921 = vpop.f32.mrf.mxu0
        %3922 = vdwg.mxu0
        %3923 = vmatpush.bf16.msra.mxu0 %v2952
        %3924 = vmatpush.bf16.msra.mxu0 %v2944
        %3925 = vmatpush.bf16.msra.mxu0 %v2936
        %3926 = vmatpush.bf16.msra.mxu0 %v2928
        %3927 = vmatpush.bf16.msra.mxu0 %v2920
        %3928 = vmatpush.bf16.msra.mxu0 %v2912
        %3929 = vmatpush.bf16.msra.mxu0 %v2904
        %3930 = vmatpush.bf16.msra.mxu0 %v2896
        %3931 = vmatmul.bf16.gmra.mxu0 %v963
        %v3932 = vpop.f32.mrf.mxu0
        %v3933 = vadd.f32 %v3920, %v3932
        %v3934 = vpop.f32.mrf.mxu0
        %3935 = vdwg.mxu0
        %3936 = vmatpush.bf16.msra.mxu0 %v3016
        %3937 = vmatpush.bf16.msra.mxu0 %v3008
        %3938 = vmatpush.bf16.msra.mxu0 %v3000
        %3939 = vmatpush.bf16.msra.mxu0 %v2992
        %3940 = vmatpush.bf16.msra.mxu0 %v2984
        %3941 = vmatpush.bf16.msra.mxu0 %v2976
        %3942 = vmatpush.bf16.msra.mxu0 %v2968
        %3943 = vmatpush.bf16.msra.mxu0 %v2960
        %3944 = vmatmul.bf16.gmra.mxu0 %v964
        %v3945 = vpop.f32.mrf.mxu0
        %v3946 = vadd.f32 %v3933, %v3945
        %v3947 = vpop.f32.mrf.mxu0
        %3948 = vdwg.mxu0
        %3949 = vmatpush.bf16.msra.mxu0 %v2569
        %3950 = vmatpush.bf16.msra.mxu0 %v2561
        %3951 = vmatpush.bf16.msra.mxu0 %v2553
        %3952 = vmatpush.bf16.msra.mxu0 %v2545
        %3953 = vmatpush.bf16.msra.mxu0 %v2537
        %3954 = vmatpush.bf16.msra.mxu0 %v2529
        %3955 = vmatpush.bf16.msra.mxu0 %v2521
        %3956 = vmatpush.bf16.msra.mxu0 %v2513
        %3957 = vmatmul.bf16.gmra.mxu0 %v957
        %v3958 = vpop.f32.mrf.mxu0
        %v3959 = vadd.f32 0.0, %v3958
        %v3960 = vpop.f32.mrf.mxu0
        %3961 = vdwg.mxu0
        %3962 = vmatpush.bf16.msra.mxu0 %v2633
        %3963 = vmatpush.bf16.msra.mxu0 %v2625
        %3964 = vmatpush.bf16.msra.mxu0 %v2617
        %3965 = vmatpush.bf16.msra.mxu0 %v2609
        %3966 = vmatpush.bf16.msra.mxu0 %v2601
        %3967 = vmatpush.bf16.msra.mxu0 %v2593
        %3968 = vmatpush.bf16.msra.mxu0 %v2585
        %3969 = vmatpush.bf16.msra.mxu0 %v2577
        %3970 = vmatmul.bf16.gmra.mxu0 %v958
        %v3971 = vpop.f32.mrf.mxu0
        %v3972 = vadd.f32 %v3959, %v3971
        %v3973 = vpop.f32.mrf.mxu0
        %3974 = vdwg.mxu0
        %3975 = vmatpush.bf16.msra.mxu0 %v2697
        %3976 = vmatpush.bf16.msra.mxu0 %v2689
        %3977 = vmatpush.bf16.msra.mxu0 %v2681
        %3978 = vmatpush.bf16.msra.mxu0 %v2673
        %3979 = vmatpush.bf16.msra.mxu0 %v2665
        %3980 = vmatpush.bf16.msra.mxu0 %v2657
        %3981 = vmatpush.bf16.msra.mxu0 %v2649
        %3982 = vmatpush.bf16.msra.mxu0 %v2641
        %3983 = vmatmul.bf16.gmra.mxu0 %v959
        %v3984 = vpop.f32.mrf.mxu0
        %v3985 = vadd.f32 %v3972, %v3984
        %v3986 = vpop.f32.mrf.mxu0
        %3987 = vdwg.mxu0
        %3988 = vmatpush.bf16.msra.mxu0 %v2761
        %3989 = vmatpush.bf16.msra.mxu0 %v2753
        %3990 = vmatpush.bf16.msra.mxu0 %v2745
        %3991 = vmatpush.bf16.msra.mxu0 %v2737
        %3992 = vmatpush.bf16.msra.mxu0 %v2729
        %3993 = vmatpush.bf16.msra.mxu0 %v2721
        %3994 = vmatpush.bf16.msra.mxu0 %v2713
        %3995 = vmatpush.bf16.msra.mxu0 %v2705
        %3996 = vmatmul.bf16.gmra.mxu0 %v960
        %v3997 = vpop.f32.mrf.mxu0
        %v3998 = vadd.f32 %v3985, %v3997
        %v3999 = vpop.f32.mrf.mxu0
        %4000 = vdwg.mxu0
        %4001 = vmatpush.bf16.msra.mxu0 %v2825
        %4002 = vmatpush.bf16.msra.mxu0 %v2817
        %4003 = vmatpush.bf16.msra.mxu0 %v2809
        %4004 = vmatpush.bf16.msra.mxu0 %v2801
        %4005 = vmatpush.bf16.msra.mxu0 %v2793
        %4006 = vmatpush.bf16.msra.mxu0 %v2785
        %4007 = vmatpush.bf16.msra.mxu0 %v2777
        %4008 = vmatpush.bf16.msra.mxu0 %v2769
        %4009 = vmatmul.bf16.gmra.mxu0 %v961
        %v4010 = vpop.f32.mrf.mxu0
        %v4011 = vadd.f32 %v3998, %v4010
        %v4012 = vpop.f32.mrf.mxu0
        %4013 = vdwg.mxu0
        %4014 = vmatpush.bf16.msra.mxu0 %v2889
        %4015 = vmatpush.bf16.msra.mxu0 %v2881
        %4016 = vmatpush.bf16.msra.mxu0 %v2873
        %4017 = vmatpush.bf16.msra.mxu0 %v2865
        %4018 = vmatpush.bf16.msra.mxu0 %v2857
        %4019 = vmatpush.bf16.msra.mxu0 %v2849
        %4020 = vmatpush.bf16.msra.mxu0 %v2841
        %4021 = vmatpush.bf16.msra.mxu0 %v2833
        %4022 = vmatmul.bf16.gmra.mxu0 %v962
        %v4023 = vpop.f32.mrf.mxu0
        %v4024 = vadd.f32 %v4011, %v4023
        %v4025 = vpop.f32.mrf.mxu0
        %4026 = vdwg.mxu0
        %4027 = vmatpush.bf16.msra.mxu0 %v2953
        %4028 = vmatpush.bf16.msra.mxu0 %v2945
        %4029 = vmatpush.bf16.msra.mxu0 %v2937
        %4030 = vmatpush.bf16.msra.mxu0 %v2929
        %4031 = vmatpush.bf16.msra.mxu0 %v2921
        %4032 = vmatpush.bf16.msra.mxu0 %v2913
        %4033 = vmatpush.bf16.msra.mxu0 %v2905
        %4034 = vmatpush.bf16.msra.mxu0 %v2897
        %4035 = vmatmul.bf16.gmra.mxu0 %v963
        %v4036 = vpop.f32.mrf.mxu0
        %v4037 = vadd.f32 %v4024, %v4036
        %v4038 = vpop.f32.mrf.mxu0
        %4039 = vdwg.mxu0
        %4040 = vmatpush.bf16.msra.mxu0 %v3017
        %4041 = vmatpush.bf16.msra.mxu0 %v3009
        %4042 = vmatpush.bf16.msra.mxu0 %v3001
        %4043 = vmatpush.bf16.msra.mxu0 %v2993
        %4044 = vmatpush.bf16.msra.mxu0 %v2985
        %4045 = vmatpush.bf16.msra.mxu0 %v2977
        %4046 = vmatpush.bf16.msra.mxu0 %v2969
        %4047 = vmatpush.bf16.msra.mxu0 %v2961
        %4048 = vmatmul.bf16.gmra.mxu0 %v964
        %v4049 = vpop.f32.mrf.mxu0
        %v4050 = vadd.f32 %v4037, %v4049
        %v4051 = vpop.f32.mrf.mxu0
        %4052 = vdwg.mxu0
        %4053 = vmatpush.bf16.msra.mxu0 %v2570
        %4054 = vmatpush.bf16.msra.mxu0 %v2562
        %4055 = vmatpush.bf16.msra.mxu0 %v2554
        %4056 = vmatpush.bf16.msra.mxu0 %v2546
        %4057 = vmatpush.bf16.msra.mxu0 %v2538
        %4058 = vmatpush.bf16.msra.mxu0 %v2530
        %4059 = vmatpush.bf16.msra.mxu0 %v2522
        %4060 = vmatpush.bf16.msra.mxu0 %v2514
        %4061 = vmatmul.bf16.gmra.mxu0 %v957
        %v4062 = vpop.f32.mrf.mxu0
        %v4063 = vadd.f32 0.0, %v4062
        %v4064 = vpop.f32.mrf.mxu0
        %4065 = vdwg.mxu0
        %4066 = vmatpush.bf16.msra.mxu0 %v2634
        %4067 = vmatpush.bf16.msra.mxu0 %v2626
        %4068 = vmatpush.bf16.msra.mxu0 %v2618
        %4069 = vmatpush.bf16.msra.mxu0 %v2610
        %4070 = vmatpush.bf16.msra.mxu0 %v2602
        %4071 = vmatpush.bf16.msra.mxu0 %v2594
        %4072 = vmatpush.bf16.msra.mxu0 %v2586
        %4073 = vmatpush.bf16.msra.mxu0 %v2578
        %4074 = vmatmul.bf16.gmra.mxu0 %v958
        %v4075 = vpop.f32.mrf.mxu0
        %v4076 = vadd.f32 %v4063, %v4075
        %v4077 = vpop.f32.mrf.mxu0
        %4078 = vdwg.mxu0
        %4079 = vmatpush.bf16.msra.mxu0 %v2698
        %4080 = vmatpush.bf16.msra.mxu0 %v2690
        %4081 = vmatpush.bf16.msra.mxu0 %v2682
        %4082 = vmatpush.bf16.msra.mxu0 %v2674
        %4083 = vmatpush.bf16.msra.mxu0 %v2666
        %4084 = vmatpush.bf16.msra.mxu0 %v2658
        %4085 = vmatpush.bf16.msra.mxu0 %v2650
        %4086 = vmatpush.bf16.msra.mxu0 %v2642
        %4087 = vmatmul.bf16.gmra.mxu0 %v959
        %v4088 = vpop.f32.mrf.mxu0
        %v4089 = vadd.f32 %v4076, %v4088
        %v4090 = vpop.f32.mrf.mxu0
        %4091 = vdwg.mxu0
        %4092 = vmatpush.bf16.msra.mxu0 %v2762
        %4093 = vmatpush.bf16.msra.mxu0 %v2754
        %4094 = vmatpush.bf16.msra.mxu0 %v2746
        %4095 = vmatpush.bf16.msra.mxu0 %v2738
        %4096 = vmatpush.bf16.msra.mxu0 %v2730
        %4097 = vmatpush.bf16.msra.mxu0 %v2722
        %4098 = vmatpush.bf16.msra.mxu0 %v2714
        %4099 = vmatpush.bf16.msra.mxu0 %v2706
        %4100 = vmatmul.bf16.gmra.mxu0 %v960
        %v4101 = vpop.f32.mrf.mxu0
        %v4102 = vadd.f32 %v4089, %v4101
        %v4103 = vpop.f32.mrf.mxu0
        %4104 = vdwg.mxu0
        %4105 = vmatpush.bf16.msra.mxu0 %v2826
        %4106 = vmatpush.bf16.msra.mxu0 %v2818
        %4107 = vmatpush.bf16.msra.mxu0 %v2810
        %4108 = vmatpush.bf16.msra.mxu0 %v2802
        %4109 = vmatpush.bf16.msra.mxu0 %v2794
        %4110 = vmatpush.bf16.msra.mxu0 %v2786
        %4111 = vmatpush.bf16.msra.mxu0 %v2778
        %4112 = vmatpush.bf16.msra.mxu0 %v2770
        %4113 = vmatmul.bf16.gmra.mxu0 %v961
        %v4114 = vpop.f32.mrf.mxu0
        %v4115 = vadd.f32 %v4102, %v4114
        %v4116 = vpop.f32.mrf.mxu0
        %4117 = vdwg.mxu0
        %4118 = vmatpush.bf16.msra.mxu0 %v2890
        %4119 = vmatpush.bf16.msra.mxu0 %v2882
        %4120 = vmatpush.bf16.msra.mxu0 %v2874
        %4121 = vmatpush.bf16.msra.mxu0 %v2866
        %4122 = vmatpush.bf16.msra.mxu0 %v2858
        %4123 = vmatpush.bf16.msra.mxu0 %v2850
        %4124 = vmatpush.bf16.msra.mxu0 %v2842
        %4125 = vmatpush.bf16.msra.mxu0 %v2834
        %4126 = vmatmul.bf16.gmra.mxu0 %v962
        %v4127 = vpop.f32.mrf.mxu0
        %v4128 = vadd.f32 %v4115, %v4127
        %v4129 = vpop.f32.mrf.mxu0
        %4130 = vdwg.mxu0
        %4131 = vmatpush.bf16.msra.mxu0 %v2954
        %4132 = vmatpush.bf16.msra.mxu0 %v2946
        %4133 = vmatpush.bf16.msra.mxu0 %v2938
        %4134 = vmatpush.bf16.msra.mxu0 %v2930
        %4135 = vmatpush.bf16.msra.mxu0 %v2922
        %4136 = vmatpush.bf16.msra.mxu0 %v2914
        %4137 = vmatpush.bf16.msra.mxu0 %v2906
        %4138 = vmatpush.bf16.msra.mxu0 %v2898
        %4139 = vmatmul.bf16.gmra.mxu0 %v963
        %v4140 = vpop.f32.mrf.mxu0
        %v4141 = vadd.f32 %v4128, %v4140
        %v4142 = vpop.f32.mrf.mxu0
        %4143 = vdwg.mxu0
        %4144 = vmatpush.bf16.msra.mxu0 %v3018
        %4145 = vmatpush.bf16.msra.mxu0 %v3010
        %4146 = vmatpush.bf16.msra.mxu0 %v3002
        %4147 = vmatpush.bf16.msra.mxu0 %v2994
        %4148 = vmatpush.bf16.msra.mxu0 %v2986
        %4149 = vmatpush.bf16.msra.mxu0 %v2978
        %4150 = vmatpush.bf16.msra.mxu0 %v2970
        %4151 = vmatpush.bf16.msra.mxu0 %v2962
        %4152 = vmatmul.bf16.gmra.mxu0 %v964
        %v4153 = vpop.f32.mrf.mxu0
        %v4154 = vadd.f32 %v4141, %v4153
        %v4155 = vpop.f32.mrf.mxu0
        %4156 = vdwg.mxu0
        %4157 = vmatpush.bf16.msra.mxu0 %v2571
        %4158 = vmatpush.bf16.msra.mxu0 %v2563
        %4159 = vmatpush.bf16.msra.mxu0 %v2555
        %4160 = vmatpush.bf16.msra.mxu0 %v2547
        %4161 = vmatpush.bf16.msra.mxu0 %v2539
        %4162 = vmatpush.bf16.msra.mxu0 %v2531
        %4163 = vmatpush.bf16.msra.mxu0 %v2523
        %4164 = vmatpush.bf16.msra.mxu0 %v2515
        %4165 = vmatmul.bf16.gmra.mxu0 %v957
        %v4166 = vpop.f32.mrf.mxu0
        %v4167 = vadd.f32 0.0, %v4166
        %v4168 = vpop.f32.mrf.mxu0
        %4169 = vdwg.mxu0
        %4170 = vmatpush.bf16.msra.mxu0 %v2635
        %4171 = vmatpush.bf16.msra.mxu0 %v2627
        %4172 = vmatpush.bf16.msra.mxu0 %v2619
        %4173 = vmatpush.bf16.msra.mxu0 %v2611
        %4174 = vmatpush.bf16.msra.mxu0 %v2603
        %4175 = vmatpush.bf16.msra.mxu0 %v2595
        %4176 = vmatpush.bf16.msra.mxu0 %v2587
        %4177 = vmatpush.bf16.msra.mxu0 %v2579
        %4178 = vmatmul.bf16.gmra.mxu0 %v958
        %v4179 = vpop.f32.mrf.mxu0
        %v4180 = vadd.f32 %v4167, %v4179
        %v4181 = vpop.f32.mrf.mxu0
        %4182 = vdwg.mxu0
        %4183 = vmatpush.bf16.msra.mxu0 %v2699
        %4184 = vmatpush.bf16.msra.mxu0 %v2691
        %4185 = vmatpush.bf16.msra.mxu0 %v2683
        %4186 = vmatpush.bf16.msra.mxu0 %v2675
        %4187 = vmatpush.bf16.msra.mxu0 %v2667
        %4188 = vmatpush.bf16.msra.mxu0 %v2659
        %4189 = vmatpush.bf16.msra.mxu0 %v2651
        %4190 = vmatpush.bf16.msra.mxu0 %v2643
        %4191 = vmatmul.bf16.gmra.mxu0 %v959
        %v4192 = vpop.f32.mrf.mxu0
        %v4193 = vadd.f32 %v4180, %v4192
        %v4194 = vpop.f32.mrf.mxu0
        %4195 = vdwg.mxu0
        %4196 = vmatpush.bf16.msra.mxu0 %v2763
        %4197 = vmatpush.bf16.msra.mxu0 %v2755
        %4198 = vmatpush.bf16.msra.mxu0 %v2747
        %4199 = vmatpush.bf16.msra.mxu0 %v2739
        %4200 = vmatpush.bf16.msra.mxu0 %v2731
        %4201 = vmatpush.bf16.msra.mxu0 %v2723
        %4202 = vmatpush.bf16.msra.mxu0 %v2715
        %4203 = vmatpush.bf16.msra.mxu0 %v2707
        %4204 = vmatmul.bf16.gmra.mxu0 %v960
        %v4205 = vpop.f32.mrf.mxu0
        %v4206 = vadd.f32 %v4193, %v4205
        %v4207 = vpop.f32.mrf.mxu0
        %4208 = vdwg.mxu0
        %4209 = vmatpush.bf16.msra.mxu0 %v2827
        %4210 = vmatpush.bf16.msra.mxu0 %v2819
        %4211 = vmatpush.bf16.msra.mxu0 %v2811
        %4212 = vmatpush.bf16.msra.mxu0 %v2803
        %4213 = vmatpush.bf16.msra.mxu0 %v2795
        %4214 = vmatpush.bf16.msra.mxu0 %v2787
        %4215 = vmatpush.bf16.msra.mxu0 %v2779
        %4216 = vmatpush.bf16.msra.mxu0 %v2771
        %4217 = vmatmul.bf16.gmra.mxu0 %v961
        %v4218 = vpop.f32.mrf.mxu0
        %v4219 = vadd.f32 %v4206, %v4218
        %v4220 = vpop.f32.mrf.mxu0
        %4221 = vdwg.mxu0
        %4222 = vmatpush.bf16.msra.mxu0 %v2891
        %4223 = vmatpush.bf16.msra.mxu0 %v2883
        %4224 = vmatpush.bf16.msra.mxu0 %v2875
        %4225 = vmatpush.bf16.msra.mxu0 %v2867
        %4226 = vmatpush.bf16.msra.mxu0 %v2859
        %4227 = vmatpush.bf16.msra.mxu0 %v2851
        %4228 = vmatpush.bf16.msra.mxu0 %v2843
        %4229 = vmatpush.bf16.msra.mxu0 %v2835
        %4230 = vmatmul.bf16.gmra.mxu0 %v962
        %v4231 = vpop.f32.mrf.mxu0
        %v4232 = vadd.f32 %v4219, %v4231
        %v4233 = vpop.f32.mrf.mxu0
        %4234 = vdwg.mxu0
        %4235 = vmatpush.bf16.msra.mxu0 %v2955
        %4236 = vmatpush.bf16.msra.mxu0 %v2947
        %4237 = vmatpush.bf16.msra.mxu0 %v2939
        %4238 = vmatpush.bf16.msra.mxu0 %v2931
        %4239 = vmatpush.bf16.msra.mxu0 %v2923
        %4240 = vmatpush.bf16.msra.mxu0 %v2915
        %4241 = vmatpush.bf16.msra.mxu0 %v2907
        %4242 = vmatpush.bf16.msra.mxu0 %v2899
        %4243 = vmatmul.bf16.gmra.mxu0 %v963
        %v4244 = vpop.f32.mrf.mxu0
        %v4245 = vadd.f32 %v4232, %v4244
        %v4246 = vpop.f32.mrf.mxu0
        %4247 = vdwg.mxu0
        %4248 = vmatpush.bf16.msra.mxu0 %v3019
        %4249 = vmatpush.bf16.msra.mxu0 %v3011
        %4250 = vmatpush.bf16.msra.mxu0 %v3003
        %4251 = vmatpush.bf16.msra.mxu0 %v2995
        %4252 = vmatpush.bf16.msra.mxu0 %v2987
        %4253 = vmatpush.bf16.msra.mxu0 %v2979
        %4254 = vmatpush.bf16.msra.mxu0 %v2971
        %4255 = vmatpush.bf16.msra.mxu0 %v2963
        %4256 = vmatmul.bf16.gmra.mxu0 %v964
        %v4257 = vpop.f32.mrf.mxu0
        %v4258 = vadd.f32 %v4245, %v4257
        %v4259 = vpop.f32.mrf.mxu0
        %4260 = vdwg.mxu0
        %4261 = vmatpush.bf16.msra.mxu0 %v2572
        %4262 = vmatpush.bf16.msra.mxu0 %v2564
        %4263 = vmatpush.bf16.msra.mxu0 %v2556
        %4264 = vmatpush.bf16.msra.mxu0 %v2548
        %4265 = vmatpush.bf16.msra.mxu0 %v2540
        %4266 = vmatpush.bf16.msra.mxu0 %v2532
        %4267 = vmatpush.bf16.msra.mxu0 %v2524
        %4268 = vmatpush.bf16.msra.mxu0 %v2516
        %4269 = vmatmul.bf16.gmra.mxu0 %v957
        %v4270 = vpop.f32.mrf.mxu0
        %v4271 = vadd.f32 0.0, %v4270
        %v4272 = vpop.f32.mrf.mxu0
        %4273 = vdwg.mxu0
        %4274 = vmatpush.bf16.msra.mxu0 %v2636
        %4275 = vmatpush.bf16.msra.mxu0 %v2628
        %4276 = vmatpush.bf16.msra.mxu0 %v2620
        %4277 = vmatpush.bf16.msra.mxu0 %v2612
        %4278 = vmatpush.bf16.msra.mxu0 %v2604
        %4279 = vmatpush.bf16.msra.mxu0 %v2596
        %4280 = vmatpush.bf16.msra.mxu0 %v2588
        %4281 = vmatpush.bf16.msra.mxu0 %v2580
        %4282 = vmatmul.bf16.gmra.mxu0 %v958
        %v4283 = vpop.f32.mrf.mxu0
        %v4284 = vadd.f32 %v4271, %v4283
        %v4285 = vpop.f32.mrf.mxu0
        %4286 = vdwg.mxu0
        %4287 = vmatpush.bf16.msra.mxu0 %v2700
        %4288 = vmatpush.bf16.msra.mxu0 %v2692
        %4289 = vmatpush.bf16.msra.mxu0 %v2684
        %4290 = vmatpush.bf16.msra.mxu0 %v2676
        %4291 = vmatpush.bf16.msra.mxu0 %v2668
        %4292 = vmatpush.bf16.msra.mxu0 %v2660
        %4293 = vmatpush.bf16.msra.mxu0 %v2652
        %4294 = vmatpush.bf16.msra.mxu0 %v2644
        %4295 = vmatmul.bf16.gmra.mxu0 %v959
        %v4296 = vpop.f32.mrf.mxu0
        %v4297 = vadd.f32 %v4284, %v4296
        %v4298 = vpop.f32.mrf.mxu0
        %4299 = vdwg.mxu0
        %4300 = vmatpush.bf16.msra.mxu0 %v2764
        %4301 = vmatpush.bf16.msra.mxu0 %v2756
        %4302 = vmatpush.bf16.msra.mxu0 %v2748
        %4303 = vmatpush.bf16.msra.mxu0 %v2740
        %4304 = vmatpush.bf16.msra.mxu0 %v2732
        %4305 = vmatpush.bf16.msra.mxu0 %v2724
        %4306 = vmatpush.bf16.msra.mxu0 %v2716
        %4307 = vmatpush.bf16.msra.mxu0 %v2708
        %4308 = vmatmul.bf16.gmra.mxu0 %v960
        %v4309 = vpop.f32.mrf.mxu0
        %v4310 = vadd.f32 %v4297, %v4309
        %v4311 = vpop.f32.mrf.mxu0
        %4312 = vdwg.mxu0
        %4313 = vmatpush.bf16.msra.mxu0 %v2828
        %4314 = vmatpush.bf16.msra.mxu0 %v2820
        %4315 = vmatpush.bf16.msra.mxu0 %v2812
        %4316 = vmatpush.bf16.msra.mxu0 %v2804
        %4317 = vmatpush.bf16.msra.mxu0 %v2796
        %4318 = vmatpush.bf16.msra.mxu0 %v2788
        %4319 = vmatpush.bf16.msra.mxu0 %v2780
        %4320 = vmatpush.bf16.msra.mxu0 %v2772
        %4321 = vmatmul.bf16.gmra.mxu0 %v961
        %v4322 = vpop.f32.mrf.mxu0
        %v4323 = vadd.f32 %v4310, %v4322
        %v4324 = vpop.f32.mrf.mxu0
        %4325 = vdwg.mxu0
        %4326 = vmatpush.bf16.msra.mxu0 %v2892
        %4327 = vmatpush.bf16.msra.mxu0 %v2884
        %4328 = vmatpush.bf16.msra.mxu0 %v2876
        %4329 = vmatpush.bf16.msra.mxu0 %v2868
        %4330 = vmatpush.bf16.msra.mxu0 %v2860
        %4331 = vmatpush.bf16.msra.mxu0 %v2852
        %4332 = vmatpush.bf16.msra.mxu0 %v2844
        %4333 = vmatpush.bf16.msra.mxu0 %v2836
        %4334 = vmatmul.bf16.gmra.mxu0 %v962
        %v4335 = vpop.f32.mrf.mxu0
        %v4336 = vadd.f32 %v4323, %v4335
        %v4337 = vpop.f32.mrf.mxu0
        %4338 = vdwg.mxu0
        %4339 = vmatpush.bf16.msra.mxu0 %v2956
        %4340 = vmatpush.bf16.msra.mxu0 %v2948
        %4341 = vmatpush.bf16.msra.mxu0 %v2940
        %4342 = vmatpush.bf16.msra.mxu0 %v2932
        %4343 = vmatpush.bf16.msra.mxu0 %v2924
        %4344 = vmatpush.bf16.msra.mxu0 %v2916
        %4345 = vmatpush.bf16.msra.mxu0 %v2908
        %4346 = vmatpush.bf16.msra.mxu0 %v2900
        %4347 = vmatmul.bf16.gmra.mxu0 %v963
        %v4348 = vpop.f32.mrf.mxu0
        %v4349 = vadd.f32 %v4336, %v4348
        %v4350 = vpop.f32.mrf.mxu0
        %4351 = vdwg.mxu0
        %4352 = vmatpush.bf16.msra.mxu0 %v3020
        %4353 = vmatpush.bf16.msra.mxu0 %v3012
        %4354 = vmatpush.bf16.msra.mxu0 %v3004
        %4355 = vmatpush.bf16.msra.mxu0 %v2996
        %4356 = vmatpush.bf16.msra.mxu0 %v2988
        %4357 = vmatpush.bf16.msra.mxu0 %v2980
        %4358 = vmatpush.bf16.msra.mxu0 %v2972
        %4359 = vmatpush.bf16.msra.mxu0 %v2964
        %4360 = vmatmul.bf16.gmra.mxu0 %v964
        %v4361 = vpop.f32.mrf.mxu0
        %v4362 = vadd.f32 %v4349, %v4361
        %v4363 = vpop.f32.mrf.mxu0
        %4364 = vdwg.mxu0
        %v4365 = vadd.f32 %v421, %v3634
        %v4366 = vadd.f32 %v422, %v3738
        %v4367 = vadd.f32 %v423, %v3842
        %v4368 = vadd.f32 %v424, %v3946
        %v4369 = vadd.f32 %v425, %v4050
        %v4370 = vadd.f32 %v426, %v4154
        %v4371 = vadd.f32 %v427, %v4258
        %v4372 = vadd.f32 %v428, %v4362
        %4373 = vst [vmem:[#allocation2] sm:$0xff] %v4365
        %4374 = vst [vmem:[#allocation2 + $0x8] sm:$0xff] %v4366
        %4375 = vst [vmem:[#allocation2 + $0x10] sm:$0xff] %v4367
        %4376 = vst [vmem:[#allocation2 + $0x18] sm:$0xff] %v4368
        %4377 = vst [vmem:[#allocation2 + $0x20] sm:$0xff] %v4369
        %4378 = vst [vmem:[#allocation2 + $0x28] sm:$0xff] %v4370
        %4379 = vst [vmem:[#allocation2 + $0x30] sm:$0xff] %v4371
        %4380 = vst [vmem:[#allocation2 + $0x38] sm:$0xff] %v4372
        %p4381 = scmp.eq.s32.totalorder %s28, 3
        // Predicated region
        $region73: #{cnn_module_branch_forward.3} parent=47 // pred_check
          %p4382 = pneg %p4381
        $region74: #{cnn_module_branch_forward.3} parent=47 // pred_check_branch
          %4384 = sbr.rel (%p4382) target = $region76
        $region75: #{cnn_module_branch_forward.3} parent=47 // pred_region
          %v4385 = vld [vmem:[#allocation2] sm:$0xff]
          %v4386 = vld [vmem:[#allocation2 + $0x8] sm:$0xff]
          %v4387 = vld [vmem:[#allocation2 + $0x10] sm:$0xff]
          %v4388 = vld [vmem:[#allocation2 + $0x18] sm:$0xff]
          %v4389 = vld [vmem:[#allocation2 + $0x20] sm:$0xff]
          %v4390 = vld [vmem:[#allocation2 + $0x28] sm:$0xff]
          %v4391 = vld [vmem:[#allocation2 + $0x30] sm:$0xff]
          %v4392 = vld [vmem:[#allocation2 + $0x38] sm:$0xff]
          %v4393 = vld [vmem:[#allocation5] sm:$0xff]
          %v4395 = vperm.slane %v4393, 0
          %v4396 = vperm.slane %v4393, 1
          %v4397 = vperm.slane %v4393, 2
          %v4398 = vperm.slane %v4393, 3
          %v4399 = vperm.slane %v4393, 4
          %v4400 = vperm.slane %v4393, 5
          %v4401 = vperm.slane %v4393, 6
          %v4402 = vperm.slane %v4393, 7
          %v4411 = vadd.f32 %v4385, %v4395
          %v4412 = vadd.f32 %v4386, %v4396
          %v4413 = vadd.f32 %v4387, %v4397
          %v4414 = vadd.f32 %v4388, %v4398
          %v4415 = vadd.f32 %v4389, %v4399
          %v4416 = vadd.f32 %v4390, %v4400
          %v4417 = vadd.f32 %v4391, %v4401
          %v4418 = vadd.f32 %v4392, %v4402
          %v4419 = vmax.f32 %v4411, 0.0
          %v4420 = vmax.f32 %v4412, 0.0
          %v4421 = vmax.f32 %v4413, 0.0
          %v4422 = vmax.f32 %v4414, 0.0
          %v4423 = vmax.f32 %v4415, 0.0
          %v4424 = vmax.f32 %v4416, 0.0
          %v4425 = vmax.f32 %v4417, 0.0
          %v4426 = vmax.f32 %v4418, 0.0
          %v4427 = vpack.c.bf16 %v4419, %v4419
          %v4428 = vpack.c.bf16 %v4420, %v4420
          %v4429 = vpack.c.bf16 %v4421, %v4421
          %v4430 = vpack.c.bf16 %v4422, %v4422
          %v4431 = vpack.c.bf16 %v4423, %v4423
          %v4432 = vpack.c.bf16 %v4424, %v4424
          %v4433 = vpack.c.bf16 %v4425, %v4425
          %v4434 = vpack.c.bf16 %v4426, %v4426
          %v4435 = vld [vmem:[#allocation7] sm:$0xf]
          %v4436 = vld [vmem:[#allocation7 + $0x4] sm:$0xf]
          %v4437 = vld [vmem:[#allocation7 + $0x8] sm:$0xf]
          %v4438 = vld [vmem:[#allocation7 + $0xc] sm:$0xf]
          %v4439 = vld [vmem:[#allocation7 + $0x10] sm:$0xf]
          %v4440 = vld [vmem:[#allocation7 + $0x14] sm:$0xf]
          %v4441 = vld [vmem:[#allocation7 + $0x18] sm:$0xf]
          %v4442 = vld [vmem:[#allocation7 + $0x1c] sm:$0xf]
          %v4443 = vld [vmem:[#allocation7 + $0x20] sm:$0xf]
          %v4444 = vld [vmem:[#allocation7 + $0x24] sm:$0xf]
          %v4445 = vld [vmem:[#allocation7 + $0x28] sm:$0xf]
          %v4446 = vld [vmem:[#allocation7 + $0x2c] sm:$0xf]
          %v4447 = vld [vmem:[#allocation7 + $0x30] sm:$0xf]
          %v4448 = vld [vmem:[#allocation7 + $0x34] sm:$0xf]
          %v4449 = vld [vmem:[#allocation7 + $0x38] sm:$0xf]
          %v4450 = vld [vmem:[#allocation7 + $0x3c] sm:$0xf]
          %v4451 = vld [vmem:[#allocation7 + $0x40] sm:$0xf]
          %v4452 = vld [vmem:[#allocation7 + $0x44] sm:$0xf]
          %v4453 = vld [vmem:[#allocation7 + $0x48] sm:$0xf]
          %v4454 = vld [vmem:[#allocation7 + $0x4c] sm:$0xf]
          %v4455 = vld [vmem:[#allocation7 + $0x50] sm:$0xf]
          %v4456 = vld [vmem:[#allocation7 + $0x54] sm:$0xf]
          %v4457 = vld [vmem:[#allocation7 + $0x58] sm:$0xf]
          %v4458 = vld [vmem:[#allocation7 + $0x5c] sm:$0xf]
          %v4459 = vld [vmem:[#allocation7 + $0x60] sm:$0xf]
          %v4460 = vld [vmem:[#allocation7 + $0x64] sm:$0xf]
          %v4461 = vld [vmem:[#allocation7 + $0x68] sm:$0xf]
          %v4462 = vld [vmem:[#allocation7 + $0x6c] sm:$0xf]
          %v4463 = vld [vmem:[#allocation7 + $0x70] sm:$0xf]
          %v4464 = vld [vmem:[#allocation7 + $0x74] sm:$0xf]
          %v4465 = vld [vmem:[#allocation7 + $0x78] sm:$0xf]
          %v4466 = vld [vmem:[#allocation7 + $0x7c] sm:$0xf]
          %v4467 = vld [vmem:[#allocation7 + $0x80] sm:$0xf]
          %v4468 = vld [vmem:[#allocation7 + $0x84] sm:$0xf]
          %v4469 = vld [vmem:[#allocation7 + $0x88] sm:$0xf]
          %v4470 = vld [vmem:[#allocation7 + $0x8c] sm:$0xf]
          %v4471 = vld [vmem:[#allocation7 + $0x90] sm:$0xf]
          %v4472 = vld [vmem:[#allocation7 + $0x94] sm:$0xf]
          %v4473 = vld [vmem:[#allocation7 + $0x98] sm:$0xf]
          %v4474 = vld [vmem:[#allocation7 + $0x9c] sm:$0xf]
          %v4475 = vld [vmem:[#allocation7 + $0xa0] sm:$0xf]
          %v4476 = vld [vmem:[#allocation7 + $0xa4] sm:$0xf]
          %v4477 = vld [vmem:[#allocation7 + $0xa8] sm:$0xf]
          %v4478 = vld [vmem:[#allocation7 + $0xac] sm:$0xf]
          %v4479 = vld [vmem:[#allocation7 + $0xb0] sm:$0xf]
          %v4480 = vld [vmem:[#allocation7 + $0xb4] sm:$0xf]
          %v4481 = vld [vmem:[#allocation7 + $0xb8] sm:$0xf]
          %v4482 = vld [vmem:[#allocation7 + $0xbc] sm:$0xf]
          %v4483 = vld [vmem:[#allocation7 + $0xc0] sm:$0xf]
          %v4484 = vld [vmem:[#allocation7 + $0xc4] sm:$0xf]
          %v4485 = vld [vmem:[#allocation7 + $0xc8] sm:$0xf]
          %v4486 = vld [vmem:[#allocation7 + $0xcc] sm:$0xf]
          %v4487 = vld [vmem:[#allocation7 + $0xd0] sm:$0xf]
          %v4488 = vld [vmem:[#allocation7 + $0xd4] sm:$0xf]
          %v4489 = vld [vmem:[#allocation7 + $0xd8] sm:$0xf]
          %v4490 = vld [vmem:[#allocation7 + $0xdc] sm:$0xf]
          %v4491 = vld [vmem:[#allocation7 + $0xe0] sm:$0xf]
          %v4492 = vld [vmem:[#allocation7 + $0xe4] sm:$0xf]
          %v4493 = vld [vmem:[#allocation7 + $0xe8] sm:$0xf]
          %v4494 = vld [vmem:[#allocation7 + $0xec] sm:$0xf]
          %v4495 = vld [vmem:[#allocation7 + $0xf0] sm:$0xf]
          %v4496 = vld [vmem:[#allocation7 + $0xf4] sm:$0xf]
          %v4497 = vld [vmem:[#allocation7 + $0xf8] sm:$0xf]
          %v4498 = vld [vmem:[#allocation7 + $0xfc] sm:$0xf]
          %v4499 = vld [vmem:[#allocation7 + $0x100] sm:$0xf]
          %v4500 = vld [vmem:[#allocation7 + $0x104] sm:$0xf]
          %v4501 = vld [vmem:[#allocation7 + $0x108] sm:$0xf]
          %v4502 = vld [vmem:[#allocation7 + $0x10c] sm:$0xf]
          %v4503 = vld [vmem:[#allocation7 + $0x110] sm:$0xf]
          %v4504 = vld [vmem:[#allocation7 + $0x114] sm:$0xf]
          %v4505 = vld [vmem:[#allocation7 + $0x118] sm:$0xf]
          %v4506 = vld [vmem:[#allocation7 + $0x11c] sm:$0xf]
          %v4507 = vld [vmem:[#allocation7 + $0x120] sm:$0xf]
          %v4508 = vld [vmem:[#allocation7 + $0x124] sm:$0xf]
          %v4509 = vld [vmem:[#allocation7 + $0x128] sm:$0xf]
          %v4510 = vld [vmem:[#allocation7 + $0x12c] sm:$0xf]
          %v4511 = vld [vmem:[#allocation7 + $0x130] sm:$0xf]
          %v4512 = vld [vmem:[#allocation7 + $0x134] sm:$0xf]
          %v4513 = vld [vmem:[#allocation7 + $0x138] sm:$0xf]
          %v4514 = vld [vmem:[#allocation7 + $0x13c] sm:$0xf]
          %v4515 = vld [vmem:[#allocation7 + $0x140] sm:$0xf]
          %v4516 = vld [vmem:[#allocation7 + $0x144] sm:$0xf]
          %v4517 = vld [vmem:[#allocation7 + $0x148] sm:$0xf]
          %v4518 = vld [vmem:[#allocation7 + $0x14c] sm:$0xf]
          %v4519 = vld [vmem:[#allocation7 + $0x150] sm:$0xf]
          %v4520 = vld [vmem:[#allocation7 + $0x154] sm:$0xf]
          %v4521 = vld [vmem:[#allocation7 + $0x158] sm:$0xf]
          %v4522 = vld [vmem:[#allocation7 + $0x15c] sm:$0xf]
          %v4523 = vld [vmem:[#allocation7 + $0x160] sm:$0xf]
          %v4524 = vld [vmem:[#allocation7 + $0x164] sm:$0xf]
          %v4525 = vld [vmem:[#allocation7 + $0x168] sm:$0xf]
          %v4526 = vld [vmem:[#allocation7 + $0x16c] sm:$0xf]
          %v4527 = vld [vmem:[#allocation7 + $0x170] sm:$0xf]
          %v4528 = vld [vmem:[#allocation7 + $0x174] sm:$0xf]
          %v4529 = vld [vmem:[#allocation7 + $0x178] sm:$0xf]
          %v4530 = vld [vmem:[#allocation7 + $0x17c] sm:$0xf]
          %v4531 = vld [vmem:[#allocation7 + $0x180] sm:$0xf]
          %v4532 = vld [vmem:[#allocation7 + $0x184] sm:$0xf]
          %v4533 = vld [vmem:[#allocation7 + $0x188] sm:$0xf]
          %v4534 = vld [vmem:[#allocation7 + $0x18c] sm:$0xf]
          %v4535 = vld [vmem:[#allocation7 + $0x190] sm:$0xf]
          %v4536 = vld [vmem:[#allocation7 + $0x194] sm:$0xf]
          %v4537 = vld [vmem:[#allocation7 + $0x198] sm:$0xf]
          %v4538 = vld [vmem:[#allocation7 + $0x19c] sm:$0xf]
          %v4539 = vld [vmem:[#allocation7 + $0x1a0] sm:$0xf]
          %v4540 = vld [vmem:[#allocation7 + $0x1a4] sm:$0xf]
          %v4541 = vld [vmem:[#allocation7 + $0x1a8] sm:$0xf]
          %v4542 = vld [vmem:[#allocation7 + $0x1ac] sm:$0xf]
          %v4543 = vld [vmem:[#allocation7 + $0x1b0] sm:$0xf]
          %v4544 = vld [vmem:[#allocation7 + $0x1b4] sm:$0xf]
          %v4545 = vld [vmem:[#allocation7 + $0x1b8] sm:$0xf]
          %v4546 = vld [vmem:[#allocation7 + $0x1bc] sm:$0xf]
          %v4547 = vld [vmem:[#allocation7 + $0x1c0] sm:$0xf]
          %v4548 = vld [vmem:[#allocation7 + $0x1c4] sm:$0xf]
          %v4549 = vld [vmem:[#allocation7 + $0x1c8] sm:$0xf]
          %v4550 = vld [vmem:[#allocation7 + $0x1cc] sm:$0xf]
          %v4551 = vld [vmem:[#allocation7 + $0x1d0] sm:$0xf]
          %v4552 = vld [vmem:[#allocation7 + $0x1d4] sm:$0xf]
          %v4553 = vld [vmem:[#allocation7 + $0x1d8] sm:$0xf]
          %v4554 = vld [vmem:[#allocation7 + $0x1dc] sm:$0xf]
          %v4555 = vld [vmem:[#allocation7 + $0x1e0] sm:$0xf]
          %v4556 = vld [vmem:[#allocation7 + $0x1e4] sm:$0xf]
          %v4557 = vld [vmem:[#allocation7 + $0x1e8] sm:$0xf]
          %v4558 = vld [vmem:[#allocation7 + $0x1ec] sm:$0xf]
          %v4559 = vld [vmem:[#allocation7 + $0x1f0] sm:$0xf]
          %v4560 = vld [vmem:[#allocation7 + $0x1f4] sm:$0xf]
          %v4561 = vld [vmem:[#allocation7 + $0x1f8] sm:$0xf]
          %v4562 = vld [vmem:[#allocation7 + $0x1fc] sm:$0xf]
          %v4563 = vld [vmem:[#allocation8] sm:$0x1]
          %v4565 = vperm.slane %v4563, 0
          %v4695 = vunpack.c.l.b16 %v4435
          %v4696 = vunpack.c.l.b16 %v4436
          %v4697 = vunpack.c.l.b16 %v4437
          %v4698 = vunpack.c.l.b16 %v4438
          %v4699 = vunpack.c.l.b16 %v4439
          %v4700 = vunpack.c.l.b16 %v4440
          %v4701 = vunpack.c.l.b16 %v4441
          %v4702 = vunpack.c.l.b16 %v4442
          %v4703 = vunpack.c.l.b16 %v4443
          %v4704 = vunpack.c.l.b16 %v4444
          %v4705 = vunpack.c.l.b16 %v4445
          %v4706 = vunpack.c.l.b16 %v4446
          %v4707 = vunpack.c.l.b16 %v4447
          %v4708 = vunpack.c.l.b16 %v4448
          %v4709 = vunpack.c.l.b16 %v4449
          %v4710 = vunpack.c.l.b16 %v4450
          %v4711 = vunpack.c.l.b16 %v4451
          %v4712 = vunpack.c.l.b16 %v4452
          %v4713 = vunpack.c.l.b16 %v4453
          %v4714 = vunpack.c.l.b16 %v4454
          %v4715 = vunpack.c.l.b16 %v4455
          %v4716 = vunpack.c.l.b16 %v4456
          %v4717 = vunpack.c.l.b16 %v4457
          %v4718 = vunpack.c.l.b16 %v4458
          %v4719 = vunpack.c.l.b16 %v4459
          %v4720 = vunpack.c.l.b16 %v4460
          %v4721 = vunpack.c.l.b16 %v4461
          %v4722 = vunpack.c.l.b16 %v4462
          %v4723 = vunpack.c.l.b16 %v4463
          %v4724 = vunpack.c.l.b16 %v4464
          %v4725 = vunpack.c.l.b16 %v4465
          %v4726 = vunpack.c.l.b16 %v4466
          %v4727 = vunpack.c.l.b16 %v4467
          %v4728 = vunpack.c.l.b16 %v4468
          %v4729 = vunpack.c.l.b16 %v4469
          %v4730 = vunpack.c.l.b16 %v4470
          %v4731 = vunpack.c.l.b16 %v4471
          %v4732 = vunpack.c.l.b16 %v4472
          %v4733 = vunpack.c.l.b16 %v4473
          %v4734 = vunpack.c.l.b16 %v4474
          %v4735 = vunpack.c.l.b16 %v4475
          %v4736 = vunpack.c.l.b16 %v4476
          %v4737 = vunpack.c.l.b16 %v4477
          %v4738 = vunpack.c.l.b16 %v4478
          %v4739 = vunpack.c.l.b16 %v4479
          %v4740 = vunpack.c.l.b16 %v4480
          %v4741 = vunpack.c.l.b16 %v4481
          %v4742 = vunpack.c.l.b16 %v4482
          %v4743 = vunpack.c.l.b16 %v4483
          %v4744 = vunpack.c.l.b16 %v4484
          %v4745 = vunpack.c.l.b16 %v4485
          %v4746 = vunpack.c.l.b16 %v4486
          %v4747 = vunpack.c.l.b16 %v4487
          %v4748 = vunpack.c.l.b16 %v4488
          %v4749 = vunpack.c.l.b16 %v4489
          %v4750 = vunpack.c.l.b16 %v4490
          %v4751 = vunpack.c.l.b16 %v4491
          %v4752 = vunpack.c.l.b16 %v4492
          %v4753 = vunpack.c.l.b16 %v4493
          %v4754 = vunpack.c.l.b16 %v4494
          %v4755 = vunpack.c.l.b16 %v4495
          %v4756 = vunpack.c.l.b16 %v4496
          %v4757 = vunpack.c.l.b16 %v4497
          %v4758 = vunpack.c.l.b16 %v4498
          %v4759 = vunpack.c.l.b16 %v4499
          %v4760 = vunpack.c.l.b16 %v4500
          %v4761 = vunpack.c.l.b16 %v4501
          %v4762 = vunpack.c.l.b16 %v4502
          %v4763 = vunpack.c.l.b16 %v4503
          %v4764 = vunpack.c.l.b16 %v4504
          %v4765 = vunpack.c.l.b16 %v4505
          %v4766 = vunpack.c.l.b16 %v4506
          %v4767 = vunpack.c.l.b16 %v4507
          %v4768 = vunpack.c.l.b16 %v4508
          %v4769 = vunpack.c.l.b16 %v4509
          %v4770 = vunpack.c.l.b16 %v4510
          %v4771 = vunpack.c.l.b16 %v4511
          %v4772 = vunpack.c.l.b16 %v4512
          %v4773 = vunpack.c.l.b16 %v4513
          %v4774 = vunpack.c.l.b16 %v4514
          %v4775 = vunpack.c.l.b16 %v4515
          %v4776 = vunpack.c.l.b16 %v4516
          %v4777 = vunpack.c.l.b16 %v4517
          %v4778 = vunpack.c.l.b16 %v4518
          %v4779 = vunpack.c.l.b16 %v4519
          %v4780 = vunpack.c.l.b16 %v4520
          %v4781 = vunpack.c.l.b16 %v4521
          %v4782 = vunpack.c.l.b16 %v4522
          %v4783 = vunpack.c.l.b16 %v4523
          %v4784 = vunpack.c.l.b16 %v4524
          %v4785 = vunpack.c.l.b16 %v4525
          %v4786 = vunpack.c.l.b16 %v4526
          %v4787 = vunpack.c.l.b16 %v4527
          %v4788 = vunpack.c.l.b16 %v4528
          %v4789 = vunpack.c.l.b16 %v4529
          %v4790 = vunpack.c.l.b16 %v4530
          %v4791 = vunpack.c.l.b16 %v4531
          %v4792 = vunpack.c.l.b16 %v4532
          %v4793 = vunpack.c.l.b16 %v4533
          %v4794 = vunpack.c.l.b16 %v4534
          %v4795 = vunpack.c.l.b16 %v4535
          %v4796 = vunpack.c.l.b16 %v4536
          %v4797 = vunpack.c.l.b16 %v4537
          %v4798 = vunpack.c.l.b16 %v4538
          %v4799 = vunpack.c.l.b16 %v4539
          %v4800 = vunpack.c.l.b16 %v4540
          %v4801 = vunpack.c.l.b16 %v4541
          %v4802 = vunpack.c.l.b16 %v4542
          %v4803 = vunpack.c.l.b16 %v4543
          %v4804 = vunpack.c.l.b16 %v4544
          %v4805 = vunpack.c.l.b16 %v4545
          %v4806 = vunpack.c.l.b16 %v4546
          %v4807 = vunpack.c.l.b16 %v4547
          %v4808 = vunpack.c.l.b16 %v4548
          %v4809 = vunpack.c.l.b16 %v4549
          %v4810 = vunpack.c.l.b16 %v4550
          %v4811 = vunpack.c.l.b16 %v4551
          %v4812 = vunpack.c.l.b16 %v4552
          %v4813 = vunpack.c.l.b16 %v4553
          %v4814 = vunpack.c.l.b16 %v4554
          %v4815 = vunpack.c.l.b16 %v4555
          %v4816 = vunpack.c.l.b16 %v4556
          %v4817 = vunpack.c.l.b16 %v4557
          %v4818 = vunpack.c.l.b16 %v4558
          %v4819 = vunpack.c.l.b16 %v4559
          %v4820 = vunpack.c.l.b16 %v4560
          %v4821 = vunpack.c.l.b16 %v4561
          %v4822 = vunpack.c.l.b16 %v4562
          %v4823 = vpack.c.b16 %v4696, %v4695
          %v4824 = vpack.c.b16 %v4698, %v4697
          %v4825 = vpack.c.b16 %v4700, %v4699
          %v4826 = vpack.c.b16 %v4702, %v4701
          %v4827 = vpack.c.b16 %v4704, %v4703
          %v4828 = vpack.c.b16 %v4706, %v4705
          %v4829 = vpack.c.b16 %v4708, %v4707
          %v4830 = vpack.c.b16 %v4710, %v4709
          %v4831 = vpack.c.b16 %v4712, %v4711
          %v4832 = vpack.c.b16 %v4714, %v4713
          %v4833 = vpack.c.b16 %v4716, %v4715
          %v4834 = vpack.c.b16 %v4718, %v4717
          %v4835 = vpack.c.b16 %v4720, %v4719
          %v4836 = vpack.c.b16 %v4722, %v4721
          %v4837 = vpack.c.b16 %v4724, %v4723
          %v4838 = vpack.c.b16 %v4726, %v4725
          %v4839 = vpack.c.b16 %v4728, %v4727
          %v4840 = vpack.c.b16 %v4730, %v4729
          %v4841 = vpack.c.b16 %v4732, %v4731
          %v4842 = vpack.c.b16 %v4734, %v4733
          %v4843 = vpack.c.b16 %v4736, %v4735
          %v4844 = vpack.c.b16 %v4738, %v4737
          %v4845 = vpack.c.b16 %v4740, %v4739
          %v4846 = vpack.c.b16 %v4742, %v4741
          %v4847 = vpack.c.b16 %v4744, %v4743
          %v4848 = vpack.c.b16 %v4746, %v4745
          %v4849 = vpack.c.b16 %v4748, %v4747
          %v4850 = vpack.c.b16 %v4750, %v4749
          %v4851 = vpack.c.b16 %v4752, %v4751
          %v4852 = vpack.c.b16 %v4754, %v4753
          %v4853 = vpack.c.b16 %v4756, %v4755
          %v4854 = vpack.c.b16 %v4758, %v4757
          %v4855 = vpack.c.b16 %v4760, %v4759
          %v4856 = vpack.c.b16 %v4762, %v4761
          %v4857 = vpack.c.b16 %v4764, %v4763
          %v4858 = vpack.c.b16 %v4766, %v4765
          %v4859 = vpack.c.b16 %v4768, %v4767
          %v4860 = vpack.c.b16 %v4770, %v4769
          %v4861 = vpack.c.b16 %v4772, %v4771
          %v4862 = vpack.c.b16 %v4774, %v4773
          %v4863 = vpack.c.b16 %v4776, %v4775
          %v4864 = vpack.c.b16 %v4778, %v4777
          %v4865 = vpack.c.b16 %v4780, %v4779
          %v4866 = vpack.c.b16 %v4782, %v4781
          %v4867 = vpack.c.b16 %v4784, %v4783
          %v4868 = vpack.c.b16 %v4786, %v4785
          %v4869 = vpack.c.b16 %v4788, %v4787
          %v4870 = vpack.c.b16 %v4790, %v4789
          %v4871 = vpack.c.b16 %v4792, %v4791
          %v4872 = vpack.c.b16 %v4794, %v4793
          %v4873 = vpack.c.b16 %v4796, %v4795
          %v4874 = vpack.c.b16 %v4798, %v4797
          %v4875 = vpack.c.b16 %v4800, %v4799
          %v4876 = vpack.c.b16 %v4802, %v4801
          %v4877 = vpack.c.b16 %v4804, %v4803
          %v4878 = vpack.c.b16 %v4806, %v4805
          %v4879 = vpack.c.b16 %v4808, %v4807
          %v4880 = vpack.c.b16 %v4810, %v4809
          %v4881 = vpack.c.b16 %v4812, %v4811
          %v4882 = vpack.c.b16 %v4814, %v4813
          %v4883 = vpack.c.b16 %v4816, %v4815
          %v4884 = vpack.c.b16 %v4818, %v4817
          %v4885 = vpack.c.b16 %v4820, %v4819
          %v4886 = vpack.c.b16 %v4822, %v4821
          %4951 = vmatpush.bf16.msra.mxu0 %v4830
          %4952 = vmatpush.bf16.msra.mxu0 %v4829
          %4953 = vmatpush.bf16.msra.mxu0 %v4828
          %4954 = vmatpush.bf16.msra.mxu0 %v4827
          %4955 = vmatpush.bf16.msra.mxu0 %v4826
          %4956 = vmatpush.bf16.msra.mxu0 %v4825
          %4957 = vmatpush.bf16.msra.mxu0 %v4824
          %4958 = vmatpush.bf16.msra.mxu0 %v4823
          %4959 = vmatmul.bf16.gmra.mxu0 %v4427
          %v4960 = vpop.f32.mrf.mxu0
          %v4961 = vadd.f32 %v4565, %v4960
          %v4962 = vpop.f32.mrf.mxu0
          %4963 = vdwg.mxu0
          %4964 = vmatpush.bf16.msra.mxu0 %v4838
          %4965 = vmatpush.bf16.msra.mxu0 %v4837
          %4966 = vmatpush.bf16.msra.mxu0 %v4836
          %4967 = vmatpush.bf16.msra.mxu0 %v4835
          %4968 = vmatpush.bf16.msra.mxu0 %v4834
          %4969 = vmatpush.bf16.msra.mxu0 %v4833
          %4970 = vmatpush.bf16.msra.mxu0 %v4832
          %4971 = vmatpush.bf16.msra.mxu0 %v4831
          %4972 = vmatmul.bf16.gmra.mxu0 %v4428
          %v4973 = vpop.f32.mrf.mxu0
          %v4974 = vadd.f32 %v4961, %v4973
          %v4975 = vpop.f32.mrf.mxu0
          %4976 = vdwg.mxu0
          %4977 = vmatpush.bf16.msra.mxu0 %v4846
          %4978 = vmatpush.bf16.msra.mxu0 %v4845
          %4979 = vmatpush.bf16.msra.mxu0 %v4844
          %4980 = vmatpush.bf16.msra.mxu0 %v4843
          %4981 = vmatpush.bf16.msra.mxu0 %v4842
          %4982 = vmatpush.bf16.msra.mxu0 %v4841
          %4983 = vmatpush.bf16.msra.mxu0 %v4840
          %4984 = vmatpush.bf16.msra.mxu0 %v4839
          %4985 = vmatmul.bf16.gmra.mxu0 %v4429
          %v4986 = vpop.f32.mrf.mxu0
          %v4987 = vadd.f32 %v4974, %v4986
          %v4988 = vpop.f32.mrf.mxu0
          %4989 = vdwg.mxu0
          %4990 = vmatpush.bf16.msra.mxu0 %v4854
          %4991 = vmatpush.bf16.msra.mxu0 %v4853
          %4992 = vmatpush.bf16.msra.mxu0 %v4852
          %4993 = vmatpush.bf16.msra.mxu0 %v4851
          %4994 = vmatpush.bf16.msra.mxu0 %v4850
          %4995 = vmatpush.bf16.msra.mxu0 %v4849
          %4996 = vmatpush.bf16.msra.mxu0 %v4848
          %4997 = vmatpush.bf16.msra.mxu0 %v4847
          %4998 = vmatmul.bf16.gmra.mxu0 %v4430
          %v4999 = vpop.f32.mrf.mxu0
          %v5000 = vadd.f32 %v4987, %v4999
          %v5001 = vpop.f32.mrf.mxu0
          %5002 = vdwg.mxu0
          %5003 = vmatpush.bf16.msra.mxu0 %v4862
          %5004 = vmatpush.bf16.msra.mxu0 %v4861
          %5005 = vmatpush.bf16.msra.mxu0 %v4860
          %5006 = vmatpush.bf16.msra.mxu0 %v4859
          %5007 = vmatpush.bf16.msra.mxu0 %v4858
          %5008 = vmatpush.bf16.msra.mxu0 %v4857
          %5009 = vmatpush.bf16.msra.mxu0 %v4856
          %5010 = vmatpush.bf16.msra.mxu0 %v4855
          %5011 = vmatmul.bf16.gmra.mxu0 %v4431
          %v5012 = vpop.f32.mrf.mxu0
          %v5013 = vadd.f32 %v5000, %v5012
          %v5014 = vpop.f32.mrf.mxu0
          %5015 = vdwg.mxu0
          %5016 = vmatpush.bf16.msra.mxu0 %v4870
          %5017 = vmatpush.bf16.msra.mxu0 %v4869
          %5018 = vmatpush.bf16.msra.mxu0 %v4868
          %5019 = vmatpush.bf16.msra.mxu0 %v4867
          %5020 = vmatpush.bf16.msra.mxu0 %v4866
          %5021 = vmatpush.bf16.msra.mxu0 %v4865
          %5022 = vmatpush.bf16.msra.mxu0 %v4864
          %5023 = vmatpush.bf16.msra.mxu0 %v4863
          %5024 = vmatmul.bf16.gmra.mxu0 %v4432
          %v5025 = vpop.f32.mrf.mxu0
          %v5026 = vadd.f32 %v5013, %v5025
          %v5027 = vpop.f32.mrf.mxu0
          %5028 = vdwg.mxu0
          %5029 = vmatpush.bf16.msra.mxu0 %v4878
          %5030 = vmatpush.bf16.msra.mxu0 %v4877
          %5031 = vmatpush.bf16.msra.mxu0 %v4876
          %5032 = vmatpush.bf16.msra.mxu0 %v4875
          %5033 = vmatpush.bf16.msra.mxu0 %v4874
          %5034 = vmatpush.bf16.msra.mxu0 %v4873
          %5035 = vmatpush.bf16.msra.mxu0 %v4872
          %5036 = vmatpush.bf16.msra.mxu0 %v4871
          %5037 = vmatmul.bf16.gmra.mxu0 %v4433
          %v5038 = vpop.f32.mrf.mxu0
          %v5039 = vadd.f32 %v5026, %v5038
          %v5040 = vpop.f32.mrf.mxu0
          %5041 = vdwg.mxu0
          %5042 = vmatpush.bf16.msra.mxu0 %v4886
          %5043 = vmatpush.bf16.msra.mxu0 %v4885
          %5044 = vmatpush.bf16.msra.mxu0 %v4884
          %5045 = vmatpush.bf16.msra.mxu0 %v4883
          %5046 = vmatpush.bf16.msra.mxu0 %v4882
          %5047 = vmatpush.bf16.msra.mxu0 %v4881
          %5048 = vmatpush.bf16.msra.mxu0 %v4880
          %5049 = vmatpush.bf16.msra.mxu0 %v4879
          %5050 = vmatmul.bf16.gmra.mxu0 %v4434
          %v5051 = vpop.f32.mrf.mxu0
          %v5052 = vadd.f32 %v5039, %v5051
          %v5053 = vpop.f32.mrf.mxu0
          %5054 = vdwg.mxu0
          %v5055 = vmax.f32 %v5052, 0.0
          %v5056 = vld [vmem:[%s5] sm:$0xff]
          %v5057 = vld [vmem:[%s5 + $0x8] sm:$0xff]
          %v5058 = vld [vmem:[%s5 + $0x10] sm:$0xff]
          %v5059 = vld [vmem:[%s5 + $0x18] sm:$0xff]
          %v5060 = vld [vmem:[%s5 + $0x20] sm:$0xff]
          %v5061 = vld [vmem:[%s5 + $0x28] sm:$0xff]
          %v5062 = vld [vmem:[%s5 + $0x30] sm:$0xff]
          %v5063 = vld [vmem:[%s5 + $0x38] sm:$0xff]
          %v5064 = vld [vmem:[%s5 + $0x40] sm:$0xff]
          %v5065 = vld [vmem:[%s5 + $0x48] sm:$0xff]
          %v5066 = vld [vmem:[%s5 + $0x50] sm:$0xff]
          %v5067 = vld [vmem:[%s5 + $0x58] sm:$0xff]
          %v5068 = vld [vmem:[%s5 + $0x60] sm:$0xff]
          %v5069 = vld [vmem:[%s5 + $0x68] sm:$0xff]
          %v5070 = vld [vmem:[%s5 + $0x70] sm:$0xff]
          %v5071 = vld [vmem:[%s5 + $0x78] sm:$0xff]
          %v5072 = vld [vmem:[#allocation10] sm:$0x1]
          %v5074 = vperm.slane %v5072, 0
          %5076 = vmatpush.msra.mxu0 %v5071
          %5077 = vmatpush.msra.mxu0 %v5070
          %5078 = vmatpush.msra.mxu0 %v5069
          %5079 = vmatpush.msra.mxu0 %v5068
          %5080 = vmatpush.msra.mxu0 %v5067
          %5081 = vmatpush.msra.mxu0 %v5066
          %5082 = vmatpush.msra.mxu0 %v5065
          %5083 = vmatpush.msra.mxu0 %v5064
          %5084 = vmatpush.msra.mxu0 %v5063
          %5085 = vmatpush.msra.mxu0 %v5062
          %5086 = vmatpush.msra.mxu0 %v5061
          %5087 = vmatpush.msra.mxu0 %v5060
          %5088 = vmatpush.msra.mxu0 %v5059
          %5089 = vmatpush.msra.mxu0 %v5058
          %5090 = vmatpush.msra.mxu0 %v5057
          %5091 = vmatpush.msra.mxu0 %v5056
          %5092 = vmatmul.f32.gmra.mxu0 %v5055
          %v5093 = vpop.f32.mrf.mxu0
          %v5094 = vadd.f32 %v5074, %v5093
          %5095 = vdwg.mxu0
          %vm5096 = vcmask 48128
          %v5097 = vsel %vm5096, %v5094, -inf
          %5098 = vmax.xlane.f32.xlu0 %v5097
          %v5099 = vpop.xlane.xlu0 %5098
          %v5100 = vsub.f32 %v5094, %v5099
          %v5101 = vmul.f32 %v5100, 1.442695
          %v5102 = vpow.pop %v5101
          %v5103 = vsel %vm5096, %v5102, 0.0
          %5104 = vadd.xlane.f32.xlu0 %v5103
          %v5105 = vpop.xlane.xlu0 %5104
          %v5106 = vrcp.pop %v5105
          %v5107 = vmul.f32 %v5105, %v5106
          %v5108 = vsub.f32 1.0, %v5107
          %v5109 = vmul.f32 %v5106, %v5108
          %v5110 = vadd.f32 %v5106, %v5109
          %vm5111 = vweird.f32 %v5105
          %vm5112 = vweird.f32 %v5106
          %vm5113 = vmor %vm5111, %vm5112
          %v5114 = vsel %vm5113, %v5106, %v5110
          %v5115 = vand.u32 2147483647, %v5105
          %vm5116 = vcmp.eq.f32.partialorder %v5115, 8.507059e+37
          %v5117 = vand.u32 %v5105, 2147483648
          %v5118 = vor.u32 1.1754944e-38, %v5117
          %v5119 = vsel %vm5116, %v5118, %v5114
          %v5120 = vmul.f32 %v5102, %v5119
          %vm5121 = vcmask 97328
          %v5122 = vsel %vm5121, %v5094, -inf
          %5123 = vmax.xlane.f32.xlu0 %v5122
          %v5124 = vpop.xlane.xlu0 %5123
          %v5125 = vsub.f32 %v5094, %v5124
          %v5126 = vmul.f32 %v5125, 1.442695
          %v5127 = vpow.pop %v5126
          %5129 = vrot.lane.b32.xlu0 %v5127, 122
          %v5130 = vpop.permute.xlu0 %5129
          %v5132 = vsel %vm5096, %v5130, 0.0
          %5133 = vadd.xlane.f32.xlu0 %v5132
          %v5134 = vpop.xlane.xlu0 %5133
          %v5135 = vrcp.pop %v5134
          %v5136 = vmul.f32 %v5134, %v5135
          %v5137 = vsub.f32 1.0, %v5136
          %v5138 = vmul.f32 %v5135, %v5137
          %v5139 = vadd.f32 %v5135, %v5138
          %vm5140 = vweird.f32 %v5134
          %vm5141 = vweird.f32 %v5135
          %vm5142 = vmor %vm5140, %vm5141
          %v5143 = vsel %vm5142, %v5135, %v5139
          %v5144 = vand.u32 2147483647, %v5134
          %vm5145 = vcmp.eq.f32.partialorder %v5144, 8.507059e+37
          %v5146 = vand.u32 %v5134, 2147483648
          %v5147 = vor.u32 1.1754944e-38, %v5146
          %v5148 = vsel %vm5145, %v5147, %v5143
          %v5149 = vmul.f32 %v5127, %v5148
          %v5150 = vsel %vm5096, %v5120, %v5149
          %vm5151 = vcmask 97280
          %5152 = vst.msk [vmem:[%s408] sm:$0xff] %vm5151, %v5150
        $region76: #{cnn_module_branch_forward.3} parent=47 // pred_fallthru
          _
        %p5153 = scmp.lt.s32.totalorder %s27, 0
        %s5154 = scalar_select %p5153, %s27, 0
        %s5155 = smul.addr %s5154, 8
        %s5156 = scalar_lea.vmem %s7, %s5155
        // Predicated region
        $region77: #{cnn_module_branch_forward.3} parent=47 // pred_check
          %p5157 = pneg %p212
        $region78: #{cnn_module_branch_forward.3} parent=47 // pred_check_branch
          %5159 = sbr.rel (%p5157) target = $region80
        $region79: #{cnn_module_branch_forward.3} parent=47 // pred_region
          _
        $region80: #{cnn_module_branch_forward.3} parent=47 // pred_fallthru
          _
        // Predicated region
        $region81: #{cnn_module_branch_forward.3} parent=47 // pred_check
          %p5160 = pneg %p212
        $region82: #{cnn_module_branch_forward.3} parent=47 // pred_check_branch
          %5162 = sbr.rel (%p5160) target = $region84
        $region83: #{cnn_module_branch_forward.3} parent=47 // pred_region
          %p5163 = scmp.lt.s32.totalorder %s27, 0
          %s5164 = scalar_select %p5163, %s27, 0
          %s5165 = smul.addr %s5164, 8
          %s5166 = scalar_lea.vmem %s7, %s5165
        $region84: #{cnn_module_branch_forward.3} parent=47 // pred_fallthru
          _
      $region48: #{cnn_module_branch_forward.3} parent=5 // pred_fallthru
        _
      %p5167 = scmp.le.s32.totalorder 2, %s18
      // Predicated region
      $region85: #{cnn_module_branch_forward.3} parent=5 // pred_check
        %p5168 = pneg %p5167
      $region86: #{cnn_module_branch_forward.3} parent=5 // pred_check_branch
        %5170 = sbr.rel (%p5168) target = $region88
      $region87: #{cnn_module_branch_forward.3} parent=5 // pred_region
        %s5171 = ssub.s32 %s18, 2
      $region88: #{cnn_module_branch_forward.3} parent=5 // pred_fallthru
        _
    $region6: #{cnn_module_branch_forward.3} parent=1 // loop_footer
      %s22 = sadd.s32 1, %s18
    $region7: #{cnn_module_branch_forward.3} parent=1 // loop_footer_branch
      %17 = sbr.rel target = $region3
    $region8: #{cnn_module_branch_forward.3} parent=1 // loop_exit
      _
    %5172 = vsyncpa [#allocation4], 1
    %s5173 = scalar_lea.sflag [#allocation4], 1
    %5174 = vsyncpa %s5173, 1
    %5175 = vsyncpa [#allocation6], 1
    %5176 = vsyncpa [#allocation9], 1

// kernel: cnn_module_branch_forward.2
$region0: #{cnn_module_branch_forward.2}
  #allocation0 [shape = 'u32[]', space=smem, size = 0x4, offset = 0x4, fixed_abs, tag = 'smem constant byte address 0x4 - core index']
  #allocation1 [shape = 'u32[72,128]{1,0:T(1,128)}', space=vmem, size = 0x9000, scoped, tag = 'internal scratch']
  %s0 = inlined_call_operand.vmem [shape: f32[8,128,1], index: 0, kind: input, shape index: {}]
  %s1 = inlined_call_operand.hbm [shape: f32[3,64], index: 1, kind: input, shape index: {}]
  %s2 = inlined_call_operand.hbm [shape: f32[1,64], index: 2, kind: input, shape index: {}]
  %s3 = inlined_call_operand.hbm [shape: bf16[3,64,64], index: 3, kind: input, shape index: {}]
  %s4 = inlined_call_operand.hbm [shape: f32[1,64], index: 4, kind: input, shape index: {}]
  %s5 = inlined_call_operand.hbm [shape: bf16[64,123], index: 5, kind: input, shape index: {}]
  %s6 = inlined_call_operand.vmem [shape: bf16[8,32,128], index: 6, kind: output, shape index: {}]
  %s7 = sld [smem:[#allocation0]]
  $region54: #{cnn_module_branch_forward.2} parent=0
    _
  %s9 = ssub.s32 1, %s7
  %s10 = scalar_select 0, %s9, %s7
  $region1: #{cnn_module_branch_forward.2} parent=0
    #allocation2 [shape = 'u8[2048]{0}', space=vmem, size = 0x800, scoped, tag = 'input window, operand 1, single buffered']
    #allocation3 [shape = 's32[1]{0}', space=sflag, size = 0x4, scoped, tag = 'scoped memory for cnn_module_branch_forward.2']
    #allocation4 [shape = 'u8[512]{0}', space=vmem, size = 0x400, scoped, tag = 'input window, operand 2, single buffered']
    #allocation5 [shape = 's32[1]{0}', space=sflag, size = 0x4, scoped, tag = 'scoped memory for cnn_module_branch_forward.2']
    #allocation6 [shape = 'u8[49152]{0}', space=vmem, size = 0xc000, scoped, tag = 'input window, operand 3, single buffered']
    #allocation7 [shape = 'u8[512]{0}', space=vmem, size = 0x400, scoped, tag = 'input window, operand 4, single buffered']
    #allocation8 [shape = 's32[1]{0}', space=sflag, size = 0x4, scoped, tag = 'scoped memory for cnn_module_branch_forward.2']
    #allocation9 [shape = 'u8[16384]{0}', space=vmem, size = 0x4000, scoped, tag = 'input window, operand 5, single buffered']
    %11 = vsyncpa [#allocation3], 0
    %12 = vsyncpa [#allocation5], 0
    %13 = vsyncpa [#allocation8], 0
    // Predicated region
    $region2: #{cnn_module_branch_forward.2} parent=1 // pred_check
      _
    $region3: #{cnn_module_branch_forward.2} parent=1 // pred_check_branch
      %15 = sbr.rel (0) target = $region5
    $region4: #{cnn_module_branch_forward.2} parent=1 // pred_region
      _
    $region5: #{cnn_module_branch_forward.2} parent=1 // pred_fallthru
      _
    // Predicated region
    $region6: #{cnn_module_branch_forward.2} parent=1 // pred_check
      _
    $region7: #{cnn_module_branch_forward.2} parent=1 // pred_check_branch
      %17 = sbr.rel (0) target = $region9
    $region8: #{cnn_module_branch_forward.2} parent=1 // pred_region
      %19 = vsyncadd [#allocation3], 0
      %s21 = sshll.u32 %s1, 4
      %s22 = int_to_ptr.hbm [resolvable:$true] %s21
      %s23 = sshll.u32 [#allocation2], 4
      %s24 = int_to_ptr.vmem [resolvable:$true] %s23
      %26 = dma.hbm_to_vmem [thread:$0]  %s22, 64, %s24, [#allocation3]
    $region9: #{cnn_module_branch_forward.2} parent=1 // pred_fallthru
      _
    // Predicated region
    $region10: #{cnn_module_branch_forward.2} parent=1 // pred_check
      _
    $region11: #{cnn_module_branch_forward.2} parent=1 // pred_check_branch
      %28 = sbr.rel (0) target = $region13
    $region12: #{cnn_module_branch_forward.2} parent=1 // pred_region
      %30 = vsyncadd [#allocation5], 0
      %s32 = sshll.u32 %s2, 4
      %s33 = int_to_ptr.hbm [resolvable:$true] %s32
      %s34 = sshll.u32 [#allocation4], 4
      %s35 = int_to_ptr.vmem [resolvable:$true] %s34
      %37 = dma.hbm_to_vmem [thread:$0]  %s33, 16, %s35, [#allocation5]
    $region13: #{cnn_module_branch_forward.2} parent=1 // pred_fallthru
      _
    // Predicated region
    $region14: #{cnn_module_branch_forward.2} parent=1 // pred_check
      _
    $region15: #{cnn_module_branch_forward.2} parent=1 // pred_check_branch
      %39 = sbr.rel (0) target = $region17
    $region16: #{cnn_module_branch_forward.2} parent=1 // pred_region
      %41 = vsyncadd [#allocation5], 0
      %s42 = sshll.u32 %s3, 4
      %s43 = int_to_ptr.hbm [resolvable:$true] %s42
      %s44 = sshll.u32 [#allocation6], 4
      %s45 = int_to_ptr.vmem [resolvable:$true] %s44
      %50 = dma.hbm_to_vmem [thread:$0]  %s43, 1536, %s45, [#allocation5], 64, 64, 4
    $region17: #{cnn_module_branch_forward.2} parent=1 // pred_fallthru
      _
    // Predicated region
    $region18: #{cnn_module_branch_forward.2} parent=1 // pred_check
      _
    $region19: #{cnn_module_branch_forward.2} parent=1 // pred_check_branch
      %52 = sbr.rel (0) target = $region21
    $region20: #{cnn_module_branch_forward.2} parent=1 // pred_region
      %54 = vsyncadd [#allocation8], 0
      %s56 = sshll.u32 %s4, 4
      %s57 = int_to_ptr.hbm [resolvable:$true] %s56
      %s58 = sshll.u32 [#allocation7], 4
      %s59 = int_to_ptr.vmem [resolvable:$true] %s58
      %61 = dma.hbm_to_vmem [thread:$0]  %s57, 16, %s59, [#allocation8]
    $region21: #{cnn_module_branch_forward.2} parent=1 // pred_fallthru
      _
    // Predicated region
    $region22: #{cnn_module_branch_forward.2} parent=1 // pred_check
      _
    $region23: #{cnn_module_branch_forward.2} parent=1 // pred_check_branch
      %63 = sbr.rel (0) target = $region25
    $region24: #{cnn_module_branch_forward.2} parent=1 // pred_region
      %65 = vsyncadd [#allocation8], 0
      %s66 = sshll.u32 %s5, 4
      %s67 = int_to_ptr.hbm [resolvable:$true] %s66
      %s68 = sshll.u32 [#allocation9], 4
      %s69 = int_to_ptr.vmem [resolvable:$true] %s68
      %74 = dma.hbm_to_vmem [thread:$0]  %s67, 512, %s69, [#allocation8], 64, 64, 4
    $region25: #{cnn_module_branch_forward.2} parent=1 // pred_fallthru
      _
    // Predicated region
    $region26: #{cnn_module_branch_forward.2} parent=1 // pred_check
      _
    $region27: #{cnn_module_branch_forward.2} parent=1 // pred_check_branch
      %76 = sbr.rel (0) target = $region29
    $region28: #{cnn_module_branch_forward.2} parent=1 // pred_region
      %78 = dma.done [#allocation3], 64
    $region29: #{cnn_module_branch_forward.2} parent=1 // pred_fallthru
      _
    // Predicated region
    $region30: #{cnn_module_branch_forward.2} parent=1 // pred_check
      _
    $region31: #{cnn_module_branch_forward.2} parent=1 // pred_check_branch
      %80 = sbr.rel (0) target = $region33
    $region32: #{cnn_module_branch_forward.2} parent=1 // pred_region
      %82 = dma.done [#allocation5], 16
    $region33: #{cnn_module_branch_forward.2} parent=1 // pred_fallthru
      _
    // Predicated region
    $region34: #{cnn_module_branch_forward.2} parent=1 // pred_check
      _
    $region35: #{cnn_module_branch_forward.2} parent=1 // pred_check_branch
      %84 = sbr.rel (0) target = $region37
    $region36: #{cnn_module_branch_forward.2} parent=1 // pred_region
      %86 = dma.done [#allocation5], 1536
    $region37: #{cnn_module_branch_forward.2} parent=1 // pred_fallthru
      _
    // Predicated region
    $region38: #{cnn_module_branch_forward.2} parent=1 // pred_check
      _
    $region39: #{cnn_module_branch_forward.2} parent=1 // pred_check_branch
      %88 = sbr.rel (0) target = $region41
    $region40: #{cnn_module_branch_forward.2} parent=1 // pred_region
      %90 = dma.done [#allocation8], 16
    $region41: #{cnn_module_branch_forward.2} parent=1 // pred_fallthru
      _
    // Predicated region
    $region42: #{cnn_module_branch_forward.2} parent=1 // pred_check
      _
    $region43: #{cnn_module_branch_forward.2} parent=1 // pred_check_branch
      %92 = sbr.rel (0) target = $region45
    $region44: #{cnn_module_branch_forward.2} parent=1 // pred_region
      %94 = dma.done [#allocation8], 512
    $region45: #{cnn_module_branch_forward.2} parent=1 // pred_fallthru
      _
    %v96 = vld [vmem:[%s0] sm:$0xff]
    %v97 = vld [vmem:[%s0 + $0x8] sm:$0xff]
    %v98 = vld [vmem:[%s0 + $0x10] sm:$0xff]
    %v99 = vld [vmem:[%s0 + $0x18] sm:$0xff]
    %v100 = vld [vmem:[%s0 + $0x20] sm:$0xff]
    %v101 = vld [vmem:[%s0 + $0x28] sm:$0xff]
    %v102 = vld [vmem:[%s0 + $0x30] sm:$0xff]
    %v103 = vld [vmem:[%s0 + $0x38] sm:$0xff]
    %v104 = vld [vmem:[%s0 + $0x40] sm:$0xff]
    %v105 = vld [vmem:[%s0 + $0x48] sm:$0xff]
    %v106 = vld [vmem:[%s0 + $0x50] sm:$0xff]
    %v107 = vld [vmem:[%s0 + $0x58] sm:$0xff]
    %v108 = vld [vmem:[%s0 + $0x60] sm:$0xff]
    %v109 = vld [vmem:[%s0 + $0x68] sm:$0xff]
    %v110 = vld [vmem:[%s0 + $0x70] sm:$0xff]
    %v111 = vld [vmem:[%s0 + $0x78] sm:$0xff]
    %v112 = vld [vmem:[%s0 + $0x80] sm:$0xff]
    %v113 = vld [vmem:[%s0 + $0x88] sm:$0xff]
    %v114 = vld [vmem:[%s0 + $0x90] sm:$0xff]
    %v115 = vld [vmem:[%s0 + $0x98] sm:$0xff]
    %v116 = vld [vmem:[%s0 + $0xa0] sm:$0xff]
    %v117 = vld [vmem:[%s0 + $0xa8] sm:$0xff]
    %v118 = vld [vmem:[%s0 + $0xb0] sm:$0xff]
    %v119 = vld [vmem:[%s0 + $0xb8] sm:$0xff]
    %v120 = vld [vmem:[%s0 + $0xc0] sm:$0xff]
    %v121 = vld [vmem:[%s0 + $0xc8] sm:$0xff]
    %v122 = vld [vmem:[%s0 + $0xd0] sm:$0xff]
    %v123 = vld [vmem:[%s0 + $0xd8] sm:$0xff]
    %v124 = vld [vmem:[%s0 + $0xe0] sm:$0xff]
    %v125 = vld [vmem:[%s0 + $0xe8] sm:$0xff]
    %v126 = vld [vmem:[%s0 + $0xf0] sm:$0xff]
    %v127 = vld [vmem:[%s0 + $0xf8] sm:$0xff]
    %v128 = vld [vmem:[%s0 + $0x100] sm:$0xff]
    %v129 = vld [vmem:[%s0 + $0x108] sm:$0xff]
    %v130 = vld [vmem:[%s0 + $0x110] sm:$0xff]
    %v131 = vld [vmem:[%s0 + $0x118] sm:$0xff]
    %v132 = vld [vmem:[%s0 + $0x120] sm:$0xff]
    %v133 = vld [vmem:[%s0 + $0x128] sm:$0xff]
    %v134 = vld [vmem:[%s0 + $0x130] sm:$0xff]
    %v135 = vld [vmem:[%s0 + $0x138] sm:$0xff]
    %v136 = vld [vmem:[%s0 + $0x140] sm:$0xff]
    %v137 = vld [vmem:[%s0 + $0x148] sm:$0xff]
    %v138 = vld [vmem:[%s0 + $0x150] sm:$0xff]
    %v139 = vld [vmem:[%s0 + $0x158] sm:$0xff]
    %v140 = vld [vmem:[%s0 + $0x160] sm:$0xff]
    %v141 = vld [vmem:[%s0 + $0x168] sm:$0xff]
    %v142 = vld [vmem:[%s0 + $0x170] sm:$0xff]
    %v143 = vld [vmem:[%s0 + $0x178] sm:$0xff]
    %v144 = vld [vmem:[%s0 + $0x180] sm:$0xff]
    %v145 = vld [vmem:[%s0 + $0x188] sm:$0xff]
    %v146 = vld [vmem:[%s0 + $0x190] sm:$0xff]
    %v147 = vld [vmem:[%s0 + $0x198] sm:$0xff]
    %v148 = vld [vmem:[%s0 + $0x1a0] sm:$0xff]
    %v149 = vld [vmem:[%s0 + $0x1a8] sm:$0xff]
    %v150 = vld [vmem:[%s0 + $0x1b0] sm:$0xff]
    %v151 = vld [vmem:[%s0 + $0x1b8] sm:$0xff]
    %v152 = vld [vmem:[%s0 + $0x1c0] sm:$0xff]
    %v153 = vld [vmem:[%s0 + $0x1c8] sm:$0xff]
    %v154 = vld [vmem:[%s0 + $0x1d0] sm:$0xff]
    %v155 = vld [vmem:[%s0 + $0x1d8] sm:$0xff]
    %v156 = vld [vmem:[%s0 + $0x1e0] sm:$0xff]
    %v157 = vld [vmem:[%s0 + $0x1e8] sm:$0xff]
    %v158 = vld [vmem:[%s0 + $0x1f0] sm:$0xff]
    %v159 = vld [vmem:[%s0 + $0x1f8] sm:$0xff]
    %v160 = vld [vmem:[%s0 + $0x200] sm:$0xff]
    %v161 = vld [vmem:[%s0 + $0x208] sm:$0xff]
    %v162 = vld [vmem:[%s0 + $0x210] sm:$0xff]
    %v163 = vld [vmem:[%s0 + $0x218] sm:$0xff]
    %v164 = vld [vmem:[%s0 + $0x220] sm:$0xff]
    %v165 = vld [vmem:[%s0 + $0x228] sm:$0xff]
    %v166 = vld [vmem:[%s0 + $0x230] sm:$0xff]
    %v167 = vld [vmem:[%s0 + $0x238] sm:$0xff]
    %v168 = vld [vmem:[%s0 + $0x240] sm:$0xff]
    %v169 = vld [vmem:[%s0 + $0x248] sm:$0xff]
    %v170 = vld [vmem:[%s0 + $0x250] sm:$0xff]
    %v171 = vld [vmem:[%s0 + $0x258] sm:$0xff]
    %v172 = vld [vmem:[%s0 + $0x260] sm:$0xff]
    %v173 = vld [vmem:[%s0 + $0x268] sm:$0xff]
    %v174 = vld [vmem:[%s0 + $0x270] sm:$0xff]
    %v175 = vld [vmem:[%s0 + $0x278] sm:$0xff]
    %v176 = vld [vmem:[%s0 + $0x280] sm:$0xff]
    %v177 = vld [vmem:[%s0 + $0x288] sm:$0xff]
    %v178 = vld [vmem:[%s0 + $0x290] sm:$0xff]
    %v179 = vld [vmem:[%s0 + $0x298] sm:$0xff]
    %v180 = vld [vmem:[%s0 + $0x2a0] sm:$0xff]
    %v181 = vld [vmem:[%s0 + $0x2a8] sm:$0xff]
    %v182 = vld [vmem:[%s0 + $0x2b0] sm:$0xff]
    %v183 = vld [vmem:[%s0 + $0x2b8] sm:$0xff]
    %v184 = vld [vmem:[%s0 + $0x2c0] sm:$0xff]
    %v185 = vld [vmem:[%s0 + $0x2c8] sm:$0xff]
    %v186 = vld [vmem:[%s0 + $0x2d0] sm:$0xff]
    %v187 = vld [vmem:[%s0 + $0x2d8] sm:$0xff]
    %v188 = vld [vmem:[%s0 + $0x2e0] sm:$0xff]
    %v189 = vld [vmem:[%s0 + $0x2e8] sm:$0xff]
    %v190 = vld [vmem:[%s0 + $0x2f0] sm:$0xff]
    %v191 = vld [vmem:[%s0 + $0x2f8] sm:$0xff]
    %v192 = vld [vmem:[%s0 + $0x300] sm:$0xff]
    %v193 = vld [vmem:[%s0 + $0x308] sm:$0xff]
    %v194 = vld [vmem:[%s0 + $0x310] sm:$0xff]
    %v195 = vld [vmem:[%s0 + $0x318] sm:$0xff]
    %v196 = vld [vmem:[%s0 + $0x320] sm:$0xff]
    %v197 = vld [vmem:[%s0 + $0x328] sm:$0xff]
    %v198 = vld [vmem:[%s0 + $0x330] sm:$0xff]
    %v199 = vld [vmem:[%s0 + $0x338] sm:$0xff]
    %v200 = vld [vmem:[%s0 + $0x340] sm:$0xff]
    %v201 = vld [vmem:[%s0 + $0x348] sm:$0xff]
    %v202 = vld [vmem:[%s0 + $0x350] sm:$0xff]
    %v203 = vld [vmem:[%s0 + $0x358] sm:$0xff]
    %v204 = vld [vmem:[%s0 + $0x360] sm:$0xff]
    %v205 = vld [vmem:[%s0 + $0x368] sm:$0xff]
    %v206 = vld [vmem:[%s0 + $0x370] sm:$0xff]
    %v207 = vld [vmem:[%s0 + $0x378] sm:$0xff]
    %v208 = vld [vmem:[%s0 + $0x380] sm:$0xff]
    %v209 = vld [vmem:[%s0 + $0x388] sm:$0xff]
    %v210 = vld [vmem:[%s0 + $0x390] sm:$0xff]
    %v211 = vld [vmem:[%s0 + $0x398] sm:$0xff]
    %v212 = vld [vmem:[%s0 + $0x3a0] sm:$0xff]
    %v213 = vld [vmem:[%s0 + $0x3a8] sm:$0xff]
    %v214 = vld [vmem:[%s0 + $0x3b0] sm:$0xff]
    %v215 = vld [vmem:[%s0 + $0x3b8] sm:$0xff]
    %v216 = vld [vmem:[%s0 + $0x3c0] sm:$0xff]
    %v217 = vld [vmem:[%s0 + $0x3c8] sm:$0xff]
    %v218 = vld [vmem:[%s0 + $0x3d0] sm:$0xff]
    %v219 = vld [vmem:[%s0 + $0x3d8] sm:$0xff]
    %v220 = vld [vmem:[%s0 + $0x3e0] sm:$0xff]
    %v221 = vld [vmem:[%s0 + $0x3e8] sm:$0xff]
    %v222 = vld [vmem:[%s0 + $0x3f0] sm:$0xff]
    %v223 = vld [vmem:[%s0 + $0x3f8] sm:$0xff]
    %v224 = vld [vmem:[#allocation2] sm:$0x7]
    %v225 = vld [vmem:[#allocation4] sm:$0x1]
    %v226 = vld [vmem:[#allocation6] sm:$0xf]
    %v227 = vld [vmem:[#allocation6 + $0x4] sm:$0xf]
    %v228 = vld [vmem:[#allocation6 + $0x8] sm:$0xf]
    %v229 = vld [vmem:[#allocation6 + $0xc] sm:$0xf]
    %v230 = vld [vmem:[#allocation6 + $0x10] sm:$0xf]
    %v231 = vld [vmem:[#allocation6 + $0x14] sm:$0xf]
    %v232 = vld [vmem:[#allocation6 + $0x18] sm:$0xf]
    %v233 = vld [vmem:[#allocation6 + $0x1c] sm:$0xf]
    %v234 = vld [vmem:[#allocation6 + $0x20] sm:$0xf]
    %v235 = vld [vmem:[#allocation6 + $0x24] sm:$0xf]
    %v236 = vld [vmem:[#allocation6 + $0x28] sm:$0xf]
    %v237 = vld [vmem:[#allocation6 + $0x2c] sm:$0xf]
    %v238 = vld [vmem:[#allocation6 + $0x30] sm:$0xf]
    %v239 = vld [vmem:[#allocation6 + $0x34] sm:$0xf]
    %v240 = vld [vmem:[#allocation6 + $0x38] sm:$0xf]
    %v241 = vld [vmem:[#allocation6 + $0x3c] sm:$0xf]
    %v242 = vld [vmem:[#allocation6 + $0x40] sm:$0xf]
    %v243 = vld [vmem:[#allocation6 + $0x44] sm:$0xf]
    %v244 = vld [vmem:[#allocation6 + $0x48] sm:$0xf]
    %v245 = vld [vmem:[#allocation6 + $0x4c] sm:$0xf]
    %v246 = vld [vmem:[#allocation6 + $0x50] sm:$0xf]
    %v247 = vld [vmem:[#allocation6 + $0x54] sm:$0xf]
    %v248 = vld [vmem:[#allocation6 + $0x58] sm:$0xf]
    %v249 = vld [vmem:[#allocation6 + $0x5c] sm:$0xf]
    %v250 = vld [vmem:[#allocation7] sm:$0x1]
    %252 = vset.pattern.permute.xlu0 0
    %253 = vperm.xlu0 %252, %v96
    %v254 = vpop.permute.xlu0 %253
    %257 = vset.pattern.permute.xlu0 0
    %258 = vperm.xlu0 %257, %v97
    %v259 = vpop.permute.xlu0 %258
    %262 = vset.pattern.permute.xlu0 0
    %263 = vperm.xlu0 %262, %v98
    %v264 = vpop.permute.xlu0 %263
    %267 = vset.pattern.permute.xlu0 0
    %268 = vperm.xlu0 %267, %v99
    %v269 = vpop.permute.xlu0 %268
    %272 = vset.pattern.permute.xlu0 0
    %273 = vperm.xlu0 %272, %v100
    %v274 = vpop.permute.xlu0 %273
    %277 = vset.pattern.permute.xlu0 0
    %278 = vperm.xlu0 %277, %v101
    %v279 = vpop.permute.xlu0 %278
    %282 = vset.pattern.permute.xlu0 0
    %283 = vperm.xlu0 %282, %v102
    %v284 = vpop.permute.xlu0 %283
    %287 = vset.pattern.permute.xlu0 0
    %288 = vperm.xlu0 %287, %v103
    %v289 = vpop.permute.xlu0 %288
    %292 = vset.pattern.permute.xlu0 0
    %293 = vperm.xlu0 %292, %v104
    %v294 = vpop.permute.xlu0 %293
    %297 = vset.pattern.permute.xlu0 0
    %298 = vperm.xlu0 %297, %v105
    %v299 = vpop.permute.xlu0 %298
    %302 = vset.pattern.permute.xlu0 0
    %303 = vperm.xlu0 %302, %v106
    %v304 = vpop.permute.xlu0 %303
    %307 = vset.pattern.permute.xlu0 0
    %308 = vperm.xlu0 %307, %v107
    %v309 = vpop.permute.xlu0 %308
    %312 = vset.pattern.permute.xlu0 0
    %313 = vperm.xlu0 %312, %v108
    %v314 = vpop.permute.xlu0 %313
    %317 = vset.pattern.permute.xlu0 0
    %318 = vperm.xlu0 %317, %v109
    %v319 = vpop.permute.xlu0 %318
    %322 = vset.pattern.permute.xlu0 0
    %323 = vperm.xlu0 %322, %v110
    %v324 = vpop.permute.xlu0 %323
    %327 = vset.pattern.permute.xlu0 0
    %328 = vperm.xlu0 %327, %v111
    %v329 = vpop.permute.xlu0 %328
    %332 = vset.pattern.permute.xlu0 0
    %333 = vperm.xlu0 %332, %v112
    %v334 = vpop.permute.xlu0 %333
    %337 = vset.pattern.permute.xlu0 0
    %338 = vperm.xlu0 %337, %v113
    %v339 = vpop.permute.xlu0 %338
    %342 = vset.pattern.permute.xlu0 0
    %343 = vperm.xlu0 %342, %v114
    %v344 = vpop.permute.xlu0 %343
    %347 = vset.pattern.permute.xlu0 0
    %348 = vperm.xlu0 %347, %v115
    %v349 = vpop.permute.xlu0 %348
    %352 = vset.pattern.permute.xlu0 0
    %353 = vperm.xlu0 %352, %v116
    %v354 = vpop.permute.xlu0 %353
    %357 = vset.pattern.permute.xlu0 0
    %358 = vperm.xlu0 %357, %v117
    %v359 = vpop.permute.xlu0 %358
    %362 = vset.pattern.permute.xlu0 0
    %363 = vperm.xlu0 %362, %v118
    %v364 = vpop.permute.xlu0 %363
    %367 = vset.pattern.permute.xlu0 0
    %368 = vperm.xlu0 %367, %v119
    %v369 = vpop.permute.xlu0 %368
    %372 = vset.pattern.permute.xlu0 0
    %373 = vperm.xlu0 %372, %v120
    %v374 = vpop.permute.xlu0 %373
    %377 = vset.pattern.permute.xlu0 0
    %378 = vperm.xlu0 %377, %v121
    %v379 = vpop.permute.xlu0 %378
    %382 = vset.pattern.permute.xlu0 0
    %383 = vperm.xlu0 %382, %v122
    %v384 = vpop.permute.xlu0 %383
    %387 = vset.pattern.permute.xlu0 0
    %388 = vperm.xlu0 %387, %v123
    %v389 = vpop.permute.xlu0 %388
    %392 = vset.pattern.permute.xlu0 0
    %393 = vperm.xlu0 %392, %v124
    %v394 = vpop.permute.xlu0 %393
    %397 = vset.pattern.permute.xlu0 0
    %398 = vperm.xlu0 %397, %v125
    %v399 = vpop.permute.xlu0 %398
    %402 = vset.pattern.permute.xlu0 0
    %403 = vperm.xlu0 %402, %v126
    %v404 = vpop.permute.xlu0 %403
    %407 = vset.pattern.permute.xlu0 0
    %408 = vperm.xlu0 %407, %v127
    %v409 = vpop.permute.xlu0 %408
    %412 = vset.pattern.permute.xlu0 0
    %413 = vperm.xlu0 %412, %v128
    %v414 = vpop.permute.xlu0 %413
    %417 = vset.pattern.permute.xlu0 0
    %418 = vperm.xlu0 %417, %v129
    %v419 = vpop.permute.xlu0 %418
    %422 = vset.pattern.permute.xlu0 0
    %423 = vperm.xlu0 %422, %v130
    %v424 = vpop.permute.xlu0 %423
    %427 = vset.pattern.permute.xlu0 0
    %428 = vperm.xlu0 %427, %v131
    %v429 = vpop.permute.xlu0 %428
    %432 = vset.pattern.permute.xlu0 0
    %433 = vperm.xlu0 %432, %v132
    %v434 = vpop.permute.xlu0 %433
    %437 = vset.pattern.permute.xlu0 0
    %438 = vperm.xlu0 %437, %v133
    %v439 = vpop.permute.xlu0 %438
    %442 = vset.pattern.permute.xlu0 0
    %443 = vperm.xlu0 %442, %v134
    %v444 = vpop.permute.xlu0 %443
    %447 = vset.pattern.permute.xlu0 0
    %448 = vperm.xlu0 %447, %v135
    %v449 = vpop.permute.xlu0 %448
    %452 = vset.pattern.permute.xlu0 0
    %453 = vperm.xlu0 %452, %v136
    %v454 = vpop.permute.xlu0 %453
    %457 = vset.pattern.permute.xlu0 0
    %458 = vperm.xlu0 %457, %v137
    %v459 = vpop.permute.xlu0 %458
    %462 = vset.pattern.permute.xlu0 0
    %463 = vperm.xlu0 %462, %v138
    %v464 = vpop.permute.xlu0 %463
    %467 = vset.pattern.permute.xlu0 0
    %468 = vperm.xlu0 %467, %v139
    %v469 = vpop.permute.xlu0 %468
    %472 = vset.pattern.permute.xlu0 0
    %473 = vperm.xlu0 %472, %v140
    %v474 = vpop.permute.xlu0 %473
    %477 = vset.pattern.permute.xlu0 0
    %478 = vperm.xlu0 %477, %v141
    %v479 = vpop.permute.xlu0 %478
    %482 = vset.pattern.permute.xlu0 0
    %483 = vperm.xlu0 %482, %v142
    %v484 = vpop.permute.xlu0 %483
    %487 = vset.pattern.permute.xlu0 0
    %488 = vperm.xlu0 %487, %v143
    %v489 = vpop.permute.xlu0 %488
    %492 = vset.pattern.permute.xlu0 0
    %493 = vperm.xlu0 %492, %v144
    %v494 = vpop.permute.xlu0 %493
    %497 = vset.pattern.permute.xlu0 0
    %498 = vperm.xlu0 %497, %v145
    %v499 = vpop.permute.xlu0 %498
    %502 = vset.pattern.permute.xlu0 0
    %503 = vperm.xlu0 %502, %v146
    %v504 = vpop.permute.xlu0 %503
    %507 = vset.pattern.permute.xlu0 0
    %508 = vperm.xlu0 %507, %v147
    %v509 = vpop.permute.xlu0 %508
    %512 = vset.pattern.permute.xlu0 0
    %513 = vperm.xlu0 %512, %v148
    %v514 = vpop.permute.xlu0 %513
    %517 = vset.pattern.permute.xlu0 0
    %518 = vperm.xlu0 %517, %v149
    %v519 = vpop.permute.xlu0 %518
    %522 = vset.pattern.permute.xlu0 0
    %523 = vperm.xlu0 %522, %v150
    %v524 = vpop.permute.xlu0 %523
    %527 = vset.pattern.permute.xlu0 0
    %528 = vperm.xlu0 %527, %v151
    %v529 = vpop.permute.xlu0 %528
    %532 = vset.pattern.permute.xlu0 0
    %533 = vperm.xlu0 %532, %v152
    %v534 = vpop.permute.xlu0 %533
    %537 = vset.pattern.permute.xlu0 0
    %538 = vperm.xlu0 %537, %v153
    %v539 = vpop.permute.xlu0 %538
    %542 = vset.pattern.permute.xlu0 0
    %543 = vperm.xlu0 %542, %v154
    %v544 = vpop.permute.xlu0 %543
    %547 = vset.pattern.permute.xlu0 0
    %548 = vperm.xlu0 %547, %v155
    %v549 = vpop.permute.xlu0 %548
    %552 = vset.pattern.permute.xlu0 0
    %553 = vperm.xlu0 %552, %v156
    %v554 = vpop.permute.xlu0 %553
    %557 = vset.pattern.permute.xlu0 0
    %558 = vperm.xlu0 %557, %v157
    %v559 = vpop.permute.xlu0 %558
    %562 = vset.pattern.permute.xlu0 0
    %563 = vperm.xlu0 %562, %v158
    %v564 = vpop.permute.xlu0 %563
    %567 = vset.pattern.permute.xlu0 0
    %568 = vperm.xlu0 %567, %v159
    %v569 = vpop.permute.xlu0 %568
    %572 = vset.pattern.permute.xlu0 0
    %573 = vperm.xlu0 %572, %v160
    %v574 = vpop.permute.xlu0 %573
    %577 = vset.pattern.permute.xlu0 0
    %578 = vperm.xlu0 %577, %v161
    %v579 = vpop.permute.xlu0 %578
    %582 = vset.pattern.permute.xlu0 0
    %583 = vperm.xlu0 %582, %v162
    %v584 = vpop.permute.xlu0 %583
    %587 = vset.pattern.permute.xlu0 0
    %588 = vperm.xlu0 %587, %v163
    %v589 = vpop.permute.xlu0 %588
    %592 = vset.pattern.permute.xlu0 0
    %593 = vperm.xlu0 %592, %v164
    %v594 = vpop.permute.xlu0 %593
    %597 = vset.pattern.permute.xlu0 0
    %598 = vperm.xlu0 %597, %v165
    %v599 = vpop.permute.xlu0 %598
    %602 = vset.pattern.permute.xlu0 0
    %603 = vperm.xlu0 %602, %v166
    %v604 = vpop.permute.xlu0 %603
    %607 = vset.pattern.permute.xlu0 0
    %608 = vperm.xlu0 %607, %v167
    %v609 = vpop.permute.xlu0 %608
    %612 = vset.pattern.permute.xlu0 0
    %613 = vperm.xlu0 %612, %v168
    %v614 = vpop.permute.xlu0 %613
    %617 = vset.pattern.permute.xlu0 0
    %618 = vperm.xlu0 %617, %v169
    %v619 = vpop.permute.xlu0 %618
    %622 = vset.pattern.permute.xlu0 0
    %623 = vperm.xlu0 %622, %v170
    %v624 = vpop.permute.xlu0 %623
    %627 = vset.pattern.permute.xlu0 0
    %628 = vperm.xlu0 %627, %v171
    %v629 = vpop.permute.xlu0 %628
    %632 = vset.pattern.permute.xlu0 0
    %633 = vperm.xlu0 %632, %v172
    %v634 = vpop.permute.xlu0 %633
    %637 = vset.pattern.permute.xlu0 0
    %638 = vperm.xlu0 %637, %v173
    %v639 = vpop.permute.xlu0 %638
    %642 = vset.pattern.permute.xlu0 0
    %643 = vperm.xlu0 %642, %v174
    %v644 = vpop.permute.xlu0 %643
    %647 = vset.pattern.permute.xlu0 0
    %648 = vperm.xlu0 %647, %v175
    %v649 = vpop.permute.xlu0 %648
    %652 = vset.pattern.permute.xlu0 0
    %653 = vperm.xlu0 %652, %v176
    %v654 = vpop.permute.xlu0 %653
    %657 = vset.pattern.permute.xlu0 0
    %658 = vperm.xlu0 %657, %v177
    %v659 = vpop.permute.xlu0 %658
    %662 = vset.pattern.permute.xlu0 0
    %663 = vperm.xlu0 %662, %v178
    %v664 = vpop.permute.xlu0 %663
    %667 = vset.pattern.permute.xlu0 0
    %668 = vperm.xlu0 %667, %v179
    %v669 = vpop.permute.xlu0 %668
    %672 = vset.pattern.permute.xlu0 0
    %673 = vperm.xlu0 %672, %v180
    %v674 = vpop.permute.xlu0 %673
    %677 = vset.pattern.permute.xlu0 0
    %678 = vperm.xlu0 %677, %v181
    %v679 = vpop.permute.xlu0 %678
    %682 = vset.pattern.permute.xlu0 0
    %683 = vperm.xlu0 %682, %v182
    %v684 = vpop.permute.xlu0 %683
    %687 = vset.pattern.permute.xlu0 0
    %688 = vperm.xlu0 %687, %v183
    %v689 = vpop.permute.xlu0 %688
    %692 = vset.pattern.permute.xlu0 0
    %693 = vperm.xlu0 %692, %v184
    %v694 = vpop.permute.xlu0 %693
    %697 = vset.pattern.permute.xlu0 0
    %698 = vperm.xlu0 %697, %v185
    %v699 = vpop.permute.xlu0 %698
    %702 = vset.pattern.permute.xlu0 0
    %703 = vperm.xlu0 %702, %v186
    %v704 = vpop.permute.xlu0 %703
    %707 = vset.pattern.permute.xlu0 0
    %708 = vperm.xlu0 %707, %v187
    %v709 = vpop.permute.xlu0 %708
    %712 = vset.pattern.permute.xlu0 0
    %713 = vperm.xlu0 %712, %v188
    %v714 = vpop.permute.xlu0 %713
    %717 = vset.pattern.permute.xlu0 0
    %718 = vperm.xlu0 %717, %v189
    %v719 = vpop.permute.xlu0 %718
    %722 = vset.pattern.permute.xlu0 0
    %723 = vperm.xlu0 %722, %v190
    %v724 = vpop.permute.xlu0 %723
    %727 = vset.pattern.permute.xlu0 0
    %728 = vperm.xlu0 %727, %v191
    %v729 = vpop.permute.xlu0 %728
    %732 = vset.pattern.permute.xlu0 0
    %733 = vperm.xlu0 %732, %v192
    %v734 = vpop.permute.xlu0 %733
    %737 = vset.pattern.permute.xlu0 0
    %738 = vperm.xlu0 %737, %v193
    %v739 = vpop.permute.xlu0 %738
    %742 = vset.pattern.permute.xlu0 0
    %743 = vperm.xlu0 %742, %v194
    %v744 = vpop.permute.xlu0 %743
    %747 = vset.pattern.permute.xlu0 0
    %748 = vperm.xlu0 %747, %v195
    %v749 = vpop.permute.xlu0 %748
    %752 = vset.pattern.permute.xlu0 0
    %753 = vperm.xlu0 %752, %v196
    %v754 = vpop.permute.xlu0 %753
    %757 = vset.pattern.permute.xlu0 0
    %758 = vperm.xlu0 %757, %v197
    %v759 = vpop.permute.xlu0 %758
    %762 = vset.pattern.permute.xlu0 0
    %763 = vperm.xlu0 %762, %v198
    %v764 = vpop.permute.xlu0 %763
    %767 = vset.pattern.permute.xlu0 0
    %768 = vperm.xlu0 %767, %v199
    %v769 = vpop.permute.xlu0 %768
    %772 = vset.pattern.permute.xlu0 0
    %773 = vperm.xlu0 %772, %v200
    %v774 = vpop.permute.xlu0 %773
    %777 = vset.pattern.permute.xlu0 0
    %778 = vperm.xlu0 %777, %v201
    %v779 = vpop.permute.xlu0 %778
    %782 = vset.pattern.permute.xlu0 0
    %783 = vperm.xlu0 %782, %v202
    %v784 = vpop.permute.xlu0 %783
    %787 = vset.pattern.permute.xlu0 0
    %788 = vperm.xlu0 %787, %v203
    %v789 = vpop.permute.xlu0 %788
    %792 = vset.pattern.permute.xlu0 0
    %793 = vperm.xlu0 %792, %v204
    %v794 = vpop.permute.xlu0 %793
    %797 = vset.pattern.permute.xlu0 0
    %798 = vperm.xlu0 %797, %v205
    %v799 = vpop.permute.xlu0 %798
    %802 = vset.pattern.permute.xlu0 0
    %803 = vperm.xlu0 %802, %v206
    %v804 = vpop.permute.xlu0 %803
    %807 = vset.pattern.permute.xlu0 0
    %808 = vperm.xlu0 %807, %v207
    %v809 = vpop.permute.xlu0 %808
    %812 = vset.pattern.permute.xlu0 0
    %813 = vperm.xlu0 %812, %v208
    %v814 = vpop.permute.xlu0 %813
    %817 = vset.pattern.permute.xlu0 0
    %818 = vperm.xlu0 %817, %v209
    %v819 = vpop.permute.xlu0 %818
    %822 = vset.pattern.permute.xlu0 0
    %823 = vperm.xlu0 %822, %v210
    %v824 = vpop.permute.xlu0 %823
    %827 = vset.pattern.permute.xlu0 0
    %828 = vperm.xlu0 %827, %v211
    %v829 = vpop.permute.xlu0 %828
    %832 = vset.pattern.permute.xlu0 0
    %833 = vperm.xlu0 %832, %v212
    %v834 = vpop.permute.xlu0 %833
    %837 = vset.pattern.permute.xlu0 0
    %838 = vperm.xlu0 %837, %v213
    %v839 = vpop.permute.xlu0 %838
    %842 = vset.pattern.permute.xlu0 0
    %843 = vperm.xlu0 %842, %v214
    %v844 = vpop.permute.xlu0 %843
    %847 = vset.pattern.permute.xlu0 0
    %848 = vperm.xlu0 %847, %v215
    %v849 = vpop.permute.xlu0 %848
    %852 = vset.pattern.permute.xlu0 0
    %853 = vperm.xlu0 %852, %v216
    %v854 = vpop.permute.xlu0 %853
    %857 = vset.pattern.permute.xlu0 0
    %858 = vperm.xlu0 %857, %v217
    %v859 = vpop.permute.xlu0 %858
    %862 = vset.pattern.permute.xlu0 0
    %863 = vperm.xlu0 %862, %v218
    %v864 = vpop.permute.xlu0 %863
    %867 = vset.pattern.permute.xlu0 0
    %868 = vperm.xlu0 %867, %v219
    %v869 = vpop.permute.xlu0 %868
    %872 = vset.pattern.permute.xlu0 0
    %873 = vperm.xlu0 %872, %v220
    %v874 = vpop.permute.xlu0 %873
    %877 = vset.pattern.permute.xlu0 0
    %878 = vperm.xlu0 %877, %v221
    %v879 = vpop.permute.xlu0 %878
    %882 = vset.pattern.permute.xlu0 0
    %883 = vperm.xlu0 %882, %v222
    %v884 = vpop.permute.xlu0 %883
    %887 = vset.pattern.permute.xlu0 0
    %888 = vperm.xlu0 %887, %v223
    %v889 = vpop.permute.xlu0 %888
    %v891 = vperm.slane %v224, 0
    %v892 = vmul.f32 %v254, %v891
    %v893 = vmul.f32 %v259, %v891
    %v894 = vmul.f32 %v264, %v891
    %v895 = vmul.f32 %v269, %v891
    %v896 = vmul.f32 %v274, %v891
    %v897 = vmul.f32 %v279, %v891
    %v898 = vmul.f32 %v284, %v891
    %v899 = vmul.f32 %v289, %v891
    %v900 = vmul.f32 %v294, %v891
    %v901 = vmul.f32 %v299, %v891
    %v902 = vmul.f32 %v304, %v891
    %v903 = vmul.f32 %v309, %v891
    %v904 = vmul.f32 %v314, %v891
    %v905 = vmul.f32 %v319, %v891
    %v906 = vmul.f32 %v324, %v891
    %v907 = vmul.f32 %v329, %v891
    %v908 = vmul.f32 %v334, %v891
    %v909 = vmul.f32 %v339, %v891
    %v910 = vmul.f32 %v344, %v891
    %v911 = vmul.f32 %v349, %v891
    %v912 = vmul.f32 %v354, %v891
    %v913 = vmul.f32 %v359, %v891
    %v914 = vmul.f32 %v364, %v891
    %v915 = vmul.f32 %v369, %v891
    %v916 = vmul.f32 %v374, %v891
    %v917 = vmul.f32 %v379, %v891
    %v918 = vmul.f32 %v384, %v891
    %v919 = vmul.f32 %v389, %v891
    %v920 = vmul.f32 %v394, %v891
    %v921 = vmul.f32 %v399, %v891
    %v922 = vmul.f32 %v404, %v891
    %v923 = vmul.f32 %v409, %v891
    %v924 = vmul.f32 %v414, %v891
    %v925 = vmul.f32 %v419, %v891
    %v926 = vmul.f32 %v424, %v891
    %v927 = vmul.f32 %v429, %v891
    %v928 = vmul.f32 %v434, %v891
    %v929 = vmul.f32 %v439, %v891
    %v930 = vmul.f32 %v444, %v891
    %v931 = vmul.f32 %v449, %v891
    %v932 = vmul.f32 %v454, %v891
    %v933 = vmul.f32 %v459, %v891
    %v934 = vmul.f32 %v464, %v891
    %v935 = vmul.f32 %v469, %v891
    %v936 = vmul.f32 %v474, %v891
    %v937 = vmul.f32 %v479, %v891
    %v938 = vmul.f32 %v484, %v891
    %v939 = vmul.f32 %v489, %v891
    %v940 = vmul.f32 %v494, %v891
    %v941 = vmul.f32 %v499, %v891
    %v942 = vmul.f32 %v504, %v891
    %v943 = vmul.f32 %v509, %v891
    %v944 = vmul.f32 %v514, %v891
    %v945 = vmul.f32 %v519, %v891
    %v946 = vmul.f32 %v524, %v891
    %v947 = vmul.f32 %v529, %v891
    %v948 = vmul.f32 %v534, %v891
    %v949 = vmul.f32 %v539, %v891
    %v950 = vmul.f32 %v544, %v891
    %v951 = vmul.f32 %v549, %v891
    %v952 = vmul.f32 %v554, %v891
    %v953 = vmul.f32 %v559, %v891
    %v954 = vmul.f32 %v564, %v891
    %v955 = vmul.f32 %v569, %v891
    %v956 = vmul.f32 %v574, %v891
    %v957 = vmul.f32 %v579, %v891
    %v958 = vmul.f32 %v584, %v891
    %v959 = vmul.f32 %v589, %v891
    %v960 = vmul.f32 %v594, %v891
    %v961 = vmul.f32 %v599, %v891
    %v962 = vmul.f32 %v604, %v891
    %v963 = vmul.f32 %v609, %v891
    %v964 = vmul.f32 %v614, %v891
    %v965 = vmul.f32 %v619, %v891
    %v966 = vmul.f32 %v624, %v891
    %v967 = vmul.f32 %v629, %v891
    %v968 = vmul.f32 %v634, %v891
    %v969 = vmul.f32 %v639, %v891
    %v970 = vmul.f32 %v644, %v891
    %v971 = vmul.f32 %v649, %v891
    %v972 = vmul.f32 %v654, %v891
    %v973 = vmul.f32 %v659, %v891
    %v974 = vmul.f32 %v664, %v891
    %v975 = vmul.f32 %v669, %v891
    %v976 = vmul.f32 %v674, %v891
    %v977 = vmul.f32 %v679, %v891
    %v978 = vmul.f32 %v684, %v891
    %v979 = vmul.f32 %v689, %v891
    %v980 = vmul.f32 %v694, %v891
    %v981 = vmul.f32 %v699, %v891
    %v982 = vmul.f32 %v704, %v891
    %v983 = vmul.f32 %v709, %v891
    %v984 = vmul.f32 %v714, %v891
    %v985 = vmul.f32 %v719, %v891
    %v986 = vmul.f32 %v724, %v891
    %v987 = vmul.f32 %v729, %v891
    %v988 = vmul.f32 %v734, %v891
    %v989 = vmul.f32 %v739, %v891
    %v990 = vmul.f32 %v744, %v891
    %v991 = vmul.f32 %v749, %v891
    %v992 = vmul.f32 %v754, %v891
    %v993 = vmul.f32 %v759, %v891
    %v994 = vmul.f32 %v764, %v891
    %v995 = vmul.f32 %v769, %v891
    %v996 = vmul.f32 %v774, %v891
    %v997 = vmul.f32 %v779, %v891
    %v998 = vmul.f32 %v784, %v891
    %v999 = vmul.f32 %v789, %v891
    %v1000 = vmul.f32 %v794, %v891
    %v1001 = vmul.f32 %v799, %v891
    %v1002 = vmul.f32 %v804, %v891
    %v1003 = vmul.f32 %v809, %v891
    %v1004 = vmul.f32 %v814, %v891
    %v1005 = vmul.f32 %v819, %v891
    %v1006 = vmul.f32 %v824, %v891
    %v1007 = vmul.f32 %v829, %v891
    %v1008 = vmul.f32 %v834, %v891
    %v1009 = vmul.f32 %v839, %v891
    %v1010 = vmul.f32 %v844, %v891
    %v1011 = vmul.f32 %v849, %v891
    %v1012 = vmul.f32 %v854, %v891
    %v1013 = vmul.f32 %v859, %v891
    %v1014 = vmul.f32 %v864, %v891
    %v1015 = vmul.f32 %v869, %v891
    %v1016 = vmul.f32 %v874, %v891
    %v1017 = vmul.f32 %v879, %v891
    %v1018 = vmul.f32 %v884, %v891
    %v1019 = vmul.f32 %v889, %v891
    %1021 = vset.pattern.permute.xlu0 0
    %1022 = vperm.xlu0 %1021, 0.0
    %v1023 = vpop.permute.xlu0 %1022
    %v1025 = vperm.slane %v224, 1
    %v1026 = vmul.f32 %v254, %v1025
    %v1027 = vmul.f32 %v259, %v1025
    %v1028 = vmul.f32 %v264, %v1025
    %v1029 = vmul.f32 %v269, %v1025
    %v1030 = vmul.f32 %v274, %v1025
    %v1031 = vmul.f32 %v279, %v1025
    %v1032 = vmul.f32 %v284, %v1025
    %v1033 = vmul.f32 %v289, %v1025
    %v1034 = vmul.f32 %v294, %v1025
    %v1035 = vmul.f32 %v299, %v1025
    %v1036 = vmul.f32 %v304, %v1025
    %v1037 = vmul.f32 %v309, %v1025
    %v1038 = vmul.f32 %v314, %v1025
    %v1039 = vmul.f32 %v319, %v1025
    %v1040 = vmul.f32 %v324, %v1025
    %v1041 = vmul.f32 %v329, %v1025
    %v1042 = vmul.f32 %v1023, %v1025
    %v1043 = vmul.f32 %v334, %v1025
    %v1044 = vmul.f32 %v339, %v1025
    %v1045 = vmul.f32 %v344, %v1025
    %v1046 = vmul.f32 %v349, %v1025
    %v1047 = vmul.f32 %v354, %v1025
    %v1048 = vmul.f32 %v359, %v1025
    %v1049 = vmul.f32 %v364, %v1025
    %v1050 = vmul.f32 %v369, %v1025
    %v1051 = vmul.f32 %v374, %v1025
    %v1052 = vmul.f32 %v379, %v1025
    %v1053 = vmul.f32 %v384, %v1025
    %v1054 = vmul.f32 %v389, %v1025
    %v1055 = vmul.f32 %v394, %v1025
    %v1056 = vmul.f32 %v399, %v1025
    %v1057 = vmul.f32 %v404, %v1025
    %v1058 = vmul.f32 %v409, %v1025
    %v1059 = vmul.f32 %v414, %v1025
    %v1060 = vmul.f32 %v419, %v1025
    %v1061 = vmul.f32 %v424, %v1025
    %v1062 = vmul.f32 %v429, %v1025
    %v1063 = vmul.f32 %v434, %v1025
    %v1064 = vmul.f32 %v439, %v1025
    %v1065 = vmul.f32 %v444, %v1025
    %v1066 = vmul.f32 %v449, %v1025
    %v1067 = vmul.f32 %v454, %v1025
    %v1068 = vmul.f32 %v459, %v1025
    %v1069 = vmul.f32 %v464, %v1025
    %v1070 = vmul.f32 %v469, %v1025
    %v1071 = vmul.f32 %v474, %v1025
    %v1072 = vmul.f32 %v479, %v1025
    %v1073 = vmul.f32 %v484, %v1025
    %v1074 = vmul.f32 %v489, %v1025
    %v1075 = vmul.f32 %v494, %v1025
    %v1076 = vmul.f32 %v499, %v1025
    %v1077 = vmul.f32 %v504, %v1025
    %v1078 = vmul.f32 %v509, %v1025
    %v1079 = vmul.f32 %v514, %v1025
    %v1080 = vmul.f32 %v519, %v1025
    %v1081 = vmul.f32 %v524, %v1025
    %v1082 = vmul.f32 %v529, %v1025
    %v1083 = vmul.f32 %v534, %v1025
    %v1084 = vmul.f32 %v539, %v1025
    %v1085 = vmul.f32 %v544, %v1025
    %v1086 = vmul.f32 %v549, %v1025
    %v1087 = vmul.f32 %v554, %v1025
    %v1088 = vmul.f32 %v559, %v1025
    %v1089 = vmul.f32 %v564, %v1025
    %v1090 = vmul.f32 %v569, %v1025
    %v1091 = vmul.f32 %v574, %v1025
    %v1092 = vmul.f32 %v579, %v1025
    %v1093 = vmul.f32 %v584, %v1025
    %v1094 = vmul.f32 %v589, %v1025
    %v1095 = vmul.f32 %v594, %v1025
    %v1096 = vmul.f32 %v599, %v1025
    %v1097 = vmul.f32 %v604, %v1025
    %v1098 = vmul.f32 %v609, %v1025
    %v1099 = vmul.f32 %v614, %v1025
    %v1100 = vmul.f32 %v619, %v1025
    %v1101 = vmul.f32 %v624, %v1025
    %v1102 = vmul.f32 %v629, %v1025
    %v1103 = vmul.f32 %v634, %v1025
    %v1104 = vmul.f32 %v639, %v1025
    %v1105 = vmul.f32 %v644, %v1025
    %v1106 = vmul.f32 %v649, %v1025
    %v1107 = vmul.f32 %v654, %v1025
    %v1108 = vmul.f32 %v659, %v1025
    %v1109 = vmul.f32 %v664, %v1025
    %v1110 = vmul.f32 %v669, %v1025
    %v1111 = vmul.f32 %v674, %v1025
    %v1112 = vmul.f32 %v679, %v1025
    %v1113 = vmul.f32 %v684, %v1025
    %v1114 = vmul.f32 %v689, %v1025
    %v1115 = vmul.f32 %v694, %v1025
    %v1116 = vmul.f32 %v699, %v1025
    %v1117 = vmul.f32 %v704, %v1025
    %v1118 = vmul.f32 %v709, %v1025
    %v1119 = vmul.f32 %v714, %v1025
    %v1120 = vmul.f32 %v719, %v1025
    %v1121 = vmul.f32 %v724, %v1025
    %v1122 = vmul.f32 %v729, %v1025
    %v1123 = vmul.f32 %v734, %v1025
    %v1124 = vmul.f32 %v739, %v1025
    %v1125 = vmul.f32 %v744, %v1025
    %v1126 = vmul.f32 %v749, %v1025
    %v1127 = vmul.f32 %v754, %v1025
    %v1128 = vmul.f32 %v759, %v1025
    %v1129 = vmul.f32 %v764, %v1025
    %v1130 = vmul.f32 %v769, %v1025
    %v1131 = vmul.f32 %v774, %v1025
    %v1132 = vmul.f32 %v779, %v1025
    %v1133 = vmul.f32 %v784, %v1025
    %v1134 = vmul.f32 %v789, %v1025
    %v1135 = vmul.f32 %v794, %v1025
    %v1136 = vmul.f32 %v799, %v1025
    %v1137 = vmul.f32 %v804, %v1025
    %v1138 = vmul.f32 %v809, %v1025
    %v1139 = vmul.f32 %v814, %v1025
    %v1140 = vmul.f32 %v819, %v1025
    %v1141 = vmul.f32 %v824, %v1025
    %v1142 = vmul.f32 %v829, %v1025
    %v1143 = vmul.f32 %v834, %v1025
    %v1144 = vmul.f32 %v839, %v1025
    %v1145 = vmul.f32 %v844, %v1025
    %v1146 = vmul.f32 %v849, %v1025
    %v1147 = vmul.f32 %v854, %v1025
    %v1148 = vmul.f32 %v859, %v1025
    %v1149 = vmul.f32 %v864, %v1025
    %v1150 = vmul.f32 %v869, %v1025
    %v1151 = vmul.f32 %v874, %v1025
    %v1152 = vmul.f32 %v879, %v1025
    %v1153 = vmul.f32 %v884, %v1025
    %v1154 = vmul.f32 %v889, %v1025
    %vm1284 = vcmask 1046528
    %v1285 = vrot.slane %v1026, 1
    %v1286 = vrot.slane %v1027, 1
    %v1287 = vsel %vm1284, %v1285, %v1286
    %v1288 = vrot.slane %v1028, 1
    %v1289 = vsel %vm1284, %v1286, %v1288
    %v1290 = vrot.slane %v1029, 1
    %v1291 = vsel %vm1284, %v1288, %v1290
    %v1292 = vrot.slane %v1030, 1
    %v1293 = vsel %vm1284, %v1290, %v1292
    %v1294 = vrot.slane %v1031, 1
    %v1295 = vsel %vm1284, %v1292, %v1294
    %v1296 = vrot.slane %v1032, 1
    %v1297 = vsel %vm1284, %v1294, %v1296
    %v1298 = vrot.slane %v1033, 1
    %v1299 = vsel %vm1284, %v1296, %v1298
    %v1300 = vrot.slane %v1034, 1
    %v1301 = vsel %vm1284, %v1298, %v1300
    %v1302 = vrot.slane %v1035, 1
    %v1303 = vsel %vm1284, %v1300, %v1302
    %v1304 = vrot.slane %v1036, 1
    %v1305 = vsel %vm1284, %v1302, %v1304
    %v1306 = vrot.slane %v1037, 1
    %v1307 = vsel %vm1284, %v1304, %v1306
    %v1308 = vrot.slane %v1038, 1
    %v1309 = vsel %vm1284, %v1306, %v1308
    %v1310 = vrot.slane %v1039, 1
    %v1311 = vsel %vm1284, %v1308, %v1310
    %v1312 = vrot.slane %v1040, 1
    %v1313 = vsel %vm1284, %v1310, %v1312
    %v1314 = vrot.slane %v1041, 1
    %v1315 = vsel %vm1284, %v1312, %v1314
    %v1316 = vrot.slane %v1042, 1
    %v1317 = vsel %vm1284, %v1314, %v1316
    %v1318 = vrot.slane %v1043, 1
    %v1319 = vrot.slane %v1044, 1
    %v1320 = vsel %vm1284, %v1318, %v1319
    %v1321 = vrot.slane %v1045, 1
    %v1322 = vsel %vm1284, %v1319, %v1321
    %v1323 = vrot.slane %v1046, 1
    %v1324 = vsel %vm1284, %v1321, %v1323
    %v1325 = vrot.slane %v1047, 1
    %v1326 = vsel %vm1284, %v1323, %v1325
    %v1327 = vrot.slane %v1048, 1
    %v1328 = vsel %vm1284, %v1325, %v1327
    %v1329 = vrot.slane %v1049, 1
    %v1330 = vsel %vm1284, %v1327, %v1329
    %v1331 = vrot.slane %v1050, 1
    %v1332 = vsel %vm1284, %v1329, %v1331
    %v1333 = vrot.slane %v1051, 1
    %v1334 = vsel %vm1284, %v1331, %v1333
    %v1335 = vrot.slane %v1052, 1
    %v1336 = vsel %vm1284, %v1333, %v1335
    %v1337 = vrot.slane %v1053, 1
    %v1338 = vsel %vm1284, %v1335, %v1337
    %v1339 = vrot.slane %v1054, 1
    %v1340 = vsel %vm1284, %v1337, %v1339
    %v1341 = vrot.slane %v1055, 1
    %v1342 = vsel %vm1284, %v1339, %v1341
    %v1343 = vrot.slane %v1056, 1
    %v1344 = vsel %vm1284, %v1341, %v1343
    %v1345 = vrot.slane %v1057, 1
    %v1346 = vsel %vm1284, %v1343, %v1345
    %v1347 = vrot.slane %v1058, 1
    %v1348 = vsel %vm1284, %v1345, %v1347
    %v1349 = vsel %vm1284, %v1347, %v1316
    %v1350 = vrot.slane %v1059, 1
    %v1351 = vrot.slane %v1060, 1
    %v1352 = vsel %vm1284, %v1350, %v1351
    %v1353 = vrot.slane %v1061, 1
    %v1354 = vsel %vm1284, %v1351, %v1353
    %v1355 = vrot.slane %v1062, 1
    %v1356 = vsel %vm1284, %v1353, %v1355
    %v1357 = vrot.slane %v1063, 1
    %v1358 = vsel %vm1284, %v1355, %v1357
    %v1359 = vrot.slane %v1064, 1
    %v1360 = vsel %vm1284, %v1357, %v1359
    %v1361 = vrot.slane %v1065, 1
    %v1362 = vsel %vm1284, %v1359, %v1361
    %v1363 = vrot.slane %v1066, 1
    %v1364 = vsel %vm1284, %v1361, %v1363
    %v1365 = vrot.slane %v1067, 1
    %v1366 = vsel %vm1284, %v1363, %v1365
    %v1367 = vrot.slane %v1068, 1
    %v1368 = vsel %vm1284, %v1365, %v1367
    %v1369 = vrot.slane %v1069, 1
    %v1370 = vsel %vm1284, %v1367, %v1369
    %v1371 = vrot.slane %v1070, 1
    %v1372 = vsel %vm1284, %v1369, %v1371
    %v1373 = vrot.slane %v1071, 1
    %v1374 = vsel %vm1284, %v1371, %v1373
    %v1375 = vrot.slane %v1072, 1
    %v1376 = vsel %vm1284, %v1373, %v1375
    %v1377 = vrot.slane %v1073, 1
    %v1378 = vsel %vm1284, %v1375, %v1377
    %v1379 = vrot.slane %v1074, 1
    %v1380 = vsel %vm1284, %v1377, %v1379
    %v1381 = vsel %vm1284, %v1379, %v1316
    %v1382 = vrot.slane %v1075, 1
    %v1383 = vrot.slane %v1076, 1
    %v1384 = vsel %vm1284, %v1382, %v1383
    %v1385 = vrot.slane %v1077, 1
    %v1386 = vsel %vm1284, %v1383, %v1385
    %v1387 = vrot.slane %v1078, 1
    %v1388 = vsel %vm1284, %v1385, %v1387
    %v1389 = vrot.slane %v1079, 1
    %v1390 = vsel %vm1284, %v1387, %v1389
    %v1391 = vrot.slane %v1080, 1
    %v1392 = vsel %vm1284, %v1389, %v1391
    %v1393 = vrot.slane %v1081, 1
    %v1394 = vsel %vm1284, %v1391, %v1393
    %v1395 = vrot.slane %v1082, 1
    %v1396 = vsel %vm1284, %v1393, %v1395
    %v1397 = vrot.slane %v1083, 1
    %v1398 = vsel %vm1284, %v1395, %v1397
    %v1399 = vrot.slane %v1084, 1
    %v1400 = vsel %vm1284, %v1397, %v1399
    %v1401 = vrot.slane %v1085, 1
    %v1402 = vsel %vm1284, %v1399, %v1401
    %v1403 = vrot.slane %v1086, 1
    %v1404 = vsel %vm1284, %v1401, %v1403
    %v1405 = vrot.slane %v1087, 1
    %v1406 = vsel %vm1284, %v1403, %v1405
    %v1407 = vrot.slane %v1088, 1
    %v1408 = vsel %vm1284, %v1405, %v1407
    %v1409 = vrot.slane %v1089, 1
    %v1410 = vsel %vm1284, %v1407, %v1409
    %v1411 = vrot.slane %v1090, 1
    %v1412 = vsel %vm1284, %v1409, %v1411
    %v1413 = vsel %vm1284, %v1411, %v1316
    %v1414 = vrot.slane %v1091, 1
    %v1415 = vrot.slane %v1092, 1
    %v1416 = vsel %vm1284, %v1414, %v1415
    %v1417 = vrot.slane %v1093, 1
    %v1418 = vsel %vm1284, %v1415, %v1417
    %v1419 = vrot.slane %v1094, 1
    %v1420 = vsel %vm1284, %v1417, %v1419
    %v1421 = vrot.slane %v1095, 1
    %v1422 = vsel %vm1284, %v1419, %v1421
    %v1423 = vrot.slane %v1096, 1
    %v1424 = vsel %vm1284, %v1421, %v1423
    %v1425 = vrot.slane %v1097, 1
    %v1426 = vsel %vm1284, %v1423, %v1425
    %v1427 = vrot.slane %v1098, 1
    %v1428 = vsel %vm1284, %v1425, %v1427
    %v1429 = vrot.slane %v1099, 1
    %v1430 = vsel %vm1284, %v1427, %v1429
    %v1431 = vrot.slane %v1100, 1
    %v1432 = vsel %vm1284, %v1429, %v1431
    %v1433 = vrot.slane %v1101, 1
    %v1434 = vsel %vm1284, %v1431, %v1433
    %v1435 = vrot.slane %v1102, 1
    %v1436 = vsel %vm1284, %v1433, %v1435
    %v1437 = vrot.slane %v1103, 1
    %v1438 = vsel %vm1284, %v1435, %v1437
    %v1439 = vrot.slane %v1104, 1
    %v1440 = vsel %vm1284, %v1437, %v1439
    %v1441 = vrot.slane %v1105, 1
    %v1442 = vsel %vm1284, %v1439, %v1441
    %v1443 = vrot.slane %v1106, 1
    %v1444 = vsel %vm1284, %v1441, %v1443
    %v1445 = vsel %vm1284, %v1443, %v1316
    %v1446 = vrot.slane %v1107, 1
    %v1447 = vrot.slane %v1108, 1
    %v1448 = vsel %vm1284, %v1446, %v1447
    %v1449 = vrot.slane %v1109, 1
    %v1450 = vsel %vm1284, %v1447, %v1449
    %v1451 = vrot.slane %v1110, 1
    %v1452 = vsel %vm1284, %v1449, %v1451
    %v1453 = vrot.slane %v1111, 1
    %v1454 = vsel %vm1284, %v1451, %v1453
    %v1455 = vrot.slane %v1112, 1
    %v1456 = vsel %vm1284, %v1453, %v1455
    %v1457 = vrot.slane %v1113, 1
    %v1458 = vsel %vm1284, %v1455, %v1457
    %v1459 = vrot.slane %v1114, 1
    %v1460 = vsel %vm1284, %v1457, %v1459
    %v1461 = vrot.slane %v1115, 1
    %v1462 = vsel %vm1284, %v1459, %v1461
    %v1463 = vrot.slane %v1116, 1
    %v1464 = vsel %vm1284, %v1461, %v1463
    %v1465 = vrot.slane %v1117, 1
    %v1466 = vsel %vm1284, %v1463, %v1465
    %v1467 = vrot.slane %v1118, 1
    %v1468 = vsel %vm1284, %v1465, %v1467
    %v1469 = vrot.slane %v1119, 1
    %v1470 = vsel %vm1284, %v1467, %v1469
    %v1471 = vrot.slane %v1120, 1
    %v1472 = vsel %vm1284, %v1469, %v1471
    %v1473 = vrot.slane %v1121, 1
    %v1474 = vsel %vm1284, %v1471, %v1473
    %v1475 = vrot.slane %v1122, 1
    %v1476 = vsel %vm1284, %v1473, %v1475
    %v1477 = vsel %vm1284, %v1475, %v1316
    %v1478 = vrot.slane %v1123, 1
    %v1479 = vrot.slane %v1124, 1
    %v1480 = vsel %vm1284, %v1478, %v1479
    %v1481 = vrot.slane %v1125, 1
    %v1482 = vsel %vm1284, %v1479, %v1481
    %v1483 = vrot.slane %v1126, 1
    %v1484 = vsel %vm1284, %v1481, %v1483
    %v1485 = vrot.slane %v1127, 1
    %v1486 = vsel %vm1284, %v1483, %v1485
    %v1487 = vrot.slane %v1128, 1
    %v1488 = vsel %vm1284, %v1485, %v1487
    %v1489 = vrot.slane %v1129, 1
    %v1490 = vsel %vm1284, %v1487, %v1489
    %v1491 = vrot.slane %v1130, 1
    %v1492 = vsel %vm1284, %v1489, %v1491
    %v1493 = vrot.slane %v1131, 1
    %v1494 = vsel %vm1284, %v1491, %v1493
    %v1495 = vrot.slane %v1132, 1
    %v1496 = vsel %vm1284, %v1493, %v1495
    %v1497 = vrot.slane %v1133, 1
    %v1498 = vsel %vm1284, %v1495, %v1497
    %v1499 = vrot.slane %v1134, 1
    %v1500 = vsel %vm1284, %v1497, %v1499
    %v1501 = vrot.slane %v1135, 1
    %v1502 = vsel %vm1284, %v1499, %v1501
    %v1503 = vrot.slane %v1136, 1
    %v1504 = vsel %vm1284, %v1501, %v1503
    %v1505 = vrot.slane %v1137, 1
    %v1506 = vsel %vm1284, %v1503, %v1505
    %v1507 = vrot.slane %v1138, 1
    %v1508 = vsel %vm1284, %v1505, %v1507
    %v1509 = vsel %vm1284, %v1507, %v1316
    %v1510 = vrot.slane %v1139, 1
    %v1511 = vrot.slane %v1140, 1
    %v1512 = vsel %vm1284, %v1510, %v1511
    %v1513 = vrot.slane %v1141, 1
    %v1514 = vsel %vm1284, %v1511, %v1513
    %v1515 = vrot.slane %v1142, 1
    %v1516 = vsel %vm1284, %v1513, %v1515
    %v1517 = vrot.slane %v1143, 1
    %v1518 = vsel %vm1284, %v1515, %v1517
    %v1519 = vrot.slane %v1144, 1
    %v1520 = vsel %vm1284, %v1517, %v1519
    %v1521 = vrot.slane %v1145, 1
    %v1522 = vsel %vm1284, %v1519, %v1521
    %v1523 = vrot.slane %v1146, 1
    %v1524 = vsel %vm1284, %v1521, %v1523
    %v1525 = vrot.slane %v1147, 1
    %v1526 = vsel %vm1284, %v1523, %v1525
    %v1527 = vrot.slane %v1148, 1
    %v1528 = vsel %vm1284, %v1525, %v1527
    %v1529 = vrot.slane %v1149, 1
    %v1530 = vsel %vm1284, %v1527, %v1529
    %v1531 = vrot.slane %v1150, 1
    %v1532 = vsel %vm1284, %v1529, %v1531
    %v1533 = vrot.slane %v1151, 1
    %v1534 = vsel %vm1284, %v1531, %v1533
    %v1535 = vrot.slane %v1152, 1
    %v1536 = vsel %vm1284, %v1533, %v1535
    %v1537 = vrot.slane %v1153, 1
    %v1538 = vsel %vm1284, %v1535, %v1537
    %v1539 = vrot.slane %v1154, 1
    %v1540 = vsel %vm1284, %v1537, %v1539
    %v1541 = vsel %vm1284, %v1539, %v1316
    %v1670 = vadd.f32 %v892, %v1287
    %v1671 = vadd.f32 %v893, %v1289
    %v1672 = vadd.f32 %v894, %v1291
    %v1673 = vadd.f32 %v895, %v1293
    %v1674 = vadd.f32 %v896, %v1295
    %v1675 = vadd.f32 %v897, %v1297
    %v1676 = vadd.f32 %v898, %v1299
    %v1677 = vadd.f32 %v899, %v1301
    %v1678 = vadd.f32 %v900, %v1303
    %v1679 = vadd.f32 %v901, %v1305
    %v1680 = vadd.f32 %v902, %v1307
    %v1681 = vadd.f32 %v903, %v1309
    %v1682 = vadd.f32 %v904, %v1311
    %v1683 = vadd.f32 %v905, %v1313
    %v1684 = vadd.f32 %v906, %v1315
    %v1685 = vadd.f32 %v907, %v1317
    %v1686 = vadd.f32 %v908, %v1320
    %v1687 = vadd.f32 %v909, %v1322
    %v1688 = vadd.f32 %v910, %v1324
    %v1689 = vadd.f32 %v911, %v1326
    %v1690 = vadd.f32 %v912, %v1328
    %v1691 = vadd.f32 %v913, %v1330
    %v1692 = vadd.f32 %v914, %v1332
    %v1693 = vadd.f32 %v915, %v1334
    %v1694 = vadd.f32 %v916, %v1336
    %v1695 = vadd.f32 %v917, %v1338
    %v1696 = vadd.f32 %v918, %v1340
    %v1697 = vadd.f32 %v919, %v1342
    %v1698 = vadd.f32 %v920, %v1344
    %v1699 = vadd.f32 %v921, %v1346
    %v1700 = vadd.f32 %v922, %v1348
    %v1701 = vadd.f32 %v923, %v1349
    %v1702 = vadd.f32 %v924, %v1352
    %v1703 = vadd.f32 %v925, %v1354
    %v1704 = vadd.f32 %v926, %v1356
    %v1705 = vadd.f32 %v927, %v1358
    %v1706 = vadd.f32 %v928, %v1360
    %v1707 = vadd.f32 %v929, %v1362
    %v1708 = vadd.f32 %v930, %v1364
    %v1709 = vadd.f32 %v931, %v1366
    %v1710 = vadd.f32 %v932, %v1368
    %v1711 = vadd.f32 %v933, %v1370
    %v1712 = vadd.f32 %v934, %v1372
    %v1713 = vadd.f32 %v935, %v1374
    %v1714 = vadd.f32 %v936, %v1376
    %v1715 = vadd.f32 %v937, %v1378
    %v1716 = vadd.f32 %v938, %v1380
    %v1717 = vadd.f32 %v939, %v1381
    %v1718 = vadd.f32 %v940, %v1384
    %v1719 = vadd.f32 %v941, %v1386
    %v1720 = vadd.f32 %v942, %v1388
    %v1721 = vadd.f32 %v943, %v1390
    %v1722 = vadd.f32 %v944, %v1392
    %v1723 = vadd.f32 %v945, %v1394
    %v1724 = vadd.f32 %v946, %v1396
    %v1725 = vadd.f32 %v947, %v1398
    %v1726 = vadd.f32 %v948, %v1400
    %v1727 = vadd.f32 %v949, %v1402
    %v1728 = vadd.f32 %v950, %v1404
    %v1729 = vadd.f32 %v951, %v1406
    %v1730 = vadd.f32 %v952, %v1408
    %v1731 = vadd.f32 %v953, %v1410
    %v1732 = vadd.f32 %v954, %v1412
    %v1733 = vadd.f32 %v955, %v1413
    %v1734 = vadd.f32 %v956, %v1416
    %v1735 = vadd.f32 %v957, %v1418
    %v1736 = vadd.f32 %v958, %v1420
    %v1737 = vadd.f32 %v959, %v1422
    %v1738 = vadd.f32 %v960, %v1424
    %v1739 = vadd.f32 %v961, %v1426
    %v1740 = vadd.f32 %v962, %v1428
    %v1741 = vadd.f32 %v963, %v1430
    %v1742 = vadd.f32 %v964, %v1432
    %v1743 = vadd.f32 %v965, %v1434
    %v1744 = vadd.f32 %v966, %v1436
    %v1745 = vadd.f32 %v967, %v1438
    %v1746 = vadd.f32 %v968, %v1440
    %v1747 = vadd.f32 %v969, %v1442
    %v1748 = vadd.f32 %v970, %v1444
    %v1749 = vadd.f32 %v971, %v1445
    %v1750 = vadd.f32 %v972, %v1448
    %v1751 = vadd.f32 %v973, %v1450
    %v1752 = vadd.f32 %v974, %v1452
    %v1753 = vadd.f32 %v975, %v1454
    %v1754 = vadd.f32 %v976, %v1456
    %v1755 = vadd.f32 %v977, %v1458
    %v1756 = vadd.f32 %v978, %v1460
    %v1757 = vadd.f32 %v979, %v1462
    %v1758 = vadd.f32 %v980, %v1464
    %v1759 = vadd.f32 %v981, %v1466
    %v1760 = vadd.f32 %v982, %v1468
    %v1761 = vadd.f32 %v983, %v1470
    %v1762 = vadd.f32 %v984, %v1472
    %v1763 = vadd.f32 %v985, %v1474
    %v1764 = vadd.f32 %v986, %v1476
    %v1765 = vadd.f32 %v987, %v1477
    %v1766 = vadd.f32 %v988, %v1480
    %v1767 = vadd.f32 %v989, %v1482
    %v1768 = vadd.f32 %v990, %v1484
    %v1769 = vadd.f32 %v991, %v1486
    %v1770 = vadd.f32 %v992, %v1488
    %v1771 = vadd.f32 %v993, %v1490
    %v1772 = vadd.f32 %v994, %v1492
    %v1773 = vadd.f32 %v995, %v1494
    %v1774 = vadd.f32 %v996, %v1496
    %v1775 = vadd.f32 %v997, %v1498
    %v1776 = vadd.f32 %v998, %v1500
    %v1777 = vadd.f32 %v999, %v1502
    %v1778 = vadd.f32 %v1000, %v1504
    %v1779 = vadd.f32 %v1001, %v1506
    %v1780 = vadd.f32 %v1002, %v1508
    %v1781 = vadd.f32 %v1003, %v1509
    %v1782 = vadd.f32 %v1004, %v1512
    %v1783 = vadd.f32 %v1005, %v1514
    %v1784 = vadd.f32 %v1006, %v1516
    %v1785 = vadd.f32 %v1007, %v1518
    %v1786 = vadd.f32 %v1008, %v1520
    %v1787 = vadd.f32 %v1009, %v1522
    %v1788 = vadd.f32 %v1010, %v1524
    %v1789 = vadd.f32 %v1011, %v1526
    %v1790 = vadd.f32 %v1012, %v1528
    %v1791 = vadd.f32 %v1013, %v1530
    %v1792 = vadd.f32 %v1014, %v1532
    %v1793 = vadd.f32 %v1015, %v1534
    %v1794 = vadd.f32 %v1016, %v1536
    %v1795 = vadd.f32 %v1017, %v1538
    %v1796 = vadd.f32 %v1018, %v1540
    %v1797 = vadd.f32 %v1019, %v1541
    %v1798 = vperm.slane %v224, 2
    %v1799 = vmul.f32 %v254, %v1798
    %v1800 = vmul.f32 %v259, %v1798
    %v1801 = vmul.f32 %v264, %v1798
    %v1802 = vmul.f32 %v269, %v1798
    %v1803 = vmul.f32 %v274, %v1798
    %v1804 = vmul.f32 %v279, %v1798
    %v1805 = vmul.f32 %v284, %v1798
    %v1806 = vmul.f32 %v289, %v1798
    %v1807 = vmul.f32 %v294, %v1798
    %v1808 = vmul.f32 %v299, %v1798
    %v1809 = vmul.f32 %v304, %v1798
    %v1810 = vmul.f32 %v309, %v1798
    %v1811 = vmul.f32 %v314, %v1798
    %v1812 = vmul.f32 %v319, %v1798
    %v1813 = vmul.f32 %v324, %v1798
    %v1814 = vmul.f32 %v329, %v1798
    %v1815 = vmul.f32 %v1023, %v1798
    %v1816 = vmul.f32 %v334, %v1798
    %v1817 = vmul.f32 %v339, %v1798
    %v1818 = vmul.f32 %v344, %v1798
    %v1819 = vmul.f32 %v349, %v1798
    %v1820 = vmul.f32 %v354, %v1798
    %v1821 = vmul.f32 %v359, %v1798
    %v1822 = vmul.f32 %v364, %v1798
    %v1823 = vmul.f32 %v369, %v1798
    %v1824 = vmul.f32 %v374, %v1798
    %v1825 = vmul.f32 %v379, %v1798
    %v1826 = vmul.f32 %v384, %v1798
    %v1827 = vmul.f32 %v389, %v1798
    %v1828 = vmul.f32 %v394, %v1798
    %v1829 = vmul.f32 %v399, %v1798
    %v1830 = vmul.f32 %v404, %v1798
    %v1831 = vmul.f32 %v409, %v1798
    %v1832 = vmul.f32 %v414, %v1798
    %v1833 = vmul.f32 %v419, %v1798
    %v1834 = vmul.f32 %v424, %v1798
    %v1835 = vmul.f32 %v429, %v1798
    %v1836 = vmul.f32 %v434, %v1798
    %v1837 = vmul.f32 %v439, %v1798
    %v1838 = vmul.f32 %v444, %v1798
    %v1839 = vmul.f32 %v449, %v1798
    %v1840 = vmul.f32 %v454, %v1798
    %v1841 = vmul.f32 %v459, %v1798
    %v1842 = vmul.f32 %v464, %v1798
    %v1843 = vmul.f32 %v469, %v1798
    %v1844 = vmul.f32 %v474, %v1798
    %v1845 = vmul.f32 %v479, %v1798
    %v1846 = vmul.f32 %v484, %v1798
    %v1847 = vmul.f32 %v489, %v1798
    %v1848 = vmul.f32 %v494, %v1798
    %v1849 = vmul.f32 %v499, %v1798
    %v1850 = vmul.f32 %v504, %v1798
    %v1851 = vmul.f32 %v509, %v1798
    %v1852 = vmul.f32 %v514, %v1798
    %v1853 = vmul.f32 %v519, %v1798
    %v1854 = vmul.f32 %v524, %v1798
    %v1855 = vmul.f32 %v529, %v1798
    %v1856 = vmul.f32 %v534, %v1798
    %v1857 = vmul.f32 %v539, %v1798
    %v1858 = vmul.f32 %v544, %v1798
    %v1859 = vmul.f32 %v549, %v1798
    %v1860 = vmul.f32 %v554, %v1798
    %v1861 = vmul.f32 %v559, %v1798
    %v1862 = vmul.f32 %v564, %v1798
    %v1863 = vmul.f32 %v569, %v1798
    %v1864 = vmul.f32 %v574, %v1798
    %v1865 = vmul.f32 %v579, %v1798
    %v1866 = vmul.f32 %v584, %v1798
    %v1867 = vmul.f32 %v589, %v1798
    %v1868 = vmul.f32 %v594, %v1798
    %v1869 = vmul.f32 %v599, %v1798
    %v1870 = vmul.f32 %v604, %v1798
    %v1871 = vmul.f32 %v609, %v1798
    %v1872 = vmul.f32 %v614, %v1798
    %v1873 = vmul.f32 %v619, %v1798
    %v1874 = vmul.f32 %v624, %v1798
    %v1875 = vmul.f32 %v629, %v1798
    %v1876 = vmul.f32 %v634, %v1798
    %v1877 = vmul.f32 %v639, %v1798
    %v1878 = vmul.f32 %v644, %v1798
    %v1879 = vmul.f32 %v649, %v1798
    %v1880 = vmul.f32 %v654, %v1798
    %v1881 = vmul.f32 %v659, %v1798
    %v1882 = vmul.f32 %v664, %v1798
    %v1883 = vmul.f32 %v669, %v1798
    %v1884 = vmul.f32 %v674, %v1798
    %v1885 = vmul.f32 %v679, %v1798
    %v1886 = vmul.f32 %v684, %v1798
    %v1887 = vmul.f32 %v689, %v1798
    %v1888 = vmul.f32 %v694, %v1798
    %v1889 = vmul.f32 %v699, %v1798
    %v1890 = vmul.f32 %v704, %v1798
    %v1891 = vmul.f32 %v709, %v1798
    %v1892 = vmul.f32 %v714, %v1798
    %v1893 = vmul.f32 %v719, %v1798
    %v1894 = vmul.f32 %v724, %v1798
    %v1895 = vmul.f32 %v729, %v1798
    %v1896 = vmul.f32 %v734, %v1798
    %v1897 = vmul.f32 %v739, %v1798
    %v1898 = vmul.f32 %v744, %v1798
    %v1899 = vmul.f32 %v749, %v1798
    %v1900 = vmul.f32 %v754, %v1798
    %v1901 = vmul.f32 %v759, %v1798
    %v1902 = vmul.f32 %v764, %v1798
    %v1903 = vmul.f32 %v769, %v1798
    %v1904 = vmul.f32 %v774, %v1798
    %v1905 = vmul.f32 %v779, %v1798
    %v1906 = vmul.f32 %v784, %v1798
    %v1907 = vmul.f32 %v789, %v1798
    %v1908 = vmul.f32 %v794, %v1798
    %v1909 = vmul.f32 %v799, %v1798
    %v1910 = vmul.f32 %v804, %v1798
    %v1911 = vmul.f32 %v809, %v1798
    %v1912 = vmul.f32 %v814, %v1798
    %v1913 = vmul.f32 %v819, %v1798
    %v1914 = vmul.f32 %v824, %v1798
    %v1915 = vmul.f32 %v829, %v1798
    %v1916 = vmul.f32 %v834, %v1798
    %v1917 = vmul.f32 %v839, %v1798
    %v1918 = vmul.f32 %v844, %v1798
    %v1919 = vmul.f32 %v849, %v1798
    %v1920 = vmul.f32 %v854, %v1798
    %v1921 = vmul.f32 %v859, %v1798
    %v1922 = vmul.f32 %v864, %v1798
    %v1923 = vmul.f32 %v869, %v1798
    %v1924 = vmul.f32 %v874, %v1798
    %v1925 = vmul.f32 %v879, %v1798
    %v1926 = vmul.f32 %v884, %v1798
    %v1927 = vmul.f32 %v889, %v1798
    %vm2057 = vcmask 1045504
    %v2058 = vrot.slane %v1799, 2
    %v2059 = vrot.slane %v1800, 2
    %v2060 = vsel %vm2057, %v2058, %v2059
    %v2061 = vrot.slane %v1801, 2
    %v2062 = vsel %vm2057, %v2059, %v2061
    %v2063 = vrot.slane %v1802, 2
    %v2064 = vsel %vm2057, %v2061, %v2063
    %v2065 = vrot.slane %v1803, 2
    %v2066 = vsel %vm2057, %v2063, %v2065
    %v2067 = vrot.slane %v1804, 2
    %v2068 = vsel %vm2057, %v2065, %v2067
    %v2069 = vrot.slane %v1805, 2
    %v2070 = vsel %vm2057, %v2067, %v2069
    %v2071 = vrot.slane %v1806, 2
    %v2072 = vsel %vm2057, %v2069, %v2071
    %v2073 = vrot.slane %v1807, 2
    %v2074 = vsel %vm2057, %v2071, %v2073
    %v2075 = vrot.slane %v1808, 2
    %v2076 = vsel %vm2057, %v2073, %v2075
    %v2077 = vrot.slane %v1809, 2
    %v2078 = vsel %vm2057, %v2075, %v2077
    %v2079 = vrot.slane %v1810, 2
    %v2080 = vsel %vm2057, %v2077, %v2079
    %v2081 = vrot.slane %v1811, 2
    %v2082 = vsel %vm2057, %v2079, %v2081
    %v2083 = vrot.slane %v1812, 2
    %v2084 = vsel %vm2057, %v2081, %v2083
    %v2085 = vrot.slane %v1813, 2
    %v2086 = vsel %vm2057, %v2083, %v2085
    %v2087 = vrot.slane %v1814, 2
    %v2088 = vsel %vm2057, %v2085, %v2087
    %v2089 = vrot.slane %v1815, 2
    %v2090 = vsel %vm2057, %v2087, %v2089
    %v2091 = vrot.slane %v1816, 2
    %v2092 = vrot.slane %v1817, 2
    %v2093 = vsel %vm2057, %v2091, %v2092
    %v2094 = vrot.slane %v1818, 2
    %v2095 = vsel %vm2057, %v2092, %v2094
    %v2096 = vrot.slane %v1819, 2
    %v2097 = vsel %vm2057, %v2094, %v2096
    %v2098 = vrot.slane %v1820, 2
    %v2099 = vsel %vm2057, %v2096, %v2098
    %v2100 = vrot.slane %v1821, 2
    %v2101 = vsel %vm2057, %v2098, %v2100
    %v2102 = vrot.slane %v1822, 2
    %v2103 = vsel %vm2057, %v2100, %v2102
    %v2104 = vrot.slane %v1823, 2
    %v2105 = vsel %vm2057, %v2102, %v2104
    %v2106 = vrot.slane %v1824, 2
    %v2107 = vsel %vm2057, %v2104, %v2106
    %v2108 = vrot.slane %v1825, 2
    %v2109 = vsel %vm2057, %v2106, %v2108
    %v2110 = vrot.slane %v1826, 2
    %v2111 = vsel %vm2057, %v2108, %v2110
    %v2112 = vrot.slane %v1827, 2
    %v2113 = vsel %vm2057, %v2110, %v2112
    %v2114 = vrot.slane %v1828, 2
    %v2115 = vsel %vm2057, %v2112, %v2114
    %v2116 = vrot.slane %v1829, 2
    %v2117 = vsel %vm2057, %v2114, %v2116
    %v2118 = vrot.slane %v1830, 2
    %v2119 = vsel %vm2057, %v2116, %v2118
    %v2120 = vrot.slane %v1831, 2
    %v2121 = vsel %vm2057, %v2118, %v2120
    %v2122 = vsel %vm2057, %v2120, %v2089
    %v2123 = vrot.slane %v1832, 2
    %v2124 = vrot.slane %v1833, 2
    %v2125 = vsel %vm2057, %v2123, %v2124
    %v2126 = vrot.slane %v1834, 2
    %v2127 = vsel %vm2057, %v2124, %v2126
    %v2128 = vrot.slane %v1835, 2
    %v2129 = vsel %vm2057, %v2126, %v2128
    %v2130 = vrot.slane %v1836, 2
    %v2131 = vsel %vm2057, %v2128, %v2130
    %v2132 = vrot.slane %v1837, 2
    %v2133 = vsel %vm2057, %v2130, %v2132
    %v2134 = vrot.slane %v1838, 2
    %v2135 = vsel %vm2057, %v2132, %v2134
    %v2136 = vrot.slane %v1839, 2
    %v2137 = vsel %vm2057, %v2134, %v2136
    %v2138 = vrot.slane %v1840, 2
    %v2139 = vsel %vm2057, %v2136, %v2138
    %v2140 = vrot.slane %v1841, 2
    %v2141 = vsel %vm2057, %v2138, %v2140
    %v2142 = vrot.slane %v1842, 2
    %v2143 = vsel %vm2057, %v2140, %v2142
    %v2144 = vrot.slane %v1843, 2
    %v2145 = vsel %vm2057, %v2142, %v2144
    %v2146 = vrot.slane %v1844, 2
    %v2147 = vsel %vm2057, %v2144, %v2146
    %v2148 = vrot.slane %v1845, 2
    %v2149 = vsel %vm2057, %v2146, %v2148
    %v2150 = vrot.slane %v1846, 2
    %v2151 = vsel %vm2057, %v2148, %v2150
    %v2152 = vrot.slane %v1847, 2
    %v2153 = vsel %vm2057, %v2150, %v2152
    %v2154 = vsel %vm2057, %v2152, %v2089
    %v2155 = vrot.slane %v1848, 2
    %v2156 = vrot.slane %v1849, 2
    %v2157 = vsel %vm2057, %v2155, %v2156
    %v2158 = vrot.slane %v1850, 2
    %v2159 = vsel %vm2057, %v2156, %v2158
    %v2160 = vrot.slane %v1851, 2
    %v2161 = vsel %vm2057, %v2158, %v2160
    %v2162 = vrot.slane %v1852, 2
    %v2163 = vsel %vm2057, %v2160, %v2162
    %v2164 = vrot.slane %v1853, 2
    %v2165 = vsel %vm2057, %v2162, %v2164
    %v2166 = vrot.slane %v1854, 2
    %v2167 = vsel %vm2057, %v2164, %v2166
    %v2168 = vrot.slane %v1855, 2
    %v2169 = vsel %vm2057, %v2166, %v2168
    %v2170 = vrot.slane %v1856, 2
    %v2171 = vsel %vm2057, %v2168, %v2170
    %v2172 = vrot.slane %v1857, 2
    %v2173 = vsel %vm2057, %v2170, %v2172
    %v2174 = vrot.slane %v1858, 2
    %v2175 = vsel %vm2057, %v2172, %v2174
    %v2176 = vrot.slane %v1859, 2
    %v2177 = vsel %vm2057, %v2174, %v2176
    %v2178 = vrot.slane %v1860, 2
    %v2179 = vsel %vm2057, %v2176, %v2178
    %v2180 = vrot.slane %v1861, 2
    %v2181 = vsel %vm2057, %v2178, %v2180
    %v2182 = vrot.slane %v1862, 2
    %v2183 = vsel %vm2057, %v2180, %v2182
    %v2184 = vrot.slane %v1863, 2
    %v2185 = vsel %vm2057, %v2182, %v2184
    %v2186 = vsel %vm2057, %v2184, %v2089
    %v2187 = vrot.slane %v1864, 2
    %v2188 = vrot.slane %v1865, 2
    %v2189 = vsel %vm2057, %v2187, %v2188
    %v2190 = vrot.slane %v1866, 2
    %v2191 = vsel %vm2057, %v2188, %v2190
    %v2192 = vrot.slane %v1867, 2
    %v2193 = vsel %vm2057, %v2190, %v2192
    %v2194 = vrot.slane %v1868, 2
    %v2195 = vsel %vm2057, %v2192, %v2194
    %v2196 = vrot.slane %v1869, 2
    %v2197 = vsel %vm2057, %v2194, %v2196
    %v2198 = vrot.slane %v1870, 2
    %v2199 = vsel %vm2057, %v2196, %v2198
    %v2200 = vrot.slane %v1871, 2
    %v2201 = vsel %vm2057, %v2198, %v2200
    %v2202 = vrot.slane %v1872, 2
    %v2203 = vsel %vm2057, %v2200, %v2202
    %v2204 = vrot.slane %v1873, 2
    %v2205 = vsel %vm2057, %v2202, %v2204
    %v2206 = vrot.slane %v1874, 2
    %v2207 = vsel %vm2057, %v2204, %v2206
    %v2208 = vrot.slane %v1875, 2
    %v2209 = vsel %vm2057, %v2206, %v2208
    %v2210 = vrot.slane %v1876, 2
    %v2211 = vsel %vm2057, %v2208, %v2210
    %v2212 = vrot.slane %v1877, 2
    %v2213 = vsel %vm2057, %v2210, %v2212
    %v2214 = vrot.slane %v1878, 2
    %v2215 = vsel %vm2057, %v2212, %v2214
    %v2216 = vrot.slane %v1879, 2
    %v2217 = vsel %vm2057, %v2214, %v2216
    %v2218 = vsel %vm2057, %v2216, %v2089
    %v2219 = vrot.slane %v1880, 2
    %v2220 = vrot.slane %v1881, 2
    %v2221 = vsel %vm2057, %v2219, %v2220
    %v2222 = vrot.slane %v1882, 2
    %v2223 = vsel %vm2057, %v2220, %v2222
    %v2224 = vrot.slane %v1883, 2
    %v2225 = vsel %vm2057, %v2222, %v2224
    %v2226 = vrot.slane %v1884, 2
    %v2227 = vsel %vm2057, %v2224, %v2226
    %v2228 = vrot.slane %v1885, 2
    %v2229 = vsel %vm2057, %v2226, %v2228
    %v2230 = vrot.slane %v1886, 2
    %v2231 = vsel %vm2057, %v2228, %v2230
    %v2232 = vrot.slane %v1887, 2
    %v2233 = vsel %vm2057, %v2230, %v2232
    %v2234 = vrot.slane %v1888, 2
    %v2235 = vsel %vm2057, %v2232, %v2234
    %v2236 = vrot.slane %v1889, 2
    %v2237 = vsel %vm2057, %v2234, %v2236
    %v2238 = vrot.slane %v1890, 2
    %v2239 = vsel %vm2057, %v2236, %v2238
    %v2240 = vrot.slane %v1891, 2
    %v2241 = vsel %vm2057, %v2238, %v2240
    %v2242 = vrot.slane %v1892, 2
    %v2243 = vsel %vm2057, %v2240, %v2242
    %v2244 = vrot.slane %v1893, 2
    %v2245 = vsel %vm2057, %v2242, %v2244
    %v2246 = vrot.slane %v1894, 2
    %v2247 = vsel %vm2057, %v2244, %v2246
    %v2248 = vrot.slane %v1895, 2
    %v2249 = vsel %vm2057, %v2246, %v2248
    %v2250 = vsel %vm2057, %v2248, %v2089
    %v2251 = vrot.slane %v1896, 2
    %v2252 = vrot.slane %v1897, 2
    %v2253 = vsel %vm2057, %v2251, %v2252
    %v2254 = vrot.slane %v1898, 2
    %v2255 = vsel %vm2057, %v2252, %v2254
    %v2256 = vrot.slane %v1899, 2
    %v2257 = vsel %vm2057, %v2254, %v2256
    %v2258 = vrot.slane %v1900, 2
    %v2259 = vsel %vm2057, %v2256, %v2258
    %v2260 = vrot.slane %v1901, 2
    %v2261 = vsel %vm2057, %v2258, %v2260
    %v2262 = vrot.slane %v1902, 2
    %v2263 = vsel %vm2057, %v2260, %v2262
    %v2264 = vrot.slane %v1903, 2
    %v2265 = vsel %vm2057, %v2262, %v2264
    %v2266 = vrot.slane %v1904, 2
    %v2267 = vsel %vm2057, %v2264, %v2266
    %v2268 = vrot.slane %v1905, 2
    %v2269 = vsel %vm2057, %v2266, %v2268
    %v2270 = vrot.slane %v1906, 2
    %v2271 = vsel %vm2057, %v2268, %v2270
    %v2272 = vrot.slane %v1907, 2
    %v2273 = vsel %vm2057, %v2270, %v2272
    %v2274 = vrot.slane %v1908, 2
    %v2275 = vsel %vm2057, %v2272, %v2274
    %v2276 = vrot.slane %v1909, 2
    %v2277 = vsel %vm2057, %v2274, %v2276
    %v2278 = vrot.slane %v1910, 2
    %v2279 = vsel %vm2057, %v2276, %v2278
    %v2280 = vrot.slane %v1911, 2
    %v2281 = vsel %vm2057, %v2278, %v2280
    %v2282 = vsel %vm2057, %v2280, %v2089
    %v2283 = vrot.slane %v1912, 2
    %v2284 = vrot.slane %v1913, 2
    %v2285 = vsel %vm2057, %v2283, %v2284
    %v2286 = vrot.slane %v1914, 2
    %v2287 = vsel %vm2057, %v2284, %v2286
    %v2288 = vrot.slane %v1915, 2
    %v2289 = vsel %vm2057, %v2286, %v2288
    %v2290 = vrot.slane %v1916, 2
    %v2291 = vsel %vm2057, %v2288, %v2290
    %v2292 = vrot.slane %v1917, 2
    %v2293 = vsel %vm2057, %v2290, %v2292
    %v2294 = vrot.slane %v1918, 2
    %v2295 = vsel %vm2057, %v2292, %v2294
    %v2296 = vrot.slane %v1919, 2
    %v2297 = vsel %vm2057, %v2294, %v2296
    %v2298 = vrot.slane %v1920, 2
    %v2299 = vsel %vm2057, %v2296, %v2298
    %v2300 = vrot.slane %v1921, 2
    %v2301 = vsel %vm2057, %v2298, %v2300
    %v2302 = vrot.slane %v1922, 2
    %v2303 = vsel %vm2057, %v2300, %v2302
    %v2304 = vrot.slane %v1923, 2
    %v2305 = vsel %vm2057, %v2302, %v2304
    %v2306 = vrot.slane %v1924, 2
    %v2307 = vsel %vm2057, %v2304, %v2306
    %v2308 = vrot.slane %v1925, 2
    %v2309 = vsel %vm2057, %v2306, %v2308
    %v2310 = vrot.slane %v1926, 2
    %v2311 = vsel %vm2057, %v2308, %v2310
    %v2312 = vrot.slane %v1927, 2
    %v2313 = vsel %vm2057, %v2310, %v2312
    %v2314 = vsel %vm2057, %v2312, %v2089
    %v2443 = vadd.f32 %v1670, %v2060
    %v2444 = vadd.f32 %v1671, %v2062
    %v2445 = vadd.f32 %v1672, %v2064
    %v2446 = vadd.f32 %v1673, %v2066
    %v2447 = vadd.f32 %v1674, %v2068
    %v2448 = vadd.f32 %v1675, %v2070
    %v2449 = vadd.f32 %v1676, %v2072
    %v2450 = vadd.f32 %v1677, %v2074
    %v2451 = vadd.f32 %v1678, %v2076
    %v2452 = vadd.f32 %v1679, %v2078
    %v2453 = vadd.f32 %v1680, %v2080
    %v2454 = vadd.f32 %v1681, %v2082
    %v2455 = vadd.f32 %v1682, %v2084
    %v2456 = vadd.f32 %v1683, %v2086
    %v2457 = vadd.f32 %v1684, %v2088
    %v2458 = vadd.f32 %v1685, %v2090
    %v2459 = vadd.f32 %v1686, %v2093
    %v2460 = vadd.f32 %v1687, %v2095
    %v2461 = vadd.f32 %v1688, %v2097
    %v2462 = vadd.f32 %v1689, %v2099
    %v2463 = vadd.f32 %v1690, %v2101
    %v2464 = vadd.f32 %v1691, %v2103
    %v2465 = vadd.f32 %v1692, %v2105
    %v2466 = vadd.f32 %v1693, %v2107
    %v2467 = vadd.f32 %v1694, %v2109
    %v2468 = vadd.f32 %v1695, %v2111
    %v2469 = vadd.f32 %v1696, %v2113
    %v2470 = vadd.f32 %v1697, %v2115
    %v2471 = vadd.f32 %v1698, %v2117
    %v2472 = vadd.f32 %v1699, %v2119
    %v2473 = vadd.f32 %v1700, %v2121
    %v2474 = vadd.f32 %v1701, %v2122
    %v2475 = vadd.f32 %v1702, %v2125
    %v2476 = vadd.f32 %v1703, %v2127
    %v2477 = vadd.f32 %v1704, %v2129
    %v2478 = vadd.f32 %v1705, %v2131
    %v2479 = vadd.f32 %v1706, %v2133
    %v2480 = vadd.f32 %v1707, %v2135
    %v2481 = vadd.f32 %v1708, %v2137
    %v2482 = vadd.f32 %v1709, %v2139
    %v2483 = vadd.f32 %v1710, %v2141
    %v2484 = vadd.f32 %v1711, %v2143
    %v2485 = vadd.f32 %v1712, %v2145
    %v2486 = vadd.f32 %v1713, %v2147
    %v2487 = vadd.f32 %v1714, %v2149
    %v2488 = vadd.f32 %v1715, %v2151
    %v2489 = vadd.f32 %v1716, %v2153
    %v2490 = vadd.f32 %v1717, %v2154
    %v2491 = vadd.f32 %v1718, %v2157
    %v2492 = vadd.f32 %v1719, %v2159
    %v2493 = vadd.f32 %v1720, %v2161
    %v2494 = vadd.f32 %v1721, %v2163
    %v2495 = vadd.f32 %v1722, %v2165
    %v2496 = vadd.f32 %v1723, %v2167
    %v2497 = vadd.f32 %v1724, %v2169
    %v2498 = vadd.f32 %v1725, %v2171
    %v2499 = vadd.f32 %v1726, %v2173
    %v2500 = vadd.f32 %v1727, %v2175
    %v2501 = vadd.f32 %v1728, %v2177
    %v2502 = vadd.f32 %v1729, %v2179
    %v2503 = vadd.f32 %v1730, %v2181
    %v2504 = vadd.f32 %v1731, %v2183
    %v2505 = vadd.f32 %v1732, %v2185
    %v2506 = vadd.f32 %v1733, %v2186
    %v2507 = vadd.f32 %v1734, %v2189
    %v2508 = vadd.f32 %v1735, %v2191
    %v2509 = vadd.f32 %v1736, %v2193
    %v2510 = vadd.f32 %v1737, %v2195
    %v2511 = vadd.f32 %v1738, %v2197
    %v2512 = vadd.f32 %v1739, %v2199
    %v2513 = vadd.f32 %v1740, %v2201
    %v2514 = vadd.f32 %v1741, %v2203
    %v2515 = vadd.f32 %v1742, %v2205
    %v2516 = vadd.f32 %v1743, %v2207
    %v2517 = vadd.f32 %v1744, %v2209
    %v2518 = vadd.f32 %v1745, %v2211
    %v2519 = vadd.f32 %v1746, %v2213
    %v2520 = vadd.f32 %v1747, %v2215
    %v2521 = vadd.f32 %v1748, %v2217
    %v2522 = vadd.f32 %v1749, %v2218
    %v2523 = vadd.f32 %v1750, %v2221
    %v2524 = vadd.f32 %v1751, %v2223
    %v2525 = vadd.f32 %v1752, %v2225
    %v2526 = vadd.f32 %v1753, %v2227
    %v2527 = vadd.f32 %v1754, %v2229
    %v2528 = vadd.f32 %v1755, %v2231
    %v2529 = vadd.f32 %v1756, %v2233
    %v2530 = vadd.f32 %v1757, %v2235
    %v2531 = vadd.f32 %v1758, %v2237
    %v2532 = vadd.f32 %v1759, %v2239
    %v2533 = vadd.f32 %v1760, %v2241
    %v2534 = vadd.f32 %v1761, %v2243
    %v2535 = vadd.f32 %v1762, %v2245
    %v2536 = vadd.f32 %v1763, %v2247
    %v2537 = vadd.f32 %v1764, %v2249
    %v2538 = vadd.f32 %v1765, %v2250
    %v2539 = vadd.f32 %v1766, %v2253
    %v2540 = vadd.f32 %v1767, %v2255
    %v2541 = vadd.f32 %v1768, %v2257
    %v2542 = vadd.f32 %v1769, %v2259
    %v2543 = vadd.f32 %v1770, %v2261
    %v2544 = vadd.f32 %v1771, %v2263
    %v2545 = vadd.f32 %v1772, %v2265
    %v2546 = vadd.f32 %v1773, %v2267
    %v2547 = vadd.f32 %v1774, %v2269
    %v2548 = vadd.f32 %v1775, %v2271
    %v2549 = vadd.f32 %v1776, %v2273
    %v2550 = vadd.f32 %v1777, %v2275
    %v2551 = vadd.f32 %v1778, %v2277
    %v2552 = vadd.f32 %v1779, %v2279
    %v2553 = vadd.f32 %v1780, %v2281
    %v2554 = vadd.f32 %v1781, %v2282
    %v2555 = vadd.f32 %v1782, %v2285
    %v2556 = vadd.f32 %v1783, %v2287
    %v2557 = vadd.f32 %v1784, %v2289
    %v2558 = vadd.f32 %v1785, %v2291
    %v2559 = vadd.f32 %v1786, %v2293
    %v2560 = vadd.f32 %v1787, %v2295
    %v2561 = vadd.f32 %v1788, %v2297
    %v2562 = vadd.f32 %v1789, %v2299
    %v2563 = vadd.f32 %v1790, %v2301
    %v2564 = vadd.f32 %v1791, %v2303
    %v2565 = vadd.f32 %v1792, %v2305
    %v2566 = vadd.f32 %v1793, %v2307
    %v2567 = vadd.f32 %v1794, %v2309
    %v2568 = vadd.f32 %v1795, %v2311
    %v2569 = vadd.f32 %v1796, %v2313
    %v2570 = vadd.f32 %v1797, %v2314
    %v2572 = vperm.slane %v225, 0
    %v2574 = vadd.f32 %v2443, %v2572
    %v2575 = vadd.f32 %v2444, %v2572
    %v2576 = vadd.f32 %v2445, %v2572
    %v2577 = vadd.f32 %v2446, %v2572
    %v2578 = vadd.f32 %v2447, %v2572
    %v2579 = vadd.f32 %v2448, %v2572
    %v2580 = vadd.f32 %v2449, %v2572
    %v2581 = vadd.f32 %v2450, %v2572
    %v2582 = vadd.f32 %v2451, %v2572
    %v2583 = vadd.f32 %v2452, %v2572
    %v2584 = vadd.f32 %v2453, %v2572
    %v2585 = vadd.f32 %v2454, %v2572
    %v2586 = vadd.f32 %v2455, %v2572
    %v2587 = vadd.f32 %v2456, %v2572
    %v2588 = vadd.f32 %v2457, %v2572
    %v2589 = vadd.f32 %v2458, %v2572
    %v2590 = vadd.f32 %v2459, %v2572
    %v2591 = vadd.f32 %v2460, %v2572
    %v2592 = vadd.f32 %v2461, %v2572
    %v2593 = vadd.f32 %v2462, %v2572
    %v2594 = vadd.f32 %v2463, %v2572
    %v2595 = vadd.f32 %v2464, %v2572
    %v2596 = vadd.f32 %v2465, %v2572
    %v2597 = vadd.f32 %v2466, %v2572
    %v2598 = vadd.f32 %v2467, %v2572
    %v2599 = vadd.f32 %v2468, %v2572
    %v2600 = vadd.f32 %v2469, %v2572
    %v2601 = vadd.f32 %v2470, %v2572
    %v2602 = vadd.f32 %v2471, %v2572
    %v2603 = vadd.f32 %v2472, %v2572
    %v2604 = vadd.f32 %v2473, %v2572
    %v2605 = vadd.f32 %v2474, %v2572
    %v2606 = vadd.f32 %v2475, %v2572
    %v2607 = vadd.f32 %v2476, %v2572
    %v2608 = vadd.f32 %v2477, %v2572
    %v2609 = vadd.f32 %v2478, %v2572
    %v2610 = vadd.f32 %v2479, %v2572
    %v2611 = vadd.f32 %v2480, %v2572
    %v2612 = vadd.f32 %v2481, %v2572
    %v2613 = vadd.f32 %v2482, %v2572
    %v2614 = vadd.f32 %v2483, %v2572
    %v2615 = vadd.f32 %v2484, %v2572
    %v2616 = vadd.f32 %v2485, %v2572
    %v2617 = vadd.f32 %v2486, %v2572
    %v2618 = vadd.f32 %v2487, %v2572
    %v2619 = vadd.f32 %v2488, %v2572
    %v2620 = vadd.f32 %v2489, %v2572
    %v2621 = vadd.f32 %v2490, %v2572
    %v2622 = vadd.f32 %v2491, %v2572
    %v2623 = vadd.f32 %v2492, %v2572
    %v2624 = vadd.f32 %v2493, %v2572
    %v2625 = vadd.f32 %v2494, %v2572
    %v2626 = vadd.f32 %v2495, %v2572
    %v2627 = vadd.f32 %v2496, %v2572
    %v2628 = vadd.f32 %v2497, %v2572
    %v2629 = vadd.f32 %v2498, %v2572
    %v2630 = vadd.f32 %v2499, %v2572
    %v2631 = vadd.f32 %v2500, %v2572
    %v2632 = vadd.f32 %v2501, %v2572
    %v2633 = vadd.f32 %v2502, %v2572
    %v2634 = vadd.f32 %v2503, %v2572
    %v2635 = vadd.f32 %v2504, %v2572
    %v2636 = vadd.f32 %v2505, %v2572
    %v2637 = vadd.f32 %v2506, %v2572
    %v2638 = vadd.f32 %v2507, %v2572
    %v2639 = vadd.f32 %v2508, %v2572
    %v2640 = vadd.f32 %v2509, %v2572
    %v2641 = vadd.f32 %v2510, %v2572
    %v2642 = vadd.f32 %v2511, %v2572
    %v2643 = vadd.f32 %v2512, %v2572
    %v2644 = vadd.f32 %v2513, %v2572
    %v2645 = vadd.f32 %v2514, %v2572
    %v2646 = vadd.f32 %v2515, %v2572
    %v2647 = vadd.f32 %v2516, %v2572
    %v2648 = vadd.f32 %v2517, %v2572
    %v2649 = vadd.f32 %v2518, %v2572
    %v2650 = vadd.f32 %v2519, %v2572
    %v2651 = vadd.f32 %v2520, %v2572
    %v2652 = vadd.f32 %v2521, %v2572
    %v2653 = vadd.f32 %v2522, %v2572
    %v2654 = vadd.f32 %v2523, %v2572
    %v2655 = vadd.f32 %v2524, %v2572
    %v2656 = vadd.f32 %v2525, %v2572
    %v2657 = vadd.f32 %v2526, %v2572
    %v2658 = vadd.f32 %v2527, %v2572
    %v2659 = vadd.f32 %v2528, %v2572
    %v2660 = vadd.f32 %v2529, %v2572
    %v2661 = vadd.f32 %v2530, %v2572
    %v2662 = vadd.f32 %v2531, %v2572
    %v2663 = vadd.f32 %v2532, %v2572
    %v2664 = vadd.f32 %v2533, %v2572
    %v2665 = vadd.f32 %v2534, %v2572
    %v2666 = vadd.f32 %v2535, %v2572
    %v2667 = vadd.f32 %v2536, %v2572
    %v2668 = vadd.f32 %v2537, %v2572
    %v2669 = vadd.f32 %v2538, %v2572
    %v2670 = vadd.f32 %v2539, %v2572
    %v2671 = vadd.f32 %v2540, %v2572
    %v2672 = vadd.f32 %v2541, %v2572
    %v2673 = vadd.f32 %v2542, %v2572
    %v2674 = vadd.f32 %v2543, %v2572
    %v2675 = vadd.f32 %v2544, %v2572
    %v2676 = vadd.f32 %v2545, %v2572
    %v2677 = vadd.f32 %v2546, %v2572
    %v2678 = vadd.f32 %v2547, %v2572
    %v2679 = vadd.f32 %v2548, %v2572
    %v2680 = vadd.f32 %v2549, %v2572
    %v2681 = vadd.f32 %v2550, %v2572
    %v2682 = vadd.f32 %v2551, %v2572
    %v2683 = vadd.f32 %v2552, %v2572
    %v2684 = vadd.f32 %v2553, %v2572
    %v2685 = vadd.f32 %v2554, %v2572
    %v2686 = vadd.f32 %v2555, %v2572
    %v2687 = vadd.f32 %v2556, %v2572
    %v2688 = vadd.f32 %v2557, %v2572
    %v2689 = vadd.f32 %v2558, %v2572
    %v2690 = vadd.f32 %v2559, %v2572
    %v2691 = vadd.f32 %v2560, %v2572
    %v2692 = vadd.f32 %v2561, %v2572
    %v2693 = vadd.f32 %v2562, %v2572
    %v2694 = vadd.f32 %v2563, %v2572
    %v2695 = vadd.f32 %v2564, %v2572
    %v2696 = vadd.f32 %v2565, %v2572
    %v2697 = vadd.f32 %v2566, %v2572
    %v2698 = vadd.f32 %v2567, %v2572
    %v2699 = vadd.f32 %v2568, %v2572
    %v2700 = vadd.f32 %v2569, %v2572
    %v2701 = vadd.f32 %v2570, %v2572
    %v2702 = vmax.f32 %v2574, 0.0
    %v2703 = vmax.f32 %v2575, 0.0
    %v2704 = vmax.f32 %v2576, 0.0
    %v2705 = vmax.f32 %v2577, 0.0
    %v2706 = vmax.f32 %v2578, 0.0
    %v2707 = vmax.f32 %v2579, 0.0
    %v2708 = vmax.f32 %v2580, 0.0
    %v2709 = vmax.f32 %v2581, 0.0
    %v2710 = vmax.f32 %v2582, 0.0
    %v2711 = vmax.f32 %v2583, 0.0
    %v2712 = vmax.f32 %v2584, 0.0
    %v2713 = vmax.f32 %v2585, 0.0
    %v2714 = vmax.f32 %v2586, 0.0
    %v2715 = vmax.f32 %v2587, 0.0
    %v2716 = vmax.f32 %v2588, 0.0
    %v2717 = vmax.f32 %v2589, 0.0
    %v2718 = vmax.f32 %v2590, 0.0
    %v2719 = vmax.f32 %v2591, 0.0
    %v2720 = vmax.f32 %v2592, 0.0
    %v2721 = vmax.f32 %v2593, 0.0
    %v2722 = vmax.f32 %v2594, 0.0
    %v2723 = vmax.f32 %v2595, 0.0
    %v2724 = vmax.f32 %v2596, 0.0
    %v2725 = vmax.f32 %v2597, 0.0
    %v2726 = vmax.f32 %v2598, 0.0
    %v2727 = vmax.f32 %v2599, 0.0
    %v2728 = vmax.f32 %v2600, 0.0
    %v2729 = vmax.f32 %v2601, 0.0
    %v2730 = vmax.f32 %v2602, 0.0
    %v2731 = vmax.f32 %v2603, 0.0
    %v2732 = vmax.f32 %v2604, 0.0
    %v2733 = vmax.f32 %v2605, 0.0
    %v2734 = vmax.f32 %v2606, 0.0
    %v2735 = vmax.f32 %v2607, 0.0
    %v2736 = vmax.f32 %v2608, 0.0
    %v2737 = vmax.f32 %v2609, 0.0
    %v2738 = vmax.f32 %v2610, 0.0
    %v2739 = vmax.f32 %v2611, 0.0
    %v2740 = vmax.f32 %v2612, 0.0
    %v2741 = vmax.f32 %v2613, 0.0
    %v2742 = vmax.f32 %v2614, 0.0
    %v2743 = vmax.f32 %v2615, 0.0
    %v2744 = vmax.f32 %v2616, 0.0
    %v2745 = vmax.f32 %v2617, 0.0
    %v2746 = vmax.f32 %v2618, 0.0
    %v2747 = vmax.f32 %v2619, 0.0
    %v2748 = vmax.f32 %v2620, 0.0
    %v2749 = vmax.f32 %v2621, 0.0
    %v2750 = vmax.f32 %v2622, 0.0
    %v2751 = vmax.f32 %v2623, 0.0
    %v2752 = vmax.f32 %v2624, 0.0
    %v2753 = vmax.f32 %v2625, 0.0
    %v2754 = vmax.f32 %v2626, 0.0
    %v2755 = vmax.f32 %v2627, 0.0
    %v2756 = vmax.f32 %v2628, 0.0
    %v2757 = vmax.f32 %v2629, 0.0
    %v2758 = vmax.f32 %v2630, 0.0
    %v2759 = vmax.f32 %v2631, 0.0
    %v2760 = vmax.f32 %v2632, 0.0
    %v2761 = vmax.f32 %v2633, 0.0
    %v2762 = vmax.f32 %v2634, 0.0
    %v2763 = vmax.f32 %v2635, 0.0
    %v2764 = vmax.f32 %v2636, 0.0
    %v2765 = vmax.f32 %v2637, 0.0
    %v2766 = vmax.f32 %v2638, 0.0
    %v2767 = vmax.f32 %v2639, 0.0
    %v2768 = vmax.f32 %v2640, 0.0
    %v2769 = vmax.f32 %v2641, 0.0
    %v2770 = vmax.f32 %v2642, 0.0
    %v2771 = vmax.f32 %v2643, 0.0
    %v2772 = vmax.f32 %v2644, 0.0
    %v2773 = vmax.f32 %v2645, 0.0
    %v2774 = vmax.f32 %v2646, 0.0
    %v2775 = vmax.f32 %v2647, 0.0
    %v2776 = vmax.f32 %v2648, 0.0
    %v2777 = vmax.f32 %v2649, 0.0
    %v2778 = vmax.f32 %v2650, 0.0
    %v2779 = vmax.f32 %v2651, 0.0
    %v2780 = vmax.f32 %v2652, 0.0
    %v2781 = vmax.f32 %v2653, 0.0
    %v2782 = vmax.f32 %v2654, 0.0
    %v2783 = vmax.f32 %v2655, 0.0
    %v2784 = vmax.f32 %v2656, 0.0
    %v2785 = vmax.f32 %v2657, 0.0
    %v2786 = vmax.f32 %v2658, 0.0
    %v2787 = vmax.f32 %v2659, 0.0
    %v2788 = vmax.f32 %v2660, 0.0
    %v2789 = vmax.f32 %v2661, 0.0
    %v2790 = vmax.f32 %v2662, 0.0
    %v2791 = vmax.f32 %v2663, 0.0
    %v2792 = vmax.f32 %v2664, 0.0
    %v2793 = vmax.f32 %v2665, 0.0
    %v2794 = vmax.f32 %v2666, 0.0
    %v2795 = vmax.f32 %v2667, 0.0
    %v2796 = vmax.f32 %v2668, 0.0
    %v2797 = vmax.f32 %v2669, 0.0
    %v2798 = vmax.f32 %v2670, 0.0
    %v2799 = vmax.f32 %v2671, 0.0
    %v2800 = vmax.f32 %v2672, 0.0
    %v2801 = vmax.f32 %v2673, 0.0
    %v2802 = vmax.f32 %v2674, 0.0
    %v2803 = vmax.f32 %v2675, 0.0
    %v2804 = vmax.f32 %v2676, 0.0
    %v2805 = vmax.f32 %v2677, 0.0
    %v2806 = vmax.f32 %v2678, 0.0
    %v2807 = vmax.f32 %v2679, 0.0
    %v2808 = vmax.f32 %v2680, 0.0
    %v2809 = vmax.f32 %v2681, 0.0
    %v2810 = vmax.f32 %v2682, 0.0
    %v2811 = vmax.f32 %v2683, 0.0
    %v2812 = vmax.f32 %v2684, 0.0
    %v2813 = vmax.f32 %v2685, 0.0
    %v2814 = vmax.f32 %v2686, 0.0
    %v2815 = vmax.f32 %v2687, 0.0
    %v2816 = vmax.f32 %v2688, 0.0
    %v2817 = vmax.f32 %v2689, 0.0
    %v2818 = vmax.f32 %v2690, 0.0
    %v2819 = vmax.f32 %v2691, 0.0
    %v2820 = vmax.f32 %v2692, 0.0
    %v2821 = vmax.f32 %v2693, 0.0
    %v2822 = vmax.f32 %v2694, 0.0
    %v2823 = vmax.f32 %v2695, 0.0
    %v2824 = vmax.f32 %v2696, 0.0
    %v2825 = vmax.f32 %v2697, 0.0
    %v2826 = vmax.f32 %v2698, 0.0
    %v2827 = vmax.f32 %v2699, 0.0
    %v2828 = vmax.f32 %v2700, 0.0
    %v2829 = vmax.f32 %v2701, 0.0
    %v2830 = vpack.c.bf16 %v2702, %v2702
    %v2831 = vpack.c.bf16 %v2703, %v2703
    %v2832 = vpack.c.bf16 %v2704, %v2704
    %v2833 = vpack.c.bf16 %v2705, %v2705
    %v2834 = vpack.c.bf16 %v2706, %v2706
    %v2835 = vpack.c.bf16 %v2707, %v2707
    %v2836 = vpack.c.bf16 %v2708, %v2708
    %v2837 = vpack.c.bf16 %v2709, %v2709
    %v2838 = vpack.c.bf16 %v2710, %v2710
    %v2839 = vpack.c.bf16 %v2711, %v2711
    %v2840 = vpack.c.bf16 %v2712, %v2712
    %v2841 = vpack.c.bf16 %v2713, %v2713
    %v2842 = vpack.c.bf16 %v2714, %v2714
    %v2843 = vpack.c.bf16 %v2715, %v2715
    %v2844 = vpack.c.bf16 %v2716, %v2716
    %v2845 = vpack.c.bf16 %v2717, %v2717
    %v2846 = vpack.c.bf16 %v2718, %v2718
    %v2847 = vpack.c.bf16 %v2719, %v2719
    %v2848 = vpack.c.bf16 %v2720, %v2720
    %v2849 = vpack.c.bf16 %v2721, %v2721
    %v2850 = vpack.c.bf16 %v2722, %v2722
    %v2851 = vpack.c.bf16 %v2723, %v2723
    %v2852 = vpack.c.bf16 %v2724, %v2724
    %v2853 = vpack.c.bf16 %v2725, %v2725
    %v2854 = vpack.c.bf16 %v2726, %v2726
    %v2855 = vpack.c.bf16 %v2727, %v2727
    %v2856 = vpack.c.bf16 %v2728, %v2728
    %v2857 = vpack.c.bf16 %v2729, %v2729
    %v2858 = vpack.c.bf16 %v2730, %v2730
    %v2859 = vpack.c.bf16 %v2731, %v2731
    %v2860 = vpack.c.bf16 %v2732, %v2732
    %v2861 = vpack.c.bf16 %v2733, %v2733
    %v2862 = vpack.c.bf16 %v2734, %v2734
    %v2863 = vpack.c.bf16 %v2735, %v2735
    %v2864 = vpack.c.bf16 %v2736, %v2736
    %v2865 = vpack.c.bf16 %v2737, %v2737
    %v2866 = vpack.c.bf16 %v2738, %v2738
    %v2867 = vpack.c.bf16 %v2739, %v2739
    %v2868 = vpack.c.bf16 %v2740, %v2740
    %v2869 = vpack.c.bf16 %v2741, %v2741
    %v2870 = vpack.c.bf16 %v2742, %v2742
    %v2871 = vpack.c.bf16 %v2743, %v2743
    %v2872 = vpack.c.bf16 %v2744, %v2744
    %v2873 = vpack.c.bf16 %v2745, %v2745
    %v2874 = vpack.c.bf16 %v2746, %v2746
    %v2875 = vpack.c.bf16 %v2747, %v2747
    %v2876 = vpack.c.bf16 %v2748, %v2748
    %v2877 = vpack.c.bf16 %v2749, %v2749
    %v2878 = vpack.c.bf16 %v2750, %v2750
    %v2879 = vpack.c.bf16 %v2751, %v2751
    %v2880 = vpack.c.bf16 %v2752, %v2752
    %v2881 = vpack.c.bf16 %v2753, %v2753
    %v2882 = vpack.c.bf16 %v2754, %v2754
    %v2883 = vpack.c.bf16 %v2755, %v2755
    %v2884 = vpack.c.bf16 %v2756, %v2756
    %v2885 = vpack.c.bf16 %v2757, %v2757
    %v2886 = vpack.c.bf16 %v2758, %v2758
    %v2887 = vpack.c.bf16 %v2759, %v2759
    %v2888 = vpack.c.bf16 %v2760, %v2760
    %v2889 = vpack.c.bf16 %v2761, %v2761
    %v2890 = vpack.c.bf16 %v2762, %v2762
    %v2891 = vpack.c.bf16 %v2763, %v2763
    %v2892 = vpack.c.bf16 %v2764, %v2764
    %v2893 = vpack.c.bf16 %v2765, %v2765
    %v2894 = vpack.c.bf16 %v2766, %v2766
    %v2895 = vpack.c.bf16 %v2767, %v2767
    %v2896 = vpack.c.bf16 %v2768, %v2768
    %v2897 = vpack.c.bf16 %v2769, %v2769
    %v2898 = vpack.c.bf16 %v2770, %v2770
    %v2899 = vpack.c.bf16 %v2771, %v2771
    %v2900 = vpack.c.bf16 %v2772, %v2772
    %v2901 = vpack.c.bf16 %v2773, %v2773
    %v2902 = vpack.c.bf16 %v2774, %v2774
    %v2903 = vpack.c.bf16 %v2775, %v2775
    %v2904 = vpack.c.bf16 %v2776, %v2776
    %v2905 = vpack.c.bf16 %v2777, %v2777
    %v2906 = vpack.c.bf16 %v2778, %v2778
    %v2907 = vpack.c.bf16 %v2779, %v2779
    %v2908 = vpack.c.bf16 %v2780, %v2780
    %v2909 = vpack.c.bf16 %v2781, %v2781
    %v2910 = vpack.c.bf16 %v2782, %v2782
    %v2911 = vpack.c.bf16 %v2783, %v2783
    %v2912 = vpack.c.bf16 %v2784, %v2784
    %v2913 = vpack.c.bf16 %v2785, %v2785
    %v2914 = vpack.c.bf16 %v2786, %v2786
    %v2915 = vpack.c.bf16 %v2787, %v2787
    %v2916 = vpack.c.bf16 %v2788, %v2788
    %v2917 = vpack.c.bf16 %v2789, %v2789
    %v2918 = vpack.c.bf16 %v2790, %v2790
    %v2919 = vpack.c.bf16 %v2791, %v2791
    %v2920 = vpack.c.bf16 %v2792, %v2792
    %v2921 = vpack.c.bf16 %v2793, %v2793
    %v2922 = vpack.c.bf16 %v2794, %v2794
    %v2923 = vpack.c.bf16 %v2795, %v2795
    %v2924 = vpack.c.bf16 %v2796, %v2796
    %v2925 = vpack.c.bf16 %v2797, %v2797
    %v2926 = vpack.c.bf16 %v2798, %v2798
    %v2927 = vpack.c.bf16 %v2799, %v2799
    %v2928 = vpack.c.bf16 %v2800, %v2800
    %v2929 = vpack.c.bf16 %v2801, %v2801
    %v2930 = vpack.c.bf16 %v2802, %v2802
    %v2931 = vpack.c.bf16 %v2803, %v2803
    %v2932 = vpack.c.bf16 %v2804, %v2804
    %v2933 = vpack.c.bf16 %v2805, %v2805
    %v2934 = vpack.c.bf16 %v2806, %v2806
    %v2935 = vpack.c.bf16 %v2807, %v2807
    %v2936 = vpack.c.bf16 %v2808, %v2808
    %v2937 = vpack.c.bf16 %v2809, %v2809
    %v2938 = vpack.c.bf16 %v2810, %v2810
    %v2939 = vpack.c.bf16 %v2811, %v2811
    %v2940 = vpack.c.bf16 %v2812, %v2812
    %v2941 = vpack.c.bf16 %v2813, %v2813
    %v2942 = vpack.c.bf16 %v2814, %v2814
    %v2943 = vpack.c.bf16 %v2815, %v2815
    %v2944 = vpack.c.bf16 %v2816, %v2816
    %v2945 = vpack.c.bf16 %v2817, %v2817
    %v2946 = vpack.c.bf16 %v2818, %v2818
    %v2947 = vpack.c.bf16 %v2819, %v2819
    %v2948 = vpack.c.bf16 %v2820, %v2820
    %v2949 = vpack.c.bf16 %v2821, %v2821
    %v2950 = vpack.c.bf16 %v2822, %v2822
    %v2951 = vpack.c.bf16 %v2823, %v2823
    %v2952 = vpack.c.bf16 %v2824, %v2824
    %v2953 = vpack.c.bf16 %v2825, %v2825
    %v2954 = vpack.c.bf16 %v2826, %v2826
    %v2955 = vpack.c.bf16 %v2827, %v2827
    %v2956 = vpack.c.bf16 %v2828, %v2828
    %v2957 = vpack.c.bf16 %v2829, %v2829
    %v3086 = vunpack.c.l.b16 %v2830
    %v3087 = vunpack.c.l.b16 %v2831
    %v3088 = vunpack.c.l.b16 %v2832
    %v3089 = vunpack.c.l.b16 %v2833
    %v3090 = vunpack.c.l.b16 %v2834
    %v3091 = vunpack.c.l.b16 %v2835
    %v3092 = vunpack.c.l.b16 %v2836
    %v3093 = vunpack.c.l.b16 %v2837
    %v3094 = vunpack.c.l.b16 %v2838
    %v3095 = vunpack.c.l.b16 %v2839
    %v3096 = vunpack.c.l.b16 %v2840
    %v3097 = vunpack.c.l.b16 %v2841
    %v3098 = vunpack.c.l.b16 %v2842
    %v3099 = vunpack.c.l.b16 %v2843
    %v3100 = vunpack.c.l.b16 %v2844
    %v3101 = vunpack.c.l.b16 %v2845
    %v3102 = vunpack.c.l.b16 %v2846
    %v3103 = vunpack.c.l.b16 %v2847
    %v3104 = vunpack.c.l.b16 %v2848
    %v3105 = vunpack.c.l.b16 %v2849
    %v3106 = vunpack.c.l.b16 %v2850
    %v3107 = vunpack.c.l.b16 %v2851
    %v3108 = vunpack.c.l.b16 %v2852
    %v3109 = vunpack.c.l.b16 %v2853
    %v3110 = vunpack.c.l.b16 %v2854
    %v3111 = vunpack.c.l.b16 %v2855
    %v3112 = vunpack.c.l.b16 %v2856
    %v3113 = vunpack.c.l.b16 %v2857
    %v3114 = vunpack.c.l.b16 %v2858
    %v3115 = vunpack.c.l.b16 %v2859
    %v3116 = vunpack.c.l.b16 %v2860
    %v3117 = vunpack.c.l.b16 %v2861
    %v3118 = vunpack.c.l.b16 %v2862
    %v3119 = vunpack.c.l.b16 %v2863
    %v3120 = vunpack.c.l.b16 %v2864
    %v3121 = vunpack.c.l.b16 %v2865
    %v3122 = vunpack.c.l.b16 %v2866
    %v3123 = vunpack.c.l.b16 %v2867
    %v3124 = vunpack.c.l.b16 %v2868
    %v3125 = vunpack.c.l.b16 %v2869
    %v3126 = vunpack.c.l.b16 %v2870
    %v3127 = vunpack.c.l.b16 %v2871
    %v3128 = vunpack.c.l.b16 %v2872
    %v3129 = vunpack.c.l.b16 %v2873
    %v3130 = vunpack.c.l.b16 %v2874
    %v3131 = vunpack.c.l.b16 %v2875
    %v3132 = vunpack.c.l.b16 %v2876
    %v3133 = vunpack.c.l.b16 %v2877
    %v3134 = vunpack.c.l.b16 %v2878
    %v3135 = vunpack.c.l.b16 %v2879
    %v3136 = vunpack.c.l.b16 %v2880
    %v3137 = vunpack.c.l.b16 %v2881
    %v3138 = vunpack.c.l.b16 %v2882
    %v3139 = vunpack.c.l.b16 %v2883
    %v3140 = vunpack.c.l.b16 %v2884
    %v3141 = vunpack.c.l.b16 %v2885
    %v3142 = vunpack.c.l.b16 %v2886
    %v3143 = vunpack.c.l.b16 %v2887
    %v3144 = vunpack.c.l.b16 %v2888
    %v3145 = vunpack.c.l.b16 %v2889
    %v3146 = vunpack.c.l.b16 %v2890
    %v3147 = vunpack.c.l.b16 %v2891
    %v3148 = vunpack.c.l.b16 %v2892
    %v3149 = vunpack.c.l.b16 %v2893
    %v3150 = vunpack.c.l.b16 %v2894
    %v3151 = vunpack.c.l.b16 %v2895
    %v3152 = vunpack.c.l.b16 %v2896
    %v3153 = vunpack.c.l.b16 %v2897
    %v3154 = vunpack.c.l.b16 %v2898
    %v3155 = vunpack.c.l.b16 %v2899
    %v3156 = vunpack.c.l.b16 %v2900
    %v3157 = vunpack.c.l.b16 %v2901
    %v3158 = vunpack.c.l.b16 %v2902
    %v3159 = vunpack.c.l.b16 %v2903
    %v3160 = vunpack.c.l.b16 %v2904
    %v3161 = vunpack.c.l.b16 %v2905
    %v3162 = vunpack.c.l.b16 %v2906
    %v3163 = vunpack.c.l.b16 %v2907
    %v3164 = vunpack.c.l.b16 %v2908
    %v3165 = vunpack.c.l.b16 %v2909
    %v3166 = vunpack.c.l.b16 %v2910
    %v3167 = vunpack.c.l.b16 %v2911
    %v3168 = vunpack.c.l.b16 %v2912
    %v3169 = vunpack.c.l.b16 %v2913
    %v3170 = vunpack.c.l.b16 %v2914
    %v3171 = vunpack.c.l.b16 %v2915
    %v3172 = vunpack.c.l.b16 %v2916
    %v3173 = vunpack.c.l.b16 %v2917
    %v3174 = vunpack.c.l.b16 %v2918
    %v3175 = vunpack.c.l.b16 %v2919
    %v3176 = vunpack.c.l.b16 %v2920
    %v3177 = vunpack.c.l.b16 %v2921
    %v3178 = vunpack.c.l.b16 %v2922
    %v3179 = vunpack.c.l.b16 %v2923
    %v3180 = vunpack.c.l.b16 %v2924
    %v3181 = vunpack.c.l.b16 %v2925
    %v3182 = vunpack.c.l.b16 %v2926
    %v3183 = vunpack.c.l.b16 %v2927
    %v3184 = vunpack.c.l.b16 %v2928
    %v3185 = vunpack.c.l.b16 %v2929
    %v3186 = vunpack.c.l.b16 %v2930
    %v3187 = vunpack.c.l.b16 %v2931
    %v3188 = vunpack.c.l.b16 %v2932
    %v3189 = vunpack.c.l.b16 %v2933
    %v3190 = vunpack.c.l.b16 %v2934
    %v3191 = vunpack.c.l.b16 %v2935
    %v3192 = vunpack.c.l.b16 %v2936
    %v3193 = vunpack.c.l.b16 %v2937
    %v3194 = vunpack.c.l.b16 %v2938
    %v3195 = vunpack.c.l.b16 %v2939
    %v3196 = vunpack.c.l.b16 %v2940
    %v3197 = vunpack.c.l.b16 %v2941
    %v3198 = vunpack.c.l.b16 %v2942
    %v3199 = vunpack.c.l.b16 %v2943
    %v3200 = vunpack.c.l.b16 %v2944
    %v3201 = vunpack.c.l.b16 %v2945
    %v3202 = vunpack.c.l.b16 %v2946
    %v3203 = vunpack.c.l.b16 %v2947
    %v3204 = vunpack.c.l.b16 %v2948
    %v3205 = vunpack.c.l.b16 %v2949
    %v3206 = vunpack.c.l.b16 %v2950
    %v3207 = vunpack.c.l.b16 %v2951
    %v3208 = vunpack.c.l.b16 %v2952
    %v3209 = vunpack.c.l.b16 %v2953
    %v3210 = vunpack.c.l.b16 %v2954
    %v3211 = vunpack.c.l.b16 %v2955
    %v3212 = vunpack.c.l.b16 %v2956
    %v3213 = vunpack.c.l.b16 %v2957
    %v3214 = vpack.c.b16 %v3087, %v3086
    %v3215 = vpack.c.b16 %v3089, %v3088
    %v3216 = vpack.c.b16 %v3091, %v3090
    %v3217 = vpack.c.b16 %v3093, %v3092
    %v3218 = vpack.c.b16 %v3095, %v3094
    %v3219 = vpack.c.b16 %v3097, %v3096
    %v3220 = vpack.c.b16 %v3099, %v3098
    %v3221 = vpack.c.b16 %v3101, %v3100
    %v3222 = vpack.c.b16 %v3103, %v3102
    %v3223 = vpack.c.b16 %v3105, %v3104
    %v3224 = vpack.c.b16 %v3107, %v3106
    %v3225 = vpack.c.b16 %v3109, %v3108
    %v3226 = vpack.c.b16 %v3111, %v3110
    %v3227 = vpack.c.b16 %v3113, %v3112
    %v3228 = vpack.c.b16 %v3115, %v3114
    %v3229 = vpack.c.b16 %v3117, %v3116
    %v3230 = vpack.c.b16 %v3119, %v3118
    %v3231 = vpack.c.b16 %v3121, %v3120
    %v3232 = vpack.c.b16 %v3123, %v3122
    %v3233 = vpack.c.b16 %v3125, %v3124
    %v3234 = vpack.c.b16 %v3127, %v3126
    %v3235 = vpack.c.b16 %v3129, %v3128
    %v3236 = vpack.c.b16 %v3131, %v3130
    %v3237 = vpack.c.b16 %v3133, %v3132
    %v3238 = vpack.c.b16 %v3135, %v3134
    %v3239 = vpack.c.b16 %v3137, %v3136
    %v3240 = vpack.c.b16 %v3139, %v3138
    %v3241 = vpack.c.b16 %v3141, %v3140
    %v3242 = vpack.c.b16 %v3143, %v3142
    %v3243 = vpack.c.b16 %v3145, %v3144
    %v3244 = vpack.c.b16 %v3147, %v3146
    %v3245 = vpack.c.b16 %v3149, %v3148
    %v3246 = vpack.c.b16 %v3151, %v3150
    %v3247 = vpack.c.b16 %v3153, %v3152
    %v3248 = vpack.c.b16 %v3155, %v3154
    %v3249 = vpack.c.b16 %v3157, %v3156
    %v3250 = vpack.c.b16 %v3159, %v3158
    %v3251 = vpack.c.b16 %v3161, %v3160
    %v3252 = vpack.c.b16 %v3163, %v3162
    %v3253 = vpack.c.b16 %v3165, %v3164
    %v3254 = vpack.c.b16 %v3167, %v3166
    %v3255 = vpack.c.b16 %v3169, %v3168
    %v3256 = vpack.c.b16 %v3171, %v3170
    %v3257 = vpack.c.b16 %v3173, %v3172
    %v3258 = vpack.c.b16 %v3175, %v3174
    %v3259 = vpack.c.b16 %v3177, %v3176
    %v3260 = vpack.c.b16 %v3179, %v3178
    %v3261 = vpack.c.b16 %v3181, %v3180
    %v3262 = vpack.c.b16 %v3183, %v3182
    %v3263 = vpack.c.b16 %v3185, %v3184
    %v3264 = vpack.c.b16 %v3187, %v3186
    %v3265 = vpack.c.b16 %v3189, %v3188
    %v3266 = vpack.c.b16 %v3191, %v3190
    %v3267 = vpack.c.b16 %v3193, %v3192
    %v3268 = vpack.c.b16 %v3195, %v3194
    %v3269 = vpack.c.b16 %v3197, %v3196
    %v3270 = vpack.c.b16 %v3199, %v3198
    %v3271 = vpack.c.b16 %v3201, %v3200
    %v3272 = vpack.c.b16 %v3203, %v3202
    %v3273 = vpack.c.b16 %v3205, %v3204
    %v3274 = vpack.c.b16 %v3207, %v3206
    %v3275 = vpack.c.b16 %v3209, %v3208
    %v3276 = vpack.c.b16 %v3211, %v3210
    %v3277 = vpack.c.b16 %v3213, %v3212
    %v3286 = vunpack.c.l.b16 %v226
    %v3287 = vunpack.c.l.b16 %v227
    %v3288 = vunpack.c.l.b16 %v228
    %v3289 = vunpack.c.l.b16 %v229
    %v3290 = vunpack.c.l.b16 %v230
    %v3291 = vunpack.c.l.b16 %v231
    %v3292 = vunpack.c.l.b16 %v232
    %v3293 = vunpack.c.l.b16 %v233
    %v3294 = vpack.c.b16 %v3287, %v3286
    %v3295 = vpack.c.b16 %v3289, %v3288
    %v3296 = vpack.c.b16 %v3291, %v3290
    %v3297 = vpack.c.b16 %v3293, %v3292
    %vm3302 = vcmask 523264
    %v3304 = vsel %vm3302, %v3214, 0
    %v3307 = vsel %vm3302, %v3215, 0
    %v3310 = vsel %vm3302, %v3216, 0
    %v3313 = vsel %vm3302, %v3217, 0
    %v3316 = vsel %vm3302, %v3218, 0
    %v3319 = vsel %vm3302, %v3219, 0
    %v3322 = vsel %vm3302, %v3220, 0
    %v3325 = vsel %vm3302, %v3221, 0
    %v3328 = vsel %vm3302, %v3222, 0
    %v3331 = vsel %vm3302, %v3223, 0
    %v3334 = vsel %vm3302, %v3224, 0
    %v3337 = vsel %vm3302, %v3225, 0
    %v3340 = vsel %vm3302, %v3226, 0
    %v3343 = vsel %vm3302, %v3227, 0
    %v3346 = vsel %vm3302, %v3228, 0
    %v3349 = vsel %vm3302, %v3229, 0
    %v3352 = vsel %vm3302, %v3230, 0
    %v3355 = vsel %vm3302, %v3231, 0
    %v3358 = vsel %vm3302, %v3232, 0
    %v3361 = vsel %vm3302, %v3233, 0
    %v3364 = vsel %vm3302, %v3234, 0
    %v3367 = vsel %vm3302, %v3235, 0
    %v3370 = vsel %vm3302, %v3236, 0
    %v3373 = vsel %vm3302, %v3237, 0
    %v3376 = vsel %vm3302, %v3238, 0
    %v3379 = vsel %vm3302, %v3239, 0
    %v3382 = vsel %vm3302, %v3240, 0
    %v3385 = vsel %vm3302, %v3241, 0
    %v3388 = vsel %vm3302, %v3242, 0
    %v3391 = vsel %vm3302, %v3243, 0
    %v3394 = vsel %vm3302, %v3244, 0
    %v3397 = vsel %vm3302, %v3245, 0
    %v3400 = vsel %vm3302, %v3246, 0
    %v3403 = vsel %vm3302, %v3247, 0
    %v3406 = vsel %vm3302, %v3248, 0
    %v3409 = vsel %vm3302, %v3249, 0
    %v3412 = vsel %vm3302, %v3250, 0
    %v3415 = vsel %vm3302, %v3251, 0
    %v3418 = vsel %vm3302, %v3252, 0
    %v3421 = vsel %vm3302, %v3253, 0
    %v3424 = vsel %vm3302, %v3254, 0
    %v3427 = vsel %vm3302, %v3255, 0
    %v3430 = vsel %vm3302, %v3256, 0
    %v3433 = vsel %vm3302, %v3257, 0
    %v3436 = vsel %vm3302, %v3258, 0
    %v3439 = vsel %vm3302, %v3259, 0
    %v3442 = vsel %vm3302, %v3260, 0
    %v3445 = vsel %vm3302, %v3261, 0
    %v3448 = vsel %vm3302, %v3262, 0
    %v3451 = vsel %vm3302, %v3263, 0
    %v3454 = vsel %vm3302, %v3264, 0
    %v3457 = vsel %vm3302, %v3265, 0
    %v3460 = vsel %vm3302, %v3266, 0
    %v3463 = vsel %vm3302, %v3267, 0
    %v3466 = vsel %vm3302, %v3268, 0
    %v3469 = vsel %vm3302, %v3269, 0
    %v3472 = vsel %vm3302, %v3270, 0
    %v3475 = vsel %vm3302, %v3271, 0
    %v3478 = vsel %vm3302, %v3272, 0
    %v3481 = vsel %vm3302, %v3273, 0
    %v3484 = vsel %vm3302, %v3274, 0
    %v3487 = vsel %vm3302, %v3275, 0
    %v3490 = vsel %vm3302, %v3276, 0
    %v3493 = vsel %vm3302, %v3277, 0
    %3495 = vmatpush.bf16.msra.mxu0 0
    %3496 = vmatpush.bf16.msra.mxu0 0
    %3497 = vmatpush.bf16.msra.mxu0 0
    %3498 = vmatpush.bf16.msra.mxu0 0
    %3499 = vmatpush.bf16.msra.mxu0 %v3297
    %3500 = vmatpush.bf16.msra.mxu0 %v3296
    %3501 = vmatpush.bf16.msra.mxu0 %v3295
    %3502 = vmatpush.bf16.msra.mxu0 %v3294
    %3503 = vmatmul.bf16.gmra.mxu0 %v3304
    %v3504 = vpop.f32.mrf.mxu0
    %v3505 = vadd.f32 0.0, %v3504
    %v3506 = vpop.f32.mrf.mxu0
    %v3507 = vadd.f32 0.0, %v3506
    %3508 = vmatmul.bf16.gmra.mxu0 %v3307
    %v3509 = vpop.f32.mrf.mxu0
    %v3510 = vadd.f32 0.0, %v3509
    %v3511 = vpop.f32.mrf.mxu0
    %v3512 = vadd.f32 0.0, %v3511
    %3513 = vmatmul.bf16.gmra.mxu0 %v3310
    %v3514 = vpop.f32.mrf.mxu0
    %v3515 = vadd.f32 0.0, %v3514
    %v3516 = vpop.f32.mrf.mxu0
    %v3517 = vadd.f32 0.0, %v3516
    %3518 = vmatmul.bf16.gmra.mxu0 %v3313
    %v3519 = vpop.f32.mrf.mxu0
    %v3520 = vadd.f32 0.0, %v3519
    %v3521 = vpop.f32.mrf.mxu0
    %v3522 = vadd.f32 0.0, %v3521
    %3523 = vmatmul.bf16.gmra.mxu0 %v3316
    %v3524 = vpop.f32.mrf.mxu0
    %v3525 = vadd.f32 0.0, %v3524
    %v3526 = vpop.f32.mrf.mxu0
    %v3527 = vadd.f32 0.0, %v3526
    %3528 = vmatmul.bf16.gmra.mxu0 %v3319
    %v3529 = vpop.f32.mrf.mxu0
    %v3530 = vadd.f32 0.0, %v3529
    %v3531 = vpop.f32.mrf.mxu0
    %v3532 = vadd.f32 0.0, %v3531
    %3533 = vmatmul.bf16.gmra.mxu0 %v3322
    %v3534 = vpop.f32.mrf.mxu0
    %v3535 = vadd.f32 0.0, %v3534
    %v3536 = vpop.f32.mrf.mxu0
    %v3537 = vadd.f32 0.0, %v3536
    %3538 = vmatmul.bf16.gmra.mxu0 %v3325
    %v3539 = vpop.f32.mrf.mxu0
    %v3540 = vadd.f32 0.0, %v3539
    %v3541 = vpop.f32.mrf.mxu0
    %v3542 = vadd.f32 0.0, %v3541
    %3543 = vmatmul.bf16.gmra.mxu0 %v3328
    %v3544 = vpop.f32.mrf.mxu0
    %v3545 = vadd.f32 0.0, %v3544
    %v3546 = vpop.f32.mrf.mxu0
    %v3547 = vadd.f32 0.0, %v3546
    %3548 = vmatmul.bf16.gmra.mxu0 %v3331
    %v3549 = vpop.f32.mrf.mxu0
    %v3550 = vadd.f32 0.0, %v3549
    %v3551 = vpop.f32.mrf.mxu0
    %v3552 = vadd.f32 0.0, %v3551
    %3553 = vmatmul.bf16.gmra.mxu0 %v3334
    %v3554 = vpop.f32.mrf.mxu0
    %v3555 = vadd.f32 0.0, %v3554
    %v3556 = vpop.f32.mrf.mxu0
    %v3557 = vadd.f32 0.0, %v3556
    %3558 = vmatmul.bf16.gmra.mxu0 %v3337
    %v3559 = vpop.f32.mrf.mxu0
    %v3560 = vadd.f32 0.0, %v3559
    %v3561 = vpop.f32.mrf.mxu0
    %v3562 = vadd.f32 0.0, %v3561
    %3563 = vmatmul.bf16.gmra.mxu0 %v3340
    %v3564 = vpop.f32.mrf.mxu0
    %v3565 = vadd.f32 0.0, %v3564
    %v3566 = vpop.f32.mrf.mxu0
    %v3567 = vadd.f32 0.0, %v3566
    %3568 = vmatmul.bf16.gmra.mxu0 %v3343
    %v3569 = vpop.f32.mrf.mxu0
    %v3570 = vadd.f32 0.0, %v3569
    %v3571 = vpop.f32.mrf.mxu0
    %v3572 = vadd.f32 0.0, %v3571
    %3573 = vmatmul.bf16.gmra.mxu0 %v3346
    %v3574 = vpop.f32.mrf.mxu0
    %v3575 = vadd.f32 0.0, %v3574
    %v3576 = vpop.f32.mrf.mxu0
    %v3577 = vadd.f32 0.0, %v3576
    %3578 = vmatmul.bf16.gmra.mxu0 %v3349
    %v3579 = vpop.f32.mrf.mxu0
    %v3580 = vadd.f32 0.0, %v3579
    %v3581 = vpop.f32.mrf.mxu0
    %v3582 = vadd.f32 0.0, %v3581
    %3583 = vmatmul.bf16.gmra.mxu0 %v3352
    %v3584 = vpop.f32.mrf.mxu0
    %v3585 = vadd.f32 0.0, %v3584
    %v3586 = vpop.f32.mrf.mxu0
    %v3587 = vadd.f32 0.0, %v3586
    %3588 = vmatmul.bf16.gmra.mxu0 %v3355
    %v3589 = vpop.f32.mrf.mxu0
    %v3590 = vadd.f32 0.0, %v3589
    %v3591 = vpop.f32.mrf.mxu0
    %v3592 = vadd.f32 0.0, %v3591
    %3593 = vmatmul.bf16.gmra.mxu0 %v3358
    %v3594 = vpop.f32.mrf.mxu0
    %v3595 = vadd.f32 0.0, %v3594
    %v3596 = vpop.f32.mrf.mxu0
    %v3597 = vadd.f32 0.0, %v3596
    %3598 = vmatmul.bf16.gmra.mxu0 %v3361
    %v3599 = vpop.f32.mrf.mxu0
    %v3600 = vadd.f32 0.0, %v3599
    %v3601 = vpop.f32.mrf.mxu0
    %v3602 = vadd.f32 0.0, %v3601
    %3603 = vmatmul.bf16.gmra.mxu0 %v3364
    %v3604 = vpop.f32.mrf.mxu0
    %v3605 = vadd.f32 0.0, %v3604
    %v3606 = vpop.f32.mrf.mxu0
    %v3607 = vadd.f32 0.0, %v3606
    %3608 = vmatmul.bf16.gmra.mxu0 %v3367
    %v3609 = vpop.f32.mrf.mxu0
    %v3610 = vadd.f32 0.0, %v3609
    %v3611 = vpop.f32.mrf.mxu0
    %v3612 = vadd.f32 0.0, %v3611
    %3613 = vmatmul.bf16.gmra.mxu0 %v3370
    %v3614 = vpop.f32.mrf.mxu0
    %v3615 = vadd.f32 0.0, %v3614
    %v3616 = vpop.f32.mrf.mxu0
    %v3617 = vadd.f32 0.0, %v3616
    %3618 = vmatmul.bf16.gmra.mxu0 %v3373
    %v3619 = vpop.f32.mrf.mxu0
    %v3620 = vadd.f32 0.0, %v3619
    %v3621 = vpop.f32.mrf.mxu0
    %v3622 = vadd.f32 0.0, %v3621
    %3623 = vmatmul.bf16.gmra.mxu0 %v3376
    %v3624 = vpop.f32.mrf.mxu0
    %v3625 = vadd.f32 0.0, %v3624
    %v3626 = vpop.f32.mrf.mxu0
    %v3627 = vadd.f32 0.0, %v3626
    %3628 = vmatmul.bf16.gmra.mxu0 %v3379
    %v3629 = vpop.f32.mrf.mxu0
    %v3630 = vadd.f32 0.0, %v3629
    %v3631 = vpop.f32.mrf.mxu0
    %v3632 = vadd.f32 0.0, %v3631
    %3633 = vmatmul.bf16.gmra.mxu0 %v3382
    %v3634 = vpop.f32.mrf.mxu0
    %v3635 = vadd.f32 0.0, %v3634
    %v3636 = vpop.f32.mrf.mxu0
    %v3637 = vadd.f32 0.0, %v3636
    %3638 = vmatmul.bf16.gmra.mxu0 %v3385
    %v3639 = vpop.f32.mrf.mxu0
    %v3640 = vadd.f32 0.0, %v3639
    %v3641 = vpop.f32.mrf.mxu0
    %v3642 = vadd.f32 0.0, %v3641
    %3643 = vmatmul.bf16.gmra.mxu0 %v3388
    %v3644 = vpop.f32.mrf.mxu0
    %v3645 = vadd.f32 0.0, %v3644
    %v3646 = vpop.f32.mrf.mxu0
    %v3647 = vadd.f32 0.0, %v3646
    %3648 = vmatmul.bf16.gmra.mxu0 %v3391
    %v3649 = vpop.f32.mrf.mxu0
    %v3650 = vadd.f32 0.0, %v3649
    %v3651 = vpop.f32.mrf.mxu0
    %v3652 = vadd.f32 0.0, %v3651
    %3653 = vmatmul.bf16.gmra.mxu0 %v3394
    %v3654 = vpop.f32.mrf.mxu0
    %v3655 = vadd.f32 0.0, %v3654
    %v3656 = vpop.f32.mrf.mxu0
    %v3657 = vadd.f32 0.0, %v3656
    %3658 = vmatmul.bf16.gmra.mxu0 %v3397
    %v3659 = vpop.f32.mrf.mxu0
    %v3660 = vadd.f32 0.0, %v3659
    %v3661 = vpop.f32.mrf.mxu0
    %v3662 = vadd.f32 0.0, %v3661
    %3663 = vmatmul.bf16.gmra.mxu0 %v3400
    %v3664 = vpop.f32.mrf.mxu0
    %v3665 = vadd.f32 0.0, %v3664
    %v3666 = vpop.f32.mrf.mxu0
    %v3667 = vadd.f32 0.0, %v3666
    %3668 = vmatmul.bf16.gmra.mxu0 %v3403
    %v3669 = vpop.f32.mrf.mxu0
    %v3670 = vadd.f32 0.0, %v3669
    %v3671 = vpop.f32.mrf.mxu0
    %v3672 = vadd.f32 0.0, %v3671
    %3673 = vmatmul.bf16.gmra.mxu0 %v3406
    %v3674 = vpop.f32.mrf.mxu0
    %v3675 = vadd.f32 0.0, %v3674
    %v3676 = vpop.f32.mrf.mxu0
    %v3677 = vadd.f32 0.0, %v3676
    %3678 = vmatmul.bf16.gmra.mxu0 %v3409
    %v3679 = vpop.f32.mrf.mxu0
    %v3680 = vadd.f32 0.0, %v3679
    %v3681 = vpop.f32.mrf.mxu0
    %v3682 = vadd.f32 0.0, %v3681
    %3683 = vmatmul.bf16.gmra.mxu0 %v3412
    %v3684 = vpop.f32.mrf.mxu0
    %v3685 = vadd.f32 0.0, %v3684
    %v3686 = vpop.f32.mrf.mxu0
    %v3687 = vadd.f32 0.0, %v3686
    %3688 = vmatmul.bf16.gmra.mxu0 %v3415
    %v3689 = vpop.f32.mrf.mxu0
    %v3690 = vadd.f32 0.0, %v3689
    %v3691 = vpop.f32.mrf.mxu0
    %v3692 = vadd.f32 0.0, %v3691
    %3693 = vmatmul.bf16.gmra.mxu0 %v3418
    %v3694 = vpop.f32.mrf.mxu0
    %v3695 = vadd.f32 0.0, %v3694
    %v3696 = vpop.f32.mrf.mxu0
    %v3697 = vadd.f32 0.0, %v3696
    %3698 = vmatmul.bf16.gmra.mxu0 %v3421
    %v3699 = vpop.f32.mrf.mxu0
    %v3700 = vadd.f32 0.0, %v3699
    %v3701 = vpop.f32.mrf.mxu0
    %v3702 = vadd.f32 0.0, %v3701
    %3703 = vmatmul.bf16.gmra.mxu0 %v3424
    %v3704 = vpop.f32.mrf.mxu0
    %v3705 = vadd.f32 0.0, %v3704
    %v3706 = vpop.f32.mrf.mxu0
    %v3707 = vadd.f32 0.0, %v3706
    %3708 = vmatmul.bf16.gmra.mxu0 %v3427
    %v3709 = vpop.f32.mrf.mxu0
    %v3710 = vadd.f32 0.0, %v3709
    %v3711 = vpop.f32.mrf.mxu0
    %v3712 = vadd.f32 0.0, %v3711
    %3713 = vmatmul.bf16.gmra.mxu0 %v3430
    %v3714 = vpop.f32.mrf.mxu0
    %v3715 = vadd.f32 0.0, %v3714
    %v3716 = vpop.f32.mrf.mxu0
    %v3717 = vadd.f32 0.0, %v3716
    %3718 = vmatmul.bf16.gmra.mxu0 %v3433
    %v3719 = vpop.f32.mrf.mxu0
    %v3720 = vadd.f32 0.0, %v3719
    %v3721 = vpop.f32.mrf.mxu0
    %v3722 = vadd.f32 0.0, %v3721
    %3723 = vmatmul.bf16.gmra.mxu0 %v3436
    %v3724 = vpop.f32.mrf.mxu0
    %v3725 = vadd.f32 0.0, %v3724
    %v3726 = vpop.f32.mrf.mxu0
    %v3727 = vadd.f32 0.0, %v3726
    %3728 = vmatmul.bf16.gmra.mxu0 %v3439
    %v3729 = vpop.f32.mrf.mxu0
    %v3730 = vadd.f32 0.0, %v3729
    %v3731 = vpop.f32.mrf.mxu0
    %v3732 = vadd.f32 0.0, %v3731
    %3733 = vmatmul.bf16.gmra.mxu0 %v3442
    %v3734 = vpop.f32.mrf.mxu0
    %v3735 = vadd.f32 0.0, %v3734
    %v3736 = vpop.f32.mrf.mxu0
    %v3737 = vadd.f32 0.0, %v3736
    %3738 = vmatmul.bf16.gmra.mxu0 %v3445
    %v3739 = vpop.f32.mrf.mxu0
    %v3740 = vadd.f32 0.0, %v3739
    %v3741 = vpop.f32.mrf.mxu0
    %v3742 = vadd.f32 0.0, %v3741
    %3743 = vmatmul.bf16.gmra.mxu0 %v3448
    %v3744 = vpop.f32.mrf.mxu0
    %v3745 = vadd.f32 0.0, %v3744
    %v3746 = vpop.f32.mrf.mxu0
    %v3747 = vadd.f32 0.0, %v3746
    %3748 = vmatmul.bf16.gmra.mxu0 %v3451
    %v3749 = vpop.f32.mrf.mxu0
    %v3750 = vadd.f32 0.0, %v3749
    %v3751 = vpop.f32.mrf.mxu0
    %v3752 = vadd.f32 0.0, %v3751
    %3753 = vmatmul.bf16.gmra.mxu0 %v3454
    %v3754 = vpop.f32.mrf.mxu0
    %v3755 = vadd.f32 0.0, %v3754
    %v3756 = vpop.f32.mrf.mxu0
    %v3757 = vadd.f32 0.0, %v3756
    %3758 = vmatmul.bf16.gmra.mxu0 %v3457
    %v3759 = vpop.f32.mrf.mxu0
    %v3760 = vadd.f32 0.0, %v3759
    %v3761 = vpop.f32.mrf.mxu0
    %v3762 = vadd.f32 0.0, %v3761
    %3763 = vmatmul.bf16.gmra.mxu0 %v3460
    %v3764 = vpop.f32.mrf.mxu0
    %v3765 = vadd.f32 0.0, %v3764
    %v3766 = vpop.f32.mrf.mxu0
    %v3767 = vadd.f32 0.0, %v3766
    %3768 = vmatmul.bf16.gmra.mxu0 %v3463
    %v3769 = vpop.f32.mrf.mxu0
    %v3770 = vadd.f32 0.0, %v3769
    %v3771 = vpop.f32.mrf.mxu0
    %v3772 = vadd.f32 0.0, %v3771
    %3773 = vmatmul.bf16.gmra.mxu0 %v3466
    %v3774 = vpop.f32.mrf.mxu0
    %v3775 = vadd.f32 0.0, %v3774
    %v3776 = vpop.f32.mrf.mxu0
    %v3777 = vadd.f32 0.0, %v3776
    %3778 = vmatmul.bf16.gmra.mxu0 %v3469
    %v3779 = vpop.f32.mrf.mxu0
    %v3780 = vadd.f32 0.0, %v3779
    %v3781 = vpop.f32.mrf.mxu0
    %v3782 = vadd.f32 0.0, %v3781
    %3783 = vmatmul.bf16.gmra.mxu0 %v3472
    %v3784 = vpop.f32.mrf.mxu0
    %v3785 = vadd.f32 0.0, %v3784
    %v3786 = vpop.f32.mrf.mxu0
    %v3787 = vadd.f32 0.0, %v3786
    %3788 = vmatmul.bf16.gmra.mxu0 %v3475
    %v3789 = vpop.f32.mrf.mxu0
    %v3790 = vadd.f32 0.0, %v3789
    %v3791 = vpop.f32.mrf.mxu0
    %v3792 = vadd.f32 0.0, %v3791
    %3793 = vmatmul.bf16.gmra.mxu0 %v3478
    %v3794 = vpop.f32.mrf.mxu0
    %v3795 = vadd.f32 0.0, %v3794
    %v3796 = vpop.f32.mrf.mxu0
    %v3797 = vadd.f32 0.0, %v3796
    %3798 = vmatmul.bf16.gmra.mxu0 %v3481
    %v3799 = vpop.f32.mrf.mxu0
    %v3800 = vadd.f32 0.0, %v3799
    %v3801 = vpop.f32.mrf.mxu0
    %v3802 = vadd.f32 0.0, %v3801
    %3803 = vmatmul.bf16.gmra.mxu0 %v3484
    %v3804 = vpop.f32.mrf.mxu0
    %v3805 = vadd.f32 0.0, %v3804
    %v3806 = vpop.f32.mrf.mxu0
    %v3807 = vadd.f32 0.0, %v3806
    %3808 = vmatmul.bf16.gmra.mxu0 %v3487
    %v3809 = vpop.f32.mrf.mxu0
    %v3810 = vadd.f32 0.0, %v3809
    %v3811 = vpop.f32.mrf.mxu0
    %v3812 = vadd.f32 0.0, %v3811
    %3813 = vmatmul.bf16.gmra.mxu0 %v3490
    %v3814 = vpop.f32.mrf.mxu0
    %v3815 = vadd.f32 0.0, %v3814
    %v3816 = vpop.f32.mrf.mxu0
    %v3817 = vadd.f32 0.0, %v3816
    %3818 = vmatmul.bf16.gmra.mxu0 %v3493
    %v3819 = vpop.f32.mrf.mxu0
    %v3820 = vadd.f32 0.0, %v3819
    %v3821 = vpop.f32.mrf.mxu0
    %v3822 = vadd.f32 0.0, %v3821
    %3823 = vdwg.mxu0
    %v3832 = vunpack.c.l.b16 %v234
    %v3833 = vunpack.c.l.b16 %v235
    %v3834 = vunpack.c.l.b16 %v236
    %v3835 = vunpack.c.l.b16 %v237
    %v3836 = vunpack.c.l.b16 %v238
    %v3837 = vunpack.c.l.b16 %v239
    %v3838 = vunpack.c.l.b16 %v240
    %v3839 = vunpack.c.l.b16 %v241
    %v3840 = vpack.c.b16 %v3833, %v3832
    %v3841 = vpack.c.b16 %v3835, %v3834
    %v3842 = vpack.c.b16 %v3837, %v3836
    %v3843 = vpack.c.b16 %v3839, %v3838
    %3848 = vmatpush.bf16.msra.mxu0 0
    %3849 = vmatpush.bf16.msra.mxu0 0
    %3850 = vmatpush.bf16.msra.mxu0 0
    %3851 = vmatpush.bf16.msra.mxu0 0
    %3852 = vmatpush.bf16.msra.mxu0 %v3843
    %3853 = vmatpush.bf16.msra.mxu0 %v3842
    %3854 = vmatpush.bf16.msra.mxu0 %v3841
    %3855 = vmatpush.bf16.msra.mxu0 %v3840
    %3856 = vmatmul.bf16.gmra.mxu0 %v3304
    %v3857 = vpop.f32.mrf.mxu0
    %v3858 = vadd.f32 0.0, %v3857
    %v3859 = vpop.f32.mrf.mxu0
    %v3860 = vadd.f32 0.0, %v3859
    %3861 = vmatmul.bf16.gmra.mxu0 %v3307
    %v3862 = vpop.f32.mrf.mxu0
    %v3863 = vadd.f32 0.0, %v3862
    %v3864 = vpop.f32.mrf.mxu0
    %v3865 = vadd.f32 0.0, %v3864
    %3866 = vmatmul.bf16.gmra.mxu0 %v3310
    %v3867 = vpop.f32.mrf.mxu0
    %v3868 = vadd.f32 0.0, %v3867
    %v3869 = vpop.f32.mrf.mxu0
    %v3870 = vadd.f32 0.0, %v3869
    %3871 = vmatmul.bf16.gmra.mxu0 %v3313
    %v3872 = vpop.f32.mrf.mxu0
    %v3873 = vadd.f32 0.0, %v3872
    %v3874 = vpop.f32.mrf.mxu0
    %v3875 = vadd.f32 0.0, %v3874
    %3876 = vmatmul.bf16.gmra.mxu0 %v3316
    %v3877 = vpop.f32.mrf.mxu0
    %v3878 = vadd.f32 0.0, %v3877
    %v3879 = vpop.f32.mrf.mxu0
    %v3880 = vadd.f32 0.0, %v3879
    %3881 = vmatmul.bf16.gmra.mxu0 %v3319
    %v3882 = vpop.f32.mrf.mxu0
    %v3883 = vadd.f32 0.0, %v3882
    %v3884 = vpop.f32.mrf.mxu0
    %v3885 = vadd.f32 0.0, %v3884
    %3886 = vmatmul.bf16.gmra.mxu0 %v3322
    %v3887 = vpop.f32.mrf.mxu0
    %v3888 = vadd.f32 0.0, %v3887
    %v3889 = vpop.f32.mrf.mxu0
    %v3890 = vadd.f32 0.0, %v3889
    %3891 = vmatmul.bf16.gmra.mxu0 %v3325
    %v3892 = vpop.f32.mrf.mxu0
    %v3893 = vadd.f32 0.0, %v3892
    %v3894 = vpop.f32.mrf.mxu0
    %v3895 = vadd.f32 0.0, %v3894
    %3896 = vmatmul.bf16.gmra.mxu0 %v3328
    %v3897 = vpop.f32.mrf.mxu0
    %v3898 = vadd.f32 0.0, %v3897
    %v3899 = vpop.f32.mrf.mxu0
    %v3900 = vadd.f32 0.0, %v3899
    %3901 = vmatmul.bf16.gmra.mxu0 %v3331
    %v3902 = vpop.f32.mrf.mxu0
    %v3903 = vadd.f32 0.0, %v3902
    %v3904 = vpop.f32.mrf.mxu0
    %v3905 = vadd.f32 0.0, %v3904
    %3906 = vmatmul.bf16.gmra.mxu0 %v3334
    %v3907 = vpop.f32.mrf.mxu0
    %v3908 = vadd.f32 0.0, %v3907
    %v3909 = vpop.f32.mrf.mxu0
    %v3910 = vadd.f32 0.0, %v3909
    %3911 = vmatmul.bf16.gmra.mxu0 %v3337
    %v3912 = vpop.f32.mrf.mxu0
    %v3913 = vadd.f32 0.0, %v3912
    %v3914 = vpop.f32.mrf.mxu0
    %v3915 = vadd.f32 0.0, %v3914
    %3916 = vmatmul.bf16.gmra.mxu0 %v3340
    %v3917 = vpop.f32.mrf.mxu0
    %v3918 = vadd.f32 0.0, %v3917
    %v3919 = vpop.f32.mrf.mxu0
    %v3920 = vadd.f32 0.0, %v3919
    %3921 = vmatmul.bf16.gmra.mxu0 %v3343
    %v3922 = vpop.f32.mrf.mxu0
    %v3923 = vadd.f32 0.0, %v3922
    %v3924 = vpop.f32.mrf.mxu0
    %v3925 = vadd.f32 0.0, %v3924
    %3926 = vmatmul.bf16.gmra.mxu0 %v3346
    %v3927 = vpop.f32.mrf.mxu0
    %v3928 = vadd.f32 0.0, %v3927
    %v3929 = vpop.f32.mrf.mxu0
    %v3930 = vadd.f32 0.0, %v3929
    %3931 = vmatmul.bf16.gmra.mxu0 %v3349
    %v3932 = vpop.f32.mrf.mxu0
    %v3933 = vadd.f32 0.0, %v3932
    %v3934 = vpop.f32.mrf.mxu0
    %v3935 = vadd.f32 0.0, %v3934
    %3936 = vmatmul.bf16.gmra.mxu0 %v3352
    %v3937 = vpop.f32.mrf.mxu0
    %v3938 = vadd.f32 0.0, %v3937
    %v3939 = vpop.f32.mrf.mxu0
    %v3940 = vadd.f32 0.0, %v3939
    %3941 = vmatmul.bf16.gmra.mxu0 %v3355
    %v3942 = vpop.f32.mrf.mxu0
    %v3943 = vadd.f32 0.0, %v3942
    %v3944 = vpop.f32.mrf.mxu0
    %v3945 = vadd.f32 0.0, %v3944
    %3946 = vmatmul.bf16.gmra.mxu0 %v3358
    %v3947 = vpop.f32.mrf.mxu0
    %v3948 = vadd.f32 0.0, %v3947
    %v3949 = vpop.f32.mrf.mxu0
    %v3950 = vadd.f32 0.0, %v3949
    %3951 = vmatmul.bf16.gmra.mxu0 %v3361
    %v3952 = vpop.f32.mrf.mxu0
    %v3953 = vadd.f32 0.0, %v3952
    %v3954 = vpop.f32.mrf.mxu0
    %v3955 = vadd.f32 0.0, %v3954
    %3956 = vmatmul.bf16.gmra.mxu0 %v3364
    %v3957 = vpop.f32.mrf.mxu0
    %v3958 = vadd.f32 0.0, %v3957
    %v3959 = vpop.f32.mrf.mxu0
    %v3960 = vadd.f32 0.0, %v3959
    %3961 = vmatmul.bf16.gmra.mxu0 %v3367
    %v3962 = vpop.f32.mrf.mxu0
    %v3963 = vadd.f32 0.0, %v3962
    %v3964 = vpop.f32.mrf.mxu0
    %v3965 = vadd.f32 0.0, %v3964
    %3966 = vmatmul.bf16.gmra.mxu0 %v3370
    %v3967 = vpop.f32.mrf.mxu0
    %v3968 = vadd.f32 0.0, %v3967
    %v3969 = vpop.f32.mrf.mxu0
    %v3970 = vadd.f32 0.0, %v3969
    %3971 = vmatmul.bf16.gmra.mxu0 %v3373
    %v3972 = vpop.f32.mrf.mxu0
    %v3973 = vadd.f32 0.0, %v3972
    %v3974 = vpop.f32.mrf.mxu0
    %v3975 = vadd.f32 0.0, %v3974
    %3976 = vmatmul.bf16.gmra.mxu0 %v3376
    %v3977 = vpop.f32.mrf.mxu0
    %v3978 = vadd.f32 0.0, %v3977
    %v3979 = vpop.f32.mrf.mxu0
    %v3980 = vadd.f32 0.0, %v3979
    %3981 = vmatmul.bf16.gmra.mxu0 %v3379
    %v3982 = vpop.f32.mrf.mxu0
    %v3983 = vadd.f32 0.0, %v3982
    %v3984 = vpop.f32.mrf.mxu0
    %v3985 = vadd.f32 0.0, %v3984
    %3986 = vmatmul.bf16.gmra.mxu0 %v3382
    %v3987 = vpop.f32.mrf.mxu0
    %v3988 = vadd.f32 0.0, %v3987
    %v3989 = vpop.f32.mrf.mxu0
    %v3990 = vadd.f32 0.0, %v3989
    %3991 = vmatmul.bf16.gmra.mxu0 %v3385
    %v3992 = vpop.f32.mrf.mxu0
    %v3993 = vadd.f32 0.0, %v3992
    %v3994 = vpop.f32.mrf.mxu0
    %v3995 = vadd.f32 0.0, %v3994
    %3996 = vmatmul.bf16.gmra.mxu0 %v3388
    %v3997 = vpop.f32.mrf.mxu0
    %v3998 = vadd.f32 0.0, %v3997
    %v3999 = vpop.f32.mrf.mxu0
    %v4000 = vadd.f32 0.0, %v3999
    %4001 = vmatmul.bf16.gmra.mxu0 %v3391
    %v4002 = vpop.f32.mrf.mxu0
    %v4003 = vadd.f32 0.0, %v4002
    %v4004 = vpop.f32.mrf.mxu0
    %v4005 = vadd.f32 0.0, %v4004
    %4006 = vmatmul.bf16.gmra.mxu0 %v3394
    %v4007 = vpop.f32.mrf.mxu0
    %v4008 = vadd.f32 0.0, %v4007
    %v4009 = vpop.f32.mrf.mxu0
    %v4010 = vadd.f32 0.0, %v4009
    %4011 = vmatmul.bf16.gmra.mxu0 %v3397
    %v4012 = vpop.f32.mrf.mxu0
    %v4013 = vadd.f32 0.0, %v4012
    %v4014 = vpop.f32.mrf.mxu0
    %v4015 = vadd.f32 0.0, %v4014
    %4016 = vmatmul.bf16.gmra.mxu0 %v3400
    %v4017 = vpop.f32.mrf.mxu0
    %v4018 = vadd.f32 0.0, %v4017
    %v4019 = vpop.f32.mrf.mxu0
    %v4020 = vadd.f32 0.0, %v4019
    %4021 = vmatmul.bf16.gmra.mxu0 %v3403
    %v4022 = vpop.f32.mrf.mxu0
    %v4023 = vadd.f32 0.0, %v4022
    %v4024 = vpop.f32.mrf.mxu0
    %v4025 = vadd.f32 0.0, %v4024
    %4026 = vmatmul.bf16.gmra.mxu0 %v3406
    %v4027 = vpop.f32.mrf.mxu0
    %v4028 = vadd.f32 0.0, %v4027
    %v4029 = vpop.f32.mrf.mxu0
    %v4030 = vadd.f32 0.0, %v4029
    %4031 = vmatmul.bf16.gmra.mxu0 %v3409
    %v4032 = vpop.f32.mrf.mxu0
    %v4033 = vadd.f32 0.0, %v4032
    %v4034 = vpop.f32.mrf.mxu0
    %v4035 = vadd.f32 0.0, %v4034
    %4036 = vmatmul.bf16.gmra.mxu0 %v3412
    %v4037 = vpop.f32.mrf.mxu0
    %v4038 = vadd.f32 0.0, %v4037
    %v4039 = vpop.f32.mrf.mxu0
    %v4040 = vadd.f32 0.0, %v4039
    %4041 = vmatmul.bf16.gmra.mxu0 %v3415
    %v4042 = vpop.f32.mrf.mxu0
    %v4043 = vadd.f32 0.0, %v4042
    %v4044 = vpop.f32.mrf.mxu0
    %v4045 = vadd.f32 0.0, %v4044
    %4046 = vmatmul.bf16.gmra.mxu0 %v3418
    %v4047 = vpop.f32.mrf.mxu0
    %v4048 = vadd.f32 0.0, %v4047
    %v4049 = vpop.f32.mrf.mxu0
    %v4050 = vadd.f32 0.0, %v4049
    %4051 = vmatmul.bf16.gmra.mxu0 %v3421
    %v4052 = vpop.f32.mrf.mxu0
    %v4053 = vadd.f32 0.0, %v4052
    %v4054 = vpop.f32.mrf.mxu0
    %v4055 = vadd.f32 0.0, %v4054
    %4056 = vmatmul.bf16.gmra.mxu0 %v3424
    %v4057 = vpop.f32.mrf.mxu0
    %v4058 = vadd.f32 0.0, %v4057
    %v4059 = vpop.f32.mrf.mxu0
    %v4060 = vadd.f32 0.0, %v4059
    %4061 = vmatmul.bf16.gmra.mxu0 %v3427
    %v4062 = vpop.f32.mrf.mxu0
    %v4063 = vadd.f32 0.0, %v4062
    %v4064 = vpop.f32.mrf.mxu0
    %v4065 = vadd.f32 0.0, %v4064
    %4066 = vmatmul.bf16.gmra.mxu0 %v3430
    %v4067 = vpop.f32.mrf.mxu0
    %v4068 = vadd.f32 0.0, %v4067
    %v4069 = vpop.f32.mrf.mxu0
    %v4070 = vadd.f32 0.0, %v4069
    %4071 = vmatmul.bf16.gmra.mxu0 %v3433
    %v4072 = vpop.f32.mrf.mxu0
    %v4073 = vadd.f32 0.0, %v4072
    %v4074 = vpop.f32.mrf.mxu0
    %v4075 = vadd.f32 0.0, %v4074
    %4076 = vmatmul.bf16.gmra.mxu0 %v3436
    %v4077 = vpop.f32.mrf.mxu0
    %v4078 = vadd.f32 0.0, %v4077
    %v4079 = vpop.f32.mrf.mxu0
    %v4080 = vadd.f32 0.0, %v4079
    %4081 = vmatmul.bf16.gmra.mxu0 %v3439
    %v4082 = vpop.f32.mrf.mxu0
    %v4083 = vadd.f32 0.0, %v4082
    %v4084 = vpop.f32.mrf.mxu0
    %v4085 = vadd.f32 0.0, %v4084
    %4086 = vmatmul.bf16.gmra.mxu0 %v3442
    %v4087 = vpop.f32.mrf.mxu0
    %v4088 = vadd.f32 0.0, %v4087
    %v4089 = vpop.f32.mrf.mxu0
    %v4090 = vadd.f32 0.0, %v4089
    %4091 = vmatmul.bf16.gmra.mxu0 %v3445
    %v4092 = vpop.f32.mrf.mxu0
    %v4093 = vadd.f32 0.0, %v4092
    %v4094 = vpop.f32.mrf.mxu0
    %v4095 = vadd.f32 0.0, %v4094
    %4096 = vmatmul.bf16.gmra.mxu0 %v3448
    %v4097 = vpop.f32.mrf.mxu0
    %v4098 = vadd.f32 0.0, %v4097
    %v4099 = vpop.f32.mrf.mxu0
    %v4100 = vadd.f32 0.0, %v4099
    %4101 = vmatmul.bf16.gmra.mxu0 %v3451
    %v4102 = vpop.f32.mrf.mxu0
    %v4103 = vadd.f32 0.0, %v4102
    %v4104 = vpop.f32.mrf.mxu0
    %v4105 = vadd.f32 0.0, %v4104
    %4106 = vmatmul.bf16.gmra.mxu0 %v3454
    %v4107 = vpop.f32.mrf.mxu0
    %v4108 = vadd.f32 0.0, %v4107
    %v4109 = vpop.f32.mrf.mxu0
    %v4110 = vadd.f32 0.0, %v4109
    %4111 = vmatmul.bf16.gmra.mxu0 %v3457
    %v4112 = vpop.f32.mrf.mxu0
    %v4113 = vadd.f32 0.0, %v4112
    %v4114 = vpop.f32.mrf.mxu0
    %v4115 = vadd.f32 0.0, %v4114
    %4116 = vmatmul.bf16.gmra.mxu0 %v3460
    %v4117 = vpop.f32.mrf.mxu0
    %v4118 = vadd.f32 0.0, %v4117
    %v4119 = vpop.f32.mrf.mxu0
    %v4120 = vadd.f32 0.0, %v4119
    %4121 = vmatmul.bf16.gmra.mxu0 %v3463
    %v4122 = vpop.f32.mrf.mxu0
    %v4123 = vadd.f32 0.0, %v4122
    %v4124 = vpop.f32.mrf.mxu0
    %v4125 = vadd.f32 0.0, %v4124
    %4126 = vmatmul.bf16.gmra.mxu0 %v3466
    %v4127 = vpop.f32.mrf.mxu0
    %v4128 = vadd.f32 0.0, %v4127
    %v4129 = vpop.f32.mrf.mxu0
    %v4130 = vadd.f32 0.0, %v4129
    %4131 = vmatmul.bf16.gmra.mxu0 %v3469
    %v4132 = vpop.f32.mrf.mxu0
    %v4133 = vadd.f32 0.0, %v4132
    %v4134 = vpop.f32.mrf.mxu0
    %v4135 = vadd.f32 0.0, %v4134
    %4136 = vmatmul.bf16.gmra.mxu0 %v3472
    %v4137 = vpop.f32.mrf.mxu0
    %v4138 = vadd.f32 0.0, %v4137
    %v4139 = vpop.f32.mrf.mxu0
    %v4140 = vadd.f32 0.0, %v4139
    %4141 = vmatmul.bf16.gmra.mxu0 %v3475
    %v4142 = vpop.f32.mrf.mxu0
    %v4143 = vadd.f32 0.0, %v4142
    %v4144 = vpop.f32.mrf.mxu0
    %v4145 = vadd.f32 0.0, %v4144
    %4146 = vmatmul.bf16.gmra.mxu0 %v3478
    %v4147 = vpop.f32.mrf.mxu0
    %v4148 = vadd.f32 0.0, %v4147
    %v4149 = vpop.f32.mrf.mxu0
    %v4150 = vadd.f32 0.0, %v4149
    %4151 = vmatmul.bf16.gmra.mxu0 %v3481
    %v4152 = vpop.f32.mrf.mxu0
    %v4153 = vadd.f32 0.0, %v4152
    %v4154 = vpop.f32.mrf.mxu0
    %v4155 = vadd.f32 0.0, %v4154
    %4156 = vmatmul.bf16.gmra.mxu0 %v3484
    %v4157 = vpop.f32.mrf.mxu0
    %v4158 = vadd.f32 0.0, %v4157
    %v4159 = vpop.f32.mrf.mxu0
    %v4160 = vadd.f32 0.0, %v4159
    %4161 = vmatmul.bf16.gmra.mxu0 %v3487
    %v4162 = vpop.f32.mrf.mxu0
    %v4163 = vadd.f32 0.0, %v4162
    %v4164 = vpop.f32.mrf.mxu0
    %v4165 = vadd.f32 0.0, %v4164
    %4166 = vmatmul.bf16.gmra.mxu0 %v3490
    %v4167 = vpop.f32.mrf.mxu0
    %v4168 = vadd.f32 0.0, %v4167
    %v4169 = vpop.f32.mrf.mxu0
    %v4170 = vadd.f32 0.0, %v4169
    %4171 = vmatmul.bf16.gmra.mxu0 %v3493
    %v4172 = vpop.f32.mrf.mxu0
    %v4173 = vadd.f32 0.0, %v4172
    %v4174 = vpop.f32.mrf.mxu0
    %v4175 = vadd.f32 0.0, %v4174
    %4176 = vdwg.mxu0
    %v4185 = vunpack.c.l.b16 %v242
    %v4186 = vunpack.c.l.b16 %v243
    %v4187 = vunpack.c.l.b16 %v244
    %v4188 = vunpack.c.l.b16 %v245
    %v4189 = vunpack.c.l.b16 %v246
    %v4190 = vunpack.c.l.b16 %v247
    %v4191 = vunpack.c.l.b16 %v248
    %v4192 = vunpack.c.l.b16 %v249
    %v4193 = vpack.c.b16 %v4186, %v4185
    %v4194 = vpack.c.b16 %v4188, %v4187
    %v4195 = vpack.c.b16 %v4190, %v4189
    %v4196 = vpack.c.b16 %v4192, %v4191
    %4201 = vmatpush.bf16.msra.mxu0 0
    %4202 = vmatpush.bf16.msra.mxu0 0
    %4203 = vmatpush.bf16.msra.mxu0 0
    %4204 = vmatpush.bf16.msra.mxu0 0
    %4205 = vmatpush.bf16.msra.mxu0 %v4196
    %4206 = vmatpush.bf16.msra.mxu0 %v4195
    %4207 = vmatpush.bf16.msra.mxu0 %v4194
    %4208 = vmatpush.bf16.msra.mxu0 %v4193
    %4209 = vmatmul.bf16.gmra.mxu0 %v3304
    %v4210 = vpop.f32.mrf.mxu0
    %v4211 = vadd.f32 0.0, %v4210
    %v4212 = vpop.f32.mrf.mxu0
    %v4213 = vadd.f32 0.0, %v4212
    %4214 = vmatmul.bf16.gmra.mxu0 %v3307
    %v4215 = vpop.f32.mrf.mxu0
    %v4216 = vadd.f32 0.0, %v4215
    %v4217 = vpop.f32.mrf.mxu0
    %v4218 = vadd.f32 0.0, %v4217
    %4219 = vmatmul.bf16.gmra.mxu0 %v3310
    %v4220 = vpop.f32.mrf.mxu0
    %v4221 = vadd.f32 0.0, %v4220
    %v4222 = vpop.f32.mrf.mxu0
    %v4223 = vadd.f32 0.0, %v4222
    %4224 = vmatmul.bf16.gmra.mxu0 %v3313
    %v4225 = vpop.f32.mrf.mxu0
    %v4226 = vadd.f32 0.0, %v4225
    %v4227 = vpop.f32.mrf.mxu0
    %v4228 = vadd.f32 0.0, %v4227
    %4229 = vmatmul.bf16.gmra.mxu0 %v3316
    %v4230 = vpop.f32.mrf.mxu0
    %v4231 = vadd.f32 0.0, %v4230
    %v4232 = vpop.f32.mrf.mxu0
    %v4233 = vadd.f32 0.0, %v4232
    %4234 = vmatmul.bf16.gmra.mxu0 %v3319
    %v4235 = vpop.f32.mrf.mxu0
    %v4236 = vadd.f32 0.0, %v4235
    %v4237 = vpop.f32.mrf.mxu0
    %v4238 = vadd.f32 0.0, %v4237
    %4239 = vmatmul.bf16.gmra.mxu0 %v3322
    %v4240 = vpop.f32.mrf.mxu0
    %v4241 = vadd.f32 0.0, %v4240
    %v4242 = vpop.f32.mrf.mxu0
    %v4243 = vadd.f32 0.0, %v4242
    %4244 = vmatmul.bf16.gmra.mxu0 %v3325
    %v4245 = vpop.f32.mrf.mxu0
    %v4246 = vadd.f32 0.0, %v4245
    %v4247 = vpop.f32.mrf.mxu0
    %v4248 = vadd.f32 0.0, %v4247
    %4249 = vmatmul.bf16.gmra.mxu0 %v3328
    %v4250 = vpop.f32.mrf.mxu0
    %v4251 = vadd.f32 0.0, %v4250
    %v4252 = vpop.f32.mrf.mxu0
    %v4253 = vadd.f32 0.0, %v4252
    %4254 = vmatmul.bf16.gmra.mxu0 %v3331
    %v4255 = vpop.f32.mrf.mxu0
    %v4256 = vadd.f32 0.0, %v4255
    %v4257 = vpop.f32.mrf.mxu0
    %v4258 = vadd.f32 0.0, %v4257
    %4259 = vmatmul.bf16.gmra.mxu0 %v3334
    %v4260 = vpop.f32.mrf.mxu0
    %v4261 = vadd.f32 0.0, %v4260
    %v4262 = vpop.f32.mrf.mxu0
    %v4263 = vadd.f32 0.0, %v4262
    %4264 = vmatmul.bf16.gmra.mxu0 %v3337
    %v4265 = vpop.f32.mrf.mxu0
    %v4266 = vadd.f32 0.0, %v4265
    %v4267 = vpop.f32.mrf.mxu0
    %v4268 = vadd.f32 0.0, %v4267
    %4269 = vmatmul.bf16.gmra.mxu0 %v3340
    %v4270 = vpop.f32.mrf.mxu0
    %v4271 = vadd.f32 0.0, %v4270
    %v4272 = vpop.f32.mrf.mxu0
    %v4273 = vadd.f32 0.0, %v4272
    %4274 = vmatmul.bf16.gmra.mxu0 %v3343
    %v4275 = vpop.f32.mrf.mxu0
    %v4276 = vadd.f32 0.0, %v4275
    %v4277 = vpop.f32.mrf.mxu0
    %v4278 = vadd.f32 0.0, %v4277
    %4279 = vmatmul.bf16.gmra.mxu0 %v3346
    %v4280 = vpop.f32.mrf.mxu0
    %v4281 = vadd.f32 0.0, %v4280
    %v4282 = vpop.f32.mrf.mxu0
    %v4283 = vadd.f32 0.0, %v4282
    %4284 = vmatmul.bf16.gmra.mxu0 %v3349
    %v4285 = vpop.f32.mrf.mxu0
    %v4286 = vadd.f32 0.0, %v4285
    %v4287 = vpop.f32.mrf.mxu0
    %v4288 = vadd.f32 0.0, %v4287
    %4289 = vmatmul.bf16.gmra.mxu0 %v3352
    %v4290 = vpop.f32.mrf.mxu0
    %v4291 = vadd.f32 0.0, %v4290
    %v4292 = vpop.f32.mrf.mxu0
    %v4293 = vadd.f32 0.0, %v4292
    %4294 = vmatmul.bf16.gmra.mxu0 %v3355
    %v4295 = vpop.f32.mrf.mxu0
    %v4296 = vadd.f32 0.0, %v4295
    %v4297 = vpop.f32.mrf.mxu0
    %v4298 = vadd.f32 0.0, %v4297
    %4299 = vmatmul.bf16.gmra.mxu0 %v3358
    %v4300 = vpop.f32.mrf.mxu0
    %v4301 = vadd.f32 0.0, %v4300
    %v4302 = vpop.f32.mrf.mxu0
    %v4303 = vadd.f32 0.0, %v4302
    %4304 = vmatmul.bf16.gmra.mxu0 %v3361
    %v4305 = vpop.f32.mrf.mxu0
    %v4306 = vadd.f32 0.0, %v4305
    %v4307 = vpop.f32.mrf.mxu0
    %v4308 = vadd.f32 0.0, %v4307
    %4309 = vmatmul.bf16.gmra.mxu0 %v3364
    %v4310 = vpop.f32.mrf.mxu0
    %v4311 = vadd.f32 0.0, %v4310
    %v4312 = vpop.f32.mrf.mxu0
    %v4313 = vadd.f32 0.0, %v4312
    %4314 = vmatmul.bf16.gmra.mxu0 %v3367
    %v4315 = vpop.f32.mrf.mxu0
    %v4316 = vadd.f32 0.0, %v4315
    %v4317 = vpop.f32.mrf.mxu0
    %v4318 = vadd.f32 0.0, %v4317
    %4319 = vmatmul.bf16.gmra.mxu0 %v3370
    %v4320 = vpop.f32.mrf.mxu0
    %v4321 = vadd.f32 0.0, %v4320
    %v4322 = vpop.f32.mrf.mxu0
    %v4323 = vadd.f32 0.0, %v4322
    %4324 = vmatmul.bf16.gmra.mxu0 %v3373
    %v4325 = vpop.f32.mrf.mxu0
    %v4326 = vadd.f32 0.0, %v4325
    %v4327 = vpop.f32.mrf.mxu0
    %v4328 = vadd.f32 0.0, %v4327
    %4329 = vmatmul.bf16.gmra.mxu0 %v3376
    %v4330 = vpop.f32.mrf.mxu0
    %v4331 = vadd.f32 0.0, %v4330
    %v4332 = vpop.f32.mrf.mxu0
    %v4333 = vadd.f32 0.0, %v4332
    %4334 = vmatmul.bf16.gmra.mxu0 %v3379
    %v4335 = vpop.f32.mrf.mxu0
    %v4336 = vadd.f32 0.0, %v4335
    %v4337 = vpop.f32.mrf.mxu0
    %v4338 = vadd.f32 0.0, %v4337
    %4339 = vmatmul.bf16.gmra.mxu0 %v3382
    %v4340 = vpop.f32.mrf.mxu0
    %v4341 = vadd.f32 0.0, %v4340
    %v4342 = vpop.f32.mrf.mxu0
    %v4343 = vadd.f32 0.0, %v4342
    %4344 = vmatmul.bf16.gmra.mxu0 %v3385
    %v4345 = vpop.f32.mrf.mxu0
    %v4346 = vadd.f32 0.0, %v4345
    %v4347 = vpop.f32.mrf.mxu0
    %v4348 = vadd.f32 0.0, %v4347
    %4349 = vmatmul.bf16.gmra.mxu0 %v3388
    %v4350 = vpop.f32.mrf.mxu0
    %v4351 = vadd.f32 0.0, %v4350
    %v4352 = vpop.f32.mrf.mxu0
    %v4353 = vadd.f32 0.0, %v4352
    %4354 = vmatmul.bf16.gmra.mxu0 %v3391
    %v4355 = vpop.f32.mrf.mxu0
    %v4356 = vadd.f32 0.0, %v4355
    %v4357 = vpop.f32.mrf.mxu0
    %v4358 = vadd.f32 0.0, %v4357
    %4359 = vmatmul.bf16.gmra.mxu0 %v3394
    %v4360 = vpop.f32.mrf.mxu0
    %v4361 = vadd.f32 0.0, %v4360
    %v4362 = vpop.f32.mrf.mxu0
    %v4363 = vadd.f32 0.0, %v4362
    %4364 = vmatmul.bf16.gmra.mxu0 %v3397
    %v4365 = vpop.f32.mrf.mxu0
    %v4366 = vadd.f32 0.0, %v4365
    %v4367 = vpop.f32.mrf.mxu0
    %v4368 = vadd.f32 0.0, %v4367
    %4369 = vmatmul.bf16.gmra.mxu0 %v3400
    %v4370 = vpop.f32.mrf.mxu0
    %v4371 = vadd.f32 0.0, %v4370
    %v4372 = vpop.f32.mrf.mxu0
    %v4373 = vadd.f32 0.0, %v4372
    %4374 = vmatmul.bf16.gmra.mxu0 %v3403
    %v4375 = vpop.f32.mrf.mxu0
    %v4376 = vadd.f32 0.0, %v4375
    %v4377 = vpop.f32.mrf.mxu0
    %v4378 = vadd.f32 0.0, %v4377
    %4379 = vmatmul.bf16.gmra.mxu0 %v3406
    %v4380 = vpop.f32.mrf.mxu0
    %v4381 = vadd.f32 0.0, %v4380
    %v4382 = vpop.f32.mrf.mxu0
    %v4383 = vadd.f32 0.0, %v4382
    %4384 = vmatmul.bf16.gmra.mxu0 %v3409
    %v4385 = vpop.f32.mrf.mxu0
    %v4386 = vadd.f32 0.0, %v4385
    %v4387 = vpop.f32.mrf.mxu0
    %v4388 = vadd.f32 0.0, %v4387
    %4389 = vmatmul.bf16.gmra.mxu0 %v3412
    %v4390 = vpop.f32.mrf.mxu0
    %v4391 = vadd.f32 0.0, %v4390
    %v4392 = vpop.f32.mrf.mxu0
    %v4393 = vadd.f32 0.0, %v4392
    %4394 = vmatmul.bf16.gmra.mxu0 %v3415
    %v4395 = vpop.f32.mrf.mxu0
    %v4396 = vadd.f32 0.0, %v4395
    %v4397 = vpop.f32.mrf.mxu0
    %v4398 = vadd.f32 0.0, %v4397
    %4399 = vmatmul.bf16.gmra.mxu0 %v3418
    %v4400 = vpop.f32.mrf.mxu0
    %v4401 = vadd.f32 0.0, %v4400
    %v4402 = vpop.f32.mrf.mxu0
    %v4403 = vadd.f32 0.0, %v4402
    %4404 = vmatmul.bf16.gmra.mxu0 %v3421
    %v4405 = vpop.f32.mrf.mxu0
    %v4406 = vadd.f32 0.0, %v4405
    %v4407 = vpop.f32.mrf.mxu0
    %v4408 = vadd.f32 0.0, %v4407
    %4409 = vmatmul.bf16.gmra.mxu0 %v3424
    %v4410 = vpop.f32.mrf.mxu0
    %v4411 = vadd.f32 0.0, %v4410
    %v4412 = vpop.f32.mrf.mxu0
    %v4413 = vadd.f32 0.0, %v4412
    %4414 = vmatmul.bf16.gmra.mxu0 %v3427
    %v4415 = vpop.f32.mrf.mxu0
    %v4416 = vadd.f32 0.0, %v4415
    %v4417 = vpop.f32.mrf.mxu0
    %v4418 = vadd.f32 0.0, %v4417
    %4419 = vmatmul.bf16.gmra.mxu0 %v3430
    %v4420 = vpop.f32.mrf.mxu0
    %v4421 = vadd.f32 0.0, %v4420
    %v4422 = vpop.f32.mrf.mxu0
    %v4423 = vadd.f32 0.0, %v4422
    %4424 = vmatmul.bf16.gmra.mxu0 %v3433
    %v4425 = vpop.f32.mrf.mxu0
    %v4426 = vadd.f32 0.0, %v4425
    %v4427 = vpop.f32.mrf.mxu0
    %v4428 = vadd.f32 0.0, %v4427
    %4429 = vmatmul.bf16.gmra.mxu0 %v3436
    %v4430 = vpop.f32.mrf.mxu0
    %v4431 = vadd.f32 0.0, %v4430
    %v4432 = vpop.f32.mrf.mxu0
    %v4433 = vadd.f32 0.0, %v4432
    %4434 = vmatmul.bf16.gmra.mxu0 %v3439
    %v4435 = vpop.f32.mrf.mxu0
    %v4436 = vadd.f32 0.0, %v4435
    %v4437 = vpop.f32.mrf.mxu0
    %v4438 = vadd.f32 0.0, %v4437
    %4439 = vmatmul.bf16.gmra.mxu0 %v3442
    %v4440 = vpop.f32.mrf.mxu0
    %v4441 = vadd.f32 0.0, %v4440
    %v4442 = vpop.f32.mrf.mxu0
    %v4443 = vadd.f32 0.0, %v4442
    %4444 = vmatmul.bf16.gmra.mxu0 %v3445
    %v4445 = vpop.f32.mrf.mxu0
    %v4446 = vadd.f32 0.0, %v4445
    %v4447 = vpop.f32.mrf.mxu0
    %v4448 = vadd.f32 0.0, %v4447
    %4449 = vmatmul.bf16.gmra.mxu0 %v3448
    %v4450 = vpop.f32.mrf.mxu0
    %v4451 = vadd.f32 0.0, %v4450
    %v4452 = vpop.f32.mrf.mxu0
    %v4453 = vadd.f32 0.0, %v4452
    %4454 = vmatmul.bf16.gmra.mxu0 %v3451
    %v4455 = vpop.f32.mrf.mxu0
    %v4456 = vadd.f32 0.0, %v4455
    %v4457 = vpop.f32.mrf.mxu0
    %v4458 = vadd.f32 0.0, %v4457
    %4459 = vmatmul.bf16.gmra.mxu0 %v3454
    %v4460 = vpop.f32.mrf.mxu0
    %v4461 = vadd.f32 0.0, %v4460
    %v4462 = vpop.f32.mrf.mxu0
    %v4463 = vadd.f32 0.0, %v4462
    %4464 = vmatmul.bf16.gmra.mxu0 %v3457
    %v4465 = vpop.f32.mrf.mxu0
    %v4466 = vadd.f32 0.0, %v4465
    %v4467 = vpop.f32.mrf.mxu0
    %v4468 = vadd.f32 0.0, %v4467
    %4469 = vmatmul.bf16.gmra.mxu0 %v3460
    %v4470 = vpop.f32.mrf.mxu0
    %v4471 = vadd.f32 0.0, %v4470
    %v4472 = vpop.f32.mrf.mxu0
    %v4473 = vadd.f32 0.0, %v4472
    %4474 = vmatmul.bf16.gmra.mxu0 %v3463
    %v4475 = vpop.f32.mrf.mxu0
    %v4476 = vadd.f32 0.0, %v4475
    %v4477 = vpop.f32.mrf.mxu0
    %v4478 = vadd.f32 0.0, %v4477
    %4479 = vmatmul.bf16.gmra.mxu0 %v3466
    %v4480 = vpop.f32.mrf.mxu0
    %v4481 = vadd.f32 0.0, %v4480
    %v4482 = vpop.f32.mrf.mxu0
    %v4483 = vadd.f32 0.0, %v4482
    %4484 = vmatmul.bf16.gmra.mxu0 %v3469
    %v4485 = vpop.f32.mrf.mxu0
    %v4486 = vadd.f32 0.0, %v4485
    %v4487 = vpop.f32.mrf.mxu0
    %v4488 = vadd.f32 0.0, %v4487
    %4489 = vmatmul.bf16.gmra.mxu0 %v3472
    %v4490 = vpop.f32.mrf.mxu0
    %v4491 = vadd.f32 0.0, %v4490
    %v4492 = vpop.f32.mrf.mxu0
    %v4493 = vadd.f32 0.0, %v4492
    %4494 = vmatmul.bf16.gmra.mxu0 %v3475
    %v4495 = vpop.f32.mrf.mxu0
    %v4496 = vadd.f32 0.0, %v4495
    %v4497 = vpop.f32.mrf.mxu0
    %v4498 = vadd.f32 0.0, %v4497
    %4499 = vmatmul.bf16.gmra.mxu0 %v3478
    %v4500 = vpop.f32.mrf.mxu0
    %v4501 = vadd.f32 0.0, %v4500
    %v4502 = vpop.f32.mrf.mxu0
    %v4503 = vadd.f32 0.0, %v4502
    %4504 = vmatmul.bf16.gmra.mxu0 %v3481
    %v4505 = vpop.f32.mrf.mxu0
    %v4506 = vadd.f32 0.0, %v4505
    %v4507 = vpop.f32.mrf.mxu0
    %v4508 = vadd.f32 0.0, %v4507
    %4509 = vmatmul.bf16.gmra.mxu0 %v3484
    %v4510 = vpop.f32.mrf.mxu0
    %v4511 = vadd.f32 0.0, %v4510
    %v4512 = vpop.f32.mrf.mxu0
    %v4513 = vadd.f32 0.0, %v4512
    %4514 = vmatmul.bf16.gmra.mxu0 %v3487
    %v4515 = vpop.f32.mrf.mxu0
    %v4516 = vadd.f32 0.0, %v4515
    %v4517 = vpop.f32.mrf.mxu0
    %v4518 = vadd.f32 0.0, %v4517
    %4519 = vmatmul.bf16.gmra.mxu0 %v3490
    %v4520 = vpop.f32.mrf.mxu0
    %v4521 = vadd.f32 0.0, %v4520
    %v4522 = vpop.f32.mrf.mxu0
    %v4523 = vadd.f32 0.0, %v4522
    %4524 = vmatmul.bf16.gmra.mxu0 %v3493
    %v4525 = vpop.f32.mrf.mxu0
    %v4526 = vadd.f32 0.0, %v4525
    %v4527 = vpop.f32.mrf.mxu0
    %v4528 = vadd.f32 0.0, %v4527
    %4529 = vdwg.mxu0
    %v4658 = vrot.slane %v3858, 1
    %v4659 = vrot.slane %v3860, 1
    %v4660 = vsel %vm1284, %v4658, %v4659
    %v4661 = vrot.slane %v3863, 1
    %v4662 = vsel %vm1284, %v4659, %v4661
    %v4663 = vrot.slane %v3865, 1
    %v4664 = vsel %vm1284, %v4661, %v4663
    %v4665 = vrot.slane %v3868, 1
    %v4666 = vsel %vm1284, %v4663, %v4665
    %v4667 = vrot.slane %v3870, 1
    %v4668 = vsel %vm1284, %v4665, %v4667
    %v4669 = vrot.slane %v3873, 1
    %v4670 = vsel %vm1284, %v4667, %v4669
    %v4671 = vrot.slane %v3875, 1
    %v4672 = vsel %vm1284, %v4669, %v4671
    %v4673 = vrot.slane %v3878, 1
    %v4674 = vsel %vm1284, %v4671, %v4673
    %v4675 = vrot.slane %v3880, 1
    %v4676 = vsel %vm1284, %v4673, %v4675
    %v4677 = vrot.slane %v3883, 1
    %v4678 = vsel %vm1284, %v4675, %v4677
    %v4679 = vrot.slane %v3885, 1
    %v4680 = vsel %vm1284, %v4677, %v4679
    %v4681 = vrot.slane %v3888, 1
    %v4682 = vsel %vm1284, %v4679, %v4681
    %v4683 = vrot.slane %v3890, 1
    %v4684 = vsel %vm1284, %v4681, %v4683
    %v4685 = vrot.slane %v3893, 1
    %v4686 = vsel %vm1284, %v4683, %v4685
    %v4687 = vrot.slane %v3895, 1
    %v4688 = vsel %vm1284, %v4685, %v4687
    %v4689 = vrot.slane %v3898, 1
    %v4690 = vrot.slane %v3900, 1
    %v4691 = vsel %vm1284, %v4689, %v4690
    %v4692 = vrot.slane %v3903, 1
    %v4693 = vsel %vm1284, %v4690, %v4692
    %v4694 = vrot.slane %v3905, 1
    %v4695 = vsel %vm1284, %v4692, %v4694
    %v4696 = vrot.slane %v3908, 1
    %v4697 = vsel %vm1284, %v4694, %v4696
    %v4698 = vrot.slane %v3910, 1
    %v4699 = vsel %vm1284, %v4696, %v4698
    %v4700 = vrot.slane %v3913, 1
    %v4701 = vsel %vm1284, %v4698, %v4700
    %v4702 = vrot.slane %v3915, 1
    %v4703 = vsel %vm1284, %v4700, %v4702
    %v4704 = vrot.slane %v3918, 1
    %v4705 = vsel %vm1284, %v4702, %v4704
    %v4706 = vrot.slane %v3920, 1
    %v4707 = vsel %vm1284, %v4704, %v4706
    %v4708 = vrot.slane %v3923, 1
    %v4709 = vsel %vm1284, %v4706, %v4708
    %v4710 = vrot.slane %v3925, 1
    %v4711 = vsel %vm1284, %v4708, %v4710
    %v4712 = vrot.slane %v3928, 1
    %v4713 = vsel %vm1284, %v4710, %v4712
    %v4714 = vrot.slane %v3930, 1
    %v4715 = vsel %vm1284, %v4712, %v4714
    %v4716 = vrot.slane %v3933, 1
    %v4717 = vsel %vm1284, %v4714, %v4716
    %v4718 = vrot.slane %v3935, 1
    %v4719 = vsel %vm1284, %v4716, %v4718
    %v4720 = vrot.slane %v3938, 1
    %v4721 = vrot.slane %v3940, 1
    %v4722 = vsel %vm1284, %v4720, %v4721
    %v4723 = vrot.slane %v3943, 1
    %v4724 = vsel %vm1284, %v4721, %v4723
    %v4725 = vrot.slane %v3945, 1
    %v4726 = vsel %vm1284, %v4723, %v4725
    %v4727 = vrot.slane %v3948, 1
    %v4728 = vsel %vm1284, %v4725, %v4727
    %v4729 = vrot.slane %v3950, 1
    %v4730 = vsel %vm1284, %v4727, %v4729
    %v4731 = vrot.slane %v3953, 1
    %v4732 = vsel %vm1284, %v4729, %v4731
    %v4733 = vrot.slane %v3955, 1
    %v4734 = vsel %vm1284, %v4731, %v4733
    %v4735 = vrot.slane %v3958, 1
    %v4736 = vsel %vm1284, %v4733, %v4735
    %v4737 = vrot.slane %v3960, 1
    %v4738 = vsel %vm1284, %v4735, %v4737
    %v4739 = vrot.slane %v3963, 1
    %v4740 = vsel %vm1284, %v4737, %v4739
    %v4741 = vrot.slane %v3965, 1
    %v4742 = vsel %vm1284, %v4739, %v4741
    %v4743 = vrot.slane %v3968, 1
    %v4744 = vsel %vm1284, %v4741, %v4743
    %v4745 = vrot.slane %v3970, 1
    %v4746 = vsel %vm1284, %v4743, %v4745
    %v4747 = vrot.slane %v3973, 1
    %v4748 = vsel %vm1284, %v4745, %v4747
    %v4749 = vrot.slane %v3975, 1
    %v4750 = vsel %vm1284, %v4747, %v4749
    %v4751 = vrot.slane %v3978, 1
    %v4752 = vrot.slane %v3980, 1
    %v4753 = vsel %vm1284, %v4751, %v4752
    %v4754 = vrot.slane %v3983, 1
    %v4755 = vsel %vm1284, %v4752, %v4754
    %v4756 = vrot.slane %v3985, 1
    %v4757 = vsel %vm1284, %v4754, %v4756
    %v4758 = vrot.slane %v3988, 1
    %v4759 = vsel %vm1284, %v4756, %v4758
    %v4760 = vrot.slane %v3990, 1
    %v4761 = vsel %vm1284, %v4758, %v4760
    %v4762 = vrot.slane %v3993, 1
    %v4763 = vsel %vm1284, %v4760, %v4762
    %v4764 = vrot.slane %v3995, 1
    %v4765 = vsel %vm1284, %v4762, %v4764
    %v4766 = vrot.slane %v3998, 1
    %v4767 = vsel %vm1284, %v4764, %v4766
    %v4768 = vrot.slane %v4000, 1
    %v4769 = vsel %vm1284, %v4766, %v4768
    %v4770 = vrot.slane %v4003, 1
    %v4771 = vsel %vm1284, %v4768, %v4770
    %v4772 = vrot.slane %v4005, 1
    %v4773 = vsel %vm1284, %v4770, %v4772
    %v4774 = vrot.slane %v4008, 1
    %v4775 = vsel %vm1284, %v4772, %v4774
    %v4776 = vrot.slane %v4010, 1
    %v4777 = vsel %vm1284, %v4774, %v4776
    %v4778 = vrot.slane %v4013, 1
    %v4779 = vsel %vm1284, %v4776, %v4778
    %v4780 = vrot.slane %v4015, 1
    %v4781 = vsel %vm1284, %v4778, %v4780
    %v4782 = vrot.slane %v4018, 1
    %v4783 = vrot.slane %v4020, 1
    %v4784 = vsel %vm1284, %v4782, %v4783
    %v4785 = vrot.slane %v4023, 1
    %v4786 = vsel %vm1284, %v4783, %v4785
    %v4787 = vrot.slane %v4025, 1
    %v4788 = vsel %vm1284, %v4785, %v4787
    %v4789 = vrot.slane %v4028, 1
    %v4790 = vsel %vm1284, %v4787, %v4789
    %v4791 = vrot.slane %v4030, 1
    %v4792 = vsel %vm1284, %v4789, %v4791
    %v4793 = vrot.slane %v4033, 1
    %v4794 = vsel %vm1284, %v4791, %v4793
    %v4795 = vrot.slane %v4035, 1
    %v4796 = vsel %vm1284, %v4793, %v4795
    %v4797 = vrot.slane %v4038, 1
    %v4798 = vsel %vm1284, %v4795, %v4797
    %v4799 = vrot.slane %v4040, 1
    %v4800 = vsel %vm1284, %v4797, %v4799
    %v4801 = vrot.slane %v4043, 1
    %v4802 = vsel %vm1284, %v4799, %v4801
    %v4803 = vrot.slane %v4045, 1
    %v4804 = vsel %vm1284, %v4801, %v4803
    %v4805 = vrot.slane %v4048, 1
    %v4806 = vsel %vm1284, %v4803, %v4805
    %v4807 = vrot.slane %v4050, 1
    %v4808 = vsel %vm1284, %v4805, %v4807
    %v4809 = vrot.slane %v4053, 1
    %v4810 = vsel %vm1284, %v4807, %v4809
    %v4811 = vrot.slane %v4055, 1
    %v4812 = vsel %vm1284, %v4809, %v4811
    %v4813 = vrot.slane %v4058, 1
    %v4814 = vrot.slane %v4060, 1
    %v4815 = vsel %vm1284, %v4813, %v4814
    %v4816 = vrot.slane %v4063, 1
    %v4817 = vsel %vm1284, %v4814, %v4816
    %v4818 = vrot.slane %v4065, 1
    %v4819 = vsel %vm1284, %v4816, %v4818
    %v4820 = vrot.slane %v4068, 1
    %v4821 = vsel %vm1284, %v4818, %v4820
    %v4822 = vrot.slane %v4070, 1
    %v4823 = vsel %vm1284, %v4820, %v4822
    %v4824 = vrot.slane %v4073, 1
    %v4825 = vsel %vm1284, %v4822, %v4824
    %v4826 = vrot.slane %v4075, 1
    %v4827 = vsel %vm1284, %v4824, %v4826
    %v4828 = vrot.slane %v4078, 1
    %v4829 = vsel %vm1284, %v4826, %v4828
    %v4830 = vrot.slane %v4080, 1
    %v4831 = vsel %vm1284, %v4828, %v4830
    %v4832 = vrot.slane %v4083, 1
    %v4833 = vsel %vm1284, %v4830, %v4832
    %v4834 = vrot.slane %v4085, 1
    %v4835 = vsel %vm1284, %v4832, %v4834
    %v4836 = vrot.slane %v4088, 1
    %v4837 = vsel %vm1284, %v4834, %v4836
    %v4838 = vrot.slane %v4090, 1
    %v4839 = vsel %vm1284, %v4836, %v4838
    %v4840 = vrot.slane %v4093, 1
    %v4841 = vsel %vm1284, %v4838, %v4840
    %v4842 = vrot.slane %v4095, 1
    %v4843 = vsel %vm1284, %v4840, %v4842
    %v4844 = vrot.slane %v4098, 1
    %v4845 = vrot.slane %v4100, 1
    %v4846 = vsel %vm1284, %v4844, %v4845
    %v4847 = vrot.slane %v4103, 1
    %v4848 = vsel %vm1284, %v4845, %v4847
    %v4849 = vrot.slane %v4105, 1
    %v4850 = vsel %vm1284, %v4847, %v4849
    %v4851 = vrot.slane %v4108, 1
    %v4852 = vsel %vm1284, %v4849, %v4851
    %v4853 = vrot.slane %v4110, 1
    %v4854 = vsel %vm1284, %v4851, %v4853
    %v4855 = vrot.slane %v4113, 1
    %v4856 = vsel %vm1284, %v4853, %v4855
    %v4857 = vrot.slane %v4115, 1
    %v4858 = vsel %vm1284, %v4855, %v4857
    %v4859 = vrot.slane %v4118, 1
    %v4860 = vsel %vm1284, %v4857, %v4859
    %v4861 = vrot.slane %v4120, 1
    %v4862 = vsel %vm1284, %v4859, %v4861
    %v4863 = vrot.slane %v4123, 1
    %v4864 = vsel %vm1284, %v4861, %v4863
    %v4865 = vrot.slane %v4125, 1
    %v4866 = vsel %vm1284, %v4863, %v4865
    %v4867 = vrot.slane %v4128, 1
    %v4868 = vsel %vm1284, %v4865, %v4867
    %v4869 = vrot.slane %v4130, 1
    %v4870 = vsel %vm1284, %v4867, %v4869
    %v4871 = vrot.slane %v4133, 1
    %v4872 = vsel %vm1284, %v4869, %v4871
    %v4873 = vrot.slane %v4135, 1
    %v4874 = vsel %vm1284, %v4871, %v4873
    %v4875 = vrot.slane %v4138, 1
    %v4876 = vrot.slane %v4140, 1
    %v4877 = vsel %vm1284, %v4875, %v4876
    %v4878 = vrot.slane %v4143, 1
    %v4879 = vsel %vm1284, %v4876, %v4878
    %v4880 = vrot.slane %v4145, 1
    %v4881 = vsel %vm1284, %v4878, %v4880
    %v4882 = vrot.slane %v4148, 1
    %v4883 = vsel %vm1284, %v4880, %v4882
    %v4884 = vrot.slane %v4150, 1
    %v4885 = vsel %vm1284, %v4882, %v4884
    %v4886 = vrot.slane %v4153, 1
    %v4887 = vsel %vm1284, %v4884, %v4886
    %v4888 = vrot.slane %v4155, 1
    %v4889 = vsel %vm1284, %v4886, %v4888
    %v4890 = vrot.slane %v4158, 1
    %v4891 = vsel %vm1284, %v4888, %v4890
    %v4892 = vrot.slane %v4160, 1
    %v4893 = vsel %vm1284, %v4890, %v4892
    %v4894 = vrot.slane %v4163, 1
    %v4895 = vsel %vm1284, %v4892, %v4894
    %v4896 = vrot.slane %v4165, 1
    %v4897 = vsel %vm1284, %v4894, %v4896
    %v4898 = vrot.slane %v4168, 1
    %v4899 = vsel %vm1284, %v4896, %v4898
    %v4900 = vrot.slane %v4170, 1
    %v4901 = vsel %vm1284, %v4898, %v4900
    %v4902 = vrot.slane %v4173, 1
    %v4903 = vsel %vm1284, %v4900, %v4902
    %v4904 = vrot.slane %v4175, 1
    %v4905 = vsel %vm1284, %v4902, %v4904
    %v5034 = vadd.f32 %v3505, %v4660
    %v5035 = vadd.f32 %v3507, %v4662
    %v5036 = vadd.f32 %v3510, %v4664
    %v5037 = vadd.f32 %v3512, %v4666
    %v5038 = vadd.f32 %v3515, %v4668
    %v5039 = vadd.f32 %v3517, %v4670
    %v5040 = vadd.f32 %v3520, %v4672
    %v5041 = vadd.f32 %v3522, %v4674
    %v5042 = vadd.f32 %v3525, %v4676
    %v5043 = vadd.f32 %v3527, %v4678
    %v5044 = vadd.f32 %v3530, %v4680
    %v5045 = vadd.f32 %v3532, %v4682
    %v5046 = vadd.f32 %v3535, %v4684
    %v5047 = vadd.f32 %v3537, %v4686
    %v5048 = vadd.f32 %v3540, %v4688
    %v5049 = vadd.f32 %v3542, %v4687
    %v5050 = vadd.f32 %v3545, %v4691
    %v5051 = vadd.f32 %v3547, %v4693
    %v5052 = vadd.f32 %v3550, %v4695
    %v5053 = vadd.f32 %v3552, %v4697
    %v5054 = vadd.f32 %v3555, %v4699
    %v5055 = vadd.f32 %v3557, %v4701
    %v5056 = vadd.f32 %v3560, %v4703
    %v5057 = vadd.f32 %v3562, %v4705
    %v5058 = vadd.f32 %v3565, %v4707
    %v5059 = vadd.f32 %v3567, %v4709
    %v5060 = vadd.f32 %v3570, %v4711
    %v5061 = vadd.f32 %v3572, %v4713
    %v5062 = vadd.f32 %v3575, %v4715
    %v5063 = vadd.f32 %v3577, %v4717
    %v5064 = vadd.f32 %v3580, %v4719
    %v5065 = vadd.f32 %v3582, %v4718
    %v5066 = vadd.f32 %v3585, %v4722
    %v5067 = vadd.f32 %v3587, %v4724
    %v5068 = vadd.f32 %v3590, %v4726
    %v5069 = vadd.f32 %v3592, %v4728
    %v5070 = vadd.f32 %v3595, %v4730
    %v5071 = vadd.f32 %v3597, %v4732
    %v5072 = vadd.f32 %v3600, %v4734
    %v5073 = vadd.f32 %v3602, %v4736
    %v5074 = vadd.f32 %v3605, %v4738
    %v5075 = vadd.f32 %v3607, %v4740
    %v5076 = vadd.f32 %v3610, %v4742
    %v5077 = vadd.f32 %v3612, %v4744
    %v5078 = vadd.f32 %v3615, %v4746
    %v5079 = vadd.f32 %v3617, %v4748
    %v5080 = vadd.f32 %v3620, %v4750
    %v5081 = vadd.f32 %v3622, %v4749
    %v5082 = vadd.f32 %v3625, %v4753
    %v5083 = vadd.f32 %v3627, %v4755
    %v5084 = vadd.f32 %v3630, %v4757
    %v5085 = vadd.f32 %v3632, %v4759
    %v5086 = vadd.f32 %v3635, %v4761
    %v5087 = vadd.f32 %v3637, %v4763
    %v5088 = vadd.f32 %v3640, %v4765
    %v5089 = vadd.f32 %v3642, %v4767
    %v5090 = vadd.f32 %v3645, %v4769
    %v5091 = vadd.f32 %v3647, %v4771
    %v5092 = vadd.f32 %v3650, %v4773
    %v5093 = vadd.f32 %v3652, %v4775
    %v5094 = vadd.f32 %v3655, %v4777
    %v5095 = vadd.f32 %v3657, %v4779
    %v5096 = vadd.f32 %v3660, %v4781
    %v5097 = vadd.f32 %v3662, %v4780
    %v5098 = vadd.f32 %v3665, %v4784
    %v5099 = vadd.f32 %v3667, %v4786
    %v5100 = vadd.f32 %v3670, %v4788
    %v5101 = vadd.f32 %v3672, %v4790
    %v5102 = vadd.f32 %v3675, %v4792
    %v5103 = vadd.f32 %v3677, %v4794
    %v5104 = vadd.f32 %v3680, %v4796
    %v5105 = vadd.f32 %v3682, %v4798
    %v5106 = vadd.f32 %v3685, %v4800
    %v5107 = vadd.f32 %v3687, %v4802
    %v5108 = vadd.f32 %v3690, %v4804
    %v5109 = vadd.f32 %v3692, %v4806
    %v5110 = vadd.f32 %v3695, %v4808
    %v5111 = vadd.f32 %v3697, %v4810
    %v5112 = vadd.f32 %v3700, %v4812
    %v5113 = vadd.f32 %v3702, %v4811
    %v5114 = vadd.f32 %v3705, %v4815
    %v5115 = vadd.f32 %v3707, %v4817
    %v5116 = vadd.f32 %v3710, %v4819
    %v5117 = vadd.f32 %v3712, %v4821
    %v5118 = vadd.f32 %v3715, %v4823
    %v5119 = vadd.f32 %v3717, %v4825
    %v5120 = vadd.f32 %v3720, %v4827
    %v5121 = vadd.f32 %v3722, %v4829
    %v5122 = vadd.f32 %v3725, %v4831
    %v5123 = vadd.f32 %v3727, %v4833
    %v5124 = vadd.f32 %v3730, %v4835
    %v5125 = vadd.f32 %v3732, %v4837
    %v5126 = vadd.f32 %v3735, %v4839
    %v5127 = vadd.f32 %v3737, %v4841
    %v5128 = vadd.f32 %v3740, %v4843
    %v5129 = vadd.f32 %v3742, %v4842
    %v5130 = vadd.f32 %v3745, %v4846
    %v5131 = vadd.f32 %v3747, %v4848
    %v5132 = vadd.f32 %v3750, %v4850
    %v5133 = vadd.f32 %v3752, %v4852
    %v5134 = vadd.f32 %v3755, %v4854
    %v5135 = vadd.f32 %v3757, %v4856
    %v5136 = vadd.f32 %v3760, %v4858
    %v5137 = vadd.f32 %v3762, %v4860
    %v5138 = vadd.f32 %v3765, %v4862
    %v5139 = vadd.f32 %v3767, %v4864
    %v5140 = vadd.f32 %v3770, %v4866
    %v5141 = vadd.f32 %v3772, %v4868
    %v5142 = vadd.f32 %v3775, %v4870
    %v5143 = vadd.f32 %v3777, %v4872
    %v5144 = vadd.f32 %v3780, %v4874
    %v5145 = vadd.f32 %v3782, %v4873
    %v5146 = vadd.f32 %v3785, %v4877
    %v5147 = vadd.f32 %v3787, %v4879
    %v5148 = vadd.f32 %v3790, %v4881
    %v5149 = vadd.f32 %v3792, %v4883
    %v5150 = vadd.f32 %v3795, %v4885
    %v5151 = vadd.f32 %v3797, %v4887
    %v5152 = vadd.f32 %v3800, %v4889
    %v5153 = vadd.f32 %v3802, %v4891
    %v5154 = vadd.f32 %v3805, %v4893
    %v5155 = vadd.f32 %v3807, %v4895
    %v5156 = vadd.f32 %v3810, %v4897
    %v5157 = vadd.f32 %v3812, %v4899
    %v5158 = vadd.f32 %v3815, %v4901
    %v5159 = vadd.f32 %v3817, %v4903
    %v5160 = vadd.f32 %v3820, %v4905
    %v5161 = vadd.f32 %v3822, %v4904
    %v5290 = vrot.slane %v4211, 2
    %v5291 = vrot.slane %v4213, 2
    %v5292 = vsel %vm2057, %v5290, %v5291
    %v5293 = vrot.slane %v4216, 2
    %v5294 = vsel %vm2057, %v5291, %v5293
    %v5295 = vrot.slane %v4218, 2
    %v5296 = vsel %vm2057, %v5293, %v5295
    %v5297 = vrot.slane %v4221, 2
    %v5298 = vsel %vm2057, %v5295, %v5297
    %v5299 = vrot.slane %v4223, 2
    %v5300 = vsel %vm2057, %v5297, %v5299
    %v5301 = vrot.slane %v4226, 2
    %v5302 = vsel %vm2057, %v5299, %v5301
    %v5303 = vrot.slane %v4228, 2
    %v5304 = vsel %vm2057, %v5301, %v5303
    %v5305 = vrot.slane %v4231, 2
    %v5306 = vsel %vm2057, %v5303, %v5305
    %v5307 = vrot.slane %v4233, 2
    %v5308 = vsel %vm2057, %v5305, %v5307
    %v5309 = vrot.slane %v4236, 2
    %v5310 = vsel %vm2057, %v5307, %v5309
    %v5311 = vrot.slane %v4238, 2
    %v5312 = vsel %vm2057, %v5309, %v5311
    %v5313 = vrot.slane %v4241, 2
    %v5314 = vsel %vm2057, %v5311, %v5313
    %v5315 = vrot.slane %v4243, 2
    %v5316 = vsel %vm2057, %v5313, %v5315
    %v5317 = vrot.slane %v4246, 2
    %v5318 = vsel %vm2057, %v5315, %v5317
    %v5319 = vrot.slane %v4248, 2
    %v5320 = vsel %vm2057, %v5317, %v5319
    %v5321 = vrot.slane %v4251, 2
    %v5322 = vrot.slane %v4253, 2
    %v5323 = vsel %vm2057, %v5321, %v5322
    %v5324 = vrot.slane %v4256, 2
    %v5325 = vsel %vm2057, %v5322, %v5324
    %v5326 = vrot.slane %v4258, 2
    %v5327 = vsel %vm2057, %v5324, %v5326
    %v5328 = vrot.slane %v4261, 2
    %v5329 = vsel %vm2057, %v5326, %v5328
    %v5330 = vrot.slane %v4263, 2
    %v5331 = vsel %vm2057, %v5328, %v5330
    %v5332 = vrot.slane %v4266, 2
    %v5333 = vsel %vm2057, %v5330, %v5332
    %v5334 = vrot.slane %v4268, 2
    %v5335 = vsel %vm2057, %v5332, %v5334
    %v5336 = vrot.slane %v4271, 2
    %v5337 = vsel %vm2057, %v5334, %v5336
    %v5338 = vrot.slane %v4273, 2
    %v5339 = vsel %vm2057, %v5336, %v5338
    %v5340 = vrot.slane %v4276, 2
    %v5341 = vsel %vm2057, %v5338, %v5340
    %v5342 = vrot.slane %v4278, 2
    %v5343 = vsel %vm2057, %v5340, %v5342
    %v5344 = vrot.slane %v4281, 2
    %v5345 = vsel %vm2057, %v5342, %v5344
    %v5346 = vrot.slane %v4283, 2
    %v5347 = vsel %vm2057, %v5344, %v5346
    %v5348 = vrot.slane %v4286, 2
    %v5349 = vsel %vm2057, %v5346, %v5348
    %v5350 = vrot.slane %v4288, 2
    %v5351 = vsel %vm2057, %v5348, %v5350
    %v5352 = vrot.slane %v4291, 2
    %v5353 = vrot.slane %v4293, 2
    %v5354 = vsel %vm2057, %v5352, %v5353
    %v5355 = vrot.slane %v4296, 2
    %v5356 = vsel %vm2057, %v5353, %v5355
    %v5357 = vrot.slane %v4298, 2
    %v5358 = vsel %vm2057, %v5355, %v5357
    %v5359 = vrot.slane %v4301, 2
    %v5360 = vsel %vm2057, %v5357, %v5359
    %v5361 = vrot.slane %v4303, 2
    %v5362 = vsel %vm2057, %v5359, %v5361
    %v5363 = vrot.slane %v4306, 2
    %v5364 = vsel %vm2057, %v5361, %v5363
    %v5365 = vrot.slane %v4308, 2
    %v5366 = vsel %vm2057, %v5363, %v5365
    %v5367 = vrot.slane %v4311, 2
    %v5368 = vsel %vm2057, %v5365, %v5367
    %v5369 = vrot.slane %v4313, 2
    %v5370 = vsel %vm2057, %v5367, %v5369
    %v5371 = vrot.slane %v4316, 2
    %v5372 = vsel %vm2057, %v5369, %v5371
    %v5373 = vrot.slane %v4318, 2
    %v5374 = vsel %vm2057, %v5371, %v5373
    %v5375 = vrot.slane %v4321, 2
    %v5376 = vsel %vm2057, %v5373, %v5375
    %v5377 = vrot.slane %v4323, 2
    %v5378 = vsel %vm2057, %v5375, %v5377
    %v5379 = vrot.slane %v4326, 2
    %v5380 = vsel %vm2057, %v5377, %v5379
    %v5381 = vrot.slane %v4328, 2
    %v5382 = vsel %vm2057, %v5379, %v5381
    %v5383 = vrot.slane %v4331, 2
    %v5384 = vrot.slane %v4333, 2
    %v5385 = vsel %vm2057, %v5383, %v5384
    %v5386 = vrot.slane %v4336, 2
    %v5387 = vsel %vm2057, %v5384, %v5386
    %v5388 = vrot.slane %v4338, 2
    %v5389 = vsel %vm2057, %v5386, %v5388
    %v5390 = vrot.slane %v4341, 2
    %v5391 = vsel %vm2057, %v5388, %v5390
    %v5392 = vrot.slane %v4343, 2
    %v5393 = vsel %vm2057, %v5390, %v5392
    %v5394 = vrot.slane %v4346, 2
    %v5395 = vsel %vm2057, %v5392, %v5394
    %v5396 = vrot.slane %v4348, 2
    %v5397 = vsel %vm2057, %v5394, %v5396
    %v5398 = vrot.slane %v4351, 2
    %v5399 = vsel %vm2057, %v5396, %v5398
    %v5400 = vrot.slane %v4353, 2
    %v5401 = vsel %vm2057, %v5398, %v5400
    %v5402 = vrot.slane %v4356, 2
    %v5403 = vsel %vm2057, %v5400, %v5402
    %v5404 = vrot.slane %v4358, 2
    %v5405 = vsel %vm2057, %v5402, %v5404
    %v5406 = vrot.slane %v4361, 2
    %v5407 = vsel %vm2057, %v5404, %v5406
    %v5408 = vrot.slane %v4363, 2
    %v5409 = vsel %vm2057, %v5406, %v5408
    %v5410 = vrot.slane %v4366, 2
    %v5411 = vsel %vm2057, %v5408, %v5410
    %v5412 = vrot.slane %v4368, 2
    %v5413 = vsel %vm2057, %v5410, %v5412
    %v5414 = vrot.slane %v4371, 2
    %v5415 = vrot.slane %v4373, 2
    %v5416 = vsel %vm2057, %v5414, %v5415
    %v5417 = vrot.slane %v4376, 2
    %v5418 = vsel %vm2057, %v5415, %v5417
    %v5419 = vrot.slane %v4378, 2
    %v5420 = vsel %vm2057, %v5417, %v5419
    %v5421 = vrot.slane %v4381, 2
    %v5422 = vsel %vm2057, %v5419, %v5421
    %v5423 = vrot.slane %v4383, 2
    %v5424 = vsel %vm2057, %v5421, %v5423
    %v5425 = vrot.slane %v4386, 2
    %v5426 = vsel %vm2057, %v5423, %v5425
    %v5427 = vrot.slane %v4388, 2
    %v5428 = vsel %vm2057, %v5425, %v5427
    %v5429 = vrot.slane %v4391, 2
    %v5430 = vsel %vm2057, %v5427, %v5429
    %v5431 = vrot.slane %v4393, 2
    %v5432 = vsel %vm2057, %v5429, %v5431
    %v5433 = vrot.slane %v4396, 2
    %v5434 = vsel %vm2057, %v5431, %v5433
    %v5435 = vrot.slane %v4398, 2
    %v5436 = vsel %vm2057, %v5433, %v5435
    %v5437 = vrot.slane %v4401, 2
    %v5438 = vsel %vm2057, %v5435, %v5437
    %v5439 = vrot.slane %v4403, 2
    %v5440 = vsel %vm2057, %v5437, %v5439
    %v5441 = vrot.slane %v4406, 2
    %v5442 = vsel %vm2057, %v5439, %v5441
    %v5443 = vrot.slane %v4408, 2
    %v5444 = vsel %vm2057, %v5441, %v5443
    %v5445 = vrot.slane %v4411, 2
    %v5446 = vrot.slane %v4413, 2
    %v5447 = vsel %vm2057, %v5445, %v5446
    %v5448 = vrot.slane %v4416, 2
    %v5449 = vsel %vm2057, %v5446, %v5448
    %v5450 = vrot.slane %v4418, 2
    %v5451 = vsel %vm2057, %v5448, %v5450
    %v5452 = vrot.slane %v4421, 2
    %v5453 = vsel %vm2057, %v5450, %v5452
    %v5454 = vrot.slane %v4423, 2
    %v5455 = vsel %vm2057, %v5452, %v5454
    %v5456 = vrot.slane %v4426, 2
    %v5457 = vsel %vm2057, %v5454, %v5456
    %v5458 = vrot.slane %v4428, 2
    %v5459 = vsel %vm2057, %v5456, %v5458
    %v5460 = vrot.slane %v4431, 2
    %v5461 = vsel %vm2057, %v5458, %v5460
    %v5462 = vrot.slane %v4433, 2
    %v5463 = vsel %vm2057, %v5460, %v5462
    %v5464 = vrot.slane %v4436, 2
    %v5465 = vsel %vm2057, %v5462, %v5464
    %v5466 = vrot.slane %v4438, 2
    %v5467 = vsel %vm2057, %v5464, %v5466
    %v5468 = vrot.slane %v4441, 2
    %v5469 = vsel %vm2057, %v5466, %v5468
    %v5470 = vrot.slane %v4443, 2
    %v5471 = vsel %vm2057, %v5468, %v5470
    %v5472 = vrot.slane %v4446, 2
    %v5473 = vsel %vm2057, %v5470, %v5472
    %v5474 = vrot.slane %v4448, 2
    %v5475 = vsel %vm2057, %v5472, %v5474
    %v5476 = vrot.slane %v4451, 2
    %v5477 = vrot.slane %v4453, 2
    %v5478 = vsel %vm2057, %v5476, %v5477
    %v5479 = vrot.slane %v4456, 2
    %v5480 = vsel %vm2057, %v5477, %v5479
    %v5481 = vrot.slane %v4458, 2
    %v5482 = vsel %vm2057, %v5479, %v5481
    %v5483 = vrot.slane %v4461, 2
    %v5484 = vsel %vm2057, %v5481, %v5483
    %v5485 = vrot.slane %v4463, 2
    %v5486 = vsel %vm2057, %v5483, %v5485
    %v5487 = vrot.slane %v4466, 2
    %v5488 = vsel %vm2057, %v5485, %v5487
    %v5489 = vrot.slane %v4468, 2
    %v5490 = vsel %vm2057, %v5487, %v5489
    %v5491 = vrot.slane %v4471, 2
    %v5492 = vsel %vm2057, %v5489, %v5491
    %v5493 = vrot.slane %v4473, 2
    %v5494 = vsel %vm2057, %v5491, %v5493
    %v5495 = vrot.slane %v4476, 2
    %v5496 = vsel %vm2057, %v5493, %v5495
    %v5497 = vrot.slane %v4478, 2
    %v5498 = vsel %vm2057, %v5495, %v5497
    %v5499 = vrot.slane %v4481, 2
    %v5500 = vsel %vm2057, %v5497, %v5499
    %v5501 = vrot.slane %v4483, 2
    %v5502 = vsel %vm2057, %v5499, %v5501
    %v5503 = vrot.slane %v4486, 2
    %v5504 = vsel %vm2057, %v5501, %v5503
    %v5505 = vrot.slane %v4488, 2
    %v5506 = vsel %vm2057, %v5503, %v5505
    %v5507 = vrot.slane %v4491, 2
    %v5508 = vrot.slane %v4493, 2
    %v5509 = vsel %vm2057, %v5507, %v5508
    %v5510 = vrot.slane %v4496, 2
    %v5511 = vsel %vm2057, %v5508, %v5510
    %v5512 = vrot.slane %v4498, 2
    %v5513 = vsel %vm2057, %v5510, %v5512
    %v5514 = vrot.slane %v4501, 2
    %v5515 = vsel %vm2057, %v5512, %v5514
    %v5516 = vrot.slane %v4503, 2
    %v5517 = vsel %vm2057, %v5514, %v5516
    %v5518 = vrot.slane %v4506, 2
    %v5519 = vsel %vm2057, %v5516, %v5518
    %v5520 = vrot.slane %v4508, 2
    %v5521 = vsel %vm2057, %v5518, %v5520
    %v5522 = vrot.slane %v4511, 2
    %v5523 = vsel %vm2057, %v5520, %v5522
    %v5524 = vrot.slane %v4513, 2
    %v5525 = vsel %vm2057, %v5522, %v5524
    %v5526 = vrot.slane %v4516, 2
    %v5527 = vsel %vm2057, %v5524, %v5526
    %v5528 = vrot.slane %v4518, 2
    %v5529 = vsel %vm2057, %v5526, %v5528
    %v5530 = vrot.slane %v4521, 2
    %v5531 = vsel %vm2057, %v5528, %v5530
    %v5532 = vrot.slane %v4523, 2
    %v5533 = vsel %vm2057, %v5530, %v5532
    %v5534 = vrot.slane %v4526, 2
    %v5535 = vsel %vm2057, %v5532, %v5534
    %v5536 = vrot.slane %v4528, 2
    %v5537 = vsel %vm2057, %v5534, %v5536
    %v5666 = vadd.f32 %v5034, %v5292
    %v5667 = vadd.f32 %v5035, %v5294
    %v5668 = vadd.f32 %v5036, %v5296
    %v5669 = vadd.f32 %v5037, %v5298
    %v5670 = vadd.f32 %v5038, %v5300
    %v5671 = vadd.f32 %v5039, %v5302
    %v5672 = vadd.f32 %v5040, %v5304
    %v5673 = vadd.f32 %v5041, %v5306
    %v5674 = vadd.f32 %v5042, %v5308
    %v5675 = vadd.f32 %v5043, %v5310
    %v5676 = vadd.f32 %v5044, %v5312
    %v5677 = vadd.f32 %v5045, %v5314
    %v5678 = vadd.f32 %v5046, %v5316
    %v5679 = vadd.f32 %v5047, %v5318
    %v5680 = vadd.f32 %v5048, %v5320
    %v5681 = vadd.f32 %v5049, %v5319
    %v5682 = vadd.f32 %v5050, %v5323
    %v5683 = vadd.f32 %v5051, %v5325
    %v5684 = vadd.f32 %v5052, %v5327
    %v5685 = vadd.f32 %v5053, %v5329
    %v5686 = vadd.f32 %v5054, %v5331
    %v5687 = vadd.f32 %v5055, %v5333
    %v5688 = vadd.f32 %v5056, %v5335
    %v5689 = vadd.f32 %v5057, %v5337
    %v5690 = vadd.f32 %v5058, %v5339
    %v5691 = vadd.f32 %v5059, %v5341
    %v5692 = vadd.f32 %v5060, %v5343
    %v5693 = vadd.f32 %v5061, %v5345
    %v5694 = vadd.f32 %v5062, %v5347
    %v5695 = vadd.f32 %v5063, %v5349
    %v5696 = vadd.f32 %v5064, %v5351
    %v5697 = vadd.f32 %v5065, %v5350
    %v5698 = vadd.f32 %v5066, %v5354
    %v5699 = vadd.f32 %v5067, %v5356
    %v5700 = vadd.f32 %v5068, %v5358
    %v5701 = vadd.f32 %v5069, %v5360
    %v5702 = vadd.f32 %v5070, %v5362
    %v5703 = vadd.f32 %v5071, %v5364
    %v5704 = vadd.f32 %v5072, %v5366
    %v5705 = vadd.f32 %v5073, %v5368
    %v5706 = vadd.f32 %v5074, %v5370
    %v5707 = vadd.f32 %v5075, %v5372
    %v5708 = vadd.f32 %v5076, %v5374
    %v5709 = vadd.f32 %v5077, %v5376
    %v5710 = vadd.f32 %v5078, %v5378
    %v5711 = vadd.f32 %v5079, %v5380
    %v5712 = vadd.f32 %v5080, %v5382
    %v5713 = vadd.f32 %v5081, %v5381
    %v5714 = vadd.f32 %v5082, %v5385
    %v5715 = vadd.f32 %v5083, %v5387
    %v5716 = vadd.f32 %v5084, %v5389
    %v5717 = vadd.f32 %v5085, %v5391
    %v5718 = vadd.f32 %v5086, %v5393
    %v5719 = vadd.f32 %v5087, %v5395
    %v5720 = vadd.f32 %v5088, %v5397
    %v5721 = vadd.f32 %v5089, %v5399
    %v5722 = vadd.f32 %v5090, %v5401
    %v5723 = vadd.f32 %v5091, %v5403
    %v5724 = vadd.f32 %v5092, %v5405
    %v5725 = vadd.f32 %v5093, %v5407
    %v5726 = vadd.f32 %v5094, %v5409
    %v5727 = vadd.f32 %v5095, %v5411
    %v5728 = vadd.f32 %v5096, %v5413
    %v5729 = vadd.f32 %v5097, %v5412
    %v5730 = vadd.f32 %v5098, %v5416
    %v5731 = vadd.f32 %v5099, %v5418
    %v5732 = vadd.f32 %v5100, %v5420
    %v5733 = vadd.f32 %v5101, %v5422
    %v5734 = vadd.f32 %v5102, %v5424
    %v5735 = vadd.f32 %v5103, %v5426
    %v5736 = vadd.f32 %v5104, %v5428
    %v5737 = vadd.f32 %v5105, %v5430
    %v5738 = vadd.f32 %v5106, %v5432
    %v5739 = vadd.f32 %v5107, %v5434
    %v5740 = vadd.f32 %v5108, %v5436
    %v5741 = vadd.f32 %v5109, %v5438
    %v5742 = vadd.f32 %v5110, %v5440
    %v5743 = vadd.f32 %v5111, %v5442
    %v5744 = vadd.f32 %v5112, %v5444
    %v5745 = vadd.f32 %v5113, %v5443
    %v5746 = vadd.f32 %v5114, %v5447
    %v5747 = vadd.f32 %v5115, %v5449
    %v5748 = vadd.f32 %v5116, %v5451
    %v5749 = vadd.f32 %v5117, %v5453
    %v5750 = vadd.f32 %v5118, %v5455
    %v5751 = vadd.f32 %v5119, %v5457
    %v5752 = vadd.f32 %v5120, %v5459
    %v5753 = vadd.f32 %v5121, %v5461
    %v5754 = vadd.f32 %v5122, %v5463
    %v5755 = vadd.f32 %v5123, %v5465
    %v5756 = vadd.f32 %v5124, %v5467
    %v5757 = vadd.f32 %v5125, %v5469
    %v5758 = vadd.f32 %v5126, %v5471
    %v5759 = vadd.f32 %v5127, %v5473
    %v5760 = vadd.f32 %v5128, %v5475
    %v5761 = vadd.f32 %v5129, %v5474
    %v5762 = vadd.f32 %v5130, %v5478
    %v5763 = vadd.f32 %v5131, %v5480
    %v5764 = vadd.f32 %v5132, %v5482
    %v5765 = vadd.f32 %v5133, %v5484
    %v5766 = vadd.f32 %v5134, %v5486
    %v5767 = vadd.f32 %v5135, %v5488
    %v5768 = vadd.f32 %v5136, %v5490
    %v5769 = vadd.f32 %v5137, %v5492
    %v5770 = vadd.f32 %v5138, %v5494
    %v5771 = vadd.f32 %v5139, %v5496
    %v5772 = vadd.f32 %v5140, %v5498
    %v5773 = vadd.f32 %v5141, %v5500
    %v5774 = vadd.f32 %v5142, %v5502
    %v5775 = vadd.f32 %v5143, %v5504
    %v5776 = vadd.f32 %v5144, %v5506
    %v5777 = vadd.f32 %v5145, %v5505
    %v5778 = vadd.f32 %v5146, %v5509
    %v5779 = vadd.f32 %v5147, %v5511
    %v5780 = vadd.f32 %v5148, %v5513
    %v5781 = vadd.f32 %v5149, %v5515
    %v5782 = vadd.f32 %v5150, %v5517
    %v5783 = vadd.f32 %v5151, %v5519
    %v5784 = vadd.f32 %v5152, %v5521
    %v5785 = vadd.f32 %v5153, %v5523
    %v5786 = vadd.f32 %v5154, %v5525
    %v5787 = vadd.f32 %v5155, %v5527
    %v5788 = vadd.f32 %v5156, %v5529
    %v5789 = vadd.f32 %v5157, %v5531
    %v5790 = vadd.f32 %v5158, %v5533
    %v5791 = vadd.f32 %v5159, %v5535
    %v5792 = vadd.f32 %v5160, %v5537
    %v5793 = vadd.f32 %v5161, %v5536
    %v5795 = vperm.slane %v250, 0
    %v5797 = vadd.f32 %v5666, %v5795
    %v5798 = vadd.f32 %v5667, %v5795
    %v5799 = vadd.f32 %v5668, %v5795
    %v5800 = vadd.f32 %v5669, %v5795
    %v5801 = vadd.f32 %v5670, %v5795
    %v5802 = vadd.f32 %v5671, %v5795
    %v5803 = vadd.f32 %v5672, %v5795
    %v5804 = vadd.f32 %v5673, %v5795
    %v5805 = vadd.f32 %v5674, %v5795
    %v5806 = vadd.f32 %v5675, %v5795
    %v5807 = vadd.f32 %v5676, %v5795
    %v5808 = vadd.f32 %v5677, %v5795
    %v5809 = vadd.f32 %v5678, %v5795
    %v5810 = vadd.f32 %v5679, %v5795
    %v5811 = vadd.f32 %v5680, %v5795
    %v5812 = vadd.f32 %v5681, %v5795
    %v5813 = vadd.f32 %v5682, %v5795
    %v5814 = vadd.f32 %v5683, %v5795
    %v5815 = vadd.f32 %v5684, %v5795
    %v5816 = vadd.f32 %v5685, %v5795
    %v5817 = vadd.f32 %v5686, %v5795
    %v5818 = vadd.f32 %v5687, %v5795
    %v5819 = vadd.f32 %v5688, %v5795
    %v5820 = vadd.f32 %v5689, %v5795
    %v5821 = vadd.f32 %v5690, %v5795
    %v5822 = vadd.f32 %v5691, %v5795
    %v5823 = vadd.f32 %v5692, %v5795
    %v5824 = vadd.f32 %v5693, %v5795
    %v5825 = vadd.f32 %v5694, %v5795
    %v5826 = vadd.f32 %v5695, %v5795
    %v5827 = vadd.f32 %v5696, %v5795
    %v5828 = vadd.f32 %v5697, %v5795
    %v5829 = vadd.f32 %v5698, %v5795
    %v5830 = vadd.f32 %v5699, %v5795
    %v5831 = vadd.f32 %v5700, %v5795
    %v5832 = vadd.f32 %v5701, %v5795
    %v5833 = vadd.f32 %v5702, %v5795
    %v5834 = vadd.f32 %v5703, %v5795
    %v5835 = vadd.f32 %v5704, %v5795
    %v5836 = vadd.f32 %v5705, %v5795
    %v5837 = vadd.f32 %v5706, %v5795
    %v5838 = vadd.f32 %v5707, %v5795
    %v5839 = vadd.f32 %v5708, %v5795
    %v5840 = vadd.f32 %v5709, %v5795
    %v5841 = vadd.f32 %v5710, %v5795
    %v5842 = vadd.f32 %v5711, %v5795
    %v5843 = vadd.f32 %v5712, %v5795
    %v5844 = vadd.f32 %v5713, %v5795
    %v5845 = vadd.f32 %v5714, %v5795
    %v5846 = vadd.f32 %v5715, %v5795
    %v5847 = vadd.f32 %v5716, %v5795
    %v5848 = vadd.f32 %v5717, %v5795
    %v5849 = vadd.f32 %v5718, %v5795
    %v5850 = vadd.f32 %v5719, %v5795
    %v5851 = vadd.f32 %v5720, %v5795
    %v5852 = vadd.f32 %v5721, %v5795
    %v5853 = vadd.f32 %v5722, %v5795
    %v5854 = vadd.f32 %v5723, %v5795
    %v5855 = vadd.f32 %v5724, %v5795
    %v5856 = vadd.f32 %v5725, %v5795
    %v5857 = vadd.f32 %v5726, %v5795
    %v5858 = vadd.f32 %v5727, %v5795
    %v5859 = vadd.f32 %v5728, %v5795
    %v5860 = vadd.f32 %v5729, %v5795
    %v5861 = vadd.f32 %v5730, %v5795
    %v5862 = vadd.f32 %v5731, %v5795
    %v5863 = vadd.f32 %v5732, %v5795
    %v5864 = vadd.f32 %v5733, %v5795
    %v5865 = vadd.f32 %v5734, %v5795
    %v5866 = vadd.f32 %v5735, %v5795
    %v5867 = vadd.f32 %v5736, %v5795
    %v5868 = vadd.f32 %v5737, %v5795
    %v5869 = vadd.f32 %v5738, %v5795
    %v5870 = vadd.f32 %v5739, %v5795
    %v5871 = vadd.f32 %v5740, %v5795
    %v5872 = vadd.f32 %v5741, %v5795
    %v5873 = vadd.f32 %v5742, %v5795
    %v5874 = vadd.f32 %v5743, %v5795
    %v5875 = vadd.f32 %v5744, %v5795
    %v5876 = vadd.f32 %v5745, %v5795
    %v5877 = vadd.f32 %v5746, %v5795
    %v5878 = vadd.f32 %v5747, %v5795
    %v5879 = vadd.f32 %v5748, %v5795
    %v5880 = vadd.f32 %v5749, %v5795
    %v5881 = vadd.f32 %v5750, %v5795
    %v5882 = vadd.f32 %v5751, %v5795
    %v5883 = vadd.f32 %v5752, %v5795
    %v5884 = vadd.f32 %v5753, %v5795
    %v5885 = vadd.f32 %v5754, %v5795
    %v5886 = vadd.f32 %v5755, %v5795
    %v5887 = vadd.f32 %v5756, %v5795
    %v5888 = vadd.f32 %v5757, %v5795
    %v5889 = vadd.f32 %v5758, %v5795
    %v5890 = vadd.f32 %v5759, %v5795
    %v5891 = vadd.f32 %v5760, %v5795
    %v5892 = vadd.f32 %v5761, %v5795
    %v5893 = vadd.f32 %v5762, %v5795
    %v5894 = vadd.f32 %v5763, %v5795
    %v5895 = vadd.f32 %v5764, %v5795
    %v5896 = vadd.f32 %v5765, %v5795
    %v5897 = vadd.f32 %v5766, %v5795
    %v5898 = vadd.f32 %v5767, %v5795
    %v5899 = vadd.f32 %v5768, %v5795
    %v5900 = vadd.f32 %v5769, %v5795
    %v5901 = vadd.f32 %v5770, %v5795
    %v5902 = vadd.f32 %v5771, %v5795
    %v5903 = vadd.f32 %v5772, %v5795
    %v5904 = vadd.f32 %v5773, %v5795
    %v5905 = vadd.f32 %v5774, %v5795
    %v5906 = vadd.f32 %v5775, %v5795
    %v5907 = vadd.f32 %v5776, %v5795
    %v5908 = vadd.f32 %v5777, %v5795
    %v5909 = vadd.f32 %v5778, %v5795
    %v5910 = vadd.f32 %v5779, %v5795
    %v5911 = vadd.f32 %v5780, %v5795
    %v5912 = vadd.f32 %v5781, %v5795
    %v5913 = vadd.f32 %v5782, %v5795
    %v5914 = vadd.f32 %v5783, %v5795
    %v5915 = vadd.f32 %v5784, %v5795
    %v5916 = vadd.f32 %v5785, %v5795
    %v5917 = vadd.f32 %v5786, %v5795
    %v5918 = vadd.f32 %v5787, %v5795
    %v5919 = vadd.f32 %v5788, %v5795
    %v5920 = vadd.f32 %v5789, %v5795
    %v5921 = vadd.f32 %v5790, %v5795
    %v5922 = vadd.f32 %v5791, %v5795
    %v5923 = vadd.f32 %v5792, %v5795
    %v5924 = vadd.f32 %v5793, %v5795
    %v5925 = vmax.f32 %v5797, 0.0
    %v5926 = vmax.f32 %v5798, 0.0
    %v5927 = vmax.f32 %v5799, 0.0
    %v5928 = vmax.f32 %v5800, 0.0
    %v5929 = vmax.f32 %v5801, 0.0
    %v5930 = vmax.f32 %v5802, 0.0
    %v5931 = vmax.f32 %v5803, 0.0
    %v5932 = vmax.f32 %v5804, 0.0
    %v5933 = vmax.f32 %v5805, 0.0
    %v5934 = vmax.f32 %v5806, 0.0
    %v5935 = vmax.f32 %v5807, 0.0
    %v5936 = vmax.f32 %v5808, 0.0
    %v5937 = vmax.f32 %v5809, 0.0
    %v5938 = vmax.f32 %v5810, 0.0
    %v5939 = vmax.f32 %v5811, 0.0
    %v5940 = vmax.f32 %v5812, 0.0
    %v5941 = vmax.f32 %v5813, 0.0
    %v5942 = vmax.f32 %v5814, 0.0
    %v5943 = vmax.f32 %v5815, 0.0
    %v5944 = vmax.f32 %v5816, 0.0
    %v5945 = vmax.f32 %v5817, 0.0
    %v5946 = vmax.f32 %v5818, 0.0
    %v5947 = vmax.f32 %v5819, 0.0
    %v5948 = vmax.f32 %v5820, 0.0
    %v5949 = vmax.f32 %v5821, 0.0
    %v5950 = vmax.f32 %v5822, 0.0
    %v5951 = vmax.f32 %v5823, 0.0
    %v5952 = vmax.f32 %v5824, 0.0
    %v5953 = vmax.f32 %v5825, 0.0
    %v5954 = vmax.f32 %v5826, 0.0
    %v5955 = vmax.f32 %v5827, 0.0
    %v5956 = vmax.f32 %v5828, 0.0
    %v5957 = vmax.f32 %v5829, 0.0
    %v5958 = vmax.f32 %v5830, 0.0
    %v5959 = vmax.f32 %v5831, 0.0
    %v5960 = vmax.f32 %v5832, 0.0
    %v5961 = vmax.f32 %v5833, 0.0
    %v5962 = vmax.f32 %v5834, 0.0
    %v5963 = vmax.f32 %v5835, 0.0
    %v5964 = vmax.f32 %v5836, 0.0
    %v5965 = vmax.f32 %v5837, 0.0
    %v5966 = vmax.f32 %v5838, 0.0
    %v5967 = vmax.f32 %v5839, 0.0
    %v5968 = vmax.f32 %v5840, 0.0
    %v5969 = vmax.f32 %v5841, 0.0
    %v5970 = vmax.f32 %v5842, 0.0
    %v5971 = vmax.f32 %v5843, 0.0
    %v5972 = vmax.f32 %v5844, 0.0
    %v5973 = vmax.f32 %v5845, 0.0
    %v5974 = vmax.f32 %v5846, 0.0
    %v5975 = vmax.f32 %v5847, 0.0
    %v5976 = vmax.f32 %v5848, 0.0
    %v5977 = vmax.f32 %v5849, 0.0
    %v5978 = vmax.f32 %v5850, 0.0
    %v5979 = vmax.f32 %v5851, 0.0
    %v5980 = vmax.f32 %v5852, 0.0
    %v5981 = vmax.f32 %v5853, 0.0
    %v5982 = vmax.f32 %v5854, 0.0
    %v5983 = vmax.f32 %v5855, 0.0
    %v5984 = vmax.f32 %v5856, 0.0
    %v5985 = vmax.f32 %v5857, 0.0
    %v5986 = vmax.f32 %v5858, 0.0
    %v5987 = vmax.f32 %v5859, 0.0
    %v5988 = vmax.f32 %v5860, 0.0
    %v5989 = vmax.f32 %v5861, 0.0
    %v5990 = vmax.f32 %v5862, 0.0
    %v5991 = vmax.f32 %v5863, 0.0
    %v5992 = vmax.f32 %v5864, 0.0
    %v5993 = vmax.f32 %v5865, 0.0
    %v5994 = vmax.f32 %v5866, 0.0
    %v5995 = vmax.f32 %v5867, 0.0
    %v5996 = vmax.f32 %v5868, 0.0
    %v5997 = vmax.f32 %v5869, 0.0
    %v5998 = vmax.f32 %v5870, 0.0
    %v5999 = vmax.f32 %v5871, 0.0
    %v6000 = vmax.f32 %v5872, 0.0
    %v6001 = vmax.f32 %v5873, 0.0
    %v6002 = vmax.f32 %v5874, 0.0
    %v6003 = vmax.f32 %v5875, 0.0
    %v6004 = vmax.f32 %v5876, 0.0
    %v6005 = vmax.f32 %v5877, 0.0
    %v6006 = vmax.f32 %v5878, 0.0
    %v6007 = vmax.f32 %v5879, 0.0
    %v6008 = vmax.f32 %v5880, 0.0
    %v6009 = vmax.f32 %v5881, 0.0
    %v6010 = vmax.f32 %v5882, 0.0
    %v6011 = vmax.f32 %v5883, 0.0
    %v6012 = vmax.f32 %v5884, 0.0
    %v6013 = vmax.f32 %v5885, 0.0
    %v6014 = vmax.f32 %v5886, 0.0
    %v6015 = vmax.f32 %v5887, 0.0
    %v6016 = vmax.f32 %v5888, 0.0
    %v6017 = vmax.f32 %v5889, 0.0
    %v6018 = vmax.f32 %v5890, 0.0
    %v6019 = vmax.f32 %v5891, 0.0
    %v6020 = vmax.f32 %v5892, 0.0
    %v6021 = vmax.f32 %v5893, 0.0
    %v6022 = vmax.f32 %v5894, 0.0
    %v6023 = vmax.f32 %v5895, 0.0
    %v6024 = vmax.f32 %v5896, 0.0
    %v6025 = vmax.f32 %v5897, 0.0
    %v6026 = vmax.f32 %v5898, 0.0
    %v6027 = vmax.f32 %v5899, 0.0
    %v6028 = vmax.f32 %v5900, 0.0
    %v6029 = vmax.f32 %v5901, 0.0
    %v6030 = vmax.f32 %v5902, 0.0
    %v6031 = vmax.f32 %v5903, 0.0
    %v6032 = vmax.f32 %v5904, 0.0
    %v6033 = vmax.f32 %v5905, 0.0
    %v6034 = vmax.f32 %v5906, 0.0
    %v6035 = vmax.f32 %v5907, 0.0
    %v6036 = vmax.f32 %v5908, 0.0
    %v6037 = vmax.f32 %v5909, 0.0
    %v6038 = vmax.f32 %v5910, 0.0
    %v6039 = vmax.f32 %v5911, 0.0
    %v6040 = vmax.f32 %v5912, 0.0
    %v6041 = vmax.f32 %v5913, 0.0
    %v6042 = vmax.f32 %v5914, 0.0
    %v6043 = vmax.f32 %v5915, 0.0
    %v6044 = vmax.f32 %v5916, 0.0
    %v6045 = vmax.f32 %v5917, 0.0
    %v6046 = vmax.f32 %v5918, 0.0
    %v6047 = vmax.f32 %v5919, 0.0
    %v6048 = vmax.f32 %v5920, 0.0
    %v6049 = vmax.f32 %v5921, 0.0
    %v6050 = vmax.f32 %v5922, 0.0
    %v6051 = vmax.f32 %v5923, 0.0
    %v6052 = vmax.f32 %v5924, 0.0
    %v6181 = vrot.slane %v5925, 1
    %v6182 = vrot.slane %v5926, 1
    %v6183 = vsel %vm1284, %v6181, %v6182
    %v6184 = vrot.slane %v5927, 1
    %v6185 = vsel %vm1284, %v6182, %v6184
    %v6186 = vrot.slane %v5928, 1
    %v6187 = vsel %vm1284, %v6184, %v6186
    %v6188 = vrot.slane %v5929, 1
    %v6189 = vsel %vm1284, %v6186, %v6188
    %v6190 = vrot.slane %v5930, 1
    %v6191 = vsel %vm1284, %v6188, %v6190
    %v6192 = vrot.slane %v5931, 1
    %v6193 = vsel %vm1284, %v6190, %v6192
    %v6194 = vrot.slane %v5932, 1
    %v6195 = vsel %vm1284, %v6192, %v6194
    %v6196 = vrot.slane %v5933, 1
    %v6197 = vsel %vm1284, %v6194, %v6196
    %v6198 = vrot.slane %v5934, 1
    %v6199 = vsel %vm1284, %v6196, %v6198
    %v6200 = vrot.slane %v5935, 1
    %v6201 = vsel %vm1284, %v6198, %v6200
    %v6202 = vrot.slane %v5936, 1
    %v6203 = vsel %vm1284, %v6200, %v6202
    %v6204 = vrot.slane %v5937, 1
    %v6205 = vsel %vm1284, %v6202, %v6204
    %v6206 = vrot.slane %v5938, 1
    %v6207 = vsel %vm1284, %v6204, %v6206
    %v6208 = vrot.slane %v5939, 1
    %v6209 = vsel %vm1284, %v6206, %v6208
    %v6210 = vrot.slane %v5940, 1
    %v6211 = vsel %vm1284, %v6208, %v6210
    %v6212 = vrot.slane %v5941, 1
    %v6213 = vrot.slane %v5942, 1
    %v6214 = vsel %vm1284, %v6212, %v6213
    %v6215 = vrot.slane %v5943, 1
    %v6216 = vsel %vm1284, %v6213, %v6215
    %v6217 = vrot.slane %v5944, 1
    %v6218 = vsel %vm1284, %v6215, %v6217
    %v6219 = vrot.slane %v5945, 1
    %v6220 = vsel %vm1284, %v6217, %v6219
    %v6221 = vrot.slane %v5946, 1
    %v6222 = vsel %vm1284, %v6219, %v6221
    %v6223 = vrot.slane %v5947, 1
    %v6224 = vsel %vm1284, %v6221, %v6223
    %v6225 = vrot.slane %v5948, 1
    %v6226 = vsel %vm1284, %v6223, %v6225
    %v6227 = vrot.slane %v5949, 1
    %v6228 = vsel %vm1284, %v6225, %v6227
    %v6229 = vrot.slane %v5950, 1
    %v6230 = vsel %vm1284, %v6227, %v6229
    %v6231 = vrot.slane %v5951, 1
    %v6232 = vsel %vm1284, %v6229, %v6231
    %v6233 = vrot.slane %v5952, 1
    %v6234 = vsel %vm1284, %v6231, %v6233
    %v6235 = vrot.slane %v5953, 1
    %v6236 = vsel %vm1284, %v6233, %v6235
    %v6237 = vrot.slane %v5954, 1
    %v6238 = vsel %vm1284, %v6235, %v6237
    %v6239 = vrot.slane %v5955, 1
    %v6240 = vsel %vm1284, %v6237, %v6239
    %v6241 = vrot.slane %v5956, 1
    %v6242 = vsel %vm1284, %v6239, %v6241
    %v6243 = vrot.slane %v5957, 1
    %v6244 = vrot.slane %v5958, 1
    %v6245 = vsel %vm1284, %v6243, %v6244
    %v6246 = vrot.slane %v5959, 1
    %v6247 = vsel %vm1284, %v6244, %v6246
    %v6248 = vrot.slane %v5960, 1
    %v6249 = vsel %vm1284, %v6246, %v6248
    %v6250 = vrot.slane %v5961, 1
    %v6251 = vsel %vm1284, %v6248, %v6250
    %v6252 = vrot.slane %v5962, 1
    %v6253 = vsel %vm1284, %v6250, %v6252
    %v6254 = vrot.slane %v5963, 1
    %v6255 = vsel %vm1284, %v6252, %v6254
    %v6256 = vrot.slane %v5964, 1
    %v6257 = vsel %vm1284, %v6254, %v6256
    %v6258 = vrot.slane %v5965, 1
    %v6259 = vsel %vm1284, %v6256, %v6258
    %v6260 = vrot.slane %v5966, 1
    %v6261 = vsel %vm1284, %v6258, %v6260
    %v6262 = vrot.slane %v5967, 1
    %v6263 = vsel %vm1284, %v6260, %v6262
    %v6264 = vrot.slane %v5968, 1
    %v6265 = vsel %vm1284, %v6262, %v6264
    %v6266 = vrot.slane %v5969, 1
    %v6267 = vsel %vm1284, %v6264, %v6266
    %v6268 = vrot.slane %v5970, 1
    %v6269 = vsel %vm1284, %v6266, %v6268
    %v6270 = vrot.slane %v5971, 1
    %v6271 = vsel %vm1284, %v6268, %v6270
    %v6272 = vrot.slane %v5972, 1
    %v6273 = vsel %vm1284, %v6270, %v6272
    %v6274 = vrot.slane %v5973, 1
    %v6275 = vrot.slane %v5974, 1
    %v6276 = vsel %vm1284, %v6274, %v6275
    %v6277 = vrot.slane %v5975, 1
    %v6278 = vsel %vm1284, %v6275, %v6277
    %v6279 = vrot.slane %v5976, 1
    %v6280 = vsel %vm1284, %v6277, %v6279
    %v6281 = vrot.slane %v5977, 1
    %v6282 = vsel %vm1284, %v6279, %v6281
    %v6283 = vrot.slane %v5978, 1
    %v6284 = vsel %vm1284, %v6281, %v6283
    %v6285 = vrot.slane %v5979, 1
    %v6286 = vsel %vm1284, %v6283, %v6285
    %v6287 = vrot.slane %v5980, 1
    %v6288 = vsel %vm1284, %v6285, %v6287
    %v6289 = vrot.slane %v5981, 1
    %v6290 = vsel %vm1284, %v6287, %v6289
    %v6291 = vrot.slane %v5982, 1
    %v6292 = vsel %vm1284, %v6289, %v6291
    %v6293 = vrot.slane %v5983, 1
    %v6294 = vsel %vm1284, %v6291, %v6293
    %v6295 = vrot.slane %v5984, 1
    %v6296 = vsel %vm1284, %v6293, %v6295
    %v6297 = vrot.slane %v5985, 1
    %v6298 = vsel %vm1284, %v6295, %v6297
    %v6299 = vrot.slane %v5986, 1
    %v6300 = vsel %vm1284, %v6297, %v6299
    %v6301 = vrot.slane %v5987, 1
    %v6302 = vsel %vm1284, %v6299, %v6301
    %v6303 = vrot.slane %v5988, 1
    %v6304 = vsel %vm1284, %v6301, %v6303
    %v6305 = vrot.slane %v5989, 1
    %v6306 = vrot.slane %v5990, 1
    %v6307 = vsel %vm1284, %v6305, %v6306
    %v6308 = vrot.slane %v5991, 1
    %v6309 = vsel %vm1284, %v6306, %v6308
    %v6310 = vrot.slane %v5992, 1
    %v6311 = vsel %vm1284, %v6308, %v6310
    %v6312 = vrot.slane %v5993, 1
    %v6313 = vsel %vm1284, %v6310, %v6312
    %v6314 = vrot.slane %v5994, 1
    %v6315 = vsel %vm1284, %v6312, %v6314
    %v6316 = vrot.slane %v5995, 1
    %v6317 = vsel %vm1284, %v6314, %v6316
    %v6318 = vrot.slane %v5996, 1
    %v6319 = vsel %vm1284, %v6316, %v6318
    %v6320 = vrot.slane %v5997, 1
    %v6321 = vsel %vm1284, %v6318, %v6320
    %v6322 = vrot.slane %v5998, 1
    %v6323 = vsel %vm1284, %v6320, %v6322
    %v6324 = vrot.slane %v5999, 1
    %v6325 = vsel %vm1284, %v6322, %v6324
    %v6326 = vrot.slane %v6000, 1
    %v6327 = vsel %vm1284, %v6324, %v6326
    %v6328 = vrot.slane %v6001, 1
    %v6329 = vsel %vm1284, %v6326, %v6328
    %v6330 = vrot.slane %v6002, 1
    %v6331 = vsel %vm1284, %v6328, %v6330
    %v6332 = vrot.slane %v6003, 1
    %v6333 = vsel %vm1284, %v6330, %v6332
    %v6334 = vrot.slane %v6004, 1
    %v6335 = vsel %vm1284, %v6332, %v6334
    %v6336 = vrot.slane %v6005, 1
    %v6337 = vrot.slane %v6006, 1
    %v6338 = vsel %vm1284, %v6336, %v6337
    %v6339 = vrot.slane %v6007, 1
    %v6340 = vsel %vm1284, %v6337, %v6339
    %v6341 = vrot.slane %v6008, 1
    %v6342 = vsel %vm1284, %v6339, %v6341
    %v6343 = vrot.slane %v6009, 1
    %v6344 = vsel %vm1284, %v6341, %v6343
    %v6345 = vrot.slane %v6010, 1
    %v6346 = vsel %vm1284, %v6343, %v6345
    %v6347 = vrot.slane %v6011, 1
    %v6348 = vsel %vm1284, %v6345, %v6347
    %v6349 = vrot.slane %v6012, 1
    %v6350 = vsel %vm1284, %v6347, %v6349
    %v6351 = vrot.slane %v6013, 1
    %v6352 = vsel %vm1284, %v6349, %v6351
    %v6353 = vrot.slane %v6014, 1
    %v6354 = vsel %vm1284, %v6351, %v6353
    %v6355 = vrot.slane %v6015, 1
    %v6356 = vsel %vm1284, %v6353, %v6355
    %v6357 = vrot.slane %v6016, 1
    %v6358 = vsel %vm1284, %v6355, %v6357
    %v6359 = vrot.slane %v6017, 1
    %v6360 = vsel %vm1284, %v6357, %v6359
    %v6361 = vrot.slane %v6018, 1
    %v6362 = vsel %vm1284, %v6359, %v6361
    %v6363 = vrot.slane %v6019, 1
    %v6364 = vsel %vm1284, %v6361, %v6363
    %v6365 = vrot.slane %v6020, 1
    %v6366 = vsel %vm1284, %v6363, %v6365
    %v6367 = vrot.slane %v6021, 1
    %v6368 = vrot.slane %v6022, 1
    %v6369 = vsel %vm1284, %v6367, %v6368
    %v6370 = vrot.slane %v6023, 1
    %v6371 = vsel %vm1284, %v6368, %v6370
    %v6372 = vrot.slane %v6024, 1
    %v6373 = vsel %vm1284, %v6370, %v6372
    %v6374 = vrot.slane %v6025, 1
    %v6375 = vsel %vm1284, %v6372, %v6374
    %v6376 = vrot.slane %v6026, 1
    %v6377 = vsel %vm1284, %v6374, %v6376
    %v6378 = vrot.slane %v6027, 1
    %v6379 = vsel %vm1284, %v6376, %v6378
    %v6380 = vrot.slane %v6028, 1
    %v6381 = vsel %vm1284, %v6378, %v6380
    %v6382 = vrot.slane %v6029, 1
    %v6383 = vsel %vm1284, %v6380, %v6382
    %v6384 = vrot.slane %v6030, 1
    %v6385 = vsel %vm1284, %v6382, %v6384
    %v6386 = vrot.slane %v6031, 1
    %v6387 = vsel %vm1284, %v6384, %v6386
    %v6388 = vrot.slane %v6032, 1
    %v6389 = vsel %vm1284, %v6386, %v6388
    %v6390 = vrot.slane %v6033, 1
    %v6391 = vsel %vm1284, %v6388, %v6390
    %v6392 = vrot.slane %v6034, 1
    %v6393 = vsel %vm1284, %v6390, %v6392
    %v6394 = vrot.slane %v6035, 1
    %v6395 = vsel %vm1284, %v6392, %v6394
    %v6396 = vrot.slane %v6036, 1
    %v6397 = vsel %vm1284, %v6394, %v6396
    %v6398 = vrot.slane %v6037, 1
    %v6399 = vrot.slane %v6038, 1
    %v6400 = vsel %vm1284, %v6398, %v6399
    %v6401 = vrot.slane %v6039, 1
    %v6402 = vsel %vm1284, %v6399, %v6401
    %v6403 = vrot.slane %v6040, 1
    %v6404 = vsel %vm1284, %v6401, %v6403
    %v6405 = vrot.slane %v6041, 1
    %v6406 = vsel %vm1284, %v6403, %v6405
    %v6407 = vrot.slane %v6042, 1
    %v6408 = vsel %vm1284, %v6405, %v6407
    %v6409 = vrot.slane %v6043, 1
    %v6410 = vsel %vm1284, %v6407, %v6409
    %v6411 = vrot.slane %v6044, 1
    %v6412 = vsel %vm1284, %v6409, %v6411
    %v6413 = vrot.slane %v6045, 1
    %v6414 = vsel %vm1284, %v6411, %v6413
    %v6415 = vrot.slane %v6046, 1
    %v6416 = vsel %vm1284, %v6413, %v6415
    %v6417 = vrot.slane %v6047, 1
    %v6418 = vsel %vm1284, %v6415, %v6417
    %v6419 = vrot.slane %v6048, 1
    %v6420 = vsel %vm1284, %v6417, %v6419
    %v6421 = vrot.slane %v6049, 1
    %v6422 = vsel %vm1284, %v6419, %v6421
    %v6423 = vrot.slane %v6050, 1
    %v6424 = vsel %vm1284, %v6421, %v6423
    %v6425 = vrot.slane %v6051, 1
    %v6426 = vsel %vm1284, %v6423, %v6425
    %v6427 = vrot.slane %v6052, 1
    %v6428 = vsel %vm1284, %v6425, %v6427
    %v6557 = vmax.f32 %v5925, %v6183
    %v6558 = vmax.f32 %v5926, %v6185
    %v6559 = vmax.f32 %v5927, %v6187
    %v6560 = vmax.f32 %v5928, %v6189
    %v6561 = vmax.f32 %v5929, %v6191
    %v6562 = vmax.f32 %v5930, %v6193
    %v6563 = vmax.f32 %v5931, %v6195
    %v6564 = vmax.f32 %v5932, %v6197
    %v6565 = vmax.f32 %v5933, %v6199
    %v6566 = vmax.f32 %v5934, %v6201
    %v6567 = vmax.f32 %v5935, %v6203
    %v6568 = vmax.f32 %v5936, %v6205
    %v6569 = vmax.f32 %v5937, %v6207
    %v6570 = vmax.f32 %v5938, %v6209
    %v6571 = vmax.f32 %v5939, %v6211
    %v6572 = vmax.f32 %v5940, %v6210
    %v6573 = vmax.f32 %v5941, %v6214
    %v6574 = vmax.f32 %v5942, %v6216
    %v6575 = vmax.f32 %v5943, %v6218
    %v6576 = vmax.f32 %v5944, %v6220
    %v6577 = vmax.f32 %v5945, %v6222
    %v6578 = vmax.f32 %v5946, %v6224
    %v6579 = vmax.f32 %v5947, %v6226
    %v6580 = vmax.f32 %v5948, %v6228
    %v6581 = vmax.f32 %v5949, %v6230
    %v6582 = vmax.f32 %v5950, %v6232
    %v6583 = vmax.f32 %v5951, %v6234
    %v6584 = vmax.f32 %v5952, %v6236
    %v6585 = vmax.f32 %v5953, %v6238
    %v6586 = vmax.f32 %v5954, %v6240
    %v6587 = vmax.f32 %v5955, %v6242
    %v6588 = vmax.f32 %v5956, %v6241
    %v6589 = vmax.f32 %v5957, %v6245
    %v6590 = vmax.f32 %v5958, %v6247
    %v6591 = vmax.f32 %v5959, %v6249
    %v6592 = vmax.f32 %v5960, %v6251
    %v6593 = vmax.f32 %v5961, %v6253
    %v6594 = vmax.f32 %v5962, %v6255
    %v6595 = vmax.f32 %v5963, %v6257
    %v6596 = vmax.f32 %v5964, %v6259
    %v6597 = vmax.f32 %v5965, %v6261
    %v6598 = vmax.f32 %v5966, %v6263
    %v6599 = vmax.f32 %v5967, %v6265
    %v6600 = vmax.f32 %v5968, %v6267
    %v6601 = vmax.f32 %v5969, %v6269
    %v6602 = vmax.f32 %v5970, %v6271
    %v6603 = vmax.f32 %v5971, %v6273
    %v6604 = vmax.f32 %v5972, %v6272
    %v6605 = vmax.f32 %v5973, %v6276
    %v6606 = vmax.f32 %v5974, %v6278
    %v6607 = vmax.f32 %v5975, %v6280
    %v6608 = vmax.f32 %v5976, %v6282
    %v6609 = vmax.f32 %v5977, %v6284
    %v6610 = vmax.f32 %v5978, %v6286
    %v6611 = vmax.f32 %v5979, %v6288
    %v6612 = vmax.f32 %v5980, %v6290
    %v6613 = vmax.f32 %v5981, %v6292
    %v6614 = vmax.f32 %v5982, %v6294
    %v6615 = vmax.f32 %v5983, %v6296
    %v6616 = vmax.f32 %v5984, %v6298
    %v6617 = vmax.f32 %v5985, %v6300
    %v6618 = vmax.f32 %v5986, %v6302
    %v6619 = vmax.f32 %v5987, %v6304
    %v6620 = vmax.f32 %v5988, %v6303
    %v6621 = vmax.f32 %v5989, %v6307
    %v6622 = vmax.f32 %v5990, %v6309
    %v6623 = vmax.f32 %v5991, %v6311
    %v6624 = vmax.f32 %v5992, %v6313
    %v6625 = vmax.f32 %v5993, %v6315
    %v6626 = vmax.f32 %v5994, %v6317
    %v6627 = vmax.f32 %v5995, %v6319
    %v6628 = vmax.f32 %v5996, %v6321
    %v6629 = vmax.f32 %v5997, %v6323
    %v6630 = vmax.f32 %v5998, %v6325
    %v6631 = vmax.f32 %v5999, %v6327
    %v6632 = vmax.f32 %v6000, %v6329
    %v6633 = vmax.f32 %v6001, %v6331
    %v6634 = vmax.f32 %v6002, %v6333
    %v6635 = vmax.f32 %v6003, %v6335
    %v6636 = vmax.f32 %v6004, %v6334
    %v6637 = vmax.f32 %v6005, %v6338
    %v6638 = vmax.f32 %v6006, %v6340
    %v6639 = vmax.f32 %v6007, %v6342
    %v6640 = vmax.f32 %v6008, %v6344
    %v6641 = vmax.f32 %v6009, %v6346
    %v6642 = vmax.f32 %v6010, %v6348
    %v6643 = vmax.f32 %v6011, %v6350
    %v6644 = vmax.f32 %v6012, %v6352
    %v6645 = vmax.f32 %v6013, %v6354
    %v6646 = vmax.f32 %v6014, %v6356
    %v6647 = vmax.f32 %v6015, %v6358
    %v6648 = vmax.f32 %v6016, %v6360
    %v6649 = vmax.f32 %v6017, %v6362
    %v6650 = vmax.f32 %v6018, %v6364
    %v6651 = vmax.f32 %v6019, %v6366
    %v6652 = vmax.f32 %v6020, %v6365
    %v6653 = vmax.f32 %v6021, %v6369
    %v6654 = vmax.f32 %v6022, %v6371
    %v6655 = vmax.f32 %v6023, %v6373
    %v6656 = vmax.f32 %v6024, %v6375
    %v6657 = vmax.f32 %v6025, %v6377
    %v6658 = vmax.f32 %v6026, %v6379
    %v6659 = vmax.f32 %v6027, %v6381
    %v6660 = vmax.f32 %v6028, %v6383
    %v6661 = vmax.f32 %v6029, %v6385
    %v6662 = vmax.f32 %v6030, %v6387
    %v6663 = vmax.f32 %v6031, %v6389
    %v6664 = vmax.f32 %v6032, %v6391
    %v6665 = vmax.f32 %v6033, %v6393
    %v6666 = vmax.f32 %v6034, %v6395
    %v6667 = vmax.f32 %v6035, %v6397
    %v6668 = vmax.f32 %v6036, %v6396
    %v6669 = vmax.f32 %v6037, %v6400
    %v6670 = vmax.f32 %v6038, %v6402
    %v6671 = vmax.f32 %v6039, %v6404
    %v6672 = vmax.f32 %v6040, %v6406
    %v6673 = vmax.f32 %v6041, %v6408
    %v6674 = vmax.f32 %v6042, %v6410
    %v6675 = vmax.f32 %v6043, %v6412
    %v6676 = vmax.f32 %v6044, %v6414
    %v6677 = vmax.f32 %v6045, %v6416
    %v6678 = vmax.f32 %v6046, %v6418
    %v6679 = vmax.f32 %v6047, %v6420
    %v6680 = vmax.f32 %v6048, %v6422
    %v6681 = vmax.f32 %v6049, %v6424
    %v6682 = vmax.f32 %v6050, %v6426
    %v6683 = vmax.f32 %v6051, %v6428
    %v6684 = vmax.f32 %v6052, %v6427
    %v6685 = vpack.c.bf16 %v6557, %v6557
    %v6686 = vpack.c.bf16 %v6558, %v6558
    %v6687 = vpack.c.bf16 %v6559, %v6559
    %v6688 = vpack.c.bf16 %v6560, %v6560
    %v6689 = vpack.c.bf16 %v6561, %v6561
    %v6690 = vpack.c.bf16 %v6562, %v6562
    %v6691 = vpack.c.bf16 %v6563, %v6563
    %v6692 = vpack.c.bf16 %v6564, %v6564
    %v6693 = vpack.c.bf16 %v6565, %v6565
    %v6694 = vpack.c.bf16 %v6566, %v6566
    %v6695 = vpack.c.bf16 %v6567, %v6567
    %v6696 = vpack.c.bf16 %v6568, %v6568
    %v6697 = vpack.c.bf16 %v6569, %v6569
    %v6698 = vpack.c.bf16 %v6570, %v6570
    %v6699 = vpack.c.bf16 %v6571, %v6571
    %v6700 = vpack.c.bf16 %v6572, %v6572
    %v6701 = vpack.c.bf16 %v6573, %v6573
    %v6702 = vpack.c.bf16 %v6574, %v6574
    %v6703 = vpack.c.bf16 %v6575, %v6575
    %v6704 = vpack.c.bf16 %v6576, %v6576
    %v6705 = vpack.c.bf16 %v6577, %v6577
    %v6706 = vpack.c.bf16 %v6578, %v6578
    %v6707 = vpack.c.bf16 %v6579, %v6579
    %v6708 = vpack.c.bf16 %v6580, %v6580
    %v6709 = vpack.c.bf16 %v6581, %v6581
    %v6710 = vpack.c.bf16 %v6582, %v6582
    %v6711 = vpack.c.bf16 %v6583, %v6583
    %v6712 = vpack.c.bf16 %v6584, %v6584
    %v6713 = vpack.c.bf16 %v6585, %v6585
    %v6714 = vpack.c.bf16 %v6586, %v6586
    %v6715 = vpack.c.bf16 %v6587, %v6587
    %v6716 = vpack.c.bf16 %v6588, %v6588
    %v6717 = vpack.c.bf16 %v6589, %v6589
    %v6718 = vpack.c.bf16 %v6590, %v6590
    %v6719 = vpack.c.bf16 %v6591, %v6591
    %v6720 = vpack.c.bf16 %v6592, %v6592
    %v6721 = vpack.c.bf16 %v6593, %v6593
    %v6722 = vpack.c.bf16 %v6594, %v6594
    %v6723 = vpack.c.bf16 %v6595, %v6595
    %v6724 = vpack.c.bf16 %v6596, %v6596
    %v6725 = vpack.c.bf16 %v6597, %v6597
    %v6726 = vpack.c.bf16 %v6598, %v6598
    %v6727 = vpack.c.bf16 %v6599, %v6599
    %v6728 = vpack.c.bf16 %v6600, %v6600
    %v6729 = vpack.c.bf16 %v6601, %v6601
    %v6730 = vpack.c.bf16 %v6602, %v6602
    %v6731 = vpack.c.bf16 %v6603, %v6603
    %v6732 = vpack.c.bf16 %v6604, %v6604
    %v6733 = vpack.c.bf16 %v6605, %v6605
    %v6734 = vpack.c.bf16 %v6606, %v6606
    %v6735 = vpack.c.bf16 %v6607, %v6607
    %v6736 = vpack.c.bf16 %v6608, %v6608
    %v6737 = vpack.c.bf16 %v6609, %v6609
    %v6738 = vpack.c.bf16 %v6610, %v6610
    %v6739 = vpack.c.bf16 %v6611, %v6611
    %v6740 = vpack.c.bf16 %v6612, %v6612
    %v6741 = vpack.c.bf16 %v6613, %v6613
    %v6742 = vpack.c.bf16 %v6614, %v6614
    %v6743 = vpack.c.bf16 %v6615, %v6615
    %v6744 = vpack.c.bf16 %v6616, %v6616
    %v6745 = vpack.c.bf16 %v6617, %v6617
    %v6746 = vpack.c.bf16 %v6618, %v6618
    %v6747 = vpack.c.bf16 %v6619, %v6619
    %v6748 = vpack.c.bf16 %v6620, %v6620
    %v6749 = vpack.c.bf16 %v6621, %v6621
    %v6750 = vpack.c.bf16 %v6622, %v6622
    %v6751 = vpack.c.bf16 %v6623, %v6623
    %v6752 = vpack.c.bf16 %v6624, %v6624
    %v6753 = vpack.c.bf16 %v6625, %v6625
    %v6754 = vpack.c.bf16 %v6626, %v6626
    %v6755 = vpack.c.bf16 %v6627, %v6627
    %v6756 = vpack.c.bf16 %v6628, %v6628
    %v6757 = vpack.c.bf16 %v6629, %v6629
    %v6758 = vpack.c.bf16 %v6630, %v6630
    %v6759 = vpack.c.bf16 %v6631, %v6631
    %v6760 = vpack.c.bf16 %v6632, %v6632
    %v6761 = vpack.c.bf16 %v6633, %v6633
    %v6762 = vpack.c.bf16 %v6634, %v6634
    %v6763 = vpack.c.bf16 %v6635, %v6635
    %v6764 = vpack.c.bf16 %v6636, %v6636
    %v6765 = vpack.c.bf16 %v6637, %v6637
    %v6766 = vpack.c.bf16 %v6638, %v6638
    %v6767 = vpack.c.bf16 %v6639, %v6639
    %v6768 = vpack.c.bf16 %v6640, %v6640
    %v6769 = vpack.c.bf16 %v6641, %v6641
    %v6770 = vpack.c.bf16 %v6642, %v6642
    %v6771 = vpack.c.bf16 %v6643, %v6643
    %v6772 = vpack.c.bf16 %v6644, %v6644
    %v6773 = vpack.c.bf16 %v6645, %v6645
    %v6774 = vpack.c.bf16 %v6646, %v6646
    %v6775 = vpack.c.bf16 %v6647, %v6647
    %v6776 = vpack.c.bf16 %v6648, %v6648
    %v6777 = vpack.c.bf16 %v6649, %v6649
    %v6778 = vpack.c.bf16 %v6650, %v6650
    %v6779 = vpack.c.bf16 %v6651, %v6651
    %v6780 = vpack.c.bf16 %v6652, %v6652
    %v6781 = vpack.c.bf16 %v6653, %v6653
    %v6782 = vpack.c.bf16 %v6654, %v6654
    %v6783 = vpack.c.bf16 %v6655, %v6655
    %v6784 = vpack.c.bf16 %v6656, %v6656
    %v6785 = vpack.c.bf16 %v6657, %v6657
    %v6786 = vpack.c.bf16 %v6658, %v6658
    %v6787 = vpack.c.bf16 %v6659, %v6659
    %v6788 = vpack.c.bf16 %v6660, %v6660
    %v6789 = vpack.c.bf16 %v6661, %v6661
    %v6790 = vpack.c.bf16 %v6662, %v6662
    %v6791 = vpack.c.bf16 %v6663, %v6663
    %v6792 = vpack.c.bf16 %v6664, %v6664
    %v6793 = vpack.c.bf16 %v6665, %v6665
    %v6794 = vpack.c.bf16 %v6666, %v6666
    %v6795 = vpack.c.bf16 %v6667, %v6667
    %v6796 = vpack.c.bf16 %v6668, %v6668
    %v6797 = vpack.c.bf16 %v6669, %v6669
    %v6798 = vpack.c.bf16 %v6670, %v6670
    %v6799 = vpack.c.bf16 %v6671, %v6671
    %v6800 = vpack.c.bf16 %v6672, %v6672
    %v6801 = vpack.c.bf16 %v6673, %v6673
    %v6802 = vpack.c.bf16 %v6674, %v6674
    %v6803 = vpack.c.bf16 %v6675, %v6675
    %v6804 = vpack.c.bf16 %v6676, %v6676
    %v6805 = vpack.c.bf16 %v6677, %v6677
    %v6806 = vpack.c.bf16 %v6678, %v6678
    %v6807 = vpack.c.bf16 %v6679, %v6679
    %v6808 = vpack.c.bf16 %v6680, %v6680
    %v6809 = vpack.c.bf16 %v6681, %v6681
    %v6810 = vpack.c.bf16 %v6682, %v6682
    %v6811 = vpack.c.bf16 %v6683, %v6683
    %v6812 = vpack.c.bf16 %v6684, %v6684
    %v6813 = vld [vmem:[#allocation9] sm:$0xf]
    %v6814 = vld [vmem:[#allocation9 + $0x4] sm:$0xf]
    %v6815 = vld [vmem:[#allocation9 + $0x8] sm:$0xf]
    %v6816 = vld [vmem:[#allocation9 + $0xc] sm:$0xf]
    %v6817 = vld [vmem:[#allocation9 + $0x10] sm:$0xf]
    %v6818 = vld [vmem:[#allocation9 + $0x14] sm:$0xf]
    %v6819 = vld [vmem:[#allocation9 + $0x18] sm:$0xf]
    %v6820 = vld [vmem:[#allocation9 + $0x1c] sm:$0xf]
    %v6829 = vunpack.c.l.b16 %v6813
    %v6830 = vunpack.c.l.b16 %v6814
    %v6831 = vunpack.c.l.b16 %v6815
    %v6832 = vunpack.c.l.b16 %v6816
    %v6833 = vunpack.c.l.b16 %v6817
    %v6834 = vunpack.c.l.b16 %v6818
    %v6835 = vunpack.c.l.b16 %v6819
    %v6836 = vunpack.c.l.b16 %v6820
    %v6837 = vpack.c.b16 %v6830, %v6829
    %v6838 = vpack.c.b16 %v6832, %v6831
    %v6839 = vpack.c.b16 %v6834, %v6833
    %v6840 = vpack.c.b16 %v6836, %v6835
    %v6857 = vunpack.c.l.b16 %v6685
    %v6858 = vunpack.c.l.b16 %v6686
    %v6859 = vunpack.c.l.b16 %v6687
    %v6860 = vunpack.c.l.b16 %v6688
    %v6861 = vunpack.c.l.b16 %v6689
    %v6862 = vunpack.c.l.b16 %v6690
    %v6863 = vunpack.c.l.b16 %v6691
    %v6864 = vunpack.c.l.b16 %v6692
    %v6865 = vunpack.c.l.b16 %v6693
    %v6866 = vunpack.c.l.b16 %v6694
    %v6867 = vunpack.c.l.b16 %v6695
    %v6868 = vunpack.c.l.b16 %v6696
    %v6869 = vunpack.c.l.b16 %v6697
    %v6870 = vunpack.c.l.b16 %v6698
    %v6871 = vunpack.c.l.b16 %v6699
    %v6872 = vunpack.c.l.b16 %v6700
    %v6873 = vpack.c.b16 %v6858, %v6857
    %v6874 = vpack.c.b16 %v6860, %v6859
    %v6875 = vpack.c.b16 %v6862, %v6861
    %v6876 = vpack.c.b16 %v6864, %v6863
    %v6877 = vpack.c.b16 %v6866, %v6865
    %v6878 = vpack.c.b16 %v6868, %v6867
    %v6879 = vpack.c.b16 %v6870, %v6869
    %v6880 = vpack.c.b16 %v6872, %v6871
    %vm6888 = vcmask 1006592
    %v6890 = vsel %vm6888, %v6837, 0
    %v6893 = vsel %vm6888, %v6838, 0
    %v6896 = vsel %vm6888, %v6839, 0
    %v6899 = vsel %vm6888, %v6840, 0
    %vm6901 = vcmask 1044480
    %v6902 = vsel %vm6901, 4294967295, 65535
    %v6903 = vsel %vm2057, %v6902, 0
    %v6905 = vand.u32 %v6880, %v6903
    %6907 = vmatpush.bf16.msra.mxu0 %v6905
    %6908 = vmatpush.bf16.msra.mxu0 %v6879
    %6909 = vmatpush.bf16.msra.mxu0 %v6878
    %6910 = vmatpush.bf16.msra.mxu0 %v6877
    %6911 = vmatpush.bf16.msra.mxu0 %v6876
    %6912 = vmatpush.bf16.msra.mxu0 %v6875
    %6913 = vmatpush.bf16.msra.mxu0 %v6874
    %6914 = vmatpush.bf16.msra.mxu0 %v6873
    %6915 = vmatmul.bf16.gmra.mxu0 %v6890
    %v6916 = vpop.f32.mrf.mxu0
    %v6917 = vadd.f32 0.0, %v6916
    %v6918 = vpop.f32.mrf.mxu0
    %v6919 = vadd.f32 0.0, %v6918
    %6920 = vmatmul.bf16.gmra.mxu0 %v6893
    %v6921 = vpop.f32.mrf.mxu0
    %v6922 = vadd.f32 0.0, %v6921
    %v6923 = vpop.f32.mrf.mxu0
    %v6924 = vadd.f32 0.0, %v6923
    %6925 = vmatmul.bf16.gmra.mxu0 %v6896
    %v6926 = vpop.f32.mrf.mxu0
    %v6927 = vadd.f32 0.0, %v6926
    %v6928 = vpop.f32.mrf.mxu0
    %v6929 = vadd.f32 0.0, %v6928
    %6930 = vmatmul.bf16.gmra.mxu0 %v6899
    %v6931 = vpop.f32.mrf.mxu0
    %v6932 = vadd.f32 0.0, %v6931
    %v6933 = vpop.f32.mrf.mxu0
    %v6934 = vadd.f32 0.0, %v6933
    %6935 = vdwg.mxu0
    %v6952 = vunpack.c.l.b16 %v6701
    %v6953 = vunpack.c.l.b16 %v6702
    %v6954 = vunpack.c.l.b16 %v6703
    %v6955 = vunpack.c.l.b16 %v6704
    %v6956 = vunpack.c.l.b16 %v6705
    %v6957 = vunpack.c.l.b16 %v6706
    %v6958 = vunpack.c.l.b16 %v6707
    %v6959 = vunpack.c.l.b16 %v6708
    %v6960 = vunpack.c.l.b16 %v6709
    %v6961 = vunpack.c.l.b16 %v6710
    %v6962 = vunpack.c.l.b16 %v6711
    %v6963 = vunpack.c.l.b16 %v6712
    %v6964 = vunpack.c.l.b16 %v6713
    %v6965 = vunpack.c.l.b16 %v6714
    %v6966 = vunpack.c.l.b16 %v6715
    %v6967 = vunpack.c.l.b16 %v6716
    %v6968 = vpack.c.b16 %v6953, %v6952
    %v6969 = vpack.c.b16 %v6955, %v6954
    %v6970 = vpack.c.b16 %v6957, %v6956
    %v6971 = vpack.c.b16 %v6959, %v6958
    %v6972 = vpack.c.b16 %v6961, %v6960
    %v6973 = vpack.c.b16 %v6963, %v6962
    %v6974 = vpack.c.b16 %v6965, %v6964
    %v6975 = vpack.c.b16 %v6967, %v6966
    %v6984 = vand.u32 %v6975, %v6903
    %6986 = vmatpush.bf16.msra.mxu0 %v6984
    %6987 = vmatpush.bf16.msra.mxu0 %v6974
    %6988 = vmatpush.bf16.msra.mxu0 %v6973
    %6989 = vmatpush.bf16.msra.mxu0 %v6972
    %6990 = vmatpush.bf16.msra.mxu0 %v6971
    %6991 = vmatpush.bf16.msra.mxu0 %v6970
    %6992 = vmatpush.bf16.msra.mxu0 %v6969
    %6993 = vmatpush.bf16.msra.mxu0 %v6968
    %6994 = vmatmul.bf16.gmra.mxu0 %v6890
    %v6995 = vpop.f32.mrf.mxu0
    %v6996 = vadd.f32 0.0, %v6995
    %v6997 = vpop.f32.mrf.mxu0
    %v6998 = vadd.f32 0.0, %v6997
    %6999 = vmatmul.bf16.gmra.mxu0 %v6893
    %v7000 = vpop.f32.mrf.mxu0
    %v7001 = vadd.f32 0.0, %v7000
    %v7002 = vpop.f32.mrf.mxu0
    %v7003 = vadd.f32 0.0, %v7002
    %7004 = vmatmul.bf16.gmra.mxu0 %v6896
    %v7005 = vpop.f32.mrf.mxu0
    %v7006 = vadd.f32 0.0, %v7005
    %v7007 = vpop.f32.mrf.mxu0
    %v7008 = vadd.f32 0.0, %v7007
    %7009 = vmatmul.bf16.gmra.mxu0 %v6899
    %v7010 = vpop.f32.mrf.mxu0
    %v7011 = vadd.f32 0.0, %v7010
    %v7012 = vpop.f32.mrf.mxu0
    %v7013 = vadd.f32 0.0, %v7012
    %7014 = vdwg.mxu0
    %v7031 = vunpack.c.l.b16 %v6717
    %v7032 = vunpack.c.l.b16 %v6718
    %v7033 = vunpack.c.l.b16 %v6719
    %v7034 = vunpack.c.l.b16 %v6720
    %v7035 = vunpack.c.l.b16 %v6721
    %v7036 = vunpack.c.l.b16 %v6722
    %v7037 = vunpack.c.l.b16 %v6723
    %v7038 = vunpack.c.l.b16 %v6724
    %v7039 = vunpack.c.l.b16 %v6725
    %v7040 = vunpack.c.l.b16 %v6726
    %v7041 = vunpack.c.l.b16 %v6727
    %v7042 = vunpack.c.l.b16 %v6728
    %v7043 = vunpack.c.l.b16 %v6729
    %v7044 = vunpack.c.l.b16 %v6730
    %v7045 = vunpack.c.l.b16 %v6731
    %v7046 = vunpack.c.l.b16 %v6732
    %v7047 = vpack.c.b16 %v7032, %v7031
    %v7048 = vpack.c.b16 %v7034, %v7033
    %v7049 = vpack.c.b16 %v7036, %v7035
    %v7050 = vpack.c.b16 %v7038, %v7037
    %v7051 = vpack.c.b16 %v7040, %v7039
    %v7052 = vpack.c.b16 %v7042, %v7041
    %v7053 = vpack.c.b16 %v7044, %v7043
    %v7054 = vpack.c.b16 %v7046, %v7045
    %v7063 = vand.u32 %v7054, %v6903
    %7065 = vmatpush.bf16.msra.mxu0 %v7063
    %7066 = vmatpush.bf16.msra.mxu0 %v7053
    %7067 = vmatpush.bf16.msra.mxu0 %v7052
    %7068 = vmatpush.bf16.msra.mxu0 %v7051
    %7069 = vmatpush.bf16.msra.mxu0 %v7050
    %7070 = vmatpush.bf16.msra.mxu0 %v7049
    %7071 = vmatpush.bf16.msra.mxu0 %v7048
    %7072 = vmatpush.bf16.msra.mxu0 %v7047
    %7073 = vmatmul.bf16.gmra.mxu0 %v6890
    %v7074 = vpop.f32.mrf.mxu0
    %v7075 = vadd.f32 0.0, %v7074
    %v7076 = vpop.f32.mrf.mxu0
    %v7077 = vadd.f32 0.0, %v7076
    %7078 = vmatmul.bf16.gmra.mxu0 %v6893
    %v7079 = vpop.f32.mrf.mxu0
    %v7080 = vadd.f32 0.0, %v7079
    %v7081 = vpop.f32.mrf.mxu0
    %v7082 = vadd.f32 0.0, %v7081
    %7083 = vmatmul.bf16.gmra.mxu0 %v6896
    %v7084 = vpop.f32.mrf.mxu0
    %v7085 = vadd.f32 0.0, %v7084
    %v7086 = vpop.f32.mrf.mxu0
    %v7087 = vadd.f32 0.0, %v7086
    %7088 = vmatmul.bf16.gmra.mxu0 %v6899
    %v7089 = vpop.f32.mrf.mxu0
    %v7090 = vadd.f32 0.0, %v7089
    %v7091 = vpop.f32.mrf.mxu0
    %v7092 = vadd.f32 0.0, %v7091
    %7093 = vdwg.mxu0
    %v7110 = vunpack.c.l.b16 %v6733
    %v7111 = vunpack.c.l.b16 %v6734
    %v7112 = vunpack.c.l.b16 %v6735
    %v7113 = vunpack.c.l.b16 %v6736
    %v7114 = vunpack.c.l.b16 %v6737
    %v7115 = vunpack.c.l.b16 %v6738
    %v7116 = vunpack.c.l.b16 %v6739
    %v7117 = vunpack.c.l.b16 %v6740
    %v7118 = vunpack.c.l.b16 %v6741
    %v7119 = vunpack.c.l.b16 %v6742
    %v7120 = vunpack.c.l.b16 %v6743
    %v7121 = vunpack.c.l.b16 %v6744
    %v7122 = vunpack.c.l.b16 %v6745
    %v7123 = vunpack.c.l.b16 %v6746
    %v7124 = vunpack.c.l.b16 %v6747
    %v7125 = vunpack.c.l.b16 %v6748
    %v7126 = vpack.c.b16 %v7111, %v7110
    %v7127 = vpack.c.b16 %v7113, %v7112
    %v7128 = vpack.c.b16 %v7115, %v7114
    %v7129 = vpack.c.b16 %v7117, %v7116
    %v7130 = vpack.c.b16 %v7119, %v7118
    %v7131 = vpack.c.b16 %v7121, %v7120
    %v7132 = vpack.c.b16 %v7123, %v7122
    %v7133 = vpack.c.b16 %v7125, %v7124
    %v7142 = vand.u32 %v7133, %v6903
    %7144 = vmatpush.bf16.msra.mxu0 %v7142
    %7145 = vmatpush.bf16.msra.mxu0 %v7132
    %7146 = vmatpush.bf16.msra.mxu0 %v7131
    %7147 = vmatpush.bf16.msra.mxu0 %v7130
    %7148 = vmatpush.bf16.msra.mxu0 %v7129
    %7149 = vmatpush.bf16.msra.mxu0 %v7128
    %7150 = vmatpush.bf16.msra.mxu0 %v7127
    %7151 = vmatpush.bf16.msra.mxu0 %v7126
    %7152 = vmatmul.bf16.gmra.mxu0 %v6890
    %v7153 = vpop.f32.mrf.mxu0
    %v7154 = vadd.f32 0.0, %v7153
    %v7155 = vpop.f32.mrf.mxu0
    %v7156 = vadd.f32 0.0, %v7155
    %7157 = vmatmul.bf16.gmra.mxu0 %v6893
    %v7158 = vpop.f32.mrf.mxu0
    %v7159 = vadd.f32 0.0, %v7158
    %v7160 = vpop.f32.mrf.mxu0
    %v7161 = vadd.f32 0.0, %v7160
    %7162 = vmatmul.bf16.gmra.mxu0 %v6896
    %v7163 = vpop.f32.mrf.mxu0
    %v7164 = vadd.f32 0.0, %v7163
    %v7165 = vpop.f32.mrf.mxu0
    %v7166 = vadd.f32 0.0, %v7165
    %7167 = vmatmul.bf16.gmra.mxu0 %v6899
    %v7168 = vpop.f32.mrf.mxu0
    %v7169 = vadd.f32 0.0, %v7168
    %v7170 = vpop.f32.mrf.mxu0
    %v7171 = vadd.f32 0.0, %v7170
    %7172 = vdwg.mxu0
    %v7189 = vunpack.c.l.b16 %v6749
    %v7190 = vunpack.c.l.b16 %v6750
    %v7191 = vunpack.c.l.b16 %v6751
    %v7192 = vunpack.c.l.b16 %v6752
    %v7193 = vunpack.c.l.b16 %v6753
    %v7194 = vunpack.c.l.b16 %v6754
    %v7195 = vunpack.c.l.b16 %v6755
    %v7196 = vunpack.c.l.b16 %v6756
    %v7197 = vunpack.c.l.b16 %v6757
    %v7198 = vunpack.c.l.b16 %v6758
    %v7199 = vunpack.c.l.b16 %v6759
    %v7200 = vunpack.c.l.b16 %v6760
    %v7201 = vunpack.c.l.b16 %v6761
    %v7202 = vunpack.c.l.b16 %v6762
    %v7203 = vunpack.c.l.b16 %v6763
    %v7204 = vunpack.c.l.b16 %v6764
    %v7205 = vpack.c.b16 %v7190, %v7189
    %v7206 = vpack.c.b16 %v7192, %v7191
    %v7207 = vpack.c.b16 %v7194, %v7193
    %v7208 = vpack.c.b16 %v7196, %v7195
    %v7209 = vpack.c.b16 %v7198, %v7197
    %v7210 = vpack.c.b16 %v7200, %v7199
    %v7211 = vpack.c.b16 %v7202, %v7201
    %v7212 = vpack.c.b16 %v7204, %v7203
    %v7221 = vand.u32 %v7212, %v6903
    %7223 = vmatpush.bf16.msra.mxu0 %v7221
    %7224 = vmatpush.bf16.msra.mxu0 %v7211
    %7225 = vmatpush.bf16.msra.mxu0 %v7210
    %7226 = vmatpush.bf16.msra.mxu0 %v7209
    %7227 = vmatpush.bf16.msra.mxu0 %v7208
    %7228 = vmatpush.bf16.msra.mxu0 %v7207
    %7229 = vmatpush.bf16.msra.mxu0 %v7206
    %7230 = vmatpush.bf16.msra.mxu0 %v7205
    %7231 = vmatmul.bf16.gmra.mxu0 %v6890
    %v7232 = vpop.f32.mrf.mxu0
    %v7233 = vadd.f32 0.0, %v7232
    %v7234 = vpop.f32.mrf.mxu0
    %v7235 = vadd.f32 0.0, %v7234
    %7236 = vmatmul.bf16.gmra.mxu0 %v6893
    %v7237 = vpop.f32.mrf.mxu0
    %v7238 = vadd.f32 0.0, %v7237
    %v7239 = vpop.f32.mrf.mxu0
    %v7240 = vadd.f32 0.0, %v7239
    %7241 = vmatmul.bf16.gmra.mxu0 %v6896
    %v7242 = vpop.f32.mrf.mxu0
    %v7243 = vadd.f32 0.0, %v7242
    %v7244 = vpop.f32.mrf.mxu0
    %v7245 = vadd.f32 0.0, %v7244
    %7246 = vmatmul.bf16.gmra.mxu0 %v6899
    %v7247 = vpop.f32.mrf.mxu0
    %v7248 = vadd.f32 0.0, %v7247
    %v7249 = vpop.f32.mrf.mxu0
    %v7250 = vadd.f32 0.0, %v7249
    %7251 = vdwg.mxu0
    %v7268 = vunpack.c.l.b16 %v6765
    %v7269 = vunpack.c.l.b16 %v6766
    %v7270 = vunpack.c.l.b16 %v6767
    %v7271 = vunpack.c.l.b16 %v6768
    %v7272 = vunpack.c.l.b16 %v6769
    %v7273 = vunpack.c.l.b16 %v6770
    %v7274 = vunpack.c.l.b16 %v6771
    %v7275 = vunpack.c.l.b16 %v6772
    %v7276 = vunpack.c.l.b16 %v6773
    %v7277 = vunpack.c.l.b16 %v6774
    %v7278 = vunpack.c.l.b16 %v6775
    %v7279 = vunpack.c.l.b16 %v6776
    %v7280 = vunpack.c.l.b16 %v6777
    %v7281 = vunpack.c.l.b16 %v6778
    %v7282 = vunpack.c.l.b16 %v6779
    %v7283 = vunpack.c.l.b16 %v6780
    %v7284 = vpack.c.b16 %v7269, %v7268
    %v7285 = vpack.c.b16 %v7271, %v7270
    %v7286 = vpack.c.b16 %v7273, %v7272
    %v7287 = vpack.c.b16 %v7275, %v7274
    %v7288 = vpack.c.b16 %v7277, %v7276
    %v7289 = vpack.c.b16 %v7279, %v7278
    %v7290 = vpack.c.b16 %v7281, %v7280
    %v7291 = vpack.c.b16 %v7283, %v7282
    %v7300 = vand.u32 %v7291, %v6903
    %7302 = vmatpush.bf16.msra.mxu0 %v7300
    %7303 = vmatpush.bf16.msra.mxu0 %v7290
    %7304 = vmatpush.bf16.msra.mxu0 %v7289
    %7305 = vmatpush.bf16.msra.mxu0 %v7288
    %7306 = vmatpush.bf16.msra.mxu0 %v7287
    %7307 = vmatpush.bf16.msra.mxu0 %v7286
    %7308 = vmatpush.bf16.msra.mxu0 %v7285
    %7309 = vmatpush.bf16.msra.mxu0 %v7284
    %7310 = vmatmul.bf16.gmra.mxu0 %v6890
    %v7311 = vpop.f32.mrf.mxu0
    %v7312 = vadd.f32 0.0, %v7311
    %v7313 = vpop.f32.mrf.mxu0
    %v7314 = vadd.f32 0.0, %v7313
    %7315 = vmatmul.bf16.gmra.mxu0 %v6893
    %v7316 = vpop.f32.mrf.mxu0
    %v7317 = vadd.f32 0.0, %v7316
    %v7318 = vpop.f32.mrf.mxu0
    %v7319 = vadd.f32 0.0, %v7318
    %7320 = vmatmul.bf16.gmra.mxu0 %v6896
    %v7321 = vpop.f32.mrf.mxu0
    %v7322 = vadd.f32 0.0, %v7321
    %v7323 = vpop.f32.mrf.mxu0
    %v7324 = vadd.f32 0.0, %v7323
    %7325 = vmatmul.bf16.gmra.mxu0 %v6899
    %v7326 = vpop.f32.mrf.mxu0
    %v7327 = vadd.f32 0.0, %v7326
    %v7328 = vpop.f32.mrf.mxu0
    %v7329 = vadd.f32 0.0, %v7328
    %7330 = vdwg.mxu0
    %v7347 = vunpack.c.l.b16 %v6781
    %v7348 = vunpack.c.l.b16 %v6782
    %v7349 = vunpack.c.l.b16 %v6783
    %v7350 = vunpack.c.l.b16 %v6784
    %v7351 = vunpack.c.l.b16 %v6785
    %v7352 = vunpack.c.l.b16 %v6786
    %v7353 = vunpack.c.l.b16 %v6787
    %v7354 = vunpack.c.l.b16 %v6788
    %v7355 = vunpack.c.l.b16 %v6789
    %v7356 = vunpack.c.l.b16 %v6790
    %v7357 = vunpack.c.l.b16 %v6791
    %v7358 = vunpack.c.l.b16 %v6792
    %v7359 = vunpack.c.l.b16 %v6793
    %v7360 = vunpack.c.l.b16 %v6794
    %v7361 = vunpack.c.l.b16 %v6795
    %v7362 = vunpack.c.l.b16 %v6796
    %v7363 = vpack.c.b16 %v7348, %v7347
    %v7364 = vpack.c.b16 %v7350, %v7349
    %v7365 = vpack.c.b16 %v7352, %v7351
    %v7366 = vpack.c.b16 %v7354, %v7353
    %v7367 = vpack.c.b16 %v7356, %v7355
    %v7368 = vpack.c.b16 %v7358, %v7357
    %v7369 = vpack.c.b16 %v7360, %v7359
    %v7370 = vpack.c.b16 %v7362, %v7361
    %v7379 = vand.u32 %v7370, %v6903
    %7381 = vmatpush.bf16.msra.mxu0 %v7379
    %7382 = vmatpush.bf16.msra.mxu0 %v7369
    %7383 = vmatpush.bf16.msra.mxu0 %v7368
    %7384 = vmatpush.bf16.msra.mxu0 %v7367
    %7385 = vmatpush.bf16.msra.mxu0 %v7366
    %7386 = vmatpush.bf16.msra.mxu0 %v7365
    %7387 = vmatpush.bf16.msra.mxu0 %v7364
    %7388 = vmatpush.bf16.msra.mxu0 %v7363
    %7389 = vmatmul.bf16.gmra.mxu0 %v6890
    %v7390 = vpop.f32.mrf.mxu0
    %v7391 = vadd.f32 0.0, %v7390
    %v7392 = vpop.f32.mrf.mxu0
    %v7393 = vadd.f32 0.0, %v7392
    %7394 = vmatmul.bf16.gmra.mxu0 %v6893
    %v7395 = vpop.f32.mrf.mxu0
    %v7396 = vadd.f32 0.0, %v7395
    %v7397 = vpop.f32.mrf.mxu0
    %v7398 = vadd.f32 0.0, %v7397
    %7399 = vmatmul.bf16.gmra.mxu0 %v6896
    %v7400 = vpop.f32.mrf.mxu0
    %v7401 = vadd.f32 0.0, %v7400
    %v7402 = vpop.f32.mrf.mxu0
    %v7403 = vadd.f32 0.0, %v7402
    %7404 = vmatmul.bf16.gmra.mxu0 %v6899
    %v7405 = vpop.f32.mrf.mxu0
    %v7406 = vadd.f32 0.0, %v7405
    %v7407 = vpop.f32.mrf.mxu0
    %v7408 = vadd.f32 0.0, %v7407
    %7409 = vdwg.mxu0
    %v7426 = vunpack.c.l.b16 %v6797
    %v7427 = vunpack.c.l.b16 %v6798
    %v7428 = vunpack.c.l.b16 %v6799
    %v7429 = vunpack.c.l.b16 %v6800
    %v7430 = vunpack.c.l.b16 %v6801
    %v7431 = vunpack.c.l.b16 %v6802
    %v7432 = vunpack.c.l.b16 %v6803
    %v7433 = vunpack.c.l.b16 %v6804
    %v7434 = vunpack.c.l.b16 %v6805
    %v7435 = vunpack.c.l.b16 %v6806
    %v7436 = vunpack.c.l.b16 %v6807
    %v7437 = vunpack.c.l.b16 %v6808
    %v7438 = vunpack.c.l.b16 %v6809
    %v7439 = vunpack.c.l.b16 %v6810
    %v7440 = vunpack.c.l.b16 %v6811
    %v7441 = vunpack.c.l.b16 %v6812
    %v7442 = vpack.c.b16 %v7427, %v7426
    %v7443 = vpack.c.b16 %v7429, %v7428
    %v7444 = vpack.c.b16 %v7431, %v7430
    %v7445 = vpack.c.b16 %v7433, %v7432
    %v7446 = vpack.c.b16 %v7435, %v7434
    %v7447 = vpack.c.b16 %v7437, %v7436
    %v7448 = vpack.c.b16 %v7439, %v7438
    %v7449 = vpack.c.b16 %v7441, %v7440
    %v7458 = vand.u32 %v7449, %v6903
    %7460 = vmatpush.bf16.msra.mxu0 %v7458
    %7461 = vmatpush.bf16.msra.mxu0 %v7448
    %7462 = vmatpush.bf16.msra.mxu0 %v7447
    %7463 = vmatpush.bf16.msra.mxu0 %v7446
    %7464 = vmatpush.bf16.msra.mxu0 %v7445
    %7465 = vmatpush.bf16.msra.mxu0 %v7444
    %7466 = vmatpush.bf16.msra.mxu0 %v7443
    %7467 = vmatpush.bf16.msra.mxu0 %v7442
    %7468 = vmatmul.bf16.gmra.mxu0 %v6890
    %v7469 = vpop.f32.mrf.mxu0
    %v7470 = vadd.f32 0.0, %v7469
    %v7471 = vpop.f32.mrf.mxu0
    %v7472 = vadd.f32 0.0, %v7471
    %7473 = vmatmul.bf16.gmra.mxu0 %v6893
    %v7474 = vpop.f32.mrf.mxu0
    %v7475 = vadd.f32 0.0, %v7474
    %v7476 = vpop.f32.mrf.mxu0
    %v7477 = vadd.f32 0.0, %v7476
    %7478 = vmatmul.bf16.gmra.mxu0 %v6896
    %v7479 = vpop.f32.mrf.mxu0
    %v7480 = vadd.f32 0.0, %v7479
    %v7481 = vpop.f32.mrf.mxu0
    %v7482 = vadd.f32 0.0, %v7481
    %7483 = vmatmul.bf16.gmra.mxu0 %v6899
    %v7484 = vpop.f32.mrf.mxu0
    %v7485 = vadd.f32 0.0, %v7484
    %v7486 = vpop.f32.mrf.mxu0
    %v7487 = vadd.f32 0.0, %v7486
    %7488 = vdwg.mxu0
    %7521 = vrot.lane.b32.xlu0 %v6927, 64
    %v7522 = vpop.permute.xlu0 %7521
    %7523 = vrot.lane.b32.xlu0 %v6929, 64
    %v7524 = vpop.permute.xlu0 %7523
    %7525 = vrot.lane.b32.xlu0 %v6932, 64
    %v7526 = vpop.permute.xlu0 %7525
    %7527 = vrot.lane.b32.xlu0 %v6934, 64
    %v7528 = vpop.permute.xlu0 %7527
    %7529 = vrot.lane.b32.xlu0 %v7006, 64
    %v7530 = vpop.permute.xlu0 %7529
    %7531 = vrot.lane.b32.xlu0 %v7008, 64
    %v7532 = vpop.permute.xlu0 %7531
    %7533 = vrot.lane.b32.xlu0 %v7011, 64
    %v7534 = vpop.permute.xlu0 %7533
    %7535 = vrot.lane.b32.xlu0 %v7013, 64
    %v7536 = vpop.permute.xlu0 %7535
    %7537 = vrot.lane.b32.xlu0 %v7085, 64
    %v7538 = vpop.permute.xlu0 %7537
    %7539 = vrot.lane.b32.xlu0 %v7087, 64
    %v7540 = vpop.permute.xlu0 %7539
    %7541 = vrot.lane.b32.xlu0 %v7090, 64
    %v7542 = vpop.permute.xlu0 %7541
    %7543 = vrot.lane.b32.xlu0 %v7092, 64
    %v7544 = vpop.permute.xlu0 %7543
    %7545 = vrot.lane.b32.xlu0 %v7164, 64
    %v7546 = vpop.permute.xlu0 %7545
    %7547 = vrot.lane.b32.xlu0 %v7166, 64
    %v7548 = vpop.permute.xlu0 %7547
    %7549 = vrot.lane.b32.xlu0 %v7169, 64
    %v7550 = vpop.permute.xlu0 %7549
    %7551 = vrot.lane.b32.xlu0 %v7171, 64
    %v7552 = vpop.permute.xlu0 %7551
    %7553 = vrot.lane.b32.xlu0 %v7243, 64
    %v7554 = vpop.permute.xlu0 %7553
    %7555 = vrot.lane.b32.xlu0 %v7245, 64
    %v7556 = vpop.permute.xlu0 %7555
    %7557 = vrot.lane.b32.xlu0 %v7248, 64
    %v7558 = vpop.permute.xlu0 %7557
    %7559 = vrot.lane.b32.xlu0 %v7250, 64
    %v7560 = vpop.permute.xlu0 %7559
    %7561 = vrot.lane.b32.xlu0 %v7322, 64
    %v7562 = vpop.permute.xlu0 %7561
    %7563 = vrot.lane.b32.xlu0 %v7324, 64
    %v7564 = vpop.permute.xlu0 %7563
    %7565 = vrot.lane.b32.xlu0 %v7327, 64
    %v7566 = vpop.permute.xlu0 %7565
    %7567 = vrot.lane.b32.xlu0 %v7329, 64
    %v7568 = vpop.permute.xlu0 %7567
    %7569 = vrot.lane.b32.xlu0 %v7401, 64
    %v7570 = vpop.permute.xlu0 %7569
    %7571 = vrot.lane.b32.xlu0 %v7403, 64
    %v7572 = vpop.permute.xlu0 %7571
    %7573 = vrot.lane.b32.xlu0 %v7406, 64
    %v7574 = vpop.permute.xlu0 %7573
    %7575 = vrot.lane.b32.xlu0 %v7408, 64
    %v7576 = vpop.permute.xlu0 %7575
    %7577 = vrot.lane.b32.xlu0 %v7480, 64
    %v7578 = vpop.permute.xlu0 %7577
    %7579 = vrot.lane.b32.xlu0 %v7482, 64
    %v7580 = vpop.permute.xlu0 %7579
    %7581 = vrot.lane.b32.xlu0 %v7485, 64
    %v7582 = vpop.permute.xlu0 %7581
    %7583 = vrot.lane.b32.xlu0 %v7487, 64
    %v7584 = vpop.permute.xlu0 %7583
    %v7617 = vsel %vm3302, %v6917, %v7522
    %v7618 = vsel %vm3302, %v6919, %v7524
    %v7619 = vsel %vm3302, %v6922, %v7526
    %v7620 = vsel %vm3302, %v6924, %v7528
    %v7621 = vsel %vm3302, %v6996, %v7530
    %v7622 = vsel %vm3302, %v6998, %v7532
    %v7623 = vsel %vm3302, %v7001, %v7534
    %v7624 = vsel %vm3302, %v7003, %v7536
    %v7625 = vsel %vm3302, %v7075, %v7538
    %v7626 = vsel %vm3302, %v7077, %v7540
    %v7627 = vsel %vm3302, %v7080, %v7542
    %v7628 = vsel %vm3302, %v7082, %v7544
    %v7629 = vsel %vm3302, %v7154, %v7546
    %v7630 = vsel %vm3302, %v7156, %v7548
    %v7631 = vsel %vm3302, %v7159, %v7550
    %v7632 = vsel %vm3302, %v7161, %v7552
    %v7633 = vsel %vm3302, %v7233, %v7554
    %v7634 = vsel %vm3302, %v7235, %v7556
    %v7635 = vsel %vm3302, %v7238, %v7558
    %v7636 = vsel %vm3302, %v7240, %v7560
    %v7637 = vsel %vm3302, %v7312, %v7562
    %v7638 = vsel %vm3302, %v7314, %v7564
    %v7639 = vsel %vm3302, %v7317, %v7566
    %v7640 = vsel %vm3302, %v7319, %v7568
    %v7641 = vsel %vm3302, %v7391, %v7570
    %v7642 = vsel %vm3302, %v7393, %v7572
    %v7643 = vsel %vm3302, %v7396, %v7574
    %v7644 = vsel %vm3302, %v7398, %v7576
    %v7645 = vsel %vm3302, %v7470, %v7578
    %v7646 = vsel %vm3302, %v7472, %v7580
    %v7647 = vsel %vm3302, %v7475, %v7582
    %v7648 = vsel %vm3302, %v7477, %v7584
    %v7649 = vpack.c.bf16 %v7617, %v7617
    %v7650 = vpack.c.bf16 %v7618, %v7618
    %v7651 = vpack.c.bf16 %v7619, %v7619
    %v7652 = vpack.c.bf16 %v7620, %v7620
    %v7653 = vpack.c.bf16 %v7621, %v7621
    %v7654 = vpack.c.bf16 %v7622, %v7622
    %v7655 = vpack.c.bf16 %v7623, %v7623
    %v7656 = vpack.c.bf16 %v7624, %v7624
    %v7657 = vpack.c.bf16 %v7625, %v7625
    %v7658 = vpack.c.bf16 %v7626, %v7626
    %v7659 = vpack.c.bf16 %v7627, %v7627
    %v7660 = vpack.c.bf16 %v7628, %v7628
    %v7661 = vpack.c.bf16 %v7629, %v7629
    %v7662 = vpack.c.bf16 %v7630, %v7630
    %v7663 = vpack.c.bf16 %v7631, %v7631
    %v7664 = vpack.c.bf16 %v7632, %v7632
    %v7665 = vpack.c.bf16 %v7633, %v7633
    %v7666 = vpack.c.bf16 %v7634, %v7634
    %v7667 = vpack.c.bf16 %v7635, %v7635
    %v7668 = vpack.c.bf16 %v7636, %v7636
    %v7669 = vpack.c.bf16 %v7637, %v7637
    %v7670 = vpack.c.bf16 %v7638, %v7638
    %v7671 = vpack.c.bf16 %v7639, %v7639
    %v7672 = vpack.c.bf16 %v7640, %v7640
    %v7673 = vpack.c.bf16 %v7641, %v7641
    %v7674 = vpack.c.bf16 %v7642, %v7642
    %v7675 = vpack.c.bf16 %v7643, %v7643
    %v7676 = vpack.c.bf16 %v7644, %v7644
    %v7677 = vpack.c.bf16 %v7645, %v7645
    %v7678 = vpack.c.bf16 %v7646, %v7646
    %v7679 = vpack.c.bf16 %v7647, %v7647
    %v7680 = vpack.c.bf16 %v7648, %v7648
    %7681 = vst [vmem:[%s6] sm:$0xf] %v7649
    %7682 = vst [vmem:[%s6 + $0x4] sm:$0xf] %v7650
    %7683 = vst [vmem:[%s6 + $0x8] sm:$0xf] %v7651
    %7684 = vst [vmem:[%s6 + $0xc] sm:$0xf] %v7652
    %7685 = vst [vmem:[%s6 + $0x10] sm:$0xf] %v7653
    %7686 = vst [vmem:[%s6 + $0x14] sm:$0xf] %v7654
    %7687 = vst [vmem:[%s6 + $0x18] sm:$0xf] %v7655
    %7688 = vst [vmem:[%s6 + $0x1c] sm:$0xf] %v7656
    %7689 = vst [vmem:[%s6 + $0x20] sm:$0xf] %v7657
    %7690 = vst [vmem:[%s6 + $0x24] sm:$0xf] %v7658
    %7691 = vst [vmem:[%s6 + $0x28] sm:$0xf] %v7659
    %7692 = vst [vmem:[%s6 + $0x2c] sm:$0xf] %v7660
    %7693 = vst [vmem:[%s6 + $0x30] sm:$0xf] %v7661
    %7694 = vst [vmem:[%s6 + $0x34] sm:$0xf] %v7662
    %7695 = vst [vmem:[%s6 + $0x38] sm:$0xf] %v7663
    %7696 = vst [vmem:[%s6 + $0x3c] sm:$0xf] %v7664
    %7697 = vst [vmem:[%s6 + $0x40] sm:$0xf] %v7665
    %7698 = vst [vmem:[%s6 + $0x44] sm:$0xf] %v7666
    %7699 = vst [vmem:[%s6 + $0x48] sm:$0xf] %v7667
    %7700 = vst [vmem:[%s6 + $0x4c] sm:$0xf] %v7668
    %7701 = vst [vmem:[%s6 + $0x50] sm:$0xf] %v7669
    %7702 = vst [vmem:[%s6 + $0x54] sm:$0xf] %v7670
    %7703 = vst [vmem:[%s6 + $0x58] sm:$0xf] %v7671
    %7704 = vst [vmem:[%s6 + $0x5c] sm:$0xf] %v7672
    %7705 = vst [vmem:[%s6 + $0x60] sm:$0xf] %v7673
    %7706 = vst [vmem:[%s6 + $0x64] sm:$0xf] %v7674
    %7707 = vst [vmem:[%s6 + $0x68] sm:$0xf] %v7675
    %7708 = vst [vmem:[%s6 + $0x6c] sm:$0xf] %v7676
    %7709 = vst [vmem:[%s6 + $0x70] sm:$0xf] %v7677
    %7710 = vst [vmem:[%s6 + $0x74] sm:$0xf] %v7678
    %7711 = vst [vmem:[%s6 + $0x78] sm:$0xf] %v7679
    %7712 = vst [vmem:[%s6 + $0x7c] sm:$0xf] %v7680
    // Predicated region
    $region46: #{cnn_module_branch_forward.2} parent=1 // pred_check
      _
    $region47: #{cnn_module_branch_forward.2} parent=1 // pred_check_branch
      %7714 = sbr.rel (0) target = $region49
    $region48: #{cnn_module_branch_forward.2} parent=1 // pred_region
      _
    $region49: #{cnn_module_branch_forward.2} parent=1 // pred_fallthru
      _
    // Predicated region
    $region50: #{cnn_module_branch_forward.2} parent=1 // pred_check
      _
    $region51: #{cnn_module_branch_forward.2} parent=1 // pred_check_branch
      %7716 = sbr.rel (0) target = $region53
    $region52: #{cnn_module_branch_forward.2} parent=1 // pred_region
      _
    $region53: #{cnn_module_branch_forward.2} parent=1 // pred_fallthru
      _
    %7717 = vsyncpa [#allocation3], 1
    %7718 = vsyncpa [#allocation5], 1
    %7719 = vsyncpa [#allocation8], 1

</llo_original>
